<compile_context>
chip_gen: v5e
topology: v5e:2x2
jax: 0.10.0
libtpu: 0.0.40
codegen_flags: <defaults>
</compile_context>

<pallas_src>
import functools

import jax
import jax.numpy as jnp
import numpy as np
from jax.experimental import pallas as pl
from jax.experimental.pallas import tpu as pltpu

_VMEM_LIMIT = 48 * 1024 * 1024  # leave headroom for v7x's 64 MiB VMEM per TC


def _round_up(x, m):
    return (x + m - 1) // m * m


# ----------------------------------------------------------------------------
# Pallas kernel: tap-accumulated conv matmul with fused shift/residual/ReLU
# ----------------------------------------------------------------------------
def _conv_tap_kernel(*refs, tap_offsets, m_rows, relu, has_residual,
                     res_offset):
    if has_residual:
        x_ref, w_ref, shift_ref, res_ref, o_ref = refs
    else:
        x_ref, w_ref, shift_ref, o_ref = refs
        res_ref = None
    cout = o_ref.shape[-1]
    acc = jnp.zeros((m_rows, cout), jnp.float32)
    # Unrolled tap loop (<= 9 taps): each tap is a contiguous row window of the
    # flattened, padded image -> a plain (M, Cin) @ (Cin, Cout) MXU matmul.
    for t, off in enumerate(tap_offsets):
        xs = x_ref[0, off:off + m_rows, :]                  # (m_rows, Cin) bf16
        acc = acc + jnp.dot(xs, w_ref[t],
                            preferred_element_type=jnp.float32)
    y = acc + shift_ref[...]                                # folded-BN shift / bias
    if has_residual:
        y = y + res_ref[0, res_offset:res_offset + m_rows, :].astype(
            jnp.float32)
    if relu:
        y = jnp.maximum(y, 0.0)
    o_ref[0, :, :] = y.astype(o_ref.dtype)


def _conv_flat_pallas(xflat, wtaps, shift, *, wp, ho_flat, kh, kw, relu,
                      out_dtype, residual=None, res_offset=0):
    """xflat: (N, Lp, Cin) bf16 flattened padded images; wtaps: (kh*kw, Cin, Cout)."""
    n, lp, cin = xflat.shape
    ntaps, cin2, cout = wtaps.shape
    assert cin2 == cin and ntaps == kh * kw
    m_full = ho_flat * wp
    m_rows = _round_up(m_full, 8)
    tap_offsets = tuple(ki * wp + kj for ki in range(kh) for kj in range(kw))
    assert max(tap_offsets) + m_rows <= lp

    in_specs = [
        pl.BlockSpec((1, lp, cin), lambda b: (b, 0, 0)),        # per-image input
        pl.BlockSpec((ntaps, cin, cout), lambda b: (0, 0, 0)),  # resident weights
        pl.BlockSpec((1, cout), lambda b: (0, 0)),              # resident shift
    ]
    args = [xflat, wtaps, shift]
    if residual is not None:
        lr = residual.shape[1]
        assert residual.shape[0] == n and residual.shape[2] == cout
        assert res_offset + m_rows <= lr
        in_specs.append(pl.BlockSpec((1, lr, cout), lambda b: (b, 0, 0)))
        args.append(residual)

    kernel = functools.partial(
        _conv_tap_kernel, tap_offsets=tap_offsets, m_rows=m_rows, relu=relu,
        has_residual=residual is not None, res_offset=res_offset)
    out = pl.pallas_call(
        kernel,
        out_shape=jax.ShapeDtypeStruct((n, m_rows, cout), out_dtype),
        grid=(n,),
        in_specs=in_specs,
        out_specs=pl.BlockSpec((1, m_rows, cout), lambda b: (b, 0, 0)),
        compiler_params=pltpu.CompilerParams(
            dimension_semantics=("parallel",),
            vmem_limit_bytes=_VMEM_LIMIT),
    )(*args)
    return out, m_full


# ----------------------------------------------------------------------------
# Conv wrappers (pad/flatten glue in plain JAX, all MACs in the Pallas kernel)
# ----------------------------------------------------------------------------
def _pad_flatten(x, kh, kw, pad_h, pad_w):
    """Pad NHWC and flatten spatially to (N, Lp, C) bf16 rows (wide layout)."""
    n, h, w, c = x.shape
    pt, pb = pad_h
    pleft, pright = pad_w
    hp, wp = h + pt + pb, w + pleft + pright
    ho_flat, wo_flat = hp - kh + 1, wp - kw + 1
    m_rows = _round_up(ho_flat * wp, 8)
    max_off = (kh - 1) * wp + (kw - 1)
    lp = _round_up(max(hp * wp, max_off + m_rows), 8)
    xp = jnp.pad(x.astype(jnp.bfloat16),
                 ((0, 0), (pt, pb), (pleft, pright), (0, 0)))
    xflat = xp.reshape(n, hp * wp, c)
    if lp > hp * wp:
        xflat = jnp.pad(xflat, ((0, 0), (0, lp - hp * wp), (0, 0)))
    geom = dict(kh=kh, kw=kw, wp=wp, hp=hp, ho_flat=ho_flat, wo_flat=wo_flat)
    return xflat, geom


def conv2d_s1(x, w, *, pads=((0, 0), (0, 0)), scale=None, shift=None,
              relu=False, out_dtype=jnp.bfloat16,
              xflat=None, geom=None, residual_flat=None, res_offset=0):
    """Stride-1 conv (NHWC x, HWIO w) with fused folded-BN scale/shift, optional
    fused residual add (residual given in padded-flat layout) and ReLU.

    NOTE: to load PyTorch Conv2d weights use w_torch.transpose(2, 3, 1, 0)."""
    kh, kw, cin, cout = w.shape
    if xflat is None:
        xflat, geom = _pad_flatten(x, kh, kw, pads[0], pads[1])
    assert geom["kh"] == kh and geom["kw"] == kw
    if scale is None:
        scale = jnp.ones((cout,), jnp.float32)
    if shift is None:
        shift = jnp.zeros((cout,), jnp.float32)
    # Fold BN scale into the weights -> epilogue is only +shift (+ReLU).
    wtaps = (w * scale).reshape(kh * kw, cin, cout).astype(jnp.bfloat16)
    shift2 = shift.reshape(1, cout).astype(jnp.float32)
    out_wide, m_full = _conv_flat_pallas(
        xflat, wtaps, shift2, wp=geom["wp"], ho_flat=geom["ho_flat"],
        kh=kh, kw=kw, relu=relu, out_dtype=out_dtype,
        residual=residual_flat, res_offset=res_offset)
    n = xflat.shape[0]
    out = out_wide[:, :m_full, :].reshape(n, geom["ho_flat"], geom["wp"], cout)
    return out[:, :, :geom["wo_flat"], :]


def conv2d_strided(x, w, *, stride, pad, scale=None, shift=None, relu=False,
                   out_dtype=jnp.bfloat16):
    """k x k conv with stride s via space-to-depth + the stride-1 tap kernel."""
    kh, kw, cin, cout = w.shape
    s = stride
    n, h, wdt, c = x.shape
    ho = (h + 2 * pad - kh) // s + 1
    wo = (wdt + 2 * pad - kw) // s + 1
    hp = _round_up(s * (ho - 1) + kh, s)
    wp = _round_up(s * (wo - 1) + kw, s)
    pt, pleft = pad, pad
    pb, pright = hp - h - pt, wp - wdt - pleft
    assert pb >= 0 and pright >= 0
    xp = jnp.pad(x.astype(jnp.bfloat16),
                 ((0, 0), (pt, pb), (pleft, pright), (0, 0)))
    h2, w2 = hp // s, wp // s
    x2 = xp.reshape(n, h2, s, w2, s, c).transpose(0, 1, 3, 2, 4, 5)
    x2 = x2.reshape(n, h2, w2, s * s * c)
    kh2, kw2 = -(-kh // s), -(-kw // s)
    w2arr = jnp.zeros((kh2, kw2, s, s, cin, cout), w.dtype)
    for ki in range(kh):
        for kj in range(kw):
            w2arr = w2arr.at[ki // s, kj // s, ki % s, kj % s].set(w[ki, kj])
    w2arr = w2arr.reshape(kh2, kw2, s * s * cin, cout)
    out = conv2d_s1(x2, w2arr, pads=((0, 0), (0, 0)), scale=scale, shift=shift,
                    relu=relu, out_dtype=out_dtype)
    return out[:, :ho, :wo, :]


def _deconv_torch_to_conv(wt):
    """PyTorch ConvTranspose2d weight (Cin, Cout, kh, kw) -> equivalent
    regular-conv-on-dilated-input weight in HWIO layout (kh, kw, Cin, Cout)."""
    return jnp.flip(jnp.transpose(wt, (2, 3, 0, 1)), axis=(0, 1))


def conv_transpose2d_k4s2p1(x, wc, *, scale, shift, relu,
                            out_dtype=jnp.bfloat16):
    """ConvTranspose2d(kernel=4, stride=2, pad=1, bias=False) via sub-pixel
    (phase) decomposition: 4 stride-1 2x2 convs interleaved -> 4x fewer MACs
    than the zero-stuffed form.  `wc` is the regular-conv form of the weight
    (see _deconv_torch_to_conv)."""
    n, h, wdt, c = x.shape
    kh, kw, cin, cout = wc.shape
    assert kh == 4 and kw == 4
    phases = []
    for py in range(2):
        for px in range(2):
            wph = wc[py::2, px::2]                       # (2, 2, cin, cout)
            pads = ((1 - py, py), (1 - px, px))
            phases.append(conv2d_s1(x, wph, pads=pads, scale=scale,
                                    shift=shift, relu=relu,
                                    out_dtype=out_dtype))
    out = jnp.stack(phases, axis=0).reshape(2, 2, n, h, wdt, cout)
    out = out.transpose(2, 3, 0, 4, 1, 5).reshape(n, 2 * h, 2 * wdt, cout)
    return out


def _bn_fold(bn, eps=1e-5):
    scale = bn["gamma"] / jnp.sqrt(bn["var"] + eps)
    shift = bn["beta"] - bn["mean"] * scale
    return scale, shift


# ----------------------------------------------------------------------------
# Module forward (NHWC / bf16 internally)
# ----------------------------------------------------------------------------
def basic_block(x, p):
    s1, b1 = _bn_fold(p["bn1"])
    s2, b2 = _bn_fold(p["bn2"])
    # Build the padded-flat view of x once: conv1 input AND conv2's residual.
    xflat, geom = _pad_flatten(x, 3, 3, (1, 1), (1, 1))
    y1 = conv2d_s1(None, p["w1"], xflat=xflat, geom=geom,
                   scale=s1, shift=b1, relu=True)
    # Second conv: residual add + ReLU fused into the matmul epilogue.
    y2 = conv2d_s1(y1, p["w2"], pads=((1, 1), (1, 1)), scale=s2, shift=b2,
                   relu=True, residual_flat=xflat,
                   res_offset=geom["wp"] + 1)
    return y2


def deconv_heatmaps_head(x, p):
    s, b = _bn_fold(p["deconv_bn"])
    wc = _deconv_torch_to_conv(p["deconv_w_torch"])
    feats = conv_transpose2d_k4s2p1(x, wc, scale=s, shift=b, relu=True)
    for bp in p["blocks"]:
        feats = basic_block(feats, bp)
    heatmaps = conv2d_s1(feats, p["final_w"], pads=((0, 0), (0, 0)),
                         shift=p["final_b"], relu=False,
                         out_dtype=jnp.float32)
    return feats, heatmaps


def backbone_proxy(x, p):
    # TODO(synk): the full HRNetBackbone (multi-branch / multi-stage) was not
    # provided in the reference; this proxy stem produces the C-channel,
    # 1/4-resolution high-resolution-branch output that HigherHRNet consumes.
    s1, b1 = _bn_fold(p["bn1"])
    s2, b2 = _bn_fold(p["bn2"])
    y = conv2d_strided(x, p["w1"], stride=2, pad=1, scale=s1, shift=b1,
                       relu=True)
    y = conv2d_strided(y, p["w2"], stride=2, pad=1, scale=s2, shift=b2,
                       relu=True)
    return [y]


def higher_hrnet_forward(images_nchw, params, num_kpts):
    x = jnp.transpose(images_nchw, (0, 2, 3, 1)).astype(jnp.bfloat16)
    high_res = backbone_proxy(x, params["backbone"])[0]
    feats = high_res
    init_heatmaps = conv2d_s1(high_res, params["init_head_w"],
                              pads=((0, 0), (0, 0)),
                              shift=params["init_head_b"], relu=False,
                              out_dtype=jnp.float32)
    out = init_heatmaps
    heatmaps = [init_heatmaps]
    for dp in params["deconv_layers"]:
        deconv_input = jnp.concatenate(
            [feats, out.astype(jnp.bfloat16)], axis=-1)
        feats, out = deconv_heatmaps_head(deconv_input, dp)
        heatmaps.append(out)
    tags_heatmaps = init_heatmaps[..., num_kpts:]
    stages_kpts = [hm[..., :num_kpts] for hm in heatmaps]
    to_nchw = lambda t: jnp.transpose(t, (0, 3, 1, 2)).astype(jnp.float32)
    return [to_nchw(h) for h in stages_kpts], to_nchw(tags_heatmaps)


# ----------------------------------------------------------------------------
# Pure-JAX (XLA) reference with identical bf16 casting points, for validation
# ----------------------------------------------------------------------------
def _conv_ref(x, w, *, stride=1, pads=((0, 0), (0, 0)), scale=None, shift=None,
              relu=False, residual=None, out_dtype=jnp.bfloat16):
    cout = w.shape[-1]
    if scale is None:
        scale = jnp.ones((cout,), jnp.float32)
    if shift is None:
        shift = jnp.zeros((cout,), jnp.float32)
    wf = (w * scale).astype(jnp.bfloat16)
    y = jax.lax.conv_general_dilated(
        x.astype(jnp.bfloat16), wf, window_strides=(stride, stride),
        padding=[tuple(pads[0]), tuple(pads[1])],
        dimension_numbers=("NHWC", "HWIO", "NHWC"),
        preferred_element_type=jnp.float32)
    y = y + shift.reshape(1, 1, 1, cout)
    if residual is not None:
        y = y + residual.astype(jnp.float32)
    if relu:
        y = jnp.maximum(y, 0.0)
    return y.astype(out_dtype)


def _deconv_ref(x, wc, *, scale, shift, relu, out_dtype=jnp.bfloat16):
    cout = wc.shape[-1]
    wf = (wc * scale).astype(jnp.bfloat16)
    y = jax.lax.conv_general_dilated(
        x.astype(jnp.bfloat16), wf, window_strides=(1, 1),
        padding=[(2, 2), (2, 2)], lhs_dilation=(2, 2),
        dimension_numbers=("NHWC", "HWIO", "NHWC"),
        preferred_element_type=jnp.float32)
    y = y + shift.reshape(1, 1, 1, cout)
    if relu:
        y = jnp.maximum(y, 0.0)
    return y.astype(out_dtype)


def _ref_basic_block(x, p):
    s1, b1 = _bn_fold(p["bn1"])
    s2, b2 = _bn_fold(p["bn2"])
    y = _conv_ref(x, p["w1"], pads=((1, 1), (1, 1)), scale=s1, shift=b1,
                  relu=True)
    y = _conv_ref(y, p["w2"], pads=((1, 1), (1, 1)), scale=s2, shift=b2,
                  relu=True, residual=x)
    return y


def higher_hrnet_forward_ref(images_nchw, params, num_kpts):
    x = jnp.transpose(images_nchw, (0, 2, 3, 1)).astype(jnp.bfloat16)
    bp = params["backbone"]
    s1, b1 = _bn_fold(bp["bn1"])
    s2, b2 = _bn_fold(bp["bn2"])
    y = _conv_ref(x, bp["w1"], stride=2, pads=((1, 1), (1, 1)), scale=s1,
                  shift=b1, relu=True)
    high_res = _conv_ref(y, bp["w2"], stride=2, pads=((1, 1), (1, 1)),
                         scale=s2, shift=b2, relu=True)
    feats = high_res
    init_heatmaps = _conv_ref(high_res, params["init_head_w"],
                              shift=params["init_head_b"], relu=False,
                              out_dtype=jnp.float32)
    out = init_heatmaps
    heatmaps = [init_heatmaps]
    for dp in params["deconv_layers"]:
        dinp = jnp.concatenate([feats, out.astype(jnp.bfloat16)], axis=-1)
        s, b = _bn_fold(dp["deconv_bn"])
        wc = _deconv_torch_to_conv(dp["deconv_w_torch"])
        f = _deconv_ref(dinp, wc, scale=s, shift=b, relu=True)
        for blk in dp["blocks"]:
            f = _ref_basic_block(f, blk)
        hm = _conv_ref(f, dp["final_w"], shift=dp["final_b"], relu=False,
                       out_dtype=jnp.float32)
        feats, out = f, hm
        heatmaps.append(hm)
    tags = init_heatmaps[..., num_kpts:]
    stages = [hm[..., :num_kpts] for hm in heatmaps]
    to_nchw = lambda t: jnp.transpose(t, (0, 3, 1, 2)).astype(jnp.float32)
    return [to_nchw(h) for h in stages], to_nchw(tags)


# ----------------------------------------------------------------------------
# Deterministic synthetic parameters (no checkpoint)
# ----------------------------------------------------------------------------
def init_params(key, num_kpts, C, num_resid_blocks=4):
    keys = iter(jax.random.split(key, 256))

    def w(shape, scl=0.1):
        return scl * jax.random.normal(next(keys), shape, jnp.float32)

    def bn(c):
        return dict(
            gamma=1.0 + 0.1 * jax.random.normal(next(keys), (c,), jnp.float32),
            beta=0.1 * jax.random.normal(next(keys), (c,), jnp.float32),
            mean=0.1 * jax.random.normal(next(keys), (c,), jnp.float32),
            var=jnp.ones((c,), jnp.float32))

    backbone = dict(w1=w((3, 3, 3, C)), bn1=bn(C),
                    w2=w((3, 3, C, C)), bn2=bn(C))
    init_head_w = w((1, 1, C, 2 * num_kpts))
    init_head_b = w((2 * num_kpts,))

    deconv_channels = [C + num_kpts * 2, C]
    deconv_layers = []
    for i in range(len(deconv_channels) - 1):
        in_c, out_c = deconv_channels[i], deconv_channels[i + 1]
        blocks = [dict(w1=w((3, 3, out_c, out_c)), bn1=bn(out_c),
                       w2=w((3, 3, out_c, out_c)), bn2=bn(out_c))
                  for _ in range(num_resid_blocks)]
        deconv_layers.append(dict(
            # Stored in the PyTorch ConvTranspose2d layout (Cin, Cout, 4, 4);
            # converted explicitly by _deconv_torch_to_conv in the forward.
            deconv_w_torch=w((in_c, out_c, 4, 4)),
            deconv_bn=bn(out_c),
            blocks=blocks,
            final_w=w((1, 1, out_c, num_kpts)),
            final_b=w((num_kpts,)),
        ))
    return dict(backbone=backbone, init_head_w=init_head_w,
                init_head_b=init_head_b, deconv_layers=deconv_layers)


# ----------------------------------------------------------------------------
if __name__ == "__main__":
    num_kpts, C = 4, 16
    key = jax.random.PRNGKey(0)
    k_img, k_par = jax.random.split(key)

    # PyTorch-style NCHW images
    images = jax.random.normal(k_img, (2, 3, 32, 32), jnp.float32)
    params = init_params(k_par, num_kpts, C)

    fwd = jax.jit(functools.partial(higher_hrnet_forward, num_kpts=num_kpts))
    stages_kpts_heatmaps, tags_heatmaps = fwd(images, params)
    jax.block_until_ready((stages_kpts_heatmaps, tags_heatmaps))

    assert stages_kpts_heatmaps[0].shape == (2, num_kpts, 8, 8)
    assert stages_kpts_heatmaps[1].shape == (2, num_kpts, 16, 16)
    assert tags_heatmaps.shape == (2, num_kpts, 8, 8)

    # Validate the Pallas path against a pure-JAX/XLA reference that uses the
    # same bf16 casting points (differences are only accumulation order).
    ref_fwd = jax.jit(
        functools.partial(higher_hrnet_forward_ref, num_kpts=num_kpts))
    ref_stages, ref_tags = ref_fwd(images, params)
    jax.block_until_ready((ref_stages, ref_tags))

    pairs = list(zip(stages_kpts_heatmaps, ref_stages)) + [(tags_heatmaps,
                                                            ref_tags)]
    for got, ref in pairs:
        a = np.asarray(got, np.float32)
        b = np.asarray(ref, np.float32)
        assert np.isfinite(a).all()
        tol = 5e-2 * max(1.0, float(np.abs(b).max()))
        err = float(np.abs(a - b).max())
        assert err <= tol, f"mismatch vs reference: {err} > {tol}"

    print("KERNEL_OK")
</pallas_src>

<mosaic_0001>
module attributes {stable_mosaic.version = 11 : i64} {
  func.func @_conv_tap_kernel(%arg0: i32, %arg1: memref<1x296x12xbf16, #tpu.memory_space<vmem>>, %arg2: memref<4x12x16xbf16, #tpu.memory_space<vmem>>, %arg3: memref<1x16xf32, #tpu.memory_space<vmem>>, %arg4: memref<1x272x16xbf16, #tpu.memory_space<vmem>>) attributes {dimension_semantics = [#tpu.dimension_semantics<parallel>], iteration_bounds = array<i64: 2>, scalar_prefetch = 0 : i64, scratch_operands = 0 : i64, tpu.core_type = #tpu.core_type<tc>, window_params = [{transform_indices = @transform_0, window_bounds = array<i64: 1, 296, 12>}, {pipeline_mode = #tpu.pipeline_mode<synchronous>, transform_indices = @transform_1, window_bounds = array<i64: 4, 12, 16>}, {pipeline_mode = #tpu.pipeline_mode<synchronous>, transform_indices = @transform_2, window_bounds = array<i64: 1, 16>}, {transform_indices = @transform_3, window_bounds = array<i64: 1, 272, 16>}]} {
    %cst = arith.constant 0.000000e+00 : f32
    %0 = vector.broadcast %cst : f32 to vector<272x16xf32>
    %c0 = arith.constant 0 : index
    %c0_0 = arith.constant 0 : index
    %c0_1 = arith.constant 0 : index
    %1 = vector.load %arg1[%c0, %c0_0, %c0_1] : memref<1x296x12xbf16, #tpu.memory_space<vmem>>, vector<1x272x12xbf16>
    %2 = vector.shape_cast %1 : vector<1x272x12xbf16> to vector<272x12xbf16>
    %c0_2 = arith.constant 0 : index
    %c0_3 = arith.constant 0 : index
    %c0_4 = arith.constant 0 : index
    %3 = vector.load %arg2[%c0_2, %c0_3, %c0_4] : memref<4x12x16xbf16, #tpu.memory_space<vmem>>, vector<1x12x16xbf16>
    %4 = vector.shape_cast %3 : vector<1x12x16xbf16> to vector<12x16xbf16>
    %cst_5 = arith.constant dense<0.000000e+00> : vector<272x16xf32>
    %5 = tpu.matmul %2, %4, %cst_5 {dimension_numbers = #tpu.dot_dimension_numbers<[1], [0], [0], [1], [0, 0, 1, 1], [], []>} : vector<272x12xbf16>, vector<12x16xbf16>, vector<272x16xf32> -> vector<272x16xf32>
    %6 = arith.addf %0, %5 : vector<272x16xf32>
    %c0_6 = arith.constant 0 : index
    %c1 = arith.constant 1 : index
    %c0_7 = arith.constant 0 : index
    %7 = vector.load %arg1[%c0_6, %c1, %c0_7] : memref<1x296x12xbf16, #tpu.memory_space<vmem>>, vector<1x272x12xbf16>
    %8 = vector.shape_cast %7 : vector<1x272x12xbf16> to vector<272x12xbf16>
    %c1_8 = arith.constant 1 : index
    %c0_9 = arith.constant 0 : index
    %c0_10 = arith.constant 0 : index
    %9 = vector.load %arg2[%c1_8, %c0_9, %c0_10] : memref<4x12x16xbf16, #tpu.memory_space<vmem>>, vector<1x12x16xbf16>
    %10 = vector.shape_cast %9 : vector<1x12x16xbf16> to vector<12x16xbf16>
    %cst_11 = arith.constant dense<0.000000e+00> : vector<272x16xf32>
    %11 = tpu.matmul %8, %10, %cst_11 {dimension_numbers = #tpu.dot_dimension_numbers<[1], [0], [0], [1], [0, 0, 1, 1], [], []>} : vector<272x12xbf16>, vector<12x16xbf16>, vector<272x16xf32> -> vector<272x16xf32>
    %12 = arith.addf %6, %11 : vector<272x16xf32>
    %c0_12 = arith.constant 0 : index
    %c17 = arith.constant 17 : index
    %c0_13 = arith.constant 0 : index
    %13 = vector.load %arg1[%c0_12, %c17, %c0_13] : memref<1x296x12xbf16, #tpu.memory_space<vmem>>, vector<1x272x12xbf16>
    %14 = vector.shape_cast %13 : vector<1x272x12xbf16> to vector<272x12xbf16>
    %c2 = arith.constant 2 : index
    %c0_14 = arith.constant 0 : index
    %c0_15 = arith.constant 0 : index
    %15 = vector.load %arg2[%c2, %c0_14, %c0_15] : memref<4x12x16xbf16, #tpu.memory_space<vmem>>, vector<1x12x16xbf16>
    %16 = vector.shape_cast %15 : vector<1x12x16xbf16> to vector<12x16xbf16>
    %cst_16 = arith.constant dense<0.000000e+00> : vector<272x16xf32>
    %17 = tpu.matmul %14, %16, %cst_16 {dimension_numbers = #tpu.dot_dimension_numbers<[1], [0], [0], [1], [0, 0, 1, 1], [], []>} : vector<272x12xbf16>, vector<12x16xbf16>, vector<272x16xf32> -> vector<272x16xf32>
    %18 = arith.addf %12, %17 : vector<272x16xf32>
    %c0_17 = arith.constant 0 : index
    %c18 = arith.constant 18 : index
    %c0_18 = arith.constant 0 : index
    %19 = vector.load %arg1[%c0_17, %c18, %c0_18] : memref<1x296x12xbf16, #tpu.memory_space<vmem>>, vector<1x272x12xbf16>
    %20 = vector.shape_cast %19 : vector<1x272x12xbf16> to vector<272x12xbf16>
    %c3 = arith.constant 3 : index
    %c0_19 = arith.constant 0 : index
    %c0_20 = arith.constant 0 : index
    %21 = vector.load %arg2[%c3, %c0_19, %c0_20] : memref<4x12x16xbf16, #tpu.memory_space<vmem>>, vector<1x12x16xbf16>
    %22 = vector.shape_cast %21 : vector<1x12x16xbf16> to vector<12x16xbf16>
    %cst_21 = arith.constant dense<0.000000e+00> : vector<272x16xf32>
    %23 = tpu.matmul %20, %22, %cst_21 {dimension_numbers = #tpu.dot_dimension_numbers<[1], [0], [0], [1], [0, 0, 1, 1], [], []>} : vector<272x12xbf16>, vector<12x16xbf16>, vector<272x16xf32> -> vector<272x16xf32>
    %24 = arith.addf %18, %23 : vector<272x16xf32>
    %c0_22 = arith.constant 0 : index
    %c0_23 = arith.constant 0 : index
    %25 = vector.load %arg3[%c0_22, %c0_23] : memref<1x16xf32, #tpu.memory_space<vmem>>, vector<1x16xf32>
    %26 = vector.broadcast %25 : vector<1x16xf32> to vector<272x16xf32>
    %27 = arith.addf %24, %26 : vector<272x16xf32>
    %cst_24 = arith.constant 0.000000e+00 : f32
    %28 = vector.broadcast %cst_24 : f32 to vector<272x16xf32>
    %29 = arith.maximumf %27, %28 : vector<272x16xf32>
    %30 = arith.truncf %29 : vector<272x16xf32> to vector<272x16xbf16>
    %c0_25 = arith.constant 0 : index
    %c0_26 = arith.constant 0 : index
    %c0_27 = arith.constant 0 : index
    %31 = vector.load %arg4[%c0_25, %c0_26, %c0_27] : memref<1x272x16xbf16, #tpu.memory_space<vmem>>, vector<1x272x16xbf16>
    %32 = vector.shape_cast %31 : vector<1x272x16xbf16> to vector<272x16xbf16>
    %33 = vector.shape_cast %30 : vector<272x16xbf16> to vector<1x272x16xbf16>
    tpu.vector_store %arg4[%c0_25, %c0_26, %c0_27], %33 {strides = array<i32>} : memref<1x272x16xbf16, #tpu.memory_space<vmem>>, vector<1x272x16xbf16>,
    return
  }
  func.func @transform_0(%arg0: i32) -> (i32, i32, i32) {
    %c0_i32 = arith.constant 0 : i32
    %c0_i32_0 = arith.constant 0 : i32
    %c0_i32_1 = arith.constant 0 : i32
    return %arg0, %c0_i32, %c0_i32_0 : i32, i32, i32
  }
  func.func @transform_1(%arg0: i32) -> (i32, i32, i32) {
    %c0_i32 = arith.constant 0 : i32
    %c0_i32_0 = arith.constant 0 : i32
    %c0_i32_1 = arith.constant 0 : i32
    %c0_i32_2 = arith.constant 0 : i32
    return %c0_i32, %c0_i32_0, %c0_i32_1 : i32, i32, i32
  }
  func.func @transform_2(%arg0: i32) -> (i32, i32) {
    %c0_i32 = arith.constant 0 : i32
    %c0_i32_0 = arith.constant 0 : i32
    %c0_i32_1 = arith.constant 0 : i32
    return %c0_i32, %c0_i32_0 : i32, i32
  }
  func.func @transform_3(%arg0: i32) -> (i32, i32, i32) {
    %c0_i32 = arith.constant 0 : i32
    %c0_i32_0 = arith.constant 0 : i32
    %c0_i32_1 = arith.constant 0 : i32
    return %arg0, %c0_i32, %c0_i32_0 : i32, i32, i32
  }
}

module attributes {stable_mosaic.version = 11 : i64} {
  func.func @_conv_tap_kernel(%arg0: i32, %arg1: memref<1x88x64xbf16, #tpu.memory_space<vmem>>, %arg2: memref<4x64x16xbf16, #tpu.memory_space<vmem>>, %arg3: memref<1x16xf32, #tpu.memory_space<vmem>>, %arg4: memref<1x72x16xbf16, #tpu.memory_space<vmem>>) attributes {dimension_semantics = [#tpu.dimension_semantics<parallel>], iteration_bounds = array<i64: 2>, scalar_prefetch = 0 : i64, scratch_operands = 0 : i64, tpu.core_type = #tpu.core_type<tc>, window_params = [{transform_indices = @transform_0, window_bounds = array<i64: 1, 88, 64>}, {pipeline_mode = #tpu.pipeline_mode<synchronous>, transform_indices = @transform_1, window_bounds = array<i64: 4, 64, 16>}, {pipeline_mode = #tpu.pipeline_mode<synchronous>, transform_indices = @transform_2, window_bounds = array<i64: 1, 16>}, {transform_indices = @transform_3, window_bounds = array<i64: 1, 72, 16>}]} {
    %cst = arith.constant 0.000000e+00 : f32
    %0 = vector.broadcast %cst : f32 to vector<72x16xf32>
    %c0 = arith.constant 0 : index
    %c0_0 = arith.constant 0 : index
    %c0_1 = arith.constant 0 : index
    %1 = vector.load %arg1[%c0, %c0_0, %c0_1] : memref<1x88x64xbf16, #tpu.memory_space<vmem>>, vector<1x72x64xbf16>
    %2 = vector.shape_cast %1 : vector<1x72x64xbf16> to vector<72x64xbf16>
    %c0_2 = arith.constant 0 : index
    %c0_3 = arith.constant 0 : index
    %c0_4 = arith.constant 0 : index
    %3 = vector.load %arg2[%c0_2, %c0_3, %c0_4] : memref<4x64x16xbf16, #tpu.memory_space<vmem>>, vector<1x64x16xbf16>
    %4 = vector.shape_cast %3 : vector<1x64x16xbf16> to vector<64x16xbf16>
    %cst_5 = arith.constant dense<0.000000e+00> : vector<72x16xf32>
    %5 = tpu.matmul %2, %4, %cst_5 {dimension_numbers = #tpu.dot_dimension_numbers<[1], [0], [0], [1], [0, 0, 1, 1], [], []>} : vector<72x64xbf16>, vector<64x16xbf16>, vector<72x16xf32> -> vector<72x16xf32>
    %6 = arith.addf %0, %5 : vector<72x16xf32>
    %c0_6 = arith.constant 0 : index
    %c1 = arith.constant 1 : index
    %c0_7 = arith.constant 0 : index
    %7 = vector.load %arg1[%c0_6, %c1, %c0_7] : memref<1x88x64xbf16, #tpu.memory_space<vmem>>, vector<1x72x64xbf16>
    %8 = vector.shape_cast %7 : vector<1x72x64xbf16> to vector<72x64xbf16>
    %c1_8 = arith.constant 1 : index
    %c0_9 = arith.constant 0 : index
    %c0_10 = arith.constant 0 : index
    %9 = vector.load %arg2[%c1_8, %c0_9, %c0_10] : memref<4x64x16xbf16, #tpu.memory_space<vmem>>, vector<1x64x16xbf16>
    %10 = vector.shape_cast %9 : vector<1x64x16xbf16> to vector<64x16xbf16>
    %cst_11 = arith.constant dense<0.000000e+00> : vector<72x16xf32>
    %11 = tpu.matmul %8, %10, %cst_11 {dimension_numbers = #tpu.dot_dimension_numbers<[1], [0], [0], [1], [0, 0, 1, 1], [], []>} : vector<72x64xbf16>, vector<64x16xbf16>, vector<72x16xf32> -> vector<72x16xf32>
    %12 = arith.addf %6, %11 : vector<72x16xf32>
    %c0_12 = arith.constant 0 : index
    %c9 = arith.constant 9 : index
    %c0_13 = arith.constant 0 : index
    %13 = vector.load %arg1[%c0_12, %c9, %c0_13] : memref<1x88x64xbf16, #tpu.memory_space<vmem>>, vector<1x72x64xbf16>
    %14 = vector.shape_cast %13 : vector<1x72x64xbf16> to vector<72x64xbf16>
    %c2 = arith.constant 2 : index
    %c0_14 = arith.constant 0 : index
    %c0_15 = arith.constant 0 : index
    %15 = vector.load %arg2[%c2, %c0_14, %c0_15] : memref<4x64x16xbf16, #tpu.memory_space<vmem>>, vector<1x64x16xbf16>
    %16 = vector.shape_cast %15 : vector<1x64x16xbf16> to vector<64x16xbf16>
    %cst_16 = arith.constant dense<0.000000e+00> : vector<72x16xf32>
    %17 = tpu.matmul %14, %16, %cst_16 {dimension_numbers = #tpu.dot_dimension_numbers<[1], [0], [0], [1], [0, 0, 1, 1], [], []>} : vector<72x64xbf16>, vector<64x16xbf16>, vector<72x16xf32> -> vector<72x16xf32>
    %18 = arith.addf %12, %17 : vector<72x16xf32>
    %c0_17 = arith.constant 0 : index
    %c10 = arith.constant 10 : index
    %c0_18 = arith.constant 0 : index
    %19 = vector.load %arg1[%c0_17, %c10, %c0_18] : memref<1x88x64xbf16, #tpu.memory_space<vmem>>, vector<1x72x64xbf16>
    %20 = vector.shape_cast %19 : vector<1x72x64xbf16> to vector<72x64xbf16>
    %c3 = arith.constant 3 : index
    %c0_19 = arith.constant 0 : index
    %c0_20 = arith.constant 0 : index
    %21 = vector.load %arg2[%c3, %c0_19, %c0_20] : memref<4x64x16xbf16, #tpu.memory_space<vmem>>, vector<1x64x16xbf16>
    %22 = vector.shape_cast %21 : vector<1x64x16xbf16> to vector<64x16xbf16>
    %cst_21 = arith.constant dense<0.000000e+00> : vector<72x16xf32>
    %23 = tpu.matmul %20, %22, %cst_21 {dimension_numbers = #tpu.dot_dimension_numbers<[1], [0], [0], [1], [0, 0, 1, 1], [], []>} : vector<72x64xbf16>, vector<64x16xbf16>, vector<72x16xf32> -> vector<72x16xf32>
    %24 = arith.addf %18, %23 : vector<72x16xf32>
    %c0_22 = arith.constant 0 : index
    %c0_23 = arith.constant 0 : index
    %25 = vector.load %arg3[%c0_22, %c0_23] : memref<1x16xf32, #tpu.memory_space<vmem>>, vector<1x16xf32>
    %26 = vector.broadcast %25 : vector<1x16xf32> to vector<72x16xf32>
    %27 = arith.addf %24, %26 : vector<72x16xf32>
    %cst_24 = arith.constant 0.000000e+00 : f32
    %28 = vector.broadcast %cst_24 : f32 to vector<72x16xf32>
    %29 = arith.maximumf %27, %28 : vector<72x16xf32>
    %30 = arith.truncf %29 : vector<72x16xf32> to vector<72x16xbf16>
    %c0_25 = arith.constant 0 : index
    %c0_26 = arith.constant 0 : index
    %c0_27 = arith.constant 0 : index
    %31 = vector.load %arg4[%c0_25, %c0_26, %c0_27] : memref<1x72x16xbf16, #tpu.memory_space<vmem>>, vector<1x72x16xbf16>
    %32 = vector.shape_cast %31 : vector<1x72x16xbf16> to vector<72x16xbf16>
    %33 = vector.shape_cast %30 : vector<72x16xbf16> to vector<1x72x16xbf16>
    tpu.vector_store %arg4[%c0_25, %c0_26, %c0_27], %33 {strides = array<i32>} : memref<1x72x16xbf16, #tpu.memory_space<vmem>>, vector<1x72x16xbf16>,
    return
  }
  func.func @transform_0(%arg0: i32) -> (i32, i32, i32) {
    %c0_i32 = arith.constant 0 : i32
    %c0_i32_0 = arith.constant 0 : i32
    %c0_i32_1 = arith.constant 0 : i32
    return %arg0, %c0_i32, %c0_i32_0 : i32, i32, i32
  }
  func.func @transform_1(%arg0: i32) -> (i32, i32, i32) {
    %c0_i32 = arith.constant 0 : i32
    %c0_i32_0 = arith.constant 0 : i32
    %c0_i32_1 = arith.constant 0 : i32
    %c0_i32_2 = arith.constant 0 : i32
    return %c0_i32, %c0_i32_0, %c0_i32_1 : i32, i32, i32
  }
  func.func @transform_2(%arg0: i32) -> (i32, i32) {
    %c0_i32 = arith.constant 0 : i32
    %c0_i32_0 = arith.constant 0 : i32
    %c0_i32_1 = arith.constant 0 : i32
    return %c0_i32, %c0_i32_0 : i32, i32
  }
  func.func @transform_3(%arg0: i32) -> (i32, i32, i32) {
    %c0_i32 = arith.constant 0 : i32
    %c0_i32_0 = arith.constant 0 : i32
    %c0_i32_1 = arith.constant 0 : i32
    return %arg0, %c0_i32, %c0_i32_0 : i32, i32, i32
  }
}

module attributes {stable_mosaic.version = 11 : i64} {
  func.func @_conv_tap_kernel(%arg0: i32, %arg1: memref<1x64x16xbf16, #tpu.memory_space<vmem>>, %arg2: memref<1x16x8xbf16, #tpu.memory_space<vmem>>, %arg3: memref<1x8xf32, #tpu.memory_space<vmem>>, %arg4: memref<1x64x8xf32, #tpu.memory_space<vmem>>) attributes {dimension_semantics = [#tpu.dimension_semantics<parallel>], iteration_bounds = array<i64: 2>, scalar_prefetch = 0 : i64, scratch_operands = 0 : i64, tpu.core_type = #tpu.core_type<tc>, window_params = [{transform_indices = @transform_0, window_bounds = array<i64: 1, 64, 16>}, {pipeline_mode = #tpu.pipeline_mode<synchronous>, transform_indices = @transform_1, window_bounds = array<i64: 1, 16, 8>}, {pipeline_mode = #tpu.pipeline_mode<synchronous>, transform_indices = @transform_2, window_bounds = array<i64: 1, 8>}, {transform_indices = @transform_3, window_bounds = array<i64: 1, 64, 8>}]} {
    %cst = arith.constant 0.000000e+00 : f32
    %0 = vector.broadcast %cst : f32 to vector<64x8xf32>
    %c0 = arith.constant 0 : index
    %c0_0 = arith.constant 0 : index
    %c0_1 = arith.constant 0 : index
    %1 = vector.load %arg1[%c0, %c0_0, %c0_1] : memref<1x64x16xbf16, #tpu.memory_space<vmem>>, vector<1x64x16xbf16>
    %2 = vector.shape_cast %1 : vector<1x64x16xbf16> to vector<64x16xbf16>
    %c0_2 = arith.constant 0 : index
    %c0_3 = arith.constant 0 : index
    %c0_4 = arith.constant 0 : index
    %3 = vector.load %arg2[%c0_2, %c0_3, %c0_4] : memref<1x16x8xbf16, #tpu.memory_space<vmem>>, vector<1x16x8xbf16>
    %4 = vector.shape_cast %3 : vector<1x16x8xbf16> to vector<16x8xbf16>
    %cst_5 = arith.constant dense<0.000000e+00> : vector<64x8xf32>
    %5 = tpu.matmul %2, %4, %cst_5 {dimension_numbers = #tpu.dot_dimension_numbers<[1], [0], [0], [1], [0, 0, 1, 1], [], []>} : vector<64x16xbf16>, vector<16x8xbf16>, vector<64x8xf32> -> vector<64x8xf32>
    %6 = arith.addf %0, %5 : vector<64x8xf32>
    %c0_6 = arith.constant 0 : index
    %c0_7 = arith.constant 0 : index
    %7 = vector.load %arg3[%c0_6, %c0_7] : memref<1x8xf32, #tpu.memory_space<vmem>>, vector<1x8xf32>
    %8 = vector.broadcast %7 : vector<1x8xf32> to vector<64x8xf32>
    %9 = arith.addf %6, %8 : vector<64x8xf32>
    %c0_8 = arith.constant 0 : index
    %c0_9 = arith.constant 0 : index
    %c0_10 = arith.constant 0 : index
    %10 = vector.load %arg4[%c0_8, %c0_9, %c0_10] : memref<1x64x8xf32, #tpu.memory_space<vmem>>, vector<1x64x8xf32>
    %11 = vector.shape_cast %10 : vector<1x64x8xf32> to vector<64x8xf32>
    %12 = vector.shape_cast %9 : vector<64x8xf32> to vector<1x64x8xf32>
    tpu.vector_store %arg4[%c0_8, %c0_9, %c0_10], %12 {strides = array<i32>} : memref<1x64x8xf32, #tpu.memory_space<vmem>>, vector<1x64x8xf32>,
    return
  }
  func.func @transform_0(%arg0: i32) -> (i32, i32, i32) {
    %c0_i32 = arith.constant 0 : i32
    %c0_i32_0 = arith.constant 0 : i32
    %c0_i32_1 = arith.constant 0 : i32
    return %arg0, %c0_i32, %c0_i32_0 : i32, i32, i32
  }
  func.func @transform_1(%arg0: i32) -> (i32, i32, i32) {
    %c0_i32 = arith.constant 0 : i32
    %c0_i32_0 = arith.constant 0 : i32
    %c0_i32_1 = arith.constant 0 : i32
    %c0_i32_2 = arith.constant 0 : i32
    return %c0_i32, %c0_i32_0, %c0_i32_1 : i32, i32, i32
  }
  func.func @transform_2(%arg0: i32) -> (i32, i32) {
    %c0_i32 = arith.constant 0 : i32
    %c0_i32_0 = arith.constant 0 : i32
    %c0_i32_1 = arith.constant 0 : i32
    return %c0_i32, %c0_i32_0 : i32, i32
  }
  func.func @transform_3(%arg0: i32) -> (i32, i32, i32) {
    %c0_i32 = arith.constant 0 : i32
    %c0_i32_0 = arith.constant 0 : i32
    %c0_i32_1 = arith.constant 0 : i32
    return %arg0, %c0_i32, %c0_i32_0 : i32, i32, i32
  }
}

module attributes {stable_mosaic.version = 11 : i64} {
  func.func @_conv_tap_kernel(%arg0: i32, %arg1: memref<1x88x24xbf16, #tpu.memory_space<vmem>>, %arg2: memref<4x24x16xbf16, #tpu.memory_space<vmem>>, %arg3: memref<1x16xf32, #tpu.memory_space<vmem>>, %arg4: memref<1x72x16xbf16, #tpu.memory_space<vmem>>) attributes {dimension_semantics = [#tpu.dimension_semantics<parallel>], iteration_bounds = array<i64: 2>, scalar_prefetch = 0 : i64, scratch_operands = 0 : i64, tpu.core_type = #tpu.core_type<tc>, window_params = [{transform_indices = @transform_0, window_bounds = array<i64: 1, 88, 24>}, {pipeline_mode = #tpu.pipeline_mode<synchronous>, transform_indices = @transform_1, window_bounds = array<i64: 4, 24, 16>}, {pipeline_mode = #tpu.pipeline_mode<synchronous>, transform_indices = @transform_2, window_bounds = array<i64: 1, 16>}, {transform_indices = @transform_3, window_bounds = array<i64: 1, 72, 16>}]} {
    %cst = arith.constant 0.000000e+00 : f32
    %0 = vector.broadcast %cst : f32 to vector<72x16xf32>
    %c0 = arith.constant 0 : index
    %c0_0 = arith.constant 0 : index
    %c0_1 = arith.constant 0 : index
    %1 = vector.load %arg1[%c0, %c0_0, %c0_1] : memref<1x88x24xbf16, #tpu.memory_space<vmem>>, vector<1x72x24xbf16>
    %2 = vector.shape_cast %1 : vector<1x72x24xbf16> to vector<72x24xbf16>
    %c0_2 = arith.constant 0 : index
    %c0_3 = arith.constant 0 : index
    %c0_4 = arith.constant 0 : index
    %3 = vector.load %arg2[%c0_2, %c0_3, %c0_4] : memref<4x24x16xbf16, #tpu.memory_space<vmem>>, vector<1x24x16xbf16>
    %4 = vector.shape_cast %3 : vector<1x24x16xbf16> to vector<24x16xbf16>
    %cst_5 = arith.constant dense<0.000000e+00> : vector<72x16xf32>
    %5 = tpu.matmul %2, %4, %cst_5 {dimension_numbers = #tpu.dot_dimension_numbers<[1], [0], [0], [1], [0, 0, 1, 1], [], []>} : vector<72x24xbf16>, vector<24x16xbf16>, vector<72x16xf32> -> vector<72x16xf32>
    %6 = arith.addf %0, %5 : vector<72x16xf32>
    %c0_6 = arith.constant 0 : index
    %c1 = arith.constant 1 : index
    %c0_7 = arith.constant 0 : index
    %7 = vector.load %arg1[%c0_6, %c1, %c0_7] : memref<1x88x24xbf16, #tpu.memory_space<vmem>>, vector<1x72x24xbf16>
    %8 = vector.shape_cast %7 : vector<1x72x24xbf16> to vector<72x24xbf16>
    %c1_8 = arith.constant 1 : index
    %c0_9 = arith.constant 0 : index
    %c0_10 = arith.constant 0 : index
    %9 = vector.load %arg2[%c1_8, %c0_9, %c0_10] : memref<4x24x16xbf16, #tpu.memory_space<vmem>>, vector<1x24x16xbf16>
    %10 = vector.shape_cast %9 : vector<1x24x16xbf16> to vector<24x16xbf16>
    %cst_11 = arith.constant dense<0.000000e+00> : vector<72x16xf32>
    %11 = tpu.matmul %8, %10, %cst_11 {dimension_numbers = #tpu.dot_dimension_numbers<[1], [0], [0], [1], [0, 0, 1, 1], [], []>} : vector<72x24xbf16>, vector<24x16xbf16>, vector<72x16xf32> -> vector<72x16xf32>
    %12 = arith.addf %6, %11 : vector<72x16xf32>
    %c0_12 = arith.constant 0 : index
    %c9 = arith.constant 9 : index
    %c0_13 = arith.constant 0 : index
    %13 = vector.load %arg1[%c0_12, %c9, %c0_13] : memref<1x88x24xbf16, #tpu.memory_space<vmem>>, vector<1x72x24xbf16>
    %14 = vector.shape_cast %13 : vector<1x72x24xbf16> to vector<72x24xbf16>
    %c2 = arith.constant 2 : index
    %c0_14 = arith.constant 0 : index
    %c0_15 = arith.constant 0 : index
    %15 = vector.load %arg2[%c2, %c0_14, %c0_15] : memref<4x24x16xbf16, #tpu.memory_space<vmem>>, vector<1x24x16xbf16>
    %16 = vector.shape_cast %15 : vector<1x24x16xbf16> to vector<24x16xbf16>
    %cst_16 = arith.constant dense<0.000000e+00> : vector<72x16xf32>
    %17 = tpu.matmul %14, %16, %cst_16 {dimension_numbers = #tpu.dot_dimension_numbers<[1], [0], [0], [1], [0, 0, 1, 1], [], []>} : vector<72x24xbf16>, vector<24x16xbf16>, vector<72x16xf32> -> vector<72x16xf32>
    %18 = arith.addf %12, %17 : vector<72x16xf32>
    %c0_17 = arith.constant 0 : index
    %c10 = arith.constant 10 : index
    %c0_18 = arith.constant 0 : index
    %19 = vector.load %arg1[%c0_17, %c10, %c0_18] : memref<1x88x24xbf16, #tpu.memory_space<vmem>>, vector<1x72x24xbf16>
    %20 = vector.shape_cast %19 : vector<1x72x24xbf16> to vector<72x24xbf16>
    %c3 = arith.constant 3 : index
    %c0_19 = arith.constant 0 : index
    %c0_20 = arith.constant 0 : index
    %21 = vector.load %arg2[%c3, %c0_19, %c0_20] : memref<4x24x16xbf16, #tpu.memory_space<vmem>>, vector<1x24x16xbf16>
    %22 = vector.shape_cast %21 : vector<1x24x16xbf16> to vector<24x16xbf16>
    %cst_21 = arith.constant dense<0.000000e+00> : vector<72x16xf32>
    %23 = tpu.matmul %20, %22, %cst_21 {dimension_numbers = #tpu.dot_dimension_numbers<[1], [0], [0], [1], [0, 0, 1, 1], [], []>} : vector<72x24xbf16>, vector<24x16xbf16>, vector<72x16xf32> -> vector<72x16xf32>
    %24 = arith.addf %18, %23 : vector<72x16xf32>
    %c0_22 = arith.constant 0 : index
    %c0_23 = arith.constant 0 : index
    %25 = vector.load %arg3[%c0_22, %c0_23] : memref<1x16xf32, #tpu.memory_space<vmem>>, vector<1x16xf32>
    %26 = vector.broadcast %25 : vector<1x16xf32> to vector<72x16xf32>
    %27 = arith.addf %24, %26 : vector<72x16xf32>
    %cst_24 = arith.constant 0.000000e+00 : f32
    %28 = vector.broadcast %cst_24 : f32 to vector<72x16xf32>
    %29 = arith.maximumf %27, %28 : vector<72x16xf32>
    %30 = arith.truncf %29 : vector<72x16xf32> to vector<72x16xbf16>
    %c0_25 = arith.constant 0 : index
    %c0_26 = arith.constant 0 : index
    %c0_27 = arith.constant 0 : index
    %31 = vector.load %arg4[%c0_25, %c0_26, %c0_27] : memref<1x72x16xbf16, #tpu.memory_space<vmem>>, vector<1x72x16xbf16>
    %32 = vector.shape_cast %31 : vector<1x72x16xbf16> to vector<72x16xbf16>
    %33 = vector.shape_cast %30 : vector<72x16xbf16> to vector<1x72x16xbf16>
    tpu.vector_store %arg4[%c0_25, %c0_26, %c0_27], %33 {strides = array<i32>} : memref<1x72x16xbf16, #tpu.memory_space<vmem>>, vector<1x72x16xbf16>,
    return
  }
  func.func @transform_0(%arg0: i32) -> (i32, i32, i32) {
    %c0_i32 = arith.constant 0 : i32
    %c0_i32_0 = arith.constant 0 : i32
    %c0_i32_1 = arith.constant 0 : i32
    return %arg0, %c0_i32, %c0_i32_0 : i32, i32, i32
  }
  func.func @transform_1(%arg0: i32) -> (i32, i32, i32) {
    %c0_i32 = arith.constant 0 : i32
    %c0_i32_0 = arith.constant 0 : i32
    %c0_i32_1 = arith.constant 0 : i32
    %c0_i32_2 = arith.constant 0 : i32
    return %c0_i32, %c0_i32_0, %c0_i32_1 : i32, i32, i32
  }
  func.func @transform_2(%arg0: i32) -> (i32, i32) {
    %c0_i32 = arith.constant 0 : i32
    %c0_i32_0 = arith.constant 0 : i32
    %c0_i32_1 = arith.constant 0 : i32
    return %c0_i32, %c0_i32_0 : i32, i32
  }
  func.func @transform_3(%arg0: i32) -> (i32, i32, i32) {
    %c0_i32 = arith.constant 0 : i32
    %c0_i32_0 = arith.constant 0 : i32
    %c0_i32_1 = arith.constant 0 : i32
    return %arg0, %c0_i32, %c0_i32_0 : i32, i32, i32
  }
}

module attributes {stable_mosaic.version = 11 : i64} {
  func.func @_conv_tap_kernel(%arg0: i32, %arg1: memref<1x328x16xbf16, #tpu.memory_space<vmem>>, %arg2: memref<9x16x16xbf16, #tpu.memory_space<vmem>>, %arg3: memref<1x16xf32, #tpu.memory_space<vmem>>, %arg4: memref<1x288x16xbf16, #tpu.memory_space<vmem>>) attributes {dimension_semantics = [#tpu.dimension_semantics<parallel>], iteration_bounds = array<i64: 2>, scalar_prefetch = 0 : i64, scratch_operands = 0 : i64, tpu.core_type = #tpu.core_type<tc>, window_params = [{transform_indices = @transform_0, window_bounds = array<i64: 1, 328, 16>}, {pipeline_mode = #tpu.pipeline_mode<synchronous>, transform_indices = @transform_1, window_bounds = array<i64: 9, 16, 16>}, {pipeline_mode = #tpu.pipeline_mode<synchronous>, transform_indices = @transform_2, window_bounds = array<i64: 1, 16>}, {transform_indices = @transform_3, window_bounds = array<i64: 1, 288, 16>}]} {
    %cst = arith.constant 0.000000e+00 : f32
    %0 = vector.broadcast %cst : f32 to vector<288x16xf32>
    %c0 = arith.constant 0 : index
    %c0_0 = arith.constant 0 : index
    %c0_1 = arith.constant 0 : index
    %1 = vector.load %arg1[%c0, %c0_0, %c0_1] : memref<1x328x16xbf16, #tpu.memory_space<vmem>>, vector<1x288x16xbf16>
    %2 = vector.shape_cast %1 : vector<1x288x16xbf16> to vector<288x16xbf16>
    %c0_2 = arith.constant 0 : index
    %c0_3 = arith.constant 0 : index
    %c0_4 = arith.constant 0 : index
    %3 = vector.load %arg2[%c0_2, %c0_3, %c0_4] : memref<9x16x16xbf16, #tpu.memory_space<vmem>>, vector<1x16x16xbf16>
    %4 = vector.shape_cast %3 : vector<1x16x16xbf16> to vector<16x16xbf16>
    %cst_5 = arith.constant dense<0.000000e+00> : vector<288x16xf32>
    %5 = tpu.matmul %2, %4, %cst_5 {dimension_numbers = #tpu.dot_dimension_numbers<[1], [0], [0], [1], [0, 0, 1, 1], [], []>} : vector<288x16xbf16>, vector<16x16xbf16>, vector<288x16xf32> -> vector<288x16xf32>
    %6 = arith.addf %0, %5 : vector<288x16xf32>
    %c0_6 = arith.constant 0 : index
    %c1 = arith.constant 1 : index
    %c0_7 = arith.constant 0 : index
    %7 = vector.load %arg1[%c0_6, %c1, %c0_7] : memref<1x328x16xbf16, #tpu.memory_space<vmem>>, vector<1x288x16xbf16>
    %8 = vector.shape_cast %7 : vector<1x288x16xbf16> to vector<288x16xbf16>
    %c1_8 = arith.constant 1 : index
    %c0_9 = arith.constant 0 : index
    %c0_10 = arith.constant 0 : index
    %9 = vector.load %arg2[%c1_8, %c0_9, %c0_10] : memref<9x16x16xbf16, #tpu.memory_space<vmem>>, vector<1x16x16xbf16>
    %10 = vector.shape_cast %9 : vector<1x16x16xbf16> to vector<16x16xbf16>
    %cst_11 = arith.constant dense<0.000000e+00> : vector<288x16xf32>
    %11 = tpu.matmul %8, %10, %cst_11 {dimension_numbers = #tpu.dot_dimension_numbers<[1], [0], [0], [1], [0, 0, 1, 1], [], []>} : vector<288x16xbf16>, vector<16x16xbf16>, vector<288x16xf32> -> vector<288x16xf32>
    %12 = arith.addf %6, %11 : vector<288x16xf32>
    %c0_12 = arith.constant 0 : index
    %c2 = arith.constant 2 : index
    %c0_13 = arith.constant 0 : index
    %13 = vector.load %arg1[%c0_12, %c2, %c0_13] : memref<1x328x16xbf16, #tpu.memory_space<vmem>>, vector<1x288x16xbf16>
    %14 = vector.shape_cast %13 : vector<1x288x16xbf16> to vector<288x16xbf16>
    %c2_14 = arith.constant 2 : index
    %c0_15 = arith.constant 0 : index
    %c0_16 = arith.constant 0 : index
    %15 = vector.load %arg2[%c2_14, %c0_15, %c0_16] : memref<9x16x16xbf16, #tpu.memory_space<vmem>>, vector<1x16x16xbf16>
    %16 = vector.shape_cast %15 : vector<1x16x16xbf16> to vector<16x16xbf16>
    %cst_17 = arith.constant dense<0.000000e+00> : vector<288x16xf32>
    %17 = tpu.matmul %14, %16, %cst_17 {dimension_numbers = #tpu.dot_dimension_numbers<[1], [0], [0], [1], [0, 0, 1, 1], [], []>} : vector<288x16xbf16>, vector<16x16xbf16>, vector<288x16xf32> -> vector<288x16xf32>
    %18 = arith.addf %12, %17 : vector<288x16xf32>
    %c0_18 = arith.constant 0 : index
    %c18 = arith.constant 18 : index
    %c0_19 = arith.constant 0 : index
    %19 = vector.load %arg1[%c0_18, %c18, %c0_19] : memref<1x328x16xbf16, #tpu.memory_space<vmem>>, vector<1x288x16xbf16>
    %20 = vector.shape_cast %19 : vector<1x288x16xbf16> to vector<288x16xbf16>
    %c3 = arith.constant 3 : index
    %c0_20 = arith.constant 0 : index
    %c0_21 = arith.constant 0 : index
    %21 = vector.load %arg2[%c3, %c0_20, %c0_21] : memref<9x16x16xbf16, #tpu.memory_space<vmem>>, vector<1x16x16xbf16>
    %22 = vector.shape_cast %21 : vector<1x16x16xbf16> to vector<16x16xbf16>
    %cst_22 = arith.constant dense<0.000000e+00> : vector<288x16xf32>
    %23 = tpu.matmul %20, %22, %cst_22 {dimension_numbers = #tpu.dot_dimension_numbers<[1], [0], [0], [1], [0, 0, 1, 1], [], []>} : vector<288x16xbf16>, vector<16x16xbf16>, vector<288x16xf32> -> vector<288x16xf32>
    %24 = arith.addf %18, %23 : vector<288x16xf32>
    %c0_23 = arith.constant 0 : index
    %c19 = arith.constant 19 : index
    %c0_24 = arith.constant 0 : index
    %25 = vector.load %arg1[%c0_23, %c19, %c0_24] : memref<1x328x16xbf16, #tpu.memory_space<vmem>>, vector<1x288x16xbf16>
    %26 = vector.shape_cast %25 : vector<1x288x16xbf16> to vector<288x16xbf16>
    %c4 = arith.constant 4 : index
    %c0_25 = arith.constant 0 : index
    %c0_26 = arith.constant 0 : index
    %27 = vector.load %arg2[%c4, %c0_25, %c0_26] : memref<9x16x16xbf16, #tpu.memory_space<vmem>>, vector<1x16x16xbf16>
    %28 = vector.shape_cast %27 : vector<1x16x16xbf16> to vector<16x16xbf16>
    %cst_27 = arith.constant dense<0.000000e+00> : vector<288x16xf32>
    %29 = tpu.matmul %26, %28, %cst_27 {dimension_numbers = #tpu.dot_dimension_numbers<[1], [0], [0], [1], [0, 0, 1, 1], [], []>} : vector<288x16xbf16>, vector<16x16xbf16>, vector<288x16xf32> -> vector<288x16xf32>
    %30 = arith.addf %24, %29 : vector<288x16xf32>
    %c0_28 = arith.constant 0 : index
    %c20 = arith.constant 20 : index
    %c0_29 = arith.constant 0 : index
    %31 = vector.load %arg1[%c0_28, %c20, %c0_29] : memref<1x328x16xbf16, #tpu.memory_space<vmem>>, vector<1x288x16xbf16>
    %32 = vector.shape_cast %31 : vector<1x288x16xbf16> to vector<288x16xbf16>
    %c5 = arith.constant 5 : index
    %c0_30 = arith.constant 0 : index
    %c0_31 = arith.constant 0 : index
    %33 = vector.load %arg2[%c5, %c0_30, %c0_31] : memref<9x16x16xbf16, #tpu.memory_space<vmem>>, vector<1x16x16xbf16>
    %34 = vector.shape_cast %33 : vector<1x16x16xbf16> to vector<16x16xbf16>
    %cst_32 = arith.constant dense<0.000000e+00> : vector<288x16xf32>
    %35 = tpu.matmul %32, %34, %cst_32 {dimension_numbers = #tpu.dot_dimension_numbers<[1], [0], [0], [1], [0, 0, 1, 1], [], []>} : vector<288x16xbf16>, vector<16x16xbf16>, vector<288x16xf32> -> vector<288x16xf32>
    %36 = arith.addf %30, %35 : vector<288x16xf32>
    %c0_33 = arith.constant 0 : index
    %c36 = arith.constant 36 : index
    %c0_34 = arith.constant 0 : index
    %37 = vector.load %arg1[%c0_33, %c36, %c0_34] : memref<1x328x16xbf16, #tpu.memory_space<vmem>>, vector<1x288x16xbf16>
    %38 = vector.shape_cast %37 : vector<1x288x16xbf16> to vector<288x16xbf16>
    %c6 = arith.constant 6 : index
    %c0_35 = arith.constant 0 : index
    %c0_36 = arith.constant 0 : index
    %39 = vector.load %arg2[%c6, %c0_35, %c0_36] : memref<9x16x16xbf16, #tpu.memory_space<vmem>>, vector<1x16x16xbf16>
    %40 = vector.shape_cast %39 : vector<1x16x16xbf16> to vector<16x16xbf16>
    %cst_37 = arith.constant dense<0.000000e+00> : vector<288x16xf32>
    %41 = tpu.matmul %38, %40, %cst_37 {dimension_numbers = #tpu.dot_dimension_numbers<[1], [0], [0], [1], [0, 0, 1, 1], [], []>} : vector<288x16xbf16>, vector<16x16xbf16>, vector<288x16xf32> -> vector<288x16xf32>
    %42 = arith.addf %36, %41 : vector<288x16xf32>
    %c0_38 = arith.constant 0 : index
    %c37 = arith.constant 37 : index
    %c0_39 = arith.constant 0 : index
    %43 = vector.load %arg1[%c0_38, %c37, %c0_39] : memref<1x328x16xbf16, #tpu.memory_space<vmem>>, vector<1x288x16xbf16>
    %44 = vector.shape_cast %43 : vector<1x288x16xbf16> to vector<288x16xbf16>
    %c7 = arith.constant 7 : index
    %c0_40 = arith.constant 0 : index
    %c0_41 = arith.constant 0 : index
    %45 = vector.load %arg2[%c7, %c0_40, %c0_41] : memref<9x16x16xbf16, #tpu.memory_space<vmem>>, vector<1x16x16xbf16>
    %46 = vector.shape_cast %45 : vector<1x16x16xbf16> to vector<16x16xbf16>
    %cst_42 = arith.constant dense<0.000000e+00> : vector<288x16xf32>
    %47 = tpu.matmul %44, %46, %cst_42 {dimension_numbers = #tpu.dot_dimension_numbers<[1], [0], [0], [1], [0, 0, 1, 1], [], []>} : vector<288x16xbf16>, vector<16x16xbf16>, vector<288x16xf32> -> vector<288x16xf32>
    %48 = arith.addf %42, %47 : vector<288x16xf32>
    %c0_43 = arith.constant 0 : index
    %c38 = arith.constant 38 : index
    %c0_44 = arith.constant 0 : index
    %49 = vector.load %arg1[%c0_43, %c38, %c0_44] : memref<1x328x16xbf16, #tpu.memory_space<vmem>>, vector<1x288x16xbf16>
    %50 = vector.shape_cast %49 : vector<1x288x16xbf16> to vector<288x16xbf16>
    %c8 = arith.constant 8 : index
    %c0_45 = arith.constant 0 : index
    %c0_46 = arith.constant 0 : index
    %51 = vector.load %arg2[%c8, %c0_45, %c0_46] : memref<9x16x16xbf16, #tpu.memory_space<vmem>>, vector<1x16x16xbf16>
    %52 = vector.shape_cast %51 : vector<1x16x16xbf16> to vector<16x16xbf16>
    %cst_47 = arith.constant dense<0.000000e+00> : vector<288x16xf32>
    %53 = tpu.matmul %50, %52, %cst_47 {dimension_numbers = #tpu.dot_dimension_numbers<[1], [0], [0], [1], [0, 0, 1, 1], [], []>} : vector<288x16xbf16>, vector<16x16xbf16>, vector<288x16xf32> -> vector<288x16xf32>
    %54 = arith.addf %48, %53 : vector<288x16xf32>
    %c0_48 = arith.constant 0 : index
    %c0_49 = arith.constant 0 : index
    %55 = vector.load %arg3[%c0_48, %c0_49] : memref<1x16xf32, #tpu.memory_space<vmem>>, vector<1x16xf32>
    %56 = vector.broadcast %55 : vector<1x16xf32> to vector<288x16xf32>
    %57 = arith.addf %54, %56 : vector<288x16xf32>
    %cst_50 = arith.constant 0.000000e+00 : f32
    %58 = vector.broadcast %cst_50 : f32 to vector<288x16xf32>
    %59 = arith.maximumf %57, %58 : vector<288x16xf32>
    %60 = arith.truncf %59 : vector<288x16xf32> to vector<288x16xbf16>
    %c0_51 = arith.constant 0 : index
    %c0_52 = arith.constant 0 : index
    %c0_53 = arith.constant 0 : index
    %61 = vector.load %arg4[%c0_51, %c0_52, %c0_53] : memref<1x288x16xbf16, #tpu.memory_space<vmem>>, vector<1x288x16xbf16>
    %62 = vector.shape_cast %61 : vector<1x288x16xbf16> to vector<288x16xbf16>
    %63 = vector.shape_cast %60 : vector<288x16xbf16> to vector<1x288x16xbf16>
    tpu.vector_store %arg4[%c0_51, %c0_52, %c0_53], %63 {strides = array<i32>} : memref<1x288x16xbf16, #tpu.memory_space<vmem>>, vector<1x288x16xbf16>,
    return
  }
  func.func @transform_0(%arg0: i32) -> (i32, i32, i32) {
    %c0_i32 = arith.constant 0 : i32
    %c0_i32_0 = arith.constant 0 : i32
    %c0_i32_1 = arith.constant 0 : i32
    return %arg0, %c0_i32, %c0_i32_0 : i32, i32, i32
  }
  func.func @transform_1(%arg0: i32) -> (i32, i32, i32) {
    %c0_i32 = arith.constant 0 : i32
    %c0_i32_0 = arith.constant 0 : i32
    %c0_i32_1 = arith.constant 0 : i32
    %c0_i32_2 = arith.constant 0 : i32
    return %c0_i32, %c0_i32_0, %c0_i32_1 : i32, i32, i32
  }
  func.func @transform_2(%arg0: i32) -> (i32, i32) {
    %c0_i32 = arith.constant 0 : i32
    %c0_i32_0 = arith.constant 0 : i32
    %c0_i32_1 = arith.constant 0 : i32
    return %c0_i32, %c0_i32_0 : i32, i32
  }
  func.func @transform_3(%arg0: i32) -> (i32, i32, i32) {
    %c0_i32 = arith.constant 0 : i32
    %c0_i32_0 = arith.constant 0 : i32
    %c0_i32_1 = arith.constant 0 : i32
    return %arg0, %c0_i32, %c0_i32_0 : i32, i32, i32
  }
}

module attributes {stable_mosaic.version = 11 : i64} {
  func.func @_conv_tap_kernel(%arg0: i32, %arg1: memref<1x328x16xbf16, #tpu.memory_space<vmem>>, %arg2: memref<9x16x16xbf16, #tpu.memory_space<vmem>>, %arg3: memref<1x16xf32, #tpu.memory_space<vmem>>, %arg4: memref<1x328x16xbf16, #tpu.memory_space<vmem>>, %arg5: memref<1x288x16xbf16, #tpu.memory_space<vmem>>) attributes {dimension_semantics = [#tpu.dimension_semantics<parallel>], iteration_bounds = array<i64: 2>, scalar_prefetch = 0 : i64, scratch_operands = 0 : i64, tpu.core_type = #tpu.core_type<tc>, window_params = [{transform_indices = @transform_0, window_bounds = array<i64: 1, 328, 16>}, {pipeline_mode = #tpu.pipeline_mode<synchronous>, transform_indices = @transform_1, window_bounds = array<i64: 9, 16, 16>}, {pipeline_mode = #tpu.pipeline_mode<synchronous>, transform_indices = @transform_2, window_bounds = array<i64: 1, 16>}, {transform_indices = @transform_3, window_bounds = array<i64: 1, 328, 16>}, {transform_indices = @transform_4, window_bounds = array<i64: 1, 288, 16>}]} {
    %cst = arith.constant 0.000000e+00 : f32
    %0 = vector.broadcast %cst : f32 to vector<288x16xf32>
    %c0 = arith.constant 0 : index
    %c0_0 = arith.constant 0 : index
    %c0_1 = arith.constant 0 : index
    %1 = vector.load %arg1[%c0, %c0_0, %c0_1] : memref<1x328x16xbf16, #tpu.memory_space<vmem>>, vector<1x288x16xbf16>
    %2 = vector.shape_cast %1 : vector<1x288x16xbf16> to vector<288x16xbf16>
    %c0_2 = arith.constant 0 : index
    %c0_3 = arith.constant 0 : index
    %c0_4 = arith.constant 0 : index
    %3 = vector.load %arg2[%c0_2, %c0_3, %c0_4] : memref<9x16x16xbf16, #tpu.memory_space<vmem>>, vector<1x16x16xbf16>
    %4 = vector.shape_cast %3 : vector<1x16x16xbf16> to vector<16x16xbf16>
    %cst_5 = arith.constant dense<0.000000e+00> : vector<288x16xf32>
    %5 = tpu.matmul %2, %4, %cst_5 {dimension_numbers = #tpu.dot_dimension_numbers<[1], [0], [0], [1], [0, 0, 1, 1], [], []>} : vector<288x16xbf16>, vector<16x16xbf16>, vector<288x16xf32> -> vector<288x16xf32>
    %6 = arith.addf %0, %5 : vector<288x16xf32>
    %c0_6 = arith.constant 0 : index
    %c1 = arith.constant 1 : index
    %c0_7 = arith.constant 0 : index
    %7 = vector.load %arg1[%c0_6, %c1, %c0_7] : memref<1x328x16xbf16, #tpu.memory_space<vmem>>, vector<1x288x16xbf16>
    %8 = vector.shape_cast %7 : vector<1x288x16xbf16> to vector<288x16xbf16>
    %c1_8 = arith.constant 1 : index
    %c0_9 = arith.constant 0 : index
    %c0_10 = arith.constant 0 : index
    %9 = vector.load %arg2[%c1_8, %c0_9, %c0_10] : memref<9x16x16xbf16, #tpu.memory_space<vmem>>, vector<1x16x16xbf16>
    %10 = vector.shape_cast %9 : vector<1x16x16xbf16> to vector<16x16xbf16>
    %cst_11 = arith.constant dense<0.000000e+00> : vector<288x16xf32>
    %11 = tpu.matmul %8, %10, %cst_11 {dimension_numbers = #tpu.dot_dimension_numbers<[1], [0], [0], [1], [0, 0, 1, 1], [], []>} : vector<288x16xbf16>, vector<16x16xbf16>, vector<288x16xf32> -> vector<288x16xf32>
    %12 = arith.addf %6, %11 : vector<288x16xf32>
    %c0_12 = arith.constant 0 : index
    %c2 = arith.constant 2 : index
    %c0_13 = arith.constant 0 : index
    %13 = vector.load %arg1[%c0_12, %c2, %c0_13] : memref<1x328x16xbf16, #tpu.memory_space<vmem>>, vector<1x288x16xbf16>
    %14 = vector.shape_cast %13 : vector<1x288x16xbf16> to vector<288x16xbf16>
    %c2_14 = arith.constant 2 : index
    %c0_15 = arith.constant 0 : index
    %c0_16 = arith.constant 0 : index
    %15 = vector.load %arg2[%c2_14, %c0_15, %c0_16] : memref<9x16x16xbf16, #tpu.memory_space<vmem>>, vector<1x16x16xbf16>
    %16 = vector.shape_cast %15 : vector<1x16x16xbf16> to vector<16x16xbf16>
    %cst_17 = arith.constant dense<0.000000e+00> : vector<288x16xf32>
    %17 = tpu.matmul %14, %16, %cst_17 {dimension_numbers = #tpu.dot_dimension_numbers<[1], [0], [0], [1], [0, 0, 1, 1], [], []>} : vector<288x16xbf16>, vector<16x16xbf16>, vector<288x16xf32> -> vector<288x16xf32>
    %18 = arith.addf %12, %17 : vector<288x16xf32>
    %c0_18 = arith.constant 0 : index
    %c18 = arith.constant 18 : index
    %c0_19 = arith.constant 0 : index
    %19 = vector.load %arg1[%c0_18, %c18, %c0_19] : memref<1x328x16xbf16, #tpu.memory_space<vmem>>, vector<1x288x16xbf16>
    %20 = vector.shape_cast %19 : vector<1x288x16xbf16> to vector<288x16xbf16>
    %c3 = arith.constant 3 : index
    %c0_20 = arith.constant 0 : index
    %c0_21 = arith.constant 0 : index
    %21 = vector.load %arg2[%c3, %c0_20, %c0_21] : memref<9x16x16xbf16, #tpu.memory_space<vmem>>, vector<1x16x16xbf16>
    %22 = vector.shape_cast %21 : vector<1x16x16xbf16> to vector<16x16xbf16>
    %cst_22 = arith.constant dense<0.000000e+00> : vector<288x16xf32>
    %23 = tpu.matmul %20, %22, %cst_22 {dimension_numbers = #tpu.dot_dimension_numbers<[1], [0], [0], [1], [0, 0, 1, 1], [], []>} : vector<288x16xbf16>, vector<16x16xbf16>, vector<288x16xf32> -> vector<288x16xf32>
    %24 = arith.addf %18, %23 : vector<288x16xf32>
    %c0_23 = arith.constant 0 : index
    %c19 = arith.constant 19 : index
    %c0_24 = arith.constant 0 : index
    %25 = vector.load %arg1[%c0_23, %c19, %c0_24] : memref<1x328x16xbf16, #tpu.memory_space<vmem>>, vector<1x288x16xbf16>
    %26 = vector.shape_cast %25 : vector<1x288x16xbf16> to vector<288x16xbf16>
    %c4 = arith.constant 4 : index
    %c0_25 = arith.constant 0 : index
    %c0_26 = arith.constant 0 : index
    %27 = vector.load %arg2[%c4, %c0_25, %c0_26] : memref<9x16x16xbf16, #tpu.memory_space<vmem>>, vector<1x16x16xbf16>
    %28 = vector.shape_cast %27 : vector<1x16x16xbf16> to vector<16x16xbf16>
    %cst_27 = arith.constant dense<0.000000e+00> : vector<288x16xf32>
    %29 = tpu.matmul %26, %28, %cst_27 {dimension_numbers = #tpu.dot_dimension_numbers<[1], [0], [0], [1], [0, 0, 1, 1], [], []>} : vector<288x16xbf16>, vector<16x16xbf16>, vector<288x16xf32> -> vector<288x16xf32>
    %30 = arith.addf %24, %29 : vector<288x16xf32>
    %c0_28 = arith.constant 0 : index
    %c20 = arith.constant 20 : index
    %c0_29 = arith.constant 0 : index
    %31 = vector.load %arg1[%c0_28, %c20, %c0_29] : memref<1x328x16xbf16, #tpu.memory_space<vmem>>, vector<1x288x16xbf16>
    %32 = vector.shape_cast %31 : vector<1x288x16xbf16> to vector<288x16xbf16>
    %c5 = arith.constant 5 : index
    %c0_30 = arith.constant 0 : index
    %c0_31 = arith.constant 0 : index
    %33 = vector.load %arg2[%c5, %c0_30, %c0_31] : memref<9x16x16xbf16, #tpu.memory_space<vmem>>, vector<1x16x16xbf16>
    %34 = vector.shape_cast %33 : vector<1x16x16xbf16> to vector<16x16xbf16>
    %cst_32 = arith.constant dense<0.000000e+00> : vector<288x16xf32>
    %35 = tpu.matmul %32, %34, %cst_32 {dimension_numbers = #tpu.dot_dimension_numbers<[1], [0], [0], [1], [0, 0, 1, 1], [], []>} : vector<288x16xbf16>, vector<16x16xbf16>, vector<288x16xf32> -> vector<288x16xf32>
    %36 = arith.addf %30, %35 : vector<288x16xf32>
    %c0_33 = arith.constant 0 : index
    %c36 = arith.constant 36 : index
    %c0_34 = arith.constant 0 : index
    %37 = vector.load %arg1[%c0_33, %c36, %c0_34] : memref<1x328x16xbf16, #tpu.memory_space<vmem>>, vector<1x288x16xbf16>
    %38 = vector.shape_cast %37 : vector<1x288x16xbf16> to vector<288x16xbf16>
    %c6 = arith.constant 6 : index
    %c0_35 = arith.constant 0 : index
    %c0_36 = arith.constant 0 : index
    %39 = vector.load %arg2[%c6, %c0_35, %c0_36] : memref<9x16x16xbf16, #tpu.memory_space<vmem>>, vector<1x16x16xbf16>
    %40 = vector.shape_cast %39 : vector<1x16x16xbf16> to vector<16x16xbf16>
    %cst_37 = arith.constant dense<0.000000e+00> : vector<288x16xf32>
    %41 = tpu.matmul %38, %40, %cst_37 {dimension_numbers = #tpu.dot_dimension_numbers<[1], [0], [0], [1], [0, 0, 1, 1], [], []>} : vector<288x16xbf16>, vector<16x16xbf16>, vector<288x16xf32> -> vector<288x16xf32>
    %42 = arith.addf %36, %41 : vector<288x16xf32>
    %c0_38 = arith.constant 0 : index
    %c37 = arith.constant 37 : index
    %c0_39 = arith.constant 0 : index
    %43 = vector.load %arg1[%c0_38, %c37, %c0_39] : memref<1x328x16xbf16, #tpu.memory_space<vmem>>, vector<1x288x16xbf16>
    %44 = vector.shape_cast %43 : vector<1x288x16xbf16> to vector<288x16xbf16>
    %c7 = arith.constant 7 : index
    %c0_40 = arith.constant 0 : index
    %c0_41 = arith.constant 0 : index
    %45 = vector.load %arg2[%c7, %c0_40, %c0_41] : memref<9x16x16xbf16, #tpu.memory_space<vmem>>, vector<1x16x16xbf16>
    %46 = vector.shape_cast %45 : vector<1x16x16xbf16> to vector<16x16xbf16>
    %cst_42 = arith.constant dense<0.000000e+00> : vector<288x16xf32>
    %47 = tpu.matmul %44, %46, %cst_42 {dimension_numbers = #tpu.dot_dimension_numbers<[1], [0], [0], [1], [0, 0, 1, 1], [], []>} : vector<288x16xbf16>, vector<16x16xbf16>, vector<288x16xf32> -> vector<288x16xf32>
    %48 = arith.addf %42, %47 : vector<288x16xf32>
    %c0_43 = arith.constant 0 : index
    %c38 = arith.constant 38 : index
    %c0_44 = arith.constant 0 : index
    %49 = vector.load %arg1[%c0_43, %c38, %c0_44] : memref<1x328x16xbf16, #tpu.memory_space<vmem>>, vector<1x288x16xbf16>
    %50 = vector.shape_cast %49 : vector<1x288x16xbf16> to vector<288x16xbf16>
    %c8 = arith.constant 8 : index
    %c0_45 = arith.constant 0 : index
    %c0_46 = arith.constant 0 : index
    %51 = vector.load %arg2[%c8, %c0_45, %c0_46] : memref<9x16x16xbf16, #tpu.memory_space<vmem>>, vector<1x16x16xbf16>
    %52 = vector.shape_cast %51 : vector<1x16x16xbf16> to vector<16x16xbf16>
    %cst_47 = arith.constant dense<0.000000e+00> : vector<288x16xf32>
    %53 = tpu.matmul %50, %52, %cst_47 {dimension_numbers = #tpu.dot_dimension_numbers<[1], [0], [0], [1], [0, 0, 1, 1], [], []>} : vector<288x16xbf16>, vector<16x16xbf16>, vector<288x16xf32> -> vector<288x16xf32>
    %54 = arith.addf %48, %53 : vector<288x16xf32>
    %c0_48 = arith.constant 0 : index
    %c0_49 = arith.constant 0 : index
    %55 = vector.load %arg3[%c0_48, %c0_49] : memref<1x16xf32, #tpu.memory_space<vmem>>, vector<1x16xf32>
    %56 = vector.broadcast %55 : vector<1x16xf32> to vector<288x16xf32>
    %57 = arith.addf %54, %56 : vector<288x16xf32>
    %c0_50 = arith.constant 0 : index
    %c19_51 = arith.constant 19 : index
    %c0_52 = arith.constant 0 : index
    %58 = vector.load %arg4[%c0_50, %c19_51, %c0_52] : memref<1x328x16xbf16, #tpu.memory_space<vmem>>, vector<1x288x16xbf16>
    %59 = vector.shape_cast %58 : vector<1x288x16xbf16> to vector<288x16xbf16>
    %60 = arith.extf %59 : vector<288x16xbf16> to vector<288x16xf32>
    %61 = arith.addf %57, %60 : vector<288x16xf32>
    %cst_53 = arith.constant 0.000000e+00 : f32
    %62 = vector.broadcast %cst_53 : f32 to vector<288x16xf32>
    %63 = arith.maximumf %61, %62 : vector<288x16xf32>
    %64 = arith.truncf %63 : vector<288x16xf32> to vector<288x16xbf16>
    %c0_54 = arith.constant 0 : index
    %c0_55 = arith.constant 0 : index
    %c0_56 = arith.constant 0 : index
    %65 = vector.load %arg5[%c0_54, %c0_55, %c0_56] : memref<1x288x16xbf16, #tpu.memory_space<vmem>>, vector<1x288x16xbf16>
    %66 = vector.shape_cast %65 : vector<1x288x16xbf16> to vector<288x16xbf16>
    %67 = vector.shape_cast %64 : vector<288x16xbf16> to vector<1x288x16xbf16>
    tpu.vector_store %arg5[%c0_54, %c0_55, %c0_56], %67 {strides = array<i32>} : memref<1x288x16xbf16, #tpu.memory_space<vmem>>, vector<1x288x16xbf16>,
    return
  }
  func.func @transform_0(%arg0: i32) -> (i32, i32, i32) {
    %c0_i32 = arith.constant 0 : i32
    %c0_i32_0 = arith.constant 0 : i32
    %c0_i32_1 = arith.constant 0 : i32
    return %arg0, %c0_i32, %c0_i32_0 : i32, i32, i32
  }
  func.func @transform_1(%arg0: i32) -> (i32, i32, i32) {
    %c0_i32 = arith.constant 0 : i32
    %c0_i32_0 = arith.constant 0 : i32
    %c0_i32_1 = arith.constant 0 : i32
    %c0_i32_2 = arith.constant 0 : i32
    return %c0_i32, %c0_i32_0, %c0_i32_1 : i32, i32, i32
  }
  func.func @transform_2(%arg0: i32) -> (i32, i32) {
    %c0_i32 = arith.constant 0 : i32
    %c0_i32_0 = arith.constant 0 : i32
    %c0_i32_1 = arith.constant 0 : i32
    return %c0_i32, %c0_i32_0 : i32, i32
  }
  func.func @transform_3(%arg0: i32) -> (i32, i32, i32) {
    %c0_i32 = arith.constant 0 : i32
    %c0_i32_0 = arith.constant 0 : i32
    %c0_i32_1 = arith.constant 0 : i32
    return %arg0, %c0_i32, %c0_i32_0 : i32, i32, i32
  }
  func.func @transform_4(%arg0: i32) -> (i32, i32, i32) {
    %c0_i32 = arith.constant 0 : i32
    %c0_i32_0 = arith.constant 0 : i32
    %c0_i32_1 = arith.constant 0 : i32
    return %arg0, %c0_i32, %c0_i32_0 : i32, i32, i32
  }
}

module attributes {stable_mosaic.version = 11 : i64} {
  func.func @_conv_tap_kernel(%arg0: i32, %arg1: memref<1x256x16xbf16, #tpu.memory_space<vmem>>, %arg2: memref<1x16x4xbf16, #tpu.memory_space<vmem>>, %arg3: memref<1x4xf32, #tpu.memory_space<vmem>>, %arg4: memref<1x256x4xf32, #tpu.memory_space<vmem>>) attributes {dimension_semantics = [#tpu.dimension_semantics<parallel>], iteration_bounds = array<i64: 2>, scalar_prefetch = 0 : i64, scratch_operands = 0 : i64, tpu.core_type = #tpu.core_type<tc>, window_params = [{transform_indices = @transform_0, window_bounds = array<i64: 1, 256, 16>}, {pipeline_mode = #tpu.pipeline_mode<synchronous>, transform_indices = @transform_1, window_bounds = array<i64: 1, 16, 4>}, {pipeline_mode = #tpu.pipeline_mode<synchronous>, transform_indices = @transform_2, window_bounds = array<i64: 1, 4>}, {transform_indices = @transform_3, window_bounds = array<i64: 1, 256, 4>}]} {
    %cst = arith.constant 0.000000e+00 : f32
    %0 = vector.broadcast %cst : f32 to vector<256x4xf32>
    %c0 = arith.constant 0 : index
    %c0_0 = arith.constant 0 : index
    %c0_1 = arith.constant 0 : index
    %1 = vector.load %arg1[%c0, %c0_0, %c0_1] : memref<1x256x16xbf16, #tpu.memory_space<vmem>>, vector<1x256x16xbf16>
    %2 = vector.shape_cast %1 : vector<1x256x16xbf16> to vector<256x16xbf16>
    %c0_2 = arith.constant 0 : index
    %c0_3 = arith.constant 0 : index
    %c0_4 = arith.constant 0 : index
    %3 = vector.load %arg2[%c0_2, %c0_3, %c0_4] : memref<1x16x4xbf16, #tpu.memory_space<vmem>>, vector<1x16x4xbf16>
    %4 = vector.shape_cast %3 : vector<1x16x4xbf16> to vector<16x4xbf16>
    %cst_5 = arith.constant dense<0.000000e+00> : vector<256x4xf32>
    %5 = tpu.matmul %2, %4, %cst_5 {dimension_numbers = #tpu.dot_dimension_numbers<[1], [0], [0], [1], [0, 0, 1, 1], [], []>} : vector<256x16xbf16>, vector<16x4xbf16>, vector<256x4xf32> -> vector<256x4xf32>
    %6 = arith.addf %0, %5 : vector<256x4xf32>
    %c0_6 = arith.constant 0 : index
    %c0_7 = arith.constant 0 : index
    %7 = vector.load %arg3[%c0_6, %c0_7] : memref<1x4xf32, #tpu.memory_space<vmem>>, vector<1x4xf32>
    %8 = vector.broadcast %7 : vector<1x4xf32> to vector<256x4xf32>
    %9 = arith.addf %6, %8 : vector<256x4xf32>
    %c0_8 = arith.constant 0 : index
    %c0_9 = arith.constant 0 : index
    %c0_10 = arith.constant 0 : index
    %10 = vector.load %arg4[%c0_8, %c0_9, %c0_10] : memref<1x256x4xf32, #tpu.memory_space<vmem>>, vector<1x256x4xf32>
    %11 = vector.shape_cast %10 : vector<1x256x4xf32> to vector<256x4xf32>
    %12 = vector.shape_cast %9 : vector<256x4xf32> to vector<1x256x4xf32>
    tpu.vector_store %arg4[%c0_8, %c0_9, %c0_10], %12 {strides = array<i32>} : memref<1x256x4xf32, #tpu.memory_space<vmem>>, vector<1x256x4xf32>,
    return
  }
  func.func @transform_0(%arg0: i32) -> (i32, i32, i32) {
    %c0_i32 = arith.constant 0 : i32
    %c0_i32_0 = arith.constant 0 : i32
    %c0_i32_1 = arith.constant 0 : i32
    return %arg0, %c0_i32, %c0_i32_0 : i32, i32, i32
  }
  func.func @transform_1(%arg0: i32) -> (i32, i32, i32) {
    %c0_i32 = arith.constant 0 : i32
    %c0_i32_0 = arith.constant 0 : i32
    %c0_i32_1 = arith.constant 0 : i32
    %c0_i32_2 = arith.constant 0 : i32
    return %c0_i32, %c0_i32_0, %c0_i32_1 : i32, i32, i32
  }
  func.func @transform_2(%arg0: i32) -> (i32, i32) {
    %c0_i32 = arith.constant 0 : i32
    %c0_i32_0 = arith.constant 0 : i32
    %c0_i32_1 = arith.constant 0 : i32
    return %c0_i32, %c0_i32_0 : i32, i32
  }
  func.func @transform_3(%arg0: i32) -> (i32, i32, i32) {
    %c0_i32 = arith.constant 0 : i32
    %c0_i32_0 = arith.constant 0 : i32
    %c0_i32_1 = arith.constant 0 : i32
    return %arg0, %c0_i32, %c0_i32_0 : i32, i32, i32
  }
}

</mosaic_0001>

<llo_original>
// kernel: higher_hrnet_forward.16
$region0: #{higher_hrnet_forward.16}
  #allocation0 [shape = 'u32[]', space=smem, size = 0x4, offset = 0x4, fixed_abs, tag = 'smem constant byte address 0x4 - core index']
  #allocation1 [shape = 'u32[72,128]{1,0:T(1,128)}', space=vmem, size = 0x9000, scoped, tag = 'internal scratch']
  %s0 = inlined_call_operand.vmem [shape: bf16[2,296,12], index: 0, kind: input, shape index: {}]
  %s1 = inlined_call_operand.vmem [shape: bf16[4,12,16], index: 1, kind: input, shape index: {}]
  %s2 = inlined_call_operand.vmem [shape: f32[1,16], index: 2, kind: input, shape index: {}]
  %s3 = inlined_call_operand.vmem [shape: bf16[2,272,16], index: 3, kind: output, shape index: {}]
  %s4 = sld [smem:[#allocation0]]
  $region45: #{higher_hrnet_forward.16} parent=0
    _
  %s6 = ssub.s32 1, %s4
  %s7 = scalar_select 0, %s6, %s4
  loop: start=0, step=1, limit=4
  $region2: #{higher_hrnet_forward.16} parent=0 // loop_pre_header
    _
  $region3: #{higher_hrnet_forward.16} parent=0 // loop_header
    %s9 = sphi 0, %s13
    %p10 = scmp.ge.s32.totalorder %s9, 4
    %s19 = sphi 0, %s21
    %s22 = sphi 0, %s19
    %s23 = sphi 0, %s22
    %s39 = sphi 0, %s23
    %s43 = sphi 0, %s43
    %s45 = sphi 0, %s43
    %s46 = sphi 0, %s45
    %s60 = sphi 0, %s46
    %s64 = sphi 0, %s64
    %s66 = sphi 0, %s64
    %s67 = sphi 0, %s66
    %s81 = sphi 0, %s67
    %s87 = sphi 0, %s89
    %s90 = sphi 0, %s87
    %s91 = sphi 0, %s90
    %s107 = sphi 0, %s91
  $region4: #{higher_hrnet_forward.16} parent=0 // loop_header_branch
    %12 = sbr.rel (%p10) target = $region8
  $region5: #{higher_hrnet_forward.16} parent=0 // loop_body
    %s14 = ssub.s32 %s9, 1
    %s15 = ssub.s32 %s9, 2
    %s16 = sadd.s32 %s9, 1
    %s17 = ssub.s32 %s9, %s16
    %p18 = scmp.eq.s32.totalorder %s17, 0
    %s20 = sadd.s32 %s19, 1
    %s21 = scalar_select %p18, %s19, %s20
    %p24 = pneg %p18
    %p25 = scmp.eq.s32.totalorder %s9, 1
    %p26 = por %p24, %p25
    %p27 = scmp.ne.s32.totalorder %s19, %s22
    %p28 = scmp.eq.s32.totalorder %s9, 0
    %p29 = por %p27, %p28
    %p30 = scmp.ne.s32.totalorder %s19, %s22
    %p31 = scmp.eq.s32.totalorder %s14, 1
    %p32 = por %p30, %p31
    %p33 = scmp.ne.s32.totalorder %s22, %s23
    %p34 = scmp.eq.s32.totalorder %s14, 0
    %p35 = por %p33, %p34
    %p36 = scmp.ne.s32.totalorder %s22, %s23
    %p37 = scmp.eq.s32.totalorder %s15, 1
    %p38 = por %p36, %p37
    %p40 = scmp.ne.s32.totalorder %s23, %s39
    %p41 = scmp.eq.s32.totalorder %s15, 0
    %p42 = por %p40, %p41
    %s44 = sadd.s32 %s43, 1
    %p47 = scmp.eq.s32.totalorder %s9, 1
    %p48 = scmp.ne.s32.totalorder %s43, %s45
    %p49 = scmp.eq.s32.totalorder %s9, 0
    %p50 = por %p48, %p49
    %p51 = scmp.ne.s32.totalorder %s43, %s45
    %p52 = scmp.eq.s32.totalorder %s14, 1
    %p53 = por %p51, %p52
    %p54 = scmp.ne.s32.totalorder %s45, %s46
    %p55 = scmp.eq.s32.totalorder %s14, 0
    %p56 = por %p54, %p55
    %p57 = scmp.ne.s32.totalorder %s45, %s46
    %p58 = scmp.eq.s32.totalorder %s15, 1
    %p59 = por %p57, %p58
    %p61 = scmp.ne.s32.totalorder %s46, %s60
    %p62 = scmp.eq.s32.totalorder %s15, 0
    %p63 = por %p61, %p62
    %s65 = sadd.s32 %s64, 1
    %p68 = scmp.eq.s32.totalorder %s9, 1
    %p69 = scmp.ne.s32.totalorder %s64, %s66
    %p70 = scmp.eq.s32.totalorder %s9, 0
    %p71 = por %p69, %p70
    %p72 = scmp.ne.s32.totalorder %s64, %s66
    %p73 = scmp.eq.s32.totalorder %s14, 1
    %p74 = por %p72, %p73
    %p75 = scmp.ne.s32.totalorder %s66, %s67
    %p76 = scmp.eq.s32.totalorder %s14, 0
    %p77 = por %p75, %p76
    %p78 = scmp.ne.s32.totalorder %s66, %s67
    %p79 = scmp.eq.s32.totalorder %s15, 1
    %p80 = por %p78, %p79
    %p82 = scmp.ne.s32.totalorder %s67, %s81
    %p83 = scmp.eq.s32.totalorder %s15, 0
    %p84 = por %p82, %p83
    %s85 = ssub.s32 %s9, %s16
    %p86 = scmp.eq.s32.totalorder %s85, 0
    %s88 = sadd.s32 %s87, 1
    %s89 = scalar_select %p86, %s87, %s88
    %p92 = pneg %p86
    %p93 = scmp.eq.s32.totalorder %s9, 1
    %p94 = por %p92, %p93
    %p95 = scmp.ne.s32.totalorder %s87, %s90
    %p96 = scmp.eq.s32.totalorder %s9, 0
    %p97 = por %p95, %p96
    %p98 = scmp.ne.s32.totalorder %s87, %s90
    %p99 = scmp.eq.s32.totalorder %s14, 1
    %p100 = por %p98, %p99
    %p101 = scmp.ne.s32.totalorder %s90, %s91
    %p102 = scmp.eq.s32.totalorder %s14, 0
    %p103 = por %p101, %p102
    %p104 = scmp.ne.s32.totalorder %s90, %s91
    %p105 = scmp.eq.s32.totalorder %s15, 1
    %p106 = por %p104, %p105
    %p108 = scmp.ne.s32.totalorder %s91, %s107
    %p109 = scmp.eq.s32.totalorder %s15, 0
    %p110 = por %p108, %p109
    %p111 = scmp.le.s32.totalorder 1, %s9
    %p112 = scmp.lt.s32.totalorder %s9, 3
    %p113 = pnand %p111, %p112
    %p114 = pneg %p113
    // Predicated region
    $region9: #{higher_hrnet_forward.16} parent=5 // pred_check
      _
    $region10: #{higher_hrnet_forward.16} parent=5 // pred_check_branch
      %116 = sbr.rel (%p113) target = $region12
    $region11: #{higher_hrnet_forward.16} parent=5 // pred_region
      %s117 = ssub.s32 %s9, 1
      // Predicated region
      $region13: #{higher_hrnet_forward.16} parent=11 // pred_check
        %p118 = pneg %p56
      $region14: #{higher_hrnet_forward.16} parent=11 // pred_check_branch
        %120 = sbr.rel (%p118) target = $region16
      $region15: #{higher_hrnet_forward.16} parent=11 // pred_region
        _
      $region16: #{higher_hrnet_forward.16} parent=11 // pred_fallthru
        _
      // Predicated region
      $region17: #{higher_hrnet_forward.16} parent=11 // pred_check
        %p121 = pneg %p77
      $region18: #{higher_hrnet_forward.16} parent=11 // pred_check_branch
        %123 = sbr.rel (%p121) target = $region20
      $region19: #{higher_hrnet_forward.16} parent=11 // pred_region
        _
      $region20: #{higher_hrnet_forward.16} parent=11 // pred_fallthru
        _
    $region12: #{higher_hrnet_forward.16} parent=5 // pred_fallthru
      _
    %p124 = scmp.lt.s32.totalorder %s9, 2
    // Predicated region
    $region21: #{higher_hrnet_forward.16} parent=5 // pred_check
      %p125 = pneg %p124
    $region22: #{higher_hrnet_forward.16} parent=5 // pred_check_branch
      %127 = sbr.rel (%p125) target = $region24
    $region23: #{higher_hrnet_forward.16} parent=5 // pred_region
      // Predicated region
      $region25: #{higher_hrnet_forward.16} parent=23 // pred_check
        %p128 = pneg %p29
      $region26: #{higher_hrnet_forward.16} parent=23 // pred_check_branch
        %130 = sbr.rel (%p128) target = $region28
      $region27: #{higher_hrnet_forward.16} parent=23 // pred_region
        %p131 = scmp.lt.s32.totalorder %s9, 1
        %s132 = scalar_select %p131, %s9, 1
        %s133 = smul.addr %s132, 37
        %s134 = smul.addr %s133, 4
        %s135 = scalar_lea.vmem %s0, %s134
      $region28: #{higher_hrnet_forward.16} parent=23 // pred_fallthru
        _
    $region24: #{higher_hrnet_forward.16} parent=5 // pred_fallthru
      _
    %p136 = scmp.le.s32.totalorder 1, %s9
    %p137 = scmp.lt.s32.totalorder %s9, 3
    %p138 = pnand %p136, %p137
    %p139 = pneg %p138
    // Predicated region
    $region29: #{higher_hrnet_forward.16} parent=5 // pred_check
      _
    $region30: #{higher_hrnet_forward.16} parent=5 // pred_check_branch
      %141 = sbr.rel (%p138) target = $region32
    $region31: #{higher_hrnet_forward.16} parent=5 // pred_region
      %s142 = ssub.s32 %s9, 1
      %p143 = scmp.lt.s32.totalorder %s14, 1
      %s144 = scalar_select %p143, %s14, 1
      %s145 = smul.addr %s144, 37
      %s146 = smul.addr %s145, 4
      %s147 = scalar_lea.vmem %s0, %s146
      %p148 = pneg %p35
      %p149 = pneg %p32
      %p150 = pneg %p56
      %p151 = pneg %p53
      %p152 = pneg %p77
      %p153 = pneg %p74
      %p154 = pneg %p103
      %p155 = pneg %p100
      %p156 = scmp.lt.s32.totalorder %s14, 1
      %s157 = scalar_select %p156, %s14, 1
      %s158 = smul.addr %s157, 34
      %s159 = smul.addr %s158, 4
      %s160 = scalar_lea.vmem %s3, %s159
      %p161 = scmp.lt.s32.totalorder %s14, 1
      %s162 = scalar_select %p161, %s14, 1
      %s163 = smul.addr %s162, 37
      %s164 = smul.addr %s163, 4
      %s165 = scalar_lea.vmem %s0, %s164
      %p166 = scmp.lt.s32.totalorder %s14, 1
      %s167 = scalar_select %p166, %s14, 1
      %s168 = smul.addr %s167, 34
      %s169 = smul.addr %s168, 4
      %s170 = scalar_lea.vmem %s3, %s169
      %v172 = vld [vmem:[%s165] sm:$0xf]
      %v173 = vld [vmem:[%s165 + $0x4] sm:$0xf]
      %v174 = vld [vmem:[%s165 + $0x8] sm:$0xf]
      %v175 = vld [vmem:[%s165 + $0xc] sm:$0xf]
      %v176 = vld [vmem:[%s165 + $0x10] sm:$0xf]
      %v177 = vld [vmem:[%s165 + $0x14] sm:$0xf]
      %v178 = vld [vmem:[%s165 + $0x18] sm:$0xf]
      %v179 = vld [vmem:[%s165 + $0x1c] sm:$0xf]
      %v180 = vld [vmem:[%s165 + $0x20] sm:$0xf]
      %v181 = vld [vmem:[%s165 + $0x24] sm:$0xf]
      %v182 = vld [vmem:[%s165 + $0x28] sm:$0xf]
      %v183 = vld [vmem:[%s165 + $0x2c] sm:$0xf]
      %v184 = vld [vmem:[%s165 + $0x30] sm:$0xf]
      %v185 = vld [vmem:[%s165 + $0x34] sm:$0xf]
      %v186 = vld [vmem:[%s165 + $0x38] sm:$0xf]
      %v187 = vld [vmem:[%s165 + $0x3c] sm:$0xf]
      %v188 = vld [vmem:[%s165 + $0x40] sm:$0xf]
      %v189 = vld [vmem:[%s165 + $0x44] sm:$0xf]
      %v190 = vld [vmem:[%s165 + $0x48] sm:$0xf]
      %v191 = vld [vmem:[%s165 + $0x4c] sm:$0xf]
      %v192 = vld [vmem:[%s165 + $0x50] sm:$0xf]
      %v193 = vld [vmem:[%s165 + $0x54] sm:$0xf]
      %v194 = vld [vmem:[%s165 + $0x58] sm:$0xf]
      %v195 = vld [vmem:[%s165 + $0x5c] sm:$0xf]
      %v196 = vld [vmem:[%s165 + $0x60] sm:$0xf]
      %v197 = vld [vmem:[%s165 + $0x64] sm:$0xf]
      %v198 = vld [vmem:[%s165 + $0x68] sm:$0xf]
      %v199 = vld [vmem:[%s165 + $0x6c] sm:$0xf]
      %v200 = vld [vmem:[%s165 + $0x70] sm:$0xf]
      %v201 = vld [vmem:[%s165 + $0x74] sm:$0xf]
      %v202 = vld [vmem:[%s165 + $0x78] sm:$0xf]
      %v203 = vld [vmem:[%s165 + $0x7c] sm:$0xf]
      %v204 = vld [vmem:[%s165 + $0x80] sm:$0xf]
      %v205 = vld [vmem:[%s165 + $0x84] sm:$0xf]
      %v206 = vld [vmem:[%s1] sm:$0xf]
      %v207 = vld [vmem:[%s1 + $0x4] sm:$0x3]
      %v208 = vld [vmem:[%s165 + $0x88] sm:$0x1]
      %s209 = scalar_lea.vmem %s1, 8
      %v210 = vld [vmem:[%s209] sm:$0xf]
      %v211 = vld [vmem:[%s209 + $0x4] sm:$0x3]
      %v247 = vunpack.c.l.b16 %v172
      %v248 = vunpack.c.l.b16 %v173
      %v249 = vunpack.c.l.b16 %v174
      %v250 = vunpack.c.l.b16 %v175
      %v251 = vunpack.c.l.b16 %v176
      %v252 = vunpack.c.l.b16 %v177
      %v253 = vunpack.c.l.b16 %v178
      %v254 = vunpack.c.l.b16 %v179
      %v255 = vunpack.c.l.b16 %v180
      %v256 = vunpack.c.l.b16 %v181
      %v257 = vunpack.c.l.b16 %v182
      %v258 = vunpack.c.l.b16 %v183
      %v259 = vunpack.c.l.b16 %v184
      %v260 = vunpack.c.l.b16 %v185
      %v261 = vunpack.c.l.b16 %v186
      %v262 = vunpack.c.l.b16 %v187
      %v263 = vunpack.c.l.b16 %v188
      %v264 = vunpack.c.l.b16 %v189
      %v265 = vunpack.c.l.b16 %v190
      %v266 = vunpack.c.l.b16 %v191
      %v267 = vunpack.c.l.b16 %v192
      %v268 = vunpack.c.l.b16 %v193
      %v269 = vunpack.c.l.b16 %v194
      %v270 = vunpack.c.l.b16 %v195
      %v271 = vunpack.c.l.b16 %v196
      %v272 = vunpack.c.l.b16 %v197
      %v273 = vunpack.c.l.b16 %v198
      %v274 = vunpack.c.l.b16 %v199
      %v275 = vunpack.c.l.b16 %v200
      %v276 = vunpack.c.l.b16 %v201
      %v277 = vunpack.c.l.b16 %v202
      %v278 = vunpack.c.l.b16 %v203
      %v279 = vunpack.c.l.b16 %v204
      %v280 = vunpack.c.l.b16 %v205
      %v281 = vunpack.c.l.b16 %v208
      %v282 = vpack.c.b16 %v248, %v247
      %v283 = vpack.c.b16 %v250, %v249
      %v284 = vpack.c.b16 %v252, %v251
      %v285 = vpack.c.b16 %v254, %v253
      %v286 = vpack.c.b16 %v256, %v255
      %v287 = vpack.c.b16 %v258, %v257
      %v288 = vpack.c.b16 %v260, %v259
      %v289 = vpack.c.b16 %v262, %v261
      %v290 = vpack.c.b16 %v264, %v263
      %v291 = vpack.c.b16 %v266, %v265
      %v292 = vpack.c.b16 %v268, %v267
      %v293 = vpack.c.b16 %v270, %v269
      %v294 = vpack.c.b16 %v272, %v271
      %v295 = vpack.c.b16 %v274, %v273
      %v296 = vpack.c.b16 %v276, %v275
      %v297 = vpack.c.b16 %v278, %v277
      %v298 = vpack.c.b16 %v280, %v279
      %v299 = vpack.c.b16 %v281, %v281
      %vm300 = vsmask.f32 7424
      %v302 = vshrl.u32 %v282, 16
      %v304 = vshll.u32 %v282, 16
      %v306 = vrot.slane %v304, 1
      %v307 = vor.u32 %v302, %v306
      %v309 = vshll.u32 %v283, 16
      %v311 = vrot.slane %v309, 1
      %v312 = vsel %vm300, %v307, %v311
      %v313 = vshrl.u32 %v283, 16
      %v315 = vor.u32 %v313, %v311
      %v317 = vshll.u32 %v284, 16
      %v319 = vrot.slane %v317, 1
      %v320 = vsel %vm300, %v315, %v319
      %v321 = vshrl.u32 %v284, 16
      %v323 = vor.u32 %v321, %v319
      %v325 = vshll.u32 %v285, 16
      %v327 = vrot.slane %v325, 1
      %v328 = vsel %vm300, %v323, %v327
      %v329 = vshrl.u32 %v285, 16
      %v331 = vor.u32 %v329, %v327
      %v333 = vshll.u32 %v286, 16
      %v335 = vrot.slane %v333, 1
      %v336 = vsel %vm300, %v331, %v335
      %v337 = vshrl.u32 %v286, 16
      %v339 = vor.u32 %v337, %v335
      %v341 = vshll.u32 %v287, 16
      %v343 = vrot.slane %v341, 1
      %v344 = vsel %vm300, %v339, %v343
      %v345 = vshrl.u32 %v287, 16
      %v347 = vor.u32 %v345, %v343
      %v349 = vshll.u32 %v288, 16
      %v351 = vrot.slane %v349, 1
      %v352 = vsel %vm300, %v347, %v351
      %v353 = vshrl.u32 %v288, 16
      %v355 = vor.u32 %v353, %v351
      %v357 = vshll.u32 %v289, 16
      %v359 = vrot.slane %v357, 1
      %v360 = vsel %vm300, %v355, %v359
      %v361 = vshrl.u32 %v289, 16
      %v363 = vor.u32 %v361, %v359
      %v365 = vshll.u32 %v290, 16
      %v367 = vrot.slane %v365, 1
      %v368 = vsel %vm300, %v363, %v367
      %v369 = vshrl.u32 %v290, 16
      %v371 = vor.u32 %v369, %v367
      %v373 = vshll.u32 %v291, 16
      %v375 = vrot.slane %v373, 1
      %v376 = vsel %vm300, %v371, %v375
      %v377 = vshrl.u32 %v291, 16
      %v379 = vor.u32 %v377, %v375
      %v381 = vshll.u32 %v292, 16
      %v383 = vrot.slane %v381, 1
      %v384 = vsel %vm300, %v379, %v383
      %v385 = vshrl.u32 %v292, 16
      %v387 = vor.u32 %v385, %v383
      %v389 = vshll.u32 %v293, 16
      %v391 = vrot.slane %v389, 1
      %v392 = vsel %vm300, %v387, %v391
      %v393 = vshrl.u32 %v293, 16
      %v395 = vor.u32 %v393, %v391
      %v397 = vshll.u32 %v294, 16
      %v399 = vrot.slane %v397, 1
      %v400 = vsel %vm300, %v395, %v399
      %v401 = vshrl.u32 %v294, 16
      %v403 = vor.u32 %v401, %v399
      %v405 = vshll.u32 %v295, 16
      %v407 = vrot.slane %v405, 1
      %v408 = vsel %vm300, %v403, %v407
      %v409 = vshrl.u32 %v295, 16
      %v411 = vor.u32 %v409, %v407
      %v413 = vshll.u32 %v296, 16
      %v415 = vrot.slane %v413, 1
      %v416 = vsel %vm300, %v411, %v415
      %v417 = vshrl.u32 %v296, 16
      %v419 = vor.u32 %v417, %v415
      %v421 = vshll.u32 %v297, 16
      %v423 = vrot.slane %v421, 1
      %v424 = vsel %vm300, %v419, %v423
      %v425 = vshrl.u32 %v297, 16
      %v427 = vor.u32 %v425, %v423
      %v429 = vshll.u32 %v298, 16
      %v431 = vrot.slane %v429, 1
      %v432 = vsel %vm300, %v427, %v431
      %v433 = vshrl.u32 %v298, 16
      %v435 = vor.u32 %v433, %v431
      %v437 = vshll.u32 %v299, 16
      %v439 = vrot.slane %v437, 1
      %v440 = vsel %vm300, %v435, %v439
      %v443 = vunpack.c.l.b16 %v210
      %v444 = vunpack.c.l.b16 %v211
      %v445 = vpack.c.b16 %v444, %v443
      %vm446 = vcmask 97280
      %v448 = vsel %vm446, %v312, 0
      %v451 = vsel %vm446, %v320, 0
      %v454 = vsel %vm446, %v328, 0
      %v457 = vsel %vm446, %v336, 0
      %v460 = vsel %vm446, %v344, 0
      %v463 = vsel %vm446, %v352, 0
      %v466 = vsel %vm446, %v360, 0
      %v469 = vsel %vm446, %v368, 0
      %v472 = vsel %vm446, %v376, 0
      %v475 = vsel %vm446, %v384, 0
      %v478 = vsel %vm446, %v392, 0
      %v481 = vsel %vm446, %v400, 0
      %v484 = vsel %vm446, %v408, 0
      %v487 = vsel %vm446, %v416, 0
      %v490 = vsel %vm446, %v424, 0
      %v493 = vsel %vm446, %v432, 0
      %v496 = vsel %vm446, %v440, 0
      %vm498 = vcmask 1045504
      %v500 = vsel %vm498, %v445, 0
      %502 = vmatpush.bf16.msra.mxu0 0
      %503 = vmatpush.bf16.msra.mxu0 0
      %504 = vmatpush.bf16.msra.mxu0 0
      %505 = vmatpush.bf16.msra.mxu0 0
      %506 = vmatpush.bf16.msra.mxu0 0
      %507 = vmatpush.bf16.msra.mxu0 0
      %508 = vmatpush.bf16.msra.mxu0 0
      %509 = vmatpush.bf16.msra.mxu0 %v500
      %510 = vmatmul.bf16.gmra.mxu0 %v448
      %v511 = vpop.f32.mrf.mxu0
      %v512 = vadd.f32 0.0, %v511
      %v513 = vpop.f32.mrf.mxu0
      %v514 = vadd.f32 0.0, %v513
      %515 = vmatmul.bf16.gmra.mxu0 %v451
      %v516 = vpop.f32.mrf.mxu0
      %v517 = vadd.f32 0.0, %v516
      %v518 = vpop.f32.mrf.mxu0
      %v519 = vadd.f32 0.0, %v518
      %520 = vmatmul.bf16.gmra.mxu0 %v454
      %v521 = vpop.f32.mrf.mxu0
      %v522 = vadd.f32 0.0, %v521
      %v523 = vpop.f32.mrf.mxu0
      %v524 = vadd.f32 0.0, %v523
      %525 = vmatmul.bf16.gmra.mxu0 %v457
      %v526 = vpop.f32.mrf.mxu0
      %v527 = vadd.f32 0.0, %v526
      %v528 = vpop.f32.mrf.mxu0
      %v529 = vadd.f32 0.0, %v528
      %530 = vmatmul.bf16.gmra.mxu0 %v460
      %v531 = vpop.f32.mrf.mxu0
      %v532 = vadd.f32 0.0, %v531
      %v533 = vpop.f32.mrf.mxu0
      %v534 = vadd.f32 0.0, %v533
      %535 = vmatmul.bf16.gmra.mxu0 %v463
      %v536 = vpop.f32.mrf.mxu0
      %v537 = vadd.f32 0.0, %v536
      %v538 = vpop.f32.mrf.mxu0
      %v539 = vadd.f32 0.0, %v538
      %540 = vmatmul.bf16.gmra.mxu0 %v466
      %v541 = vpop.f32.mrf.mxu0
      %v542 = vadd.f32 0.0, %v541
      %v543 = vpop.f32.mrf.mxu0
      %v544 = vadd.f32 0.0, %v543
      %545 = vmatmul.bf16.gmra.mxu0 %v469
      %v546 = vpop.f32.mrf.mxu0
      %v547 = vadd.f32 0.0, %v546
      %v548 = vpop.f32.mrf.mxu0
      %v549 = vadd.f32 0.0, %v548
      %550 = vmatmul.bf16.gmra.mxu0 %v472
      %v551 = vpop.f32.mrf.mxu0
      %v552 = vadd.f32 0.0, %v551
      %v553 = vpop.f32.mrf.mxu0
      %v554 = vadd.f32 0.0, %v553
      %555 = vmatmul.bf16.gmra.mxu0 %v475
      %v556 = vpop.f32.mrf.mxu0
      %v557 = vadd.f32 0.0, %v556
      %v558 = vpop.f32.mrf.mxu0
      %v559 = vadd.f32 0.0, %v558
      %560 = vmatmul.bf16.gmra.mxu0 %v478
      %v561 = vpop.f32.mrf.mxu0
      %v562 = vadd.f32 0.0, %v561
      %v563 = vpop.f32.mrf.mxu0
      %v564 = vadd.f32 0.0, %v563
      %565 = vmatmul.bf16.gmra.mxu0 %v481
      %v566 = vpop.f32.mrf.mxu0
      %v567 = vadd.f32 0.0, %v566
      %v568 = vpop.f32.mrf.mxu0
      %v569 = vadd.f32 0.0, %v568
      %570 = vmatmul.bf16.gmra.mxu0 %v484
      %v571 = vpop.f32.mrf.mxu0
      %v572 = vadd.f32 0.0, %v571
      %v573 = vpop.f32.mrf.mxu0
      %v574 = vadd.f32 0.0, %v573
      %575 = vmatmul.bf16.gmra.mxu0 %v487
      %v576 = vpop.f32.mrf.mxu0
      %v577 = vadd.f32 0.0, %v576
      %v578 = vpop.f32.mrf.mxu0
      %v579 = vadd.f32 0.0, %v578
      %580 = vmatmul.bf16.gmra.mxu0 %v490
      %v581 = vpop.f32.mrf.mxu0
      %v582 = vadd.f32 0.0, %v581
      %v583 = vpop.f32.mrf.mxu0
      %v584 = vadd.f32 0.0, %v583
      %585 = vmatmul.bf16.gmra.mxu0 %v493
      %v586 = vpop.f32.mrf.mxu0
      %v587 = vadd.f32 0.0, %v586
      %v588 = vpop.f32.mrf.mxu0
      %v589 = vadd.f32 0.0, %v588
      %590 = vmatmul.bf16.gmra.mxu0 %v496
      %v591 = vpop.f32.mrf.mxu0
      %v592 = vadd.f32 0.0, %v591
      %v593 = vpop.f32.mrf.mxu0
      %v594 = vadd.f32 0.0, %v593
      %595 = vdwg.mxu0
      %v598 = vunpack.c.l.b16 %v206
      %v599 = vunpack.c.l.b16 %v207
      %v600 = vpack.c.b16 %v599, %v598
      %v601 = vsel %vm446, %v282, 0
      %v603 = vsel %vm446, %v283, 0
      %v605 = vsel %vm446, %v284, 0
      %v607 = vsel %vm446, %v285, 0
      %v609 = vsel %vm446, %v286, 0
      %v611 = vsel %vm446, %v287, 0
      %v613 = vsel %vm446, %v288, 0
      %v615 = vsel %vm446, %v289, 0
      %v617 = vsel %vm446, %v290, 0
      %v619 = vsel %vm446, %v291, 0
      %v621 = vsel %vm446, %v292, 0
      %v623 = vsel %vm446, %v293, 0
      %v625 = vsel %vm446, %v294, 0
      %v627 = vsel %vm446, %v295, 0
      %v629 = vsel %vm446, %v296, 0
      %v631 = vsel %vm446, %v297, 0
      %v633 = vsel %vm446, %v298, 0
      %v636 = vsel %vm498, %v600, 0
      %638 = vmatpush.bf16.msra.mxu0 0
      %639 = vmatpush.bf16.msra.mxu0 0
      %640 = vmatpush.bf16.msra.mxu0 0
      %641 = vmatpush.bf16.msra.mxu0 0
      %642 = vmatpush.bf16.msra.mxu0 0
      %643 = vmatpush.bf16.msra.mxu0 0
      %644 = vmatpush.bf16.msra.mxu0 0
      %645 = vmatpush.bf16.msra.mxu0 %v636
      %646 = vmatmul.bf16.gmra.mxu0 %v601
      %v647 = vpop.f32.mrf.mxu0
      %v648 = vadd.f32 %v512, %v647
      %v649 = vpop.f32.mrf.mxu0
      %v650 = vadd.f32 %v514, %v649
      %651 = vmatmul.bf16.gmra.mxu0 %v603
      %v652 = vpop.f32.mrf.mxu0
      %v653 = vadd.f32 %v517, %v652
      %v654 = vpop.f32.mrf.mxu0
      %v655 = vadd.f32 %v519, %v654
      %656 = vmatmul.bf16.gmra.mxu0 %v605
      %v657 = vpop.f32.mrf.mxu0
      %v658 = vadd.f32 %v522, %v657
      %v659 = vpop.f32.mrf.mxu0
      %v660 = vadd.f32 %v524, %v659
      %661 = vmatmul.bf16.gmra.mxu0 %v607
      %v662 = vpop.f32.mrf.mxu0
      %v663 = vadd.f32 %v527, %v662
      %v664 = vpop.f32.mrf.mxu0
      %v665 = vadd.f32 %v529, %v664
      %666 = vmatmul.bf16.gmra.mxu0 %v609
      %v667 = vpop.f32.mrf.mxu0
      %v668 = vadd.f32 %v532, %v667
      %v669 = vpop.f32.mrf.mxu0
      %v670 = vadd.f32 %v534, %v669
      %671 = vmatmul.bf16.gmra.mxu0 %v611
      %v672 = vpop.f32.mrf.mxu0
      %v673 = vadd.f32 %v537, %v672
      %v674 = vpop.f32.mrf.mxu0
      %v675 = vadd.f32 %v539, %v674
      %676 = vmatmul.bf16.gmra.mxu0 %v613
      %v677 = vpop.f32.mrf.mxu0
      %v678 = vadd.f32 %v542, %v677
      %v679 = vpop.f32.mrf.mxu0
      %v680 = vadd.f32 %v544, %v679
      %681 = vmatmul.bf16.gmra.mxu0 %v615
      %v682 = vpop.f32.mrf.mxu0
      %v683 = vadd.f32 %v547, %v682
      %v684 = vpop.f32.mrf.mxu0
      %v685 = vadd.f32 %v549, %v684
      %686 = vmatmul.bf16.gmra.mxu0 %v617
      %v687 = vpop.f32.mrf.mxu0
      %v688 = vadd.f32 %v552, %v687
      %v689 = vpop.f32.mrf.mxu0
      %v690 = vadd.f32 %v554, %v689
      %691 = vmatmul.bf16.gmra.mxu0 %v619
      %v692 = vpop.f32.mrf.mxu0
      %v693 = vadd.f32 %v557, %v692
      %v694 = vpop.f32.mrf.mxu0
      %v695 = vadd.f32 %v559, %v694
      %696 = vmatmul.bf16.gmra.mxu0 %v621
      %v697 = vpop.f32.mrf.mxu0
      %v698 = vadd.f32 %v562, %v697
      %v699 = vpop.f32.mrf.mxu0
      %v700 = vadd.f32 %v564, %v699
      %701 = vmatmul.bf16.gmra.mxu0 %v623
      %v702 = vpop.f32.mrf.mxu0
      %v703 = vadd.f32 %v567, %v702
      %v704 = vpop.f32.mrf.mxu0
      %v705 = vadd.f32 %v569, %v704
      %706 = vmatmul.bf16.gmra.mxu0 %v625
      %v707 = vpop.f32.mrf.mxu0
      %v708 = vadd.f32 %v572, %v707
      %v709 = vpop.f32.mrf.mxu0
      %v710 = vadd.f32 %v574, %v709
      %711 = vmatmul.bf16.gmra.mxu0 %v627
      %v712 = vpop.f32.mrf.mxu0
      %v713 = vadd.f32 %v577, %v712
      %v714 = vpop.f32.mrf.mxu0
      %v715 = vadd.f32 %v579, %v714
      %716 = vmatmul.bf16.gmra.mxu0 %v629
      %v717 = vpop.f32.mrf.mxu0
      %v718 = vadd.f32 %v582, %v717
      %v719 = vpop.f32.mrf.mxu0
      %v720 = vadd.f32 %v584, %v719
      %721 = vmatmul.bf16.gmra.mxu0 %v631
      %v722 = vpop.f32.mrf.mxu0
      %v723 = vadd.f32 %v587, %v722
      %v724 = vpop.f32.mrf.mxu0
      %v725 = vadd.f32 %v589, %v724
      %726 = vmatmul.bf16.gmra.mxu0 %v633
      %v727 = vpop.f32.mrf.mxu0
      %v728 = vadd.f32 %v592, %v727
      %v729 = vpop.f32.mrf.mxu0
      %v730 = vadd.f32 %v594, %v729
      %731 = vdwg.mxu0
      %v732 = vld [vmem:[%s165 + $0x8] sm:$0xf]
      %v733 = vld [vmem:[%s165 + $0xc] sm:$0xf]
      %v734 = vld [vmem:[%s165 + $0x10] sm:$0xf]
      %v735 = vld [vmem:[%s165 + $0x14] sm:$0xf]
      %v736 = vld [vmem:[%s165 + $0x18] sm:$0xf]
      %v737 = vld [vmem:[%s165 + $0x1c] sm:$0xf]
      %v738 = vld [vmem:[%s165 + $0x20] sm:$0xf]
      %v739 = vld [vmem:[%s165 + $0x24] sm:$0xf]
      %v740 = vld [vmem:[%s165 + $0x28] sm:$0xf]
      %v741 = vld [vmem:[%s165 + $0x2c] sm:$0xf]
      %v742 = vld [vmem:[%s165 + $0x30] sm:$0xf]
      %v743 = vld [vmem:[%s165 + $0x34] sm:$0xf]
      %v744 = vld [vmem:[%s165 + $0x38] sm:$0xf]
      %v745 = vld [vmem:[%s165 + $0x3c] sm:$0xf]
      %v746 = vld [vmem:[%s165 + $0x40] sm:$0xf]
      %v747 = vld [vmem:[%s165 + $0x44] sm:$0xf]
      %v748 = vld [vmem:[%s165 + $0x48] sm:$0xf]
      %v749 = vld [vmem:[%s165 + $0x4c] sm:$0xf]
      %v750 = vld [vmem:[%s165 + $0x50] sm:$0xf]
      %v751 = vld [vmem:[%s165 + $0x54] sm:$0xf]
      %v752 = vld [vmem:[%s165 + $0x58] sm:$0xf]
      %v753 = vld [vmem:[%s165 + $0x5c] sm:$0xf]
      %v754 = vld [vmem:[%s165 + $0x60] sm:$0xf]
      %v755 = vld [vmem:[%s165 + $0x64] sm:$0xf]
      %v756 = vld [vmem:[%s165 + $0x68] sm:$0xf]
      %v757 = vld [vmem:[%s165 + $0x6c] sm:$0xf]
      %v758 = vld [vmem:[%s165 + $0x70] sm:$0xf]
      %v759 = vld [vmem:[%s165 + $0x74] sm:$0xf]
      %v760 = vld [vmem:[%s165 + $0x78] sm:$0xf]
      %v761 = vld [vmem:[%s165 + $0x7c] sm:$0xf]
      %v762 = vld [vmem:[%s165 + $0x80] sm:$0xf]
      %v763 = vld [vmem:[%s165 + $0x84] sm:$0xf]
      %v764 = vld [vmem:[%s165 + $0x88] sm:$0xf]
      %v765 = vld [vmem:[%s165 + $0x8c] sm:$0xf]
      %v766 = vld [vmem:[%s165 + $0x90] sm:$0x1]
      %s767 = scalar_lea.vmem %s1, 16
      %v768 = vld [vmem:[%s767] sm:$0xf]
      %v769 = vld [vmem:[%s767 + $0x4] sm:$0x3]
      %v805 = vunpack.c.l.b16 %v732
      %v806 = vunpack.c.l.b16 %v733
      %v807 = vunpack.c.l.b16 %v734
      %v808 = vunpack.c.l.b16 %v735
      %v809 = vunpack.c.l.b16 %v736
      %v810 = vunpack.c.l.b16 %v737
      %v811 = vunpack.c.l.b16 %v738
      %v812 = vunpack.c.l.b16 %v739
      %v813 = vunpack.c.l.b16 %v740
      %v814 = vunpack.c.l.b16 %v741
      %v815 = vunpack.c.l.b16 %v742
      %v816 = vunpack.c.l.b16 %v743
      %v817 = vunpack.c.l.b16 %v744
      %v818 = vunpack.c.l.b16 %v745
      %v819 = vunpack.c.l.b16 %v746
      %v820 = vunpack.c.l.b16 %v747
      %v821 = vunpack.c.l.b16 %v748
      %v822 = vunpack.c.l.b16 %v749
      %v823 = vunpack.c.l.b16 %v750
      %v824 = vunpack.c.l.b16 %v751
      %v825 = vunpack.c.l.b16 %v752
      %v826 = vunpack.c.l.b16 %v753
      %v827 = vunpack.c.l.b16 %v754
      %v828 = vunpack.c.l.b16 %v755
      %v829 = vunpack.c.l.b16 %v756
      %v830 = vunpack.c.l.b16 %v757
      %v831 = vunpack.c.l.b16 %v758
      %v832 = vunpack.c.l.b16 %v759
      %v833 = vunpack.c.l.b16 %v760
      %v834 = vunpack.c.l.b16 %v761
      %v835 = vunpack.c.l.b16 %v762
      %v836 = vunpack.c.l.b16 %v763
      %v837 = vunpack.c.l.b16 %v764
      %v838 = vunpack.c.l.b16 %v765
      %v839 = vunpack.c.l.b16 %v766
      %v840 = vpack.c.b16 %v806, %v805
      %v841 = vpack.c.b16 %v808, %v807
      %v842 = vpack.c.b16 %v810, %v809
      %v843 = vpack.c.b16 %v812, %v811
      %v844 = vpack.c.b16 %v814, %v813
      %v845 = vpack.c.b16 %v816, %v815
      %v846 = vpack.c.b16 %v818, %v817
      %v847 = vpack.c.b16 %v820, %v819
      %v848 = vpack.c.b16 %v822, %v821
      %v849 = vpack.c.b16 %v824, %v823
      %v850 = vpack.c.b16 %v826, %v825
      %v851 = vpack.c.b16 %v828, %v827
      %v852 = vpack.c.b16 %v830, %v829
      %v853 = vpack.c.b16 %v832, %v831
      %v854 = vpack.c.b16 %v834, %v833
      %v855 = vpack.c.b16 %v836, %v835
      %v856 = vpack.c.b16 %v838, %v837
      %v857 = vpack.c.b16 %v839, %v839
      %v859 = vshrl.u32 %v840, 16
      %v861 = vshll.u32 %v840, 16
      %v863 = vrot.slane %v861, 1
      %v864 = vor.u32 %v859, %v863
      %v866 = vshll.u32 %v841, 16
      %v868 = vrot.slane %v866, 1
      %v869 = vsel %vm300, %v864, %v868
      %v870 = vshrl.u32 %v841, 16
      %v872 = vor.u32 %v870, %v868
      %v874 = vshll.u32 %v842, 16
      %v876 = vrot.slane %v874, 1
      %v877 = vsel %vm300, %v872, %v876
      %v878 = vshrl.u32 %v842, 16
      %v880 = vor.u32 %v878, %v876
      %v882 = vshll.u32 %v843, 16
      %v884 = vrot.slane %v882, 1
      %v885 = vsel %vm300, %v880, %v884
      %v886 = vshrl.u32 %v843, 16
      %v888 = vor.u32 %v886, %v884
      %v890 = vshll.u32 %v844, 16
      %v892 = vrot.slane %v890, 1
      %v893 = vsel %vm300, %v888, %v892
      %v894 = vshrl.u32 %v844, 16
      %v896 = vor.u32 %v894, %v892
      %v898 = vshll.u32 %v845, 16
      %v900 = vrot.slane %v898, 1
      %v901 = vsel %vm300, %v896, %v900
      %v902 = vshrl.u32 %v845, 16
      %v904 = vor.u32 %v902, %v900
      %v906 = vshll.u32 %v846, 16
      %v908 = vrot.slane %v906, 1
      %v909 = vsel %vm300, %v904, %v908
      %v910 = vshrl.u32 %v846, 16
      %v912 = vor.u32 %v910, %v908
      %v914 = vshll.u32 %v847, 16
      %v916 = vrot.slane %v914, 1
      %v917 = vsel %vm300, %v912, %v916
      %v918 = vshrl.u32 %v847, 16
      %v920 = vor.u32 %v918, %v916
      %v922 = vshll.u32 %v848, 16
      %v924 = vrot.slane %v922, 1
      %v925 = vsel %vm300, %v920, %v924
      %v926 = vshrl.u32 %v848, 16
      %v928 = vor.u32 %v926, %v924
      %v930 = vshll.u32 %v849, 16
      %v932 = vrot.slane %v930, 1
      %v933 = vsel %vm300, %v928, %v932
      %v934 = vshrl.u32 %v849, 16
      %v936 = vor.u32 %v934, %v932
      %v938 = vshll.u32 %v850, 16
      %v940 = vrot.slane %v938, 1
      %v941 = vsel %vm300, %v936, %v940
      %v942 = vshrl.u32 %v850, 16
      %v944 = vor.u32 %v942, %v940
      %v946 = vshll.u32 %v851, 16
      %v948 = vrot.slane %v946, 1
      %v949 = vsel %vm300, %v944, %v948
      %v950 = vshrl.u32 %v851, 16
      %v952 = vor.u32 %v950, %v948
      %v954 = vshll.u32 %v852, 16
      %v956 = vrot.slane %v954, 1
      %v957 = vsel %vm300, %v952, %v956
      %v958 = vshrl.u32 %v852, 16
      %v960 = vor.u32 %v958, %v956
      %v962 = vshll.u32 %v853, 16
      %v964 = vrot.slane %v962, 1
      %v965 = vsel %vm300, %v960, %v964
      %v966 = vshrl.u32 %v853, 16
      %v968 = vor.u32 %v966, %v964
      %v970 = vshll.u32 %v854, 16
      %v972 = vrot.slane %v970, 1
      %v973 = vsel %vm300, %v968, %v972
      %v974 = vshrl.u32 %v854, 16
      %v976 = vor.u32 %v974, %v972
      %v978 = vshll.u32 %v855, 16
      %v980 = vrot.slane %v978, 1
      %v981 = vsel %vm300, %v976, %v980
      %v982 = vshrl.u32 %v855, 16
      %v984 = vor.u32 %v982, %v980
      %v986 = vshll.u32 %v856, 16
      %v988 = vrot.slane %v986, 1
      %v989 = vsel %vm300, %v984, %v988
      %v990 = vshrl.u32 %v856, 16
      %v992 = vor.u32 %v990, %v988
      %v994 = vshll.u32 %v857, 16
      %v996 = vrot.slane %v994, 1
      %v997 = vsel %vm300, %v992, %v996
      %v1000 = vunpack.c.l.b16 %v768
      %v1001 = vunpack.c.l.b16 %v769
      %v1002 = vpack.c.b16 %v1001, %v1000
      %v1004 = vsel %vm446, %v869, 0
      %v1007 = vsel %vm446, %v877, 0
      %v1010 = vsel %vm446, %v885, 0
      %v1013 = vsel %vm446, %v893, 0
      %v1016 = vsel %vm446, %v901, 0
      %v1019 = vsel %vm446, %v909, 0
      %v1022 = vsel %vm446, %v917, 0
      %v1025 = vsel %vm446, %v925, 0
      %v1028 = vsel %vm446, %v933, 0
      %v1031 = vsel %vm446, %v941, 0
      %v1034 = vsel %vm446, %v949, 0
      %v1037 = vsel %vm446, %v957, 0
      %v1040 = vsel %vm446, %v965, 0
      %v1043 = vsel %vm446, %v973, 0
      %v1046 = vsel %vm446, %v981, 0
      %v1049 = vsel %vm446, %v989, 0
      %v1052 = vsel %vm446, %v997, 0
      %v1055 = vsel %vm498, %v1002, 0
      %1057 = vmatpush.bf16.msra.mxu0 0
      %1058 = vmatpush.bf16.msra.mxu0 0
      %1059 = vmatpush.bf16.msra.mxu0 0
      %1060 = vmatpush.bf16.msra.mxu0 0
      %1061 = vmatpush.bf16.msra.mxu0 0
      %1062 = vmatpush.bf16.msra.mxu0 0
      %1063 = vmatpush.bf16.msra.mxu0 0
      %1064 = vmatpush.bf16.msra.mxu0 %v1055
      %1065 = vmatmul.bf16.gmra.mxu0 %v1004
      %v1066 = vpop.f32.mrf.mxu0
      %v1067 = vadd.f32 0.0, %v1066
      %v1068 = vpop.f32.mrf.mxu0
      %v1069 = vadd.f32 0.0, %v1068
      %1070 = vmatmul.bf16.gmra.mxu0 %v1007
      %v1071 = vpop.f32.mrf.mxu0
      %v1072 = vadd.f32 0.0, %v1071
      %v1073 = vpop.f32.mrf.mxu0
      %v1074 = vadd.f32 0.0, %v1073
      %1075 = vmatmul.bf16.gmra.mxu0 %v1010
      %v1076 = vpop.f32.mrf.mxu0
      %v1077 = vadd.f32 0.0, %v1076
      %v1078 = vpop.f32.mrf.mxu0
      %v1079 = vadd.f32 0.0, %v1078
      %1080 = vmatmul.bf16.gmra.mxu0 %v1013
      %v1081 = vpop.f32.mrf.mxu0
      %v1082 = vadd.f32 0.0, %v1081
      %v1083 = vpop.f32.mrf.mxu0
      %v1084 = vadd.f32 0.0, %v1083
      %1085 = vmatmul.bf16.gmra.mxu0 %v1016
      %v1086 = vpop.f32.mrf.mxu0
      %v1087 = vadd.f32 0.0, %v1086
      %v1088 = vpop.f32.mrf.mxu0
      %v1089 = vadd.f32 0.0, %v1088
      %1090 = vmatmul.bf16.gmra.mxu0 %v1019
      %v1091 = vpop.f32.mrf.mxu0
      %v1092 = vadd.f32 0.0, %v1091
      %v1093 = vpop.f32.mrf.mxu0
      %v1094 = vadd.f32 0.0, %v1093
      %1095 = vmatmul.bf16.gmra.mxu0 %v1022
      %v1096 = vpop.f32.mrf.mxu0
      %v1097 = vadd.f32 0.0, %v1096
      %v1098 = vpop.f32.mrf.mxu0
      %v1099 = vadd.f32 0.0, %v1098
      %1100 = vmatmul.bf16.gmra.mxu0 %v1025
      %v1101 = vpop.f32.mrf.mxu0
      %v1102 = vadd.f32 0.0, %v1101
      %v1103 = vpop.f32.mrf.mxu0
      %v1104 = vadd.f32 0.0, %v1103
      %1105 = vmatmul.bf16.gmra.mxu0 %v1028
      %v1106 = vpop.f32.mrf.mxu0
      %v1107 = vadd.f32 0.0, %v1106
      %v1108 = vpop.f32.mrf.mxu0
      %v1109 = vadd.f32 0.0, %v1108
      %1110 = vmatmul.bf16.gmra.mxu0 %v1031
      %v1111 = vpop.f32.mrf.mxu0
      %v1112 = vadd.f32 0.0, %v1111
      %v1113 = vpop.f32.mrf.mxu0
      %v1114 = vadd.f32 0.0, %v1113
      %1115 = vmatmul.bf16.gmra.mxu0 %v1034
      %v1116 = vpop.f32.mrf.mxu0
      %v1117 = vadd.f32 0.0, %v1116
      %v1118 = vpop.f32.mrf.mxu0
      %v1119 = vadd.f32 0.0, %v1118
      %1120 = vmatmul.bf16.gmra.mxu0 %v1037
      %v1121 = vpop.f32.mrf.mxu0
      %v1122 = vadd.f32 0.0, %v1121
      %v1123 = vpop.f32.mrf.mxu0
      %v1124 = vadd.f32 0.0, %v1123
      %1125 = vmatmul.bf16.gmra.mxu0 %v1040
      %v1126 = vpop.f32.mrf.mxu0
      %v1127 = vadd.f32 0.0, %v1126
      %v1128 = vpop.f32.mrf.mxu0
      %v1129 = vadd.f32 0.0, %v1128
      %1130 = vmatmul.bf16.gmra.mxu0 %v1043
      %v1131 = vpop.f32.mrf.mxu0
      %v1132 = vadd.f32 0.0, %v1131
      %v1133 = vpop.f32.mrf.mxu0
      %v1134 = vadd.f32 0.0, %v1133
      %1135 = vmatmul.bf16.gmra.mxu0 %v1046
      %v1136 = vpop.f32.mrf.mxu0
      %v1137 = vadd.f32 0.0, %v1136
      %v1138 = vpop.f32.mrf.mxu0
      %v1139 = vadd.f32 0.0, %v1138
      %1140 = vmatmul.bf16.gmra.mxu0 %v1049
      %v1141 = vpop.f32.mrf.mxu0
      %v1142 = vadd.f32 0.0, %v1141
      %v1143 = vpop.f32.mrf.mxu0
      %v1144 = vadd.f32 0.0, %v1143
      %1145 = vmatmul.bf16.gmra.mxu0 %v1052
      %v1146 = vpop.f32.mrf.mxu0
      %v1147 = vadd.f32 0.0, %v1146
      %v1148 = vpop.f32.mrf.mxu0
      %v1149 = vadd.f32 0.0, %v1148
      %1150 = vdwg.mxu0
      %v1151 = vadd.f32 %v648, %v1067
      %v1152 = vadd.f32 %v650, %v1069
      %v1153 = vadd.f32 %v653, %v1072
      %v1154 = vadd.f32 %v655, %v1074
      %v1155 = vadd.f32 %v658, %v1077
      %v1156 = vadd.f32 %v660, %v1079
      %v1157 = vadd.f32 %v663, %v1082
      %v1158 = vadd.f32 %v665, %v1084
      %v1159 = vadd.f32 %v668, %v1087
      %v1160 = vadd.f32 %v670, %v1089
      %v1161 = vadd.f32 %v673, %v1092
      %v1162 = vadd.f32 %v675, %v1094
      %v1163 = vadd.f32 %v678, %v1097
      %v1164 = vadd.f32 %v680, %v1099
      %v1165 = vadd.f32 %v683, %v1102
      %v1166 = vadd.f32 %v685, %v1104
      %v1167 = vadd.f32 %v688, %v1107
      %v1168 = vadd.f32 %v690, %v1109
      %v1169 = vadd.f32 %v693, %v1112
      %v1170 = vadd.f32 %v695, %v1114
      %v1171 = vadd.f32 %v698, %v1117
      %v1172 = vadd.f32 %v700, %v1119
      %v1173 = vadd.f32 %v703, %v1122
      %v1174 = vadd.f32 %v705, %v1124
      %v1175 = vadd.f32 %v708, %v1127
      %v1176 = vadd.f32 %v710, %v1129
      %v1177 = vadd.f32 %v713, %v1132
      %v1178 = vadd.f32 %v715, %v1134
      %v1179 = vadd.f32 %v718, %v1137
      %v1180 = vadd.f32 %v720, %v1139
      %v1181 = vadd.f32 %v723, %v1142
      %v1182 = vadd.f32 %v725, %v1144
      %v1183 = vadd.f32 %v728, %v1147
      %v1184 = vadd.f32 %v730, %v1149
      %v1185 = vld [vmem:[%s165 + $0x8] sm:$0xe]
      %s1186 = scalar_lea.vmem %s1, 24
      %v1187 = vld [vmem:[%s1186] sm:$0xf]
      %v1188 = vld [vmem:[%s1186 + $0x4] sm:$0x3]
      %v1190 = vunpack.c.l.b16 %v1185
      %v1191 = vpack.c.b16 %v806, %v1190
      %vm1192 = vcmask 1046528
      %v1193 = vrot.slane %v1191, 1
      %v1194 = vrot.slane %v841, 1
      %v1195 = vsel %vm1192, %v1193, %v1194
      %v1196 = vrot.slane %v842, 1
      %v1197 = vsel %vm1192, %v1194, %v1196
      %v1198 = vrot.slane %v843, 1
      %v1199 = vsel %vm1192, %v1196, %v1198
      %v1200 = vrot.slane %v844, 1
      %v1201 = vsel %vm1192, %v1198, %v1200
      %v1202 = vrot.slane %v845, 1
      %v1203 = vsel %vm1192, %v1200, %v1202
      %v1204 = vrot.slane %v846, 1
      %v1205 = vsel %vm1192, %v1202, %v1204
      %v1206 = vrot.slane %v847, 1
      %v1207 = vsel %vm1192, %v1204, %v1206
      %v1208 = vrot.slane %v848, 1
      %v1209 = vsel %vm1192, %v1206, %v1208
      %v1210 = vrot.slane %v849, 1
      %v1211 = vsel %vm1192, %v1208, %v1210
      %v1212 = vrot.slane %v850, 1
      %v1213 = vsel %vm1192, %v1210, %v1212
      %v1214 = vrot.slane %v851, 1
      %v1215 = vsel %vm1192, %v1212, %v1214
      %v1216 = vrot.slane %v852, 1
      %v1217 = vsel %vm1192, %v1214, %v1216
      %v1218 = vrot.slane %v853, 1
      %v1219 = vsel %vm1192, %v1216, %v1218
      %v1220 = vrot.slane %v854, 1
      %v1221 = vsel %vm1192, %v1218, %v1220
      %v1222 = vrot.slane %v855, 1
      %v1223 = vsel %vm1192, %v1220, %v1222
      %v1224 = vrot.slane %v856, 1
      %v1225 = vsel %vm1192, %v1222, %v1224
      %v1226 = vrot.slane %v857, 1
      %v1227 = vsel %vm1192, %v1224, %v1226
      %v1230 = vunpack.c.l.b16 %v1187
      %v1231 = vunpack.c.l.b16 %v1188
      %v1232 = vpack.c.b16 %v1231, %v1230
      %v1234 = vsel %vm446, %v1195, 0
      %v1237 = vsel %vm446, %v1197, 0
      %v1240 = vsel %vm446, %v1199, 0
      %v1243 = vsel %vm446, %v1201, 0
      %v1246 = vsel %vm446, %v1203, 0
      %v1249 = vsel %vm446, %v1205, 0
      %v1252 = vsel %vm446, %v1207, 0
      %v1255 = vsel %vm446, %v1209, 0
      %v1258 = vsel %vm446, %v1211, 0
      %v1261 = vsel %vm446, %v1213, 0
      %v1264 = vsel %vm446, %v1215, 0
      %v1267 = vsel %vm446, %v1217, 0
      %v1270 = vsel %vm446, %v1219, 0
      %v1273 = vsel %vm446, %v1221, 0
      %v1276 = vsel %vm446, %v1223, 0
      %v1279 = vsel %vm446, %v1225, 0
      %v1282 = vsel %vm446, %v1227, 0
      %v1285 = vsel %vm498, %v1232, 0
      %1287 = vmatpush.bf16.msra.mxu0 0
      %1288 = vmatpush.bf16.msra.mxu0 0
      %1289 = vmatpush.bf16.msra.mxu0 0
      %1290 = vmatpush.bf16.msra.mxu0 0
      %1291 = vmatpush.bf16.msra.mxu0 0
      %1292 = vmatpush.bf16.msra.mxu0 0
      %1293 = vmatpush.bf16.msra.mxu0 0
      %1294 = vmatpush.bf16.msra.mxu0 %v1285
      %1295 = vmatmul.bf16.gmra.mxu0 %v1234
      %v1296 = vpop.f32.mrf.mxu0
      %v1297 = vadd.f32 0.0, %v1296
      %v1298 = vpop.f32.mrf.mxu0
      %v1299 = vadd.f32 0.0, %v1298
      %1300 = vmatmul.bf16.gmra.mxu0 %v1237
      %v1301 = vpop.f32.mrf.mxu0
      %v1302 = vadd.f32 0.0, %v1301
      %v1303 = vpop.f32.mrf.mxu0
      %v1304 = vadd.f32 0.0, %v1303
      %1305 = vmatmul.bf16.gmra.mxu0 %v1240
      %v1306 = vpop.f32.mrf.mxu0
      %v1307 = vadd.f32 0.0, %v1306
      %v1308 = vpop.f32.mrf.mxu0
      %v1309 = vadd.f32 0.0, %v1308
      %1310 = vmatmul.bf16.gmra.mxu0 %v1243
      %v1311 = vpop.f32.mrf.mxu0
      %v1312 = vadd.f32 0.0, %v1311
      %v1313 = vpop.f32.mrf.mxu0
      %v1314 = vadd.f32 0.0, %v1313
      %1315 = vmatmul.bf16.gmra.mxu0 %v1246
      %v1316 = vpop.f32.mrf.mxu0
      %v1317 = vadd.f32 0.0, %v1316
      %v1318 = vpop.f32.mrf.mxu0
      %v1319 = vadd.f32 0.0, %v1318
      %1320 = vmatmul.bf16.gmra.mxu0 %v1249
      %v1321 = vpop.f32.mrf.mxu0
      %v1322 = vadd.f32 0.0, %v1321
      %v1323 = vpop.f32.mrf.mxu0
      %v1324 = vadd.f32 0.0, %v1323
      %1325 = vmatmul.bf16.gmra.mxu0 %v1252
      %v1326 = vpop.f32.mrf.mxu0
      %v1327 = vadd.f32 0.0, %v1326
      %v1328 = vpop.f32.mrf.mxu0
      %v1329 = vadd.f32 0.0, %v1328
      %1330 = vmatmul.bf16.gmra.mxu0 %v1255
      %v1331 = vpop.f32.mrf.mxu0
      %v1332 = vadd.f32 0.0, %v1331
      %v1333 = vpop.f32.mrf.mxu0
      %v1334 = vadd.f32 0.0, %v1333
      %1335 = vmatmul.bf16.gmra.mxu0 %v1258
      %v1336 = vpop.f32.mrf.mxu0
      %v1337 = vadd.f32 0.0, %v1336
      %v1338 = vpop.f32.mrf.mxu0
      %v1339 = vadd.f32 0.0, %v1338
      %1340 = vmatmul.bf16.gmra.mxu0 %v1261
      %v1341 = vpop.f32.mrf.mxu0
      %v1342 = vadd.f32 0.0, %v1341
      %v1343 = vpop.f32.mrf.mxu0
      %v1344 = vadd.f32 0.0, %v1343
      %1345 = vmatmul.bf16.gmra.mxu0 %v1264
      %v1346 = vpop.f32.mrf.mxu0
      %v1347 = vadd.f32 0.0, %v1346
      %v1348 = vpop.f32.mrf.mxu0
      %v1349 = vadd.f32 0.0, %v1348
      %1350 = vmatmul.bf16.gmra.mxu0 %v1267
      %v1351 = vpop.f32.mrf.mxu0
      %v1352 = vadd.f32 0.0, %v1351
      %v1353 = vpop.f32.mrf.mxu0
      %v1354 = vadd.f32 0.0, %v1353
      %1355 = vmatmul.bf16.gmra.mxu0 %v1270
      %v1356 = vpop.f32.mrf.mxu0
      %v1357 = vadd.f32 0.0, %v1356
      %v1358 = vpop.f32.mrf.mxu0
      %v1359 = vadd.f32 0.0, %v1358
      %1360 = vmatmul.bf16.gmra.mxu0 %v1273
      %v1361 = vpop.f32.mrf.mxu0
      %v1362 = vadd.f32 0.0, %v1361
      %v1363 = vpop.f32.mrf.mxu0
      %v1364 = vadd.f32 0.0, %v1363
      %1365 = vmatmul.bf16.gmra.mxu0 %v1276
      %v1366 = vpop.f32.mrf.mxu0
      %v1367 = vadd.f32 0.0, %v1366
      %v1368 = vpop.f32.mrf.mxu0
      %v1369 = vadd.f32 0.0, %v1368
      %1370 = vmatmul.bf16.gmra.mxu0 %v1279
      %v1371 = vpop.f32.mrf.mxu0
      %v1372 = vadd.f32 0.0, %v1371
      %v1373 = vpop.f32.mrf.mxu0
      %v1374 = vadd.f32 0.0, %v1373
      %1375 = vmatmul.bf16.gmra.mxu0 %v1282
      %v1376 = vpop.f32.mrf.mxu0
      %v1377 = vadd.f32 0.0, %v1376
      %v1378 = vpop.f32.mrf.mxu0
      %v1379 = vadd.f32 0.0, %v1378
      %1380 = vdwg.mxu0
      %v1381 = vadd.f32 %v1151, %v1297
      %v1382 = vadd.f32 %v1152, %v1299
      %v1383 = vadd.f32 %v1153, %v1302
      %v1384 = vadd.f32 %v1154, %v1304
      %v1385 = vadd.f32 %v1155, %v1307
      %v1386 = vadd.f32 %v1156, %v1309
      %v1387 = vadd.f32 %v1157, %v1312
      %v1388 = vadd.f32 %v1158, %v1314
      %v1389 = vadd.f32 %v1159, %v1317
      %v1390 = vadd.f32 %v1160, %v1319
      %v1391 = vadd.f32 %v1161, %v1322
      %v1392 = vadd.f32 %v1162, %v1324
      %v1393 = vadd.f32 %v1163, %v1327
      %v1394 = vadd.f32 %v1164, %v1329
      %v1395 = vadd.f32 %v1165, %v1332
      %v1396 = vadd.f32 %v1166, %v1334
      %v1397 = vadd.f32 %v1167, %v1337
      %v1398 = vadd.f32 %v1168, %v1339
      %v1399 = vadd.f32 %v1169, %v1342
      %v1400 = vadd.f32 %v1170, %v1344
      %v1401 = vadd.f32 %v1171, %v1347
      %v1402 = vadd.f32 %v1172, %v1349
      %v1403 = vadd.f32 %v1173, %v1352
      %v1404 = vadd.f32 %v1174, %v1354
      %v1405 = vadd.f32 %v1175, %v1357
      %v1406 = vadd.f32 %v1176, %v1359
      %v1407 = vadd.f32 %v1177, %v1362
      %v1408 = vadd.f32 %v1178, %v1364
      %v1409 = vadd.f32 %v1179, %v1367
      %v1410 = vadd.f32 %v1180, %v1369
      %v1411 = vadd.f32 %v1181, %v1372
      %v1412 = vadd.f32 %v1182, %v1374
      %v1413 = vadd.f32 %v1183, %v1377
      %v1414 = vadd.f32 %v1184, %v1379
      %v1415 = vld [vmem:[%s2] sm:$0x1]
      %v1417 = vperm.slane %v1415, 0
      %v1419 = vadd.f32 %v1381, %v1417
      %v1420 = vadd.f32 %v1382, %v1417
      %v1421 = vadd.f32 %v1383, %v1417
      %v1422 = vadd.f32 %v1384, %v1417
      %v1423 = vadd.f32 %v1385, %v1417
      %v1424 = vadd.f32 %v1386, %v1417
      %v1425 = vadd.f32 %v1387, %v1417
      %v1426 = vadd.f32 %v1388, %v1417
      %v1427 = vadd.f32 %v1389, %v1417
      %v1428 = vadd.f32 %v1390, %v1417
      %v1429 = vadd.f32 %v1391, %v1417
      %v1430 = vadd.f32 %v1392, %v1417
      %v1431 = vadd.f32 %v1393, %v1417
      %v1432 = vadd.f32 %v1394, %v1417
      %v1433 = vadd.f32 %v1395, %v1417
      %v1434 = vadd.f32 %v1396, %v1417
      %v1435 = vadd.f32 %v1397, %v1417
      %v1436 = vadd.f32 %v1398, %v1417
      %v1437 = vadd.f32 %v1399, %v1417
      %v1438 = vadd.f32 %v1400, %v1417
      %v1439 = vadd.f32 %v1401, %v1417
      %v1440 = vadd.f32 %v1402, %v1417
      %v1441 = vadd.f32 %v1403, %v1417
      %v1442 = vadd.f32 %v1404, %v1417
      %v1443 = vadd.f32 %v1405, %v1417
      %v1444 = vadd.f32 %v1406, %v1417
      %v1445 = vadd.f32 %v1407, %v1417
      %v1446 = vadd.f32 %v1408, %v1417
      %v1447 = vadd.f32 %v1409, %v1417
      %v1448 = vadd.f32 %v1410, %v1417
      %v1449 = vadd.f32 %v1411, %v1417
      %v1450 = vadd.f32 %v1412, %v1417
      %v1451 = vadd.f32 %v1413, %v1417
      %v1452 = vadd.f32 %v1414, %v1417
      %v1453 = vmax.f32 %v1419, 0.0
      %v1454 = vmax.f32 %v1420, 0.0
      %v1455 = vmax.f32 %v1421, 0.0
      %v1456 = vmax.f32 %v1422, 0.0
      %v1457 = vmax.f32 %v1423, 0.0
      %v1458 = vmax.f32 %v1424, 0.0
      %v1459 = vmax.f32 %v1425, 0.0
      %v1460 = vmax.f32 %v1426, 0.0
      %v1461 = vmax.f32 %v1427, 0.0
      %v1462 = vmax.f32 %v1428, 0.0
      %v1463 = vmax.f32 %v1429, 0.0
      %v1464 = vmax.f32 %v1430, 0.0
      %v1465 = vmax.f32 %v1431, 0.0
      %v1466 = vmax.f32 %v1432, 0.0
      %v1467 = vmax.f32 %v1433, 0.0
      %v1468 = vmax.f32 %v1434, 0.0
      %v1469 = vmax.f32 %v1435, 0.0
      %v1470 = vmax.f32 %v1436, 0.0
      %v1471 = vmax.f32 %v1437, 0.0
      %v1472 = vmax.f32 %v1438, 0.0
      %v1473 = vmax.f32 %v1439, 0.0
      %v1474 = vmax.f32 %v1440, 0.0
      %v1475 = vmax.f32 %v1441, 0.0
      %v1476 = vmax.f32 %v1442, 0.0
      %v1477 = vmax.f32 %v1443, 0.0
      %v1478 = vmax.f32 %v1444, 0.0
      %v1479 = vmax.f32 %v1445, 0.0
      %v1480 = vmax.f32 %v1446, 0.0
      %v1481 = vmax.f32 %v1447, 0.0
      %v1482 = vmax.f32 %v1448, 0.0
      %v1483 = vmax.f32 %v1449, 0.0
      %v1484 = vmax.f32 %v1450, 0.0
      %v1485 = vmax.f32 %v1451, 0.0
      %v1486 = vmax.f32 %v1452, 0.0
      %v1487 = vpack.c.bf16 %v1453, %v1453
      %v1488 = vpack.c.bf16 %v1454, %v1454
      %v1489 = vpack.c.bf16 %v1455, %v1455
      %v1490 = vpack.c.bf16 %v1456, %v1456
      %v1491 = vpack.c.bf16 %v1457, %v1457
      %v1492 = vpack.c.bf16 %v1458, %v1458
      %v1493 = vpack.c.bf16 %v1459, %v1459
      %v1494 = vpack.c.bf16 %v1460, %v1460
      %v1495 = vpack.c.bf16 %v1461, %v1461
      %v1496 = vpack.c.bf16 %v1462, %v1462
      %v1497 = vpack.c.bf16 %v1463, %v1463
      %v1498 = vpack.c.bf16 %v1464, %v1464
      %v1499 = vpack.c.bf16 %v1465, %v1465
      %v1500 = vpack.c.bf16 %v1466, %v1466
      %v1501 = vpack.c.bf16 %v1467, %v1467
      %v1502 = vpack.c.bf16 %v1468, %v1468
      %v1503 = vpack.c.bf16 %v1469, %v1469
      %v1504 = vpack.c.bf16 %v1470, %v1470
      %v1505 = vpack.c.bf16 %v1471, %v1471
      %v1506 = vpack.c.bf16 %v1472, %v1472
      %v1507 = vpack.c.bf16 %v1473, %v1473
      %v1508 = vpack.c.bf16 %v1474, %v1474
      %v1509 = vpack.c.bf16 %v1475, %v1475
      %v1510 = vpack.c.bf16 %v1476, %v1476
      %v1511 = vpack.c.bf16 %v1477, %v1477
      %v1512 = vpack.c.bf16 %v1478, %v1478
      %v1513 = vpack.c.bf16 %v1479, %v1479
      %v1514 = vpack.c.bf16 %v1480, %v1480
      %v1515 = vpack.c.bf16 %v1481, %v1481
      %v1516 = vpack.c.bf16 %v1482, %v1482
      %v1517 = vpack.c.bf16 %v1483, %v1483
      %v1518 = vpack.c.bf16 %v1484, %v1484
      %v1519 = vpack.c.bf16 %v1485, %v1485
      %v1520 = vpack.c.bf16 %v1486, %v1486
      %vm1521 = vcmask 125952
      %1522 = vst.msk [vmem:[%s170] sm:$0xf] %vm1521, %v1487
      %1523 = vst.msk [vmem:[%s170 + $0x4] sm:$0xf] %vm1521, %v1488
      %1524 = vst.msk [vmem:[%s170 + $0x8] sm:$0xf] %vm1521, %v1489
      %1525 = vst.msk [vmem:[%s170 + $0xc] sm:$0xf] %vm1521, %v1490
      %1526 = vst.msk [vmem:[%s170 + $0x10] sm:$0xf] %vm1521, %v1491
      %1527 = vst.msk [vmem:[%s170 + $0x14] sm:$0xf] %vm1521, %v1492
      %1528 = vst.msk [vmem:[%s170 + $0x18] sm:$0xf] %vm1521, %v1493
      %1529 = vst.msk [vmem:[%s170 + $0x1c] sm:$0xf] %vm1521, %v1494
      %1530 = vst.msk [vmem:[%s170 + $0x20] sm:$0xf] %vm1521, %v1495
      %1531 = vst.msk [vmem:[%s170 + $0x24] sm:$0xf] %vm1521, %v1496
      %1532 = vst.msk [vmem:[%s170 + $0x28] sm:$0xf] %vm1521, %v1497
      %1533 = vst.msk [vmem:[%s170 + $0x2c] sm:$0xf] %vm1521, %v1498
      %1534 = vst.msk [vmem:[%s170 + $0x30] sm:$0xf] %vm1521, %v1499
      %1535 = vst.msk [vmem:[%s170 + $0x34] sm:$0xf] %vm1521, %v1500
      %1536 = vst.msk [vmem:[%s170 + $0x38] sm:$0xf] %vm1521, %v1501
      %1537 = vst.msk [vmem:[%s170 + $0x3c] sm:$0xf] %vm1521, %v1502
      %1538 = vst.msk [vmem:[%s170 + $0x40] sm:$0xf] %vm1521, %v1503
      %1539 = vst.msk [vmem:[%s170 + $0x44] sm:$0xf] %vm1521, %v1504
      %1540 = vst.msk [vmem:[%s170 + $0x48] sm:$0xf] %vm1521, %v1505
      %1541 = vst.msk [vmem:[%s170 + $0x4c] sm:$0xf] %vm1521, %v1506
      %1542 = vst.msk [vmem:[%s170 + $0x50] sm:$0xf] %vm1521, %v1507
      %1543 = vst.msk [vmem:[%s170 + $0x54] sm:$0xf] %vm1521, %v1508
      %1544 = vst.msk [vmem:[%s170 + $0x58] sm:$0xf] %vm1521, %v1509
      %1545 = vst.msk [vmem:[%s170 + $0x5c] sm:$0xf] %vm1521, %v1510
      %1546 = vst.msk [vmem:[%s170 + $0x60] sm:$0xf] %vm1521, %v1511
      %1547 = vst.msk [vmem:[%s170 + $0x64] sm:$0xf] %vm1521, %v1512
      %1548 = vst.msk [vmem:[%s170 + $0x68] sm:$0xf] %vm1521, %v1513
      %1549 = vst.msk [vmem:[%s170 + $0x6c] sm:$0xf] %vm1521, %v1514
      %1550 = vst.msk [vmem:[%s170 + $0x70] sm:$0xf] %vm1521, %v1515
      %1551 = vst.msk [vmem:[%s170 + $0x74] sm:$0xf] %vm1521, %v1516
      %1552 = vst.msk [vmem:[%s170 + $0x78] sm:$0xf] %vm1521, %v1517
      %1553 = vst.msk [vmem:[%s170 + $0x7c] sm:$0xf] %vm1521, %v1518
      %1554 = vst.msk [vmem:[%s170 + $0x80] sm:$0xf] %vm1521, %v1519
      %1555 = vst.msk [vmem:[%s170 + $0x84] sm:$0xf] %vm1521, %v1520
      %p1556 = scmp.lt.s32.totalorder %s14, 1
      %s1557 = scalar_select %p1556, %s14, 1
      %s1558 = smul.addr %s1557, 34
      %s1559 = smul.addr %s1558, 4
      %s1560 = scalar_lea.vmem %s3, %s1559
      // Predicated region
      $region33: #{higher_hrnet_forward.16} parent=31 // pred_check
        %p1561 = pneg %p100
      $region34: #{higher_hrnet_forward.16} parent=31 // pred_check_branch
        %1563 = sbr.rel (%p1561) target = $region36
      $region35: #{higher_hrnet_forward.16} parent=31 // pred_region
        _
      $region36: #{higher_hrnet_forward.16} parent=31 // pred_fallthru
        _
    $region32: #{higher_hrnet_forward.16} parent=5 // pred_fallthru
      _
    %p1564 = scmp.le.s32.totalorder 2, %s9
    // Predicated region
    $region37: #{higher_hrnet_forward.16} parent=5 // pred_check
      %p1565 = pneg %p1564
    $region38: #{higher_hrnet_forward.16} parent=5 // pred_check_branch
      %1567 = sbr.rel (%p1565) target = $region40
    $region39: #{higher_hrnet_forward.16} parent=5 // pred_region
      %s1568 = ssub.s32 %s9, 2
      // Predicated region
      $region41: #{higher_hrnet_forward.16} parent=39 // pred_check
        %p1569 = pneg %p106
      $region42: #{higher_hrnet_forward.16} parent=39 // pred_check_branch
        %1571 = sbr.rel (%p1569) target = $region44
      $region43: #{higher_hrnet_forward.16} parent=39 // pred_region
        %p1572 = scmp.lt.s32.totalorder %s15, 1
        %s1573 = scalar_select %p1572, %s15, 1
        %s1574 = smul.addr %s1573, 34
        %s1575 = smul.addr %s1574, 4
        %s1576 = scalar_lea.vmem %s3, %s1575
      $region44: #{higher_hrnet_forward.16} parent=39 // pred_fallthru
        _
    $region40: #{higher_hrnet_forward.16} parent=5 // pred_fallthru
      _
  $region6: #{higher_hrnet_forward.16} parent=0 // loop_footer
    %s13 = sadd.s32 1, %s9
  $region7: #{higher_hrnet_forward.16} parent=0 // loop_footer_branch
    %8 = sbr.rel target = $region3
  $region8: #{higher_hrnet_forward.16} parent=0 // loop_exit
    _

// kernel: higher_hrnet_forward.17
$region0: #{higher_hrnet_forward.17}
  #allocation0 [shape = 'u32[]', space=smem, size = 0x4, offset = 0x4, fixed_abs, tag = 'smem constant byte address 0x4 - core index']
  #allocation1 [shape = 'u32[72,128]{1,0:T(1,128)}', space=vmem, size = 0x9000, scoped, tag = 'internal scratch']
  %s0 = inlined_call_operand.vmem [shape: bf16[2,88,64], index: 0, kind: input, shape index: {}]
  %s1 = inlined_call_operand.vmem [shape: bf16[4,64,16], index: 1, kind: input, shape index: {}]
  %s2 = inlined_call_operand.vmem [shape: f32[1,16], index: 2, kind: input, shape index: {}]
  %s3 = inlined_call_operand.vmem [shape: bf16[2,72,16], index: 3, kind: output, shape index: {}]
  %s4 = sld [smem:[#allocation0]]
  $region45: #{higher_hrnet_forward.17} parent=0
    _
  %s6 = ssub.s32 1, %s4
  %s7 = scalar_select 0, %s6, %s4
  loop: start=0, step=1, limit=4
  $region2: #{higher_hrnet_forward.17} parent=0 // loop_pre_header
    _
  $region3: #{higher_hrnet_forward.17} parent=0 // loop_header
    %s9 = sphi 0, %s13
    %p10 = scmp.ge.s32.totalorder %s9, 4
    %s19 = sphi 0, %s21
    %s22 = sphi 0, %s19
    %s23 = sphi 0, %s22
    %s39 = sphi 0, %s23
    %s43 = sphi 0, %s43
    %s45 = sphi 0, %s43
    %s46 = sphi 0, %s45
    %s60 = sphi 0, %s46
    %s64 = sphi 0, %s64
    %s66 = sphi 0, %s64
    %s67 = sphi 0, %s66
    %s81 = sphi 0, %s67
    %s87 = sphi 0, %s89
    %s90 = sphi 0, %s87
    %s91 = sphi 0, %s90
    %s107 = sphi 0, %s91
  $region4: #{higher_hrnet_forward.17} parent=0 // loop_header_branch
    %12 = sbr.rel (%p10) target = $region8
  $region5: #{higher_hrnet_forward.17} parent=0 // loop_body
    %s14 = ssub.s32 %s9, 1
    %s15 = ssub.s32 %s9, 2
    %s16 = sadd.s32 %s9, 1
    %s17 = ssub.s32 %s9, %s16
    %p18 = scmp.eq.s32.totalorder %s17, 0
    %s20 = sadd.s32 %s19, 1
    %s21 = scalar_select %p18, %s19, %s20
    %p24 = pneg %p18
    %p25 = scmp.eq.s32.totalorder %s9, 1
    %p26 = por %p24, %p25
    %p27 = scmp.ne.s32.totalorder %s19, %s22
    %p28 = scmp.eq.s32.totalorder %s9, 0
    %p29 = por %p27, %p28
    %p30 = scmp.ne.s32.totalorder %s19, %s22
    %p31 = scmp.eq.s32.totalorder %s14, 1
    %p32 = por %p30, %p31
    %p33 = scmp.ne.s32.totalorder %s22, %s23
    %p34 = scmp.eq.s32.totalorder %s14, 0
    %p35 = por %p33, %p34
    %p36 = scmp.ne.s32.totalorder %s22, %s23
    %p37 = scmp.eq.s32.totalorder %s15, 1
    %p38 = por %p36, %p37
    %p40 = scmp.ne.s32.totalorder %s23, %s39
    %p41 = scmp.eq.s32.totalorder %s15, 0
    %p42 = por %p40, %p41
    %s44 = sadd.s32 %s43, 1
    %p47 = scmp.eq.s32.totalorder %s9, 1
    %p48 = scmp.ne.s32.totalorder %s43, %s45
    %p49 = scmp.eq.s32.totalorder %s9, 0
    %p50 = por %p48, %p49
    %p51 = scmp.ne.s32.totalorder %s43, %s45
    %p52 = scmp.eq.s32.totalorder %s14, 1
    %p53 = por %p51, %p52
    %p54 = scmp.ne.s32.totalorder %s45, %s46
    %p55 = scmp.eq.s32.totalorder %s14, 0
    %p56 = por %p54, %p55
    %p57 = scmp.ne.s32.totalorder %s45, %s46
    %p58 = scmp.eq.s32.totalorder %s15, 1
    %p59 = por %p57, %p58
    %p61 = scmp.ne.s32.totalorder %s46, %s60
    %p62 = scmp.eq.s32.totalorder %s15, 0
    %p63 = por %p61, %p62
    %s65 = sadd.s32 %s64, 1
    %p68 = scmp.eq.s32.totalorder %s9, 1
    %p69 = scmp.ne.s32.totalorder %s64, %s66
    %p70 = scmp.eq.s32.totalorder %s9, 0
    %p71 = por %p69, %p70
    %p72 = scmp.ne.s32.totalorder %s64, %s66
    %p73 = scmp.eq.s32.totalorder %s14, 1
    %p74 = por %p72, %p73
    %p75 = scmp.ne.s32.totalorder %s66, %s67
    %p76 = scmp.eq.s32.totalorder %s14, 0
    %p77 = por %p75, %p76
    %p78 = scmp.ne.s32.totalorder %s66, %s67
    %p79 = scmp.eq.s32.totalorder %s15, 1
    %p80 = por %p78, %p79
    %p82 = scmp.ne.s32.totalorder %s67, %s81
    %p83 = scmp.eq.s32.totalorder %s15, 0
    %p84 = por %p82, %p83
    %s85 = ssub.s32 %s9, %s16
    %p86 = scmp.eq.s32.totalorder %s85, 0
    %s88 = sadd.s32 %s87, 1
    %s89 = scalar_select %p86, %s87, %s88
    %p92 = pneg %p86
    %p93 = scmp.eq.s32.totalorder %s9, 1
    %p94 = por %p92, %p93
    %p95 = scmp.ne.s32.totalorder %s87, %s90
    %p96 = scmp.eq.s32.totalorder %s9, 0
    %p97 = por %p95, %p96
    %p98 = scmp.ne.s32.totalorder %s87, %s90
    %p99 = scmp.eq.s32.totalorder %s14, 1
    %p100 = por %p98, %p99
    %p101 = scmp.ne.s32.totalorder %s90, %s91
    %p102 = scmp.eq.s32.totalorder %s14, 0
    %p103 = por %p101, %p102
    %p104 = scmp.ne.s32.totalorder %s90, %s91
    %p105 = scmp.eq.s32.totalorder %s15, 1
    %p106 = por %p104, %p105
    %p108 = scmp.ne.s32.totalorder %s91, %s107
    %p109 = scmp.eq.s32.totalorder %s15, 0
    %p110 = por %p108, %p109
    %p111 = scmp.le.s32.totalorder 1, %s9
    %p112 = scmp.lt.s32.totalorder %s9, 3
    %p113 = pnand %p111, %p112
    %p114 = pneg %p113
    // Predicated region
    $region9: #{higher_hrnet_forward.17} parent=5 // pred_check
      _
    $region10: #{higher_hrnet_forward.17} parent=5 // pred_check_branch
      %116 = sbr.rel (%p113) target = $region12
    $region11: #{higher_hrnet_forward.17} parent=5 // pred_region
      %s117 = ssub.s32 %s9, 1
      // Predicated region
      $region13: #{higher_hrnet_forward.17} parent=11 // pred_check
        %p118 = pneg %p56
      $region14: #{higher_hrnet_forward.17} parent=11 // pred_check_branch
        %120 = sbr.rel (%p118) target = $region16
      $region15: #{higher_hrnet_forward.17} parent=11 // pred_region
        _
      $region16: #{higher_hrnet_forward.17} parent=11 // pred_fallthru
        _
      // Predicated region
      $region17: #{higher_hrnet_forward.17} parent=11 // pred_check
        %p121 = pneg %p77
      $region18: #{higher_hrnet_forward.17} parent=11 // pred_check_branch
        %123 = sbr.rel (%p121) target = $region20
      $region19: #{higher_hrnet_forward.17} parent=11 // pred_region
        _
      $region20: #{higher_hrnet_forward.17} parent=11 // pred_fallthru
        _
    $region12: #{higher_hrnet_forward.17} parent=5 // pred_fallthru
      _
    %p124 = scmp.lt.s32.totalorder %s9, 2
    // Predicated region
    $region21: #{higher_hrnet_forward.17} parent=5 // pred_check
      %p125 = pneg %p124
    $region22: #{higher_hrnet_forward.17} parent=5 // pred_check_branch
      %127 = sbr.rel (%p125) target = $region24
    $region23: #{higher_hrnet_forward.17} parent=5 // pred_region
      // Predicated region
      $region25: #{higher_hrnet_forward.17} parent=23 // pred_check
        %p128 = pneg %p29
      $region26: #{higher_hrnet_forward.17} parent=23 // pred_check_branch
        %130 = sbr.rel (%p128) target = $region28
      $region27: #{higher_hrnet_forward.17} parent=23 // pred_region
        %p131 = scmp.lt.s32.totalorder %s9, 1
        %s132 = scalar_select %p131, %s9, 1
        %s133 = smul.addr %s132, 11
        %s134 = smul.addr %s133, 4
        %s135 = scalar_lea.vmem %s0, %s134
      $region28: #{higher_hrnet_forward.17} parent=23 // pred_fallthru
        _
    $region24: #{higher_hrnet_forward.17} parent=5 // pred_fallthru
      _
    %p136 = scmp.le.s32.totalorder 1, %s9
    %p137 = scmp.lt.s32.totalorder %s9, 3
    %p138 = pnand %p136, %p137
    %p139 = pneg %p138
    // Predicated region
    $region29: #{higher_hrnet_forward.17} parent=5 // pred_check
      _
    $region30: #{higher_hrnet_forward.17} parent=5 // pred_check_branch
      %141 = sbr.rel (%p138) target = $region32
    $region31: #{higher_hrnet_forward.17} parent=5 // pred_region
      %s142 = ssub.s32 %s9, 1
      %p143 = scmp.lt.s32.totalorder %s14, 1
      %s144 = scalar_select %p143, %s14, 1
      %s145 = smul.addr %s144, 11
      %s146 = smul.addr %s145, 4
      %s147 = scalar_lea.vmem %s0, %s146
      %p148 = pneg %p35
      %p149 = pneg %p32
      %p150 = pneg %p56
      %p151 = pneg %p53
      %p152 = pneg %p77
      %p153 = pneg %p74
      %p154 = pneg %p103
      %p155 = pneg %p100
      %p156 = scmp.lt.s32.totalorder %s14, 1
      %s157 = scalar_select %p156, %s14, 1
      %s158 = smul.addr %s157, 9
      %s159 = smul.addr %s158, 4
      %s160 = scalar_lea.vmem %s3, %s159
      %p161 = scmp.lt.s32.totalorder %s14, 1
      %s162 = scalar_select %p161, %s14, 1
      %s163 = smul.addr %s162, 11
      %s164 = smul.addr %s163, 4
      %s165 = scalar_lea.vmem %s0, %s164
      %p166 = scmp.lt.s32.totalorder %s14, 1
      %s167 = scalar_select %p166, %s14, 1
      %s168 = smul.addr %s167, 9
      %s169 = smul.addr %s168, 4
      %s170 = scalar_lea.vmem %s3, %s169
      %v172 = vld [vmem:[%s165] sm:$0xf]
      %v173 = vld [vmem:[%s165 + $0x4] sm:$0xf]
      %v174 = vld [vmem:[%s165 + $0x8] sm:$0xf]
      %v175 = vld [vmem:[%s165 + $0xc] sm:$0xf]
      %v176 = vld [vmem:[%s165 + $0x10] sm:$0xf]
      %v177 = vld [vmem:[%s165 + $0x14] sm:$0xf]
      %v178 = vld [vmem:[%s165 + $0x18] sm:$0xf]
      %v179 = vld [vmem:[%s165 + $0x1c] sm:$0xf]
      %v180 = vld [vmem:[%s165 + $0x20] sm:$0xf]
      %v181 = vld [vmem:[%s1] sm:$0xf]
      %v182 = vld [vmem:[%s1 + $0x4] sm:$0xf]
      %v183 = vld [vmem:[%s1 + $0x8] sm:$0xf]
      %v184 = vld [vmem:[%s1 + $0xc] sm:$0xf]
      %v185 = vld [vmem:[%s1 + $0x10] sm:$0xf]
      %v186 = vld [vmem:[%s1 + $0x14] sm:$0xf]
      %v187 = vld [vmem:[%s1 + $0x18] sm:$0xf]
      %v188 = vld [vmem:[%s1 + $0x1c] sm:$0xf]
      %v189 = vld [vmem:[%s165 + $0x24] sm:$0x1]
      %s190 = scalar_lea.vmem %s1, 32
      %v191 = vld [vmem:[%s190] sm:$0xf]
      %v192 = vld [vmem:[%s190 + $0x4] sm:$0xf]
      %v193 = vld [vmem:[%s190 + $0x8] sm:$0xf]
      %v194 = vld [vmem:[%s190 + $0xc] sm:$0xf]
      %v195 = vld [vmem:[%s190 + $0x10] sm:$0xf]
      %v196 = vld [vmem:[%s190 + $0x14] sm:$0xf]
      %v197 = vld [vmem:[%s190 + $0x18] sm:$0xf]
      %v198 = vld [vmem:[%s190 + $0x1c] sm:$0xf]
      %v209 = vunpack.c.l.b16 %v172
      %v210 = vunpack.c.l.b16 %v173
      %v211 = vunpack.c.l.b16 %v174
      %v212 = vunpack.c.l.b16 %v175
      %v213 = vunpack.c.l.b16 %v176
      %v214 = vunpack.c.l.b16 %v177
      %v215 = vunpack.c.l.b16 %v178
      %v216 = vunpack.c.l.b16 %v179
      %v217 = vunpack.c.l.b16 %v180
      %v218 = vunpack.c.l.b16 %v189
      %v219 = vpack.c.b16 %v210, %v209
      %v220 = vpack.c.b16 %v212, %v211
      %v221 = vpack.c.b16 %v214, %v213
      %v222 = vpack.c.b16 %v216, %v215
      %v223 = vpack.c.b16 %v218, %v217
      %vm224 = vsmask.f32 7424
      %v226 = vshrl.u32 %v219, 16
      %v228 = vshll.u32 %v219, 16
      %v230 = vrot.slane %v228, 1
      %v231 = vor.u32 %v226, %v230
      %v233 = vshll.u32 %v220, 16
      %v235 = vrot.slane %v233, 1
      %v236 = vsel %vm224, %v231, %v235
      %v237 = vshrl.u32 %v220, 16
      %v239 = vor.u32 %v237, %v235
      %v241 = vshll.u32 %v221, 16
      %v243 = vrot.slane %v241, 1
      %v244 = vsel %vm224, %v239, %v243
      %v245 = vshrl.u32 %v221, 16
      %v247 = vor.u32 %v245, %v243
      %v249 = vshll.u32 %v222, 16
      %v251 = vrot.slane %v249, 1
      %v252 = vsel %vm224, %v247, %v251
      %v253 = vshrl.u32 %v222, 16
      %v255 = vor.u32 %v253, %v251
      %v257 = vshll.u32 %v223, 16
      %v259 = vrot.slane %v257, 1
      %v260 = vsel %vm224, %v255, %v259
      %v261 = vshrl.u32 %v223, 16
      %v263 = vor.u32 %v261, %v259
      %v272 = vunpack.c.l.b16 %v191
      %v273 = vunpack.c.l.b16 %v192
      %v274 = vunpack.c.l.b16 %v193
      %v275 = vunpack.c.l.b16 %v194
      %v276 = vunpack.c.l.b16 %v195
      %v277 = vunpack.c.l.b16 %v196
      %v278 = vunpack.c.l.b16 %v197
      %v279 = vunpack.c.l.b16 %v198
      %v280 = vpack.c.b16 %v273, %v272
      %v281 = vpack.c.b16 %v275, %v274
      %v282 = vpack.c.b16 %v277, %v276
      %v283 = vpack.c.b16 %v279, %v278
      %vm288 = vcmask 523264
      %v290 = vsel %vm288, %v236, 0
      %v293 = vsel %vm288, %v244, 0
      %v296 = vsel %vm288, %v252, 0
      %v299 = vsel %vm288, %v260, 0
      %v302 = vsel %vm288, %v263, 0
      %304 = vmatpush.bf16.msra.mxu0 0
      %305 = vmatpush.bf16.msra.mxu0 0
      %306 = vmatpush.bf16.msra.mxu0 0
      %307 = vmatpush.bf16.msra.mxu0 0
      %308 = vmatpush.bf16.msra.mxu0 %v283
      %309 = vmatpush.bf16.msra.mxu0 %v282
      %310 = vmatpush.bf16.msra.mxu0 %v281
      %311 = vmatpush.bf16.msra.mxu0 %v280
      %312 = vmatmul.bf16.gmra.mxu0 %v290
      %v313 = vpop.f32.mrf.mxu0
      %v314 = vadd.f32 0.0, %v313
      %v315 = vpop.f32.mrf.mxu0
      %v316 = vadd.f32 0.0, %v315
      %317 = vmatmul.bf16.gmra.mxu0 %v293
      %v318 = vpop.f32.mrf.mxu0
      %v319 = vadd.f32 0.0, %v318
      %v320 = vpop.f32.mrf.mxu0
      %v321 = vadd.f32 0.0, %v320
      %322 = vmatmul.bf16.gmra.mxu0 %v296
      %v323 = vpop.f32.mrf.mxu0
      %v324 = vadd.f32 0.0, %v323
      %v325 = vpop.f32.mrf.mxu0
      %v326 = vadd.f32 0.0, %v325
      %327 = vmatmul.bf16.gmra.mxu0 %v299
      %v328 = vpop.f32.mrf.mxu0
      %v329 = vadd.f32 0.0, %v328
      %v330 = vpop.f32.mrf.mxu0
      %v331 = vadd.f32 0.0, %v330
      %332 = vmatmul.bf16.gmra.mxu0 %v302
      %v333 = vpop.f32.mrf.mxu0
      %v334 = vadd.f32 0.0, %v333
      %v335 = vpop.f32.mrf.mxu0
      %336 = vdwg.mxu0
      %v337 = vpack.c.b16 %v217, %v217
      %v346 = vunpack.c.l.b16 %v181
      %v347 = vunpack.c.l.b16 %v182
      %v348 = vunpack.c.l.b16 %v183
      %v349 = vunpack.c.l.b16 %v184
      %v350 = vunpack.c.l.b16 %v185
      %v351 = vunpack.c.l.b16 %v186
      %v352 = vunpack.c.l.b16 %v187
      %v353 = vunpack.c.l.b16 %v188
      %v354 = vpack.c.b16 %v347, %v346
      %v355 = vpack.c.b16 %v349, %v348
      %v356 = vpack.c.b16 %v351, %v350
      %v357 = vpack.c.b16 %v353, %v352
      %v362 = vsel %vm288, %v219, 0
      %v364 = vsel %vm288, %v220, 0
      %v366 = vsel %vm288, %v221, 0
      %v368 = vsel %vm288, %v222, 0
      %v371 = vsel %vm288, %v337, 0
      %373 = vmatpush.bf16.msra.mxu0 0
      %374 = vmatpush.bf16.msra.mxu0 0
      %375 = vmatpush.bf16.msra.mxu0 0
      %376 = vmatpush.bf16.msra.mxu0 0
      %377 = vmatpush.bf16.msra.mxu0 %v357
      %378 = vmatpush.bf16.msra.mxu0 %v356
      %379 = vmatpush.bf16.msra.mxu0 %v355
      %380 = vmatpush.bf16.msra.mxu0 %v354
      %381 = vmatmul.bf16.gmra.mxu0 %v362
      %v382 = vpop.f32.mrf.mxu0
      %v383 = vadd.f32 %v314, %v382
      %v384 = vpop.f32.mrf.mxu0
      %v385 = vadd.f32 %v316, %v384
      %386 = vmatmul.bf16.gmra.mxu0 %v364
      %v387 = vpop.f32.mrf.mxu0
      %v388 = vadd.f32 %v319, %v387
      %v389 = vpop.f32.mrf.mxu0
      %v390 = vadd.f32 %v321, %v389
      %391 = vmatmul.bf16.gmra.mxu0 %v366
      %v392 = vpop.f32.mrf.mxu0
      %v393 = vadd.f32 %v324, %v392
      %v394 = vpop.f32.mrf.mxu0
      %v395 = vadd.f32 %v326, %v394
      %396 = vmatmul.bf16.gmra.mxu0 %v368
      %v397 = vpop.f32.mrf.mxu0
      %v398 = vadd.f32 %v329, %v397
      %v399 = vpop.f32.mrf.mxu0
      %v400 = vadd.f32 %v331, %v399
      %401 = vmatmul.bf16.gmra.mxu0 %v371
      %v402 = vpop.f32.mrf.mxu0
      %v403 = vadd.f32 %v334, %v402
      %v404 = vpop.f32.mrf.mxu0
      %405 = vdwg.mxu0
      %v406 = vld [vmem:[%s165 + $0x4] sm:$0xf]
      %v407 = vld [vmem:[%s165 + $0x8] sm:$0xf]
      %v408 = vld [vmem:[%s165 + $0xc] sm:$0xf]
      %v409 = vld [vmem:[%s165 + $0x10] sm:$0xf]
      %v410 = vld [vmem:[%s165 + $0x14] sm:$0xf]
      %v411 = vld [vmem:[%s165 + $0x18] sm:$0xf]
      %v412 = vld [vmem:[%s165 + $0x1c] sm:$0xf]
      %v413 = vld [vmem:[%s165 + $0x20] sm:$0xf]
      %v414 = vld [vmem:[%s165 + $0x24] sm:$0xf]
      %v415 = vld [vmem:[%s165 + $0x28] sm:$0x1]
      %s416 = scalar_lea.vmem %s1, 64
      %v417 = vld [vmem:[%s416] sm:$0xf]
      %v418 = vld [vmem:[%s416 + $0x4] sm:$0xf]
      %v419 = vld [vmem:[%s416 + $0x8] sm:$0xf]
      %v420 = vld [vmem:[%s416 + $0xc] sm:$0xf]
      %v421 = vld [vmem:[%s416 + $0x10] sm:$0xf]
      %v422 = vld [vmem:[%s416 + $0x14] sm:$0xf]
      %v423 = vld [vmem:[%s416 + $0x18] sm:$0xf]
      %v424 = vld [vmem:[%s416 + $0x1c] sm:$0xf]
      %v435 = vunpack.c.l.b16 %v406
      %v436 = vunpack.c.l.b16 %v407
      %v437 = vunpack.c.l.b16 %v408
      %v438 = vunpack.c.l.b16 %v409
      %v439 = vunpack.c.l.b16 %v410
      %v440 = vunpack.c.l.b16 %v411
      %v441 = vunpack.c.l.b16 %v412
      %v442 = vunpack.c.l.b16 %v413
      %v443 = vunpack.c.l.b16 %v414
      %v444 = vunpack.c.l.b16 %v415
      %v445 = vpack.c.b16 %v436, %v435
      %v446 = vpack.c.b16 %v438, %v437
      %v447 = vpack.c.b16 %v440, %v439
      %v448 = vpack.c.b16 %v442, %v441
      %v449 = vpack.c.b16 %v444, %v443
      %v451 = vshrl.u32 %v445, 16
      %v453 = vshll.u32 %v445, 16
      %v455 = vrot.slane %v453, 1
      %v456 = vor.u32 %v451, %v455
      %v458 = vshll.u32 %v446, 16
      %v460 = vrot.slane %v458, 1
      %v461 = vsel %vm224, %v456, %v460
      %v462 = vshrl.u32 %v446, 16
      %v464 = vor.u32 %v462, %v460
      %v466 = vshll.u32 %v447, 16
      %v468 = vrot.slane %v466, 1
      %v469 = vsel %vm224, %v464, %v468
      %v470 = vshrl.u32 %v447, 16
      %v472 = vor.u32 %v470, %v468
      %v474 = vshll.u32 %v448, 16
      %v476 = vrot.slane %v474, 1
      %v477 = vsel %vm224, %v472, %v476
      %v478 = vshrl.u32 %v448, 16
      %v480 = vor.u32 %v478, %v476
      %v482 = vshll.u32 %v449, 16
      %v484 = vrot.slane %v482, 1
      %v485 = vsel %vm224, %v480, %v484
      %v486 = vshrl.u32 %v449, 16
      %v488 = vor.u32 %v486, %v484
      %v497 = vunpack.c.l.b16 %v417
      %v498 = vunpack.c.l.b16 %v418
      %v499 = vunpack.c.l.b16 %v419
      %v500 = vunpack.c.l.b16 %v420
      %v501 = vunpack.c.l.b16 %v421
      %v502 = vunpack.c.l.b16 %v422
      %v503 = vunpack.c.l.b16 %v423
      %v504 = vunpack.c.l.b16 %v424
      %v505 = vpack.c.b16 %v498, %v497
      %v506 = vpack.c.b16 %v500, %v499
      %v507 = vpack.c.b16 %v502, %v501
      %v508 = vpack.c.b16 %v504, %v503
      %v514 = vsel %vm288, %v461, 0
      %v517 = vsel %vm288, %v469, 0
      %v520 = vsel %vm288, %v477, 0
      %v523 = vsel %vm288, %v485, 0
      %v526 = vsel %vm288, %v488, 0
      %528 = vmatpush.bf16.msra.mxu0 0
      %529 = vmatpush.bf16.msra.mxu0 0
      %530 = vmatpush.bf16.msra.mxu0 0
      %531 = vmatpush.bf16.msra.mxu0 0
      %532 = vmatpush.bf16.msra.mxu0 %v508
      %533 = vmatpush.bf16.msra.mxu0 %v507
      %534 = vmatpush.bf16.msra.mxu0 %v506
      %535 = vmatpush.bf16.msra.mxu0 %v505
      %536 = vmatmul.bf16.gmra.mxu0 %v514
      %v537 = vpop.f32.mrf.mxu0
      %v538 = vadd.f32 0.0, %v537
      %v539 = vpop.f32.mrf.mxu0
      %v540 = vadd.f32 0.0, %v539
      %541 = vmatmul.bf16.gmra.mxu0 %v517
      %v542 = vpop.f32.mrf.mxu0
      %v543 = vadd.f32 0.0, %v542
      %v544 = vpop.f32.mrf.mxu0
      %v545 = vadd.f32 0.0, %v544
      %546 = vmatmul.bf16.gmra.mxu0 %v520
      %v547 = vpop.f32.mrf.mxu0
      %v548 = vadd.f32 0.0, %v547
      %v549 = vpop.f32.mrf.mxu0
      %v550 = vadd.f32 0.0, %v549
      %551 = vmatmul.bf16.gmra.mxu0 %v523
      %v552 = vpop.f32.mrf.mxu0
      %v553 = vadd.f32 0.0, %v552
      %v554 = vpop.f32.mrf.mxu0
      %v555 = vadd.f32 0.0, %v554
      %556 = vmatmul.bf16.gmra.mxu0 %v526
      %v557 = vpop.f32.mrf.mxu0
      %v558 = vadd.f32 0.0, %v557
      %v559 = vpop.f32.mrf.mxu0
      %560 = vdwg.mxu0
      %v561 = vadd.f32 %v383, %v538
      %v562 = vadd.f32 %v385, %v540
      %v563 = vadd.f32 %v388, %v543
      %v564 = vadd.f32 %v390, %v545
      %v565 = vadd.f32 %v393, %v548
      %v566 = vadd.f32 %v395, %v550
      %v567 = vadd.f32 %v398, %v553
      %v568 = vadd.f32 %v400, %v555
      %v569 = vadd.f32 %v403, %v558
      %v570 = vld [vmem:[%s165 + $0x4] sm:$0xe]
      %s571 = scalar_lea.vmem %s1, 96
      %v572 = vld [vmem:[%s571] sm:$0xf]
      %v573 = vld [vmem:[%s571 + $0x4] sm:$0xf]
      %v574 = vld [vmem:[%s571 + $0x8] sm:$0xf]
      %v575 = vld [vmem:[%s571 + $0xc] sm:$0xf]
      %v576 = vld [vmem:[%s571 + $0x10] sm:$0xf]
      %v577 = vld [vmem:[%s571 + $0x14] sm:$0xf]
      %v578 = vld [vmem:[%s571 + $0x18] sm:$0xf]
      %v579 = vld [vmem:[%s571 + $0x1c] sm:$0xf]
      %v581 = vunpack.c.l.b16 %v570
      %v582 = vpack.c.b16 %v436, %v581
      %vm583 = vcmask 1046528
      %v584 = vrot.slane %v582, 1
      %v585 = vrot.slane %v446, 1
      %v586 = vsel %vm583, %v584, %v585
      %v587 = vrot.slane %v447, 1
      %v588 = vsel %vm583, %v585, %v587
      %v589 = vrot.slane %v448, 1
      %v590 = vsel %vm583, %v587, %v589
      %v591 = vrot.slane %v449, 1
      %v592 = vsel %vm583, %v589, %v591
      %v601 = vunpack.c.l.b16 %v572
      %v602 = vunpack.c.l.b16 %v573
      %v603 = vunpack.c.l.b16 %v574
      %v604 = vunpack.c.l.b16 %v575
      %v605 = vunpack.c.l.b16 %v576
      %v606 = vunpack.c.l.b16 %v577
      %v607 = vunpack.c.l.b16 %v578
      %v608 = vunpack.c.l.b16 %v579
      %v609 = vpack.c.b16 %v602, %v601
      %v610 = vpack.c.b16 %v604, %v603
      %v611 = vpack.c.b16 %v606, %v605
      %v612 = vpack.c.b16 %v608, %v607
      %v618 = vsel %vm288, %v586, 0
      %v621 = vsel %vm288, %v588, 0
      %v624 = vsel %vm288, %v590, 0
      %v627 = vsel %vm288, %v592, 0
      %v630 = vsel %vm288, %v591, 0
      %632 = vmatpush.bf16.msra.mxu0 0
      %633 = vmatpush.bf16.msra.mxu0 0
      %634 = vmatpush.bf16.msra.mxu0 0
      %635 = vmatpush.bf16.msra.mxu0 0
      %636 = vmatpush.bf16.msra.mxu0 %v612
      %637 = vmatpush.bf16.msra.mxu0 %v611
      %638 = vmatpush.bf16.msra.mxu0 %v610
      %639 = vmatpush.bf16.msra.mxu0 %v609
      %640 = vmatmul.bf16.gmra.mxu0 %v618
      %v641 = vpop.f32.mrf.mxu0
      %v642 = vadd.f32 0.0, %v641
      %v643 = vpop.f32.mrf.mxu0
      %v644 = vadd.f32 0.0, %v643
      %645 = vmatmul.bf16.gmra.mxu0 %v621
      %v646 = vpop.f32.mrf.mxu0
      %v647 = vadd.f32 0.0, %v646
      %v648 = vpop.f32.mrf.mxu0
      %v649 = vadd.f32 0.0, %v648
      %650 = vmatmul.bf16.gmra.mxu0 %v624
      %v651 = vpop.f32.mrf.mxu0
      %v652 = vadd.f32 0.0, %v651
      %v653 = vpop.f32.mrf.mxu0
      %v654 = vadd.f32 0.0, %v653
      %655 = vmatmul.bf16.gmra.mxu0 %v627
      %v656 = vpop.f32.mrf.mxu0
      %v657 = vadd.f32 0.0, %v656
      %v658 = vpop.f32.mrf.mxu0
      %v659 = vadd.f32 0.0, %v658
      %660 = vmatmul.bf16.gmra.mxu0 %v630
      %v661 = vpop.f32.mrf.mxu0
      %v662 = vadd.f32 0.0, %v661
      %v663 = vpop.f32.mrf.mxu0
      %664 = vdwg.mxu0
      %v665 = vadd.f32 %v561, %v642
      %v666 = vadd.f32 %v562, %v644
      %v667 = vadd.f32 %v563, %v647
      %v668 = vadd.f32 %v564, %v649
      %v669 = vadd.f32 %v565, %v652
      %v670 = vadd.f32 %v566, %v654
      %v671 = vadd.f32 %v567, %v657
      %v672 = vadd.f32 %v568, %v659
      %v673 = vadd.f32 %v569, %v662
      %v674 = vld [vmem:[%s2] sm:$0x1]
      %v676 = vperm.slane %v674, 0
      %v678 = vadd.f32 %v665, %v676
      %v679 = vadd.f32 %v666, %v676
      %v680 = vadd.f32 %v667, %v676
      %v681 = vadd.f32 %v668, %v676
      %v682 = vadd.f32 %v669, %v676
      %v683 = vadd.f32 %v670, %v676
      %v684 = vadd.f32 %v671, %v676
      %v685 = vadd.f32 %v672, %v676
      %v686 = vadd.f32 %v673, %v676
      %v687 = vmax.f32 %v678, 0.0
      %v688 = vmax.f32 %v679, 0.0
      %v689 = vmax.f32 %v680, 0.0
      %v690 = vmax.f32 %v681, 0.0
      %v691 = vmax.f32 %v682, 0.0
      %v692 = vmax.f32 %v683, 0.0
      %v693 = vmax.f32 %v684, 0.0
      %v694 = vmax.f32 %v685, 0.0
      %v695 = vmax.f32 %v686, 0.0
      %v696 = vpack.c.bf16 %v687, %v687
      %v697 = vpack.c.bf16 %v688, %v688
      %v698 = vpack.c.bf16 %v689, %v689
      %v699 = vpack.c.bf16 %v690, %v690
      %v700 = vpack.c.bf16 %v691, %v691
      %v701 = vpack.c.bf16 %v692, %v692
      %v702 = vpack.c.bf16 %v693, %v693
      %v703 = vpack.c.bf16 %v694, %v694
      %v704 = vpack.c.bf16 %v695, %v695
      %vm705 = vcmask 125952
      %706 = vst.msk [vmem:[%s170] sm:$0xf] %vm705, %v696
      %707 = vst.msk [vmem:[%s170 + $0x4] sm:$0xf] %vm705, %v697
      %708 = vst.msk [vmem:[%s170 + $0x8] sm:$0xf] %vm705, %v698
      %709 = vst.msk [vmem:[%s170 + $0xc] sm:$0xf] %vm705, %v699
      %710 = vst.msk [vmem:[%s170 + $0x10] sm:$0xf] %vm705, %v700
      %711 = vst.msk [vmem:[%s170 + $0x14] sm:$0xf] %vm705, %v701
      %712 = vst.msk [vmem:[%s170 + $0x18] sm:$0xf] %vm705, %v702
      %713 = vst.msk [vmem:[%s170 + $0x1c] sm:$0xf] %vm705, %v703
      %714 = vst.msk [vmem:[%s170 + $0x20] sm:$0xf] %vm705, %v704
      %p715 = scmp.lt.s32.totalorder %s14, 1
      %s716 = scalar_select %p715, %s14, 1
      %s717 = smul.addr %s716, 9
      %s718 = smul.addr %s717, 4
      %s719 = scalar_lea.vmem %s3, %s718
      // Predicated region
      $region33: #{higher_hrnet_forward.17} parent=31 // pred_check
        %p720 = pneg %p100
      $region34: #{higher_hrnet_forward.17} parent=31 // pred_check_branch
        %722 = sbr.rel (%p720) target = $region36
      $region35: #{higher_hrnet_forward.17} parent=31 // pred_region
        _
      $region36: #{higher_hrnet_forward.17} parent=31 // pred_fallthru
        _
    $region32: #{higher_hrnet_forward.17} parent=5 // pred_fallthru
      _
    %p723 = scmp.le.s32.totalorder 2, %s9
    // Predicated region
    $region37: #{higher_hrnet_forward.17} parent=5 // pred_check
      %p724 = pneg %p723
    $region38: #{higher_hrnet_forward.17} parent=5 // pred_check_branch
      %726 = sbr.rel (%p724) target = $region40
    $region39: #{higher_hrnet_forward.17} parent=5 // pred_region
      %s727 = ssub.s32 %s9, 2
      // Predicated region
      $region41: #{higher_hrnet_forward.17} parent=39 // pred_check
        %p728 = pneg %p106
      $region42: #{higher_hrnet_forward.17} parent=39 // pred_check_branch
        %730 = sbr.rel (%p728) target = $region44
      $region43: #{higher_hrnet_forward.17} parent=39 // pred_region
        %p731 = scmp.lt.s32.totalorder %s15, 1
        %s732 = scalar_select %p731, %s15, 1
        %s733 = smul.addr %s732, 9
        %s734 = smul.addr %s733, 4
        %s735 = scalar_lea.vmem %s3, %s734
      $region44: #{higher_hrnet_forward.17} parent=39 // pred_fallthru
        _
    $region40: #{higher_hrnet_forward.17} parent=5 // pred_fallthru
      _
  $region6: #{higher_hrnet_forward.17} parent=0 // loop_footer
    %s13 = sadd.s32 1, %s9
  $region7: #{higher_hrnet_forward.17} parent=0 // loop_footer_branch
    %8 = sbr.rel target = $region3
  $region8: #{higher_hrnet_forward.17} parent=0 // loop_exit
    _

// kernel: higher_hrnet_forward.18
$region0: #{higher_hrnet_forward.18}
  #allocation0 [shape = 'u32[]', space=smem, size = 0x4, offset = 0x4, fixed_abs, tag = 'smem constant byte address 0x4 - core index']
  #allocation1 [shape = 'u32[72,128]{1,0:T(1,128)}', space=vmem, size = 0x9000, scoped, tag = 'internal scratch']
  %s0 = inlined_call_operand.vmem [shape: bf16[2,64,16], index: 0, kind: input, shape index: {}]
  %s1 = inlined_call_operand.vmem [shape: bf16[1,16,8], index: 1, kind: input, shape index: {}]
  %s2 = inlined_call_operand.vmem [shape: f32[1,8], index: 2, kind: input, shape index: {}]
  %s3 = inlined_call_operand.vmem [shape: f32[2,64,8], index: 3, kind: output, shape index: {}]
  %s4 = sld [smem:[#allocation0]]
  $region45: #{higher_hrnet_forward.18} parent=0
    _
  %s6 = ssub.s32 1, %s4
  %s7 = scalar_select 0, %s6, %s4
  loop: start=0, step=1, limit=4
  $region2: #{higher_hrnet_forward.18} parent=0 // loop_pre_header
    _
  $region3: #{higher_hrnet_forward.18} parent=0 // loop_header
    %s9 = sphi 0, %s13
    %p10 = scmp.ge.s32.totalorder %s9, 4
    %s19 = sphi 0, %s21
    %s22 = sphi 0, %s19
    %s23 = sphi 0, %s22
    %s39 = sphi 0, %s23
    %s43 = sphi 0, %s43
    %s45 = sphi 0, %s43
    %s46 = sphi 0, %s45
    %s60 = sphi 0, %s46
    %s64 = sphi 0, %s64
    %s66 = sphi 0, %s64
    %s67 = sphi 0, %s66
    %s81 = sphi 0, %s67
    %s87 = sphi 0, %s89
    %s90 = sphi 0, %s87
    %s91 = sphi 0, %s90
    %s107 = sphi 0, %s91
  $region4: #{higher_hrnet_forward.18} parent=0 // loop_header_branch
    %12 = sbr.rel (%p10) target = $region8
  $region5: #{higher_hrnet_forward.18} parent=0 // loop_body
    %s14 = ssub.s32 %s9, 1
    %s15 = ssub.s32 %s9, 2
    %s16 = sadd.s32 %s9, 1
    %s17 = ssub.s32 %s9, %s16
    %p18 = scmp.eq.s32.totalorder %s17, 0
    %s20 = sadd.s32 %s19, 1
    %s21 = scalar_select %p18, %s19, %s20
    %p24 = pneg %p18
    %p25 = scmp.eq.s32.totalorder %s9, 1
    %p26 = por %p24, %p25
    %p27 = scmp.ne.s32.totalorder %s19, %s22
    %p28 = scmp.eq.s32.totalorder %s9, 0
    %p29 = por %p27, %p28
    %p30 = scmp.ne.s32.totalorder %s19, %s22
    %p31 = scmp.eq.s32.totalorder %s14, 1
    %p32 = por %p30, %p31
    %p33 = scmp.ne.s32.totalorder %s22, %s23
    %p34 = scmp.eq.s32.totalorder %s14, 0
    %p35 = por %p33, %p34
    %p36 = scmp.ne.s32.totalorder %s22, %s23
    %p37 = scmp.eq.s32.totalorder %s15, 1
    %p38 = por %p36, %p37
    %p40 = scmp.ne.s32.totalorder %s23, %s39
    %p41 = scmp.eq.s32.totalorder %s15, 0
    %p42 = por %p40, %p41
    %s44 = sadd.s32 %s43, 1
    %p47 = scmp.eq.s32.totalorder %s9, 1
    %p48 = scmp.ne.s32.totalorder %s43, %s45
    %p49 = scmp.eq.s32.totalorder %s9, 0
    %p50 = por %p48, %p49
    %p51 = scmp.ne.s32.totalorder %s43, %s45
    %p52 = scmp.eq.s32.totalorder %s14, 1
    %p53 = por %p51, %p52
    %p54 = scmp.ne.s32.totalorder %s45, %s46
    %p55 = scmp.eq.s32.totalorder %s14, 0
    %p56 = por %p54, %p55
    %p57 = scmp.ne.s32.totalorder %s45, %s46
    %p58 = scmp.eq.s32.totalorder %s15, 1
    %p59 = por %p57, %p58
    %p61 = scmp.ne.s32.totalorder %s46, %s60
    %p62 = scmp.eq.s32.totalorder %s15, 0
    %p63 = por %p61, %p62
    %s65 = sadd.s32 %s64, 1
    %p68 = scmp.eq.s32.totalorder %s9, 1
    %p69 = scmp.ne.s32.totalorder %s64, %s66
    %p70 = scmp.eq.s32.totalorder %s9, 0
    %p71 = por %p69, %p70
    %p72 = scmp.ne.s32.totalorder %s64, %s66
    %p73 = scmp.eq.s32.totalorder %s14, 1
    %p74 = por %p72, %p73
    %p75 = scmp.ne.s32.totalorder %s66, %s67
    %p76 = scmp.eq.s32.totalorder %s14, 0
    %p77 = por %p75, %p76
    %p78 = scmp.ne.s32.totalorder %s66, %s67
    %p79 = scmp.eq.s32.totalorder %s15, 1
    %p80 = por %p78, %p79
    %p82 = scmp.ne.s32.totalorder %s67, %s81
    %p83 = scmp.eq.s32.totalorder %s15, 0
    %p84 = por %p82, %p83
    %s85 = ssub.s32 %s9, %s16
    %p86 = scmp.eq.s32.totalorder %s85, 0
    %s88 = sadd.s32 %s87, 1
    %s89 = scalar_select %p86, %s87, %s88
    %p92 = pneg %p86
    %p93 = scmp.eq.s32.totalorder %s9, 1
    %p94 = por %p92, %p93
    %p95 = scmp.ne.s32.totalorder %s87, %s90
    %p96 = scmp.eq.s32.totalorder %s9, 0
    %p97 = por %p95, %p96
    %p98 = scmp.ne.s32.totalorder %s87, %s90
    %p99 = scmp.eq.s32.totalorder %s14, 1
    %p100 = por %p98, %p99
    %p101 = scmp.ne.s32.totalorder %s90, %s91
    %p102 = scmp.eq.s32.totalorder %s14, 0
    %p103 = por %p101, %p102
    %p104 = scmp.ne.s32.totalorder %s90, %s91
    %p105 = scmp.eq.s32.totalorder %s15, 1
    %p106 = por %p104, %p105
    %p108 = scmp.ne.s32.totalorder %s91, %s107
    %p109 = scmp.eq.s32.totalorder %s15, 0
    %p110 = por %p108, %p109
    %p111 = scmp.le.s32.totalorder 1, %s9
    %p112 = scmp.lt.s32.totalorder %s9, 3
    %p113 = pnand %p111, %p112
    %p114 = pneg %p113
    // Predicated region
    $region9: #{higher_hrnet_forward.18} parent=5 // pred_check
      _
    $region10: #{higher_hrnet_forward.18} parent=5 // pred_check_branch
      %116 = sbr.rel (%p113) target = $region12
    $region11: #{higher_hrnet_forward.18} parent=5 // pred_region
      %s117 = ssub.s32 %s9, 1
      // Predicated region
      $region13: #{higher_hrnet_forward.18} parent=11 // pred_check
        %p118 = pneg %p56
      $region14: #{higher_hrnet_forward.18} parent=11 // pred_check_branch
        %120 = sbr.rel (%p118) target = $region16
      $region15: #{higher_hrnet_forward.18} parent=11 // pred_region
        _
      $region16: #{higher_hrnet_forward.18} parent=11 // pred_fallthru
        _
      // Predicated region
      $region17: #{higher_hrnet_forward.18} parent=11 // pred_check
        %p121 = pneg %p77
      $region18: #{higher_hrnet_forward.18} parent=11 // pred_check_branch
        %123 = sbr.rel (%p121) target = $region20
      $region19: #{higher_hrnet_forward.18} parent=11 // pred_region
        _
      $region20: #{higher_hrnet_forward.18} parent=11 // pred_fallthru
        _
    $region12: #{higher_hrnet_forward.18} parent=5 // pred_fallthru
      _
    %p124 = scmp.lt.s32.totalorder %s9, 2
    // Predicated region
    $region21: #{higher_hrnet_forward.18} parent=5 // pred_check
      %p125 = pneg %p124
    $region22: #{higher_hrnet_forward.18} parent=5 // pred_check_branch
      %127 = sbr.rel (%p125) target = $region24
    $region23: #{higher_hrnet_forward.18} parent=5 // pred_region
      // Predicated region
      $region25: #{higher_hrnet_forward.18} parent=23 // pred_check
        %p128 = pneg %p29
      $region26: #{higher_hrnet_forward.18} parent=23 // pred_check_branch
        %130 = sbr.rel (%p128) target = $region28
      $region27: #{higher_hrnet_forward.18} parent=23 // pred_region
        %p131 = scmp.lt.s32.totalorder %s9, 1
        %s132 = scalar_select %p131, %s9, 1
        %s133 = smul.addr %s132, 8
        %s134 = smul.addr %s133, 4
        %s135 = scalar_lea.vmem %s0, %s134
      $region28: #{higher_hrnet_forward.18} parent=23 // pred_fallthru
        _
    $region24: #{higher_hrnet_forward.18} parent=5 // pred_fallthru
      _
    %p136 = scmp.le.s32.totalorder 1, %s9
    %p137 = scmp.lt.s32.totalorder %s9, 3
    %p138 = pnand %p136, %p137
    %p139 = pneg %p138
    // Predicated region
    $region29: #{higher_hrnet_forward.18} parent=5 // pred_check
      _
    $region30: #{higher_hrnet_forward.18} parent=5 // pred_check_branch
      %141 = sbr.rel (%p138) target = $region32
    $region31: #{higher_hrnet_forward.18} parent=5 // pred_region
      %s142 = ssub.s32 %s9, 1
      %p143 = scmp.lt.s32.totalorder %s14, 1
      %s144 = scalar_select %p143, %s14, 1
      %s145 = smul.addr %s144, 8
      %s146 = smul.addr %s145, 4
      %s147 = scalar_lea.vmem %s0, %s146
      %p148 = pneg %p35
      %p149 = pneg %p32
      %p150 = pneg %p56
      %p151 = pneg %p53
      %p152 = pneg %p77
      %p153 = pneg %p74
      %p154 = pneg %p103
      %p155 = pneg %p100
      %p156 = scmp.lt.s32.totalorder %s14, 1
      %s157 = scalar_select %p156, %s14, 1
      %s158 = smul.addr %s157, 8
      %s159 = smul.addr %s158, 8
      %s160 = scalar_lea.vmem %s3, %s159
      %p161 = scmp.lt.s32.totalorder %s14, 1
      %s162 = scalar_select %p161, %s14, 1
      %s163 = smul.addr %s162, 8
      %s164 = smul.addr %s163, 4
      %s165 = scalar_lea.vmem %s0, %s164
      %p166 = scmp.lt.s32.totalorder %s14, 1
      %s167 = scalar_select %p166, %s14, 1
      %s168 = smul.addr %s167, 8
      %s169 = smul.addr %s168, 8
      %s170 = scalar_lea.vmem %s3, %s169
      %v172 = vld [vmem:[%s165] sm:$0xf]
      %v173 = vld [vmem:[%s165 + $0x4] sm:$0xf]
      %v174 = vld [vmem:[%s165 + $0x8] sm:$0xf]
      %v175 = vld [vmem:[%s165 + $0xc] sm:$0xf]
      %v176 = vld [vmem:[%s165 + $0x10] sm:$0xf]
      %v177 = vld [vmem:[%s165 + $0x14] sm:$0xf]
      %v178 = vld [vmem:[%s165 + $0x18] sm:$0xf]
      %v179 = vld [vmem:[%s165 + $0x1c] sm:$0xf]
      %v180 = vld [vmem:[%s1] sm:$0xf]
      %v181 = vld [vmem:[%s1 + $0x4] sm:$0xf]
      %v182 = vld [vmem:[%s2] sm:$0x1]
      %v184 = vperm.slane %v182, 0
      %v194 = vunpack.c.l.b16 %v172
      %v195 = vunpack.c.l.b16 %v173
      %v196 = vunpack.c.l.b16 %v174
      %v197 = vunpack.c.l.b16 %v175
      %v198 = vunpack.c.l.b16 %v176
      %v199 = vunpack.c.l.b16 %v177
      %v200 = vunpack.c.l.b16 %v178
      %v201 = vunpack.c.l.b16 %v179
      %v202 = vpack.c.b16 %v195, %v194
      %v203 = vpack.c.b16 %v197, %v196
      %v204 = vpack.c.b16 %v199, %v198
      %v205 = vpack.c.b16 %v201, %v200
      %v208 = vunpack.c.l.b16 %v180
      %v209 = vunpack.c.l.b16 %v181
      %v210 = vpack.c.b16 %v209, %v208
      %vm212 = vcmask 130048
      %v214 = vsel %vm212, %v202, 0
      %v217 = vsel %vm212, %v203, 0
      %v220 = vsel %vm212, %v204, 0
      %v223 = vsel %vm212, %v205, 0
      %225 = vmatpush.bf16.msra.mxu0 0
      %226 = vmatpush.bf16.msra.mxu0 0
      %227 = vmatpush.bf16.msra.mxu0 0
      %228 = vmatpush.bf16.msra.mxu0 0
      %229 = vmatpush.bf16.msra.mxu0 0
      %230 = vmatpush.bf16.msra.mxu0 0
      %231 = vmatpush.bf16.msra.mxu0 0
      %232 = vmatpush.bf16.msra.mxu0 %v210
      %233 = vmatmul.bf16.gmra.mxu0 %v214
      %v234 = vpop.f32.mrf.mxu0
      %v235 = vadd.f32 %v184, %v234
      %v236 = vpop.f32.mrf.mxu0
      %v237 = vadd.f32 %v184, %v236
      %238 = vmatmul.bf16.gmra.mxu0 %v217
      %v239 = vpop.f32.mrf.mxu0
      %v240 = vadd.f32 %v184, %v239
      %v241 = vpop.f32.mrf.mxu0
      %v242 = vadd.f32 %v184, %v241
      %243 = vmatmul.bf16.gmra.mxu0 %v220
      %v244 = vpop.f32.mrf.mxu0
      %v245 = vadd.f32 %v184, %v244
      %v246 = vpop.f32.mrf.mxu0
      %v247 = vadd.f32 %v184, %v246
      %248 = vmatmul.bf16.gmra.mxu0 %v223
      %v249 = vpop.f32.mrf.mxu0
      %v250 = vadd.f32 %v184, %v249
      %v251 = vpop.f32.mrf.mxu0
      %v252 = vadd.f32 %v184, %v251
      %253 = vdwg.mxu0
      %vm254 = vcmask 64512
      %255 = vst.msk [vmem:[%s170] sm:$0xff] %vm254, %v235
      %256 = vst.msk [vmem:[%s170 + $0x8] sm:$0xff] %vm254, %v237
      %257 = vst.msk [vmem:[%s170 + $0x10] sm:$0xff] %vm254, %v240
      %258 = vst.msk [vmem:[%s170 + $0x18] sm:$0xff] %vm254, %v242
      %259 = vst.msk [vmem:[%s170 + $0x20] sm:$0xff] %vm254, %v245
      %260 = vst.msk [vmem:[%s170 + $0x28] sm:$0xff] %vm254, %v247
      %261 = vst.msk [vmem:[%s170 + $0x30] sm:$0xff] %vm254, %v250
      %262 = vst.msk [vmem:[%s170 + $0x38] sm:$0xff] %vm254, %v252
      %p263 = scmp.lt.s32.totalorder %s14, 1
      %s264 = scalar_select %p263, %s14, 1
      %s265 = smul.addr %s264, 8
      %s266 = smul.addr %s265, 8
      %s267 = scalar_lea.vmem %s3, %s266
      // Predicated region
      $region33: #{higher_hrnet_forward.18} parent=31 // pred_check
        %p268 = pneg %p100
      $region34: #{higher_hrnet_forward.18} parent=31 // pred_check_branch
        %270 = sbr.rel (%p268) target = $region36
      $region35: #{higher_hrnet_forward.18} parent=31 // pred_region
        _
      $region36: #{higher_hrnet_forward.18} parent=31 // pred_fallthru
        _
    $region32: #{higher_hrnet_forward.18} parent=5 // pred_fallthru
      _
    %p271 = scmp.le.s32.totalorder 2, %s9
    // Predicated region
    $region37: #{higher_hrnet_forward.18} parent=5 // pred_check
      %p272 = pneg %p271
    $region38: #{higher_hrnet_forward.18} parent=5 // pred_check_branch
      %274 = sbr.rel (%p272) target = $region40
    $region39: #{higher_hrnet_forward.18} parent=5 // pred_region
      %s275 = ssub.s32 %s9, 2
      // Predicated region
      $region41: #{higher_hrnet_forward.18} parent=39 // pred_check
        %p276 = pneg %p106
      $region42: #{higher_hrnet_forward.18} parent=39 // pred_check_branch
        %278 = sbr.rel (%p276) target = $region44
      $region43: #{higher_hrnet_forward.18} parent=39 // pred_region
        %p279 = scmp.lt.s32.totalorder %s15, 1
        %s280 = scalar_select %p279, %s15, 1
        %s281 = smul.addr %s280, 8
        %s282 = smul.addr %s281, 8
        %s283 = scalar_lea.vmem %s3, %s282
      $region44: #{higher_hrnet_forward.18} parent=39 // pred_fallthru
        _
    $region40: #{higher_hrnet_forward.18} parent=5 // pred_fallthru
      _
  $region6: #{higher_hrnet_forward.18} parent=0 // loop_footer
    %s13 = sadd.s32 1, %s9
  $region7: #{higher_hrnet_forward.18} parent=0 // loop_footer_branch
    %8 = sbr.rel target = $region3
  $region8: #{higher_hrnet_forward.18} parent=0 // loop_exit
    _

// kernel: higher_hrnet_forward.22
$region0: #{higher_hrnet_forward.22}
  #allocation0 [shape = 'u32[]', space=smem, size = 0x4, offset = 0x4, fixed_abs, tag = 'smem constant byte address 0x4 - core index']
  #allocation1 [shape = 'u32[72,128]{1,0:T(1,128)}', space=vmem, size = 0x9000, scoped, tag = 'internal scratch']
  %s0 = inlined_call_operand.vmem [shape: bf16[2,88,24], index: 0, kind: input, shape index: {}]
  %s1 = inlined_call_operand.vmem [shape: bf16[4,24,16], index: 1, kind: input, shape index: {}]
  %s2 = inlined_call_operand.vmem [shape: f32[1,16], index: 2, kind: input, shape index: {}]
  %s3 = inlined_call_operand.vmem [shape: bf16[2,72,16], index: 3, kind: output, shape index: {}]
  %s4 = sld [smem:[#allocation0]]
  $region45: #{higher_hrnet_forward.22} parent=0
    _
  %s6 = ssub.s32 1, %s4
  %s7 = scalar_select 0, %s6, %s4
  loop: start=0, step=1, limit=4
  $region2: #{higher_hrnet_forward.22} parent=0 // loop_pre_header
    _
  $region3: #{higher_hrnet_forward.22} parent=0 // loop_header
    %s9 = sphi 0, %s13
    %p10 = scmp.ge.s32.totalorder %s9, 4
    %s19 = sphi 0, %s21
    %s22 = sphi 0, %s19
    %s23 = sphi 0, %s22
    %s39 = sphi 0, %s23
    %s43 = sphi 0, %s43
    %s45 = sphi 0, %s43
    %s46 = sphi 0, %s45
    %s60 = sphi 0, %s46
    %s64 = sphi 0, %s64
    %s66 = sphi 0, %s64
    %s67 = sphi 0, %s66
    %s81 = sphi 0, %s67
    %s87 = sphi 0, %s89
    %s90 = sphi 0, %s87
    %s91 = sphi 0, %s90
    %s107 = sphi 0, %s91
  $region4: #{higher_hrnet_forward.22} parent=0 // loop_header_branch
    %12 = sbr.rel (%p10) target = $region8
  $region5: #{higher_hrnet_forward.22} parent=0 // loop_body
    %s14 = ssub.s32 %s9, 1
    %s15 = ssub.s32 %s9, 2
    %s16 = sadd.s32 %s9, 1
    %s17 = ssub.s32 %s9, %s16
    %p18 = scmp.eq.s32.totalorder %s17, 0
    %s20 = sadd.s32 %s19, 1
    %s21 = scalar_select %p18, %s19, %s20
    %p24 = pneg %p18
    %p25 = scmp.eq.s32.totalorder %s9, 1
    %p26 = por %p24, %p25
    %p27 = scmp.ne.s32.totalorder %s19, %s22
    %p28 = scmp.eq.s32.totalorder %s9, 0
    %p29 = por %p27, %p28
    %p30 = scmp.ne.s32.totalorder %s19, %s22
    %p31 = scmp.eq.s32.totalorder %s14, 1
    %p32 = por %p30, %p31
    %p33 = scmp.ne.s32.totalorder %s22, %s23
    %p34 = scmp.eq.s32.totalorder %s14, 0
    %p35 = por %p33, %p34
    %p36 = scmp.ne.s32.totalorder %s22, %s23
    %p37 = scmp.eq.s32.totalorder %s15, 1
    %p38 = por %p36, %p37
    %p40 = scmp.ne.s32.totalorder %s23, %s39
    %p41 = scmp.eq.s32.totalorder %s15, 0
    %p42 = por %p40, %p41
    %s44 = sadd.s32 %s43, 1
    %p47 = scmp.eq.s32.totalorder %s9, 1
    %p48 = scmp.ne.s32.totalorder %s43, %s45
    %p49 = scmp.eq.s32.totalorder %s9, 0
    %p50 = por %p48, %p49
    %p51 = scmp.ne.s32.totalorder %s43, %s45
    %p52 = scmp.eq.s32.totalorder %s14, 1
    %p53 = por %p51, %p52
    %p54 = scmp.ne.s32.totalorder %s45, %s46
    %p55 = scmp.eq.s32.totalorder %s14, 0
    %p56 = por %p54, %p55
    %p57 = scmp.ne.s32.totalorder %s45, %s46
    %p58 = scmp.eq.s32.totalorder %s15, 1
    %p59 = por %p57, %p58
    %p61 = scmp.ne.s32.totalorder %s46, %s60
    %p62 = scmp.eq.s32.totalorder %s15, 0
    %p63 = por %p61, %p62
    %s65 = sadd.s32 %s64, 1
    %p68 = scmp.eq.s32.totalorder %s9, 1
    %p69 = scmp.ne.s32.totalorder %s64, %s66
    %p70 = scmp.eq.s32.totalorder %s9, 0
    %p71 = por %p69, %p70
    %p72 = scmp.ne.s32.totalorder %s64, %s66
    %p73 = scmp.eq.s32.totalorder %s14, 1
    %p74 = por %p72, %p73
    %p75 = scmp.ne.s32.totalorder %s66, %s67
    %p76 = scmp.eq.s32.totalorder %s14, 0
    %p77 = por %p75, %p76
    %p78 = scmp.ne.s32.totalorder %s66, %s67
    %p79 = scmp.eq.s32.totalorder %s15, 1
    %p80 = por %p78, %p79
    %p82 = scmp.ne.s32.totalorder %s67, %s81
    %p83 = scmp.eq.s32.totalorder %s15, 0
    %p84 = por %p82, %p83
    %s85 = ssub.s32 %s9, %s16
    %p86 = scmp.eq.s32.totalorder %s85, 0
    %s88 = sadd.s32 %s87, 1
    %s89 = scalar_select %p86, %s87, %s88
    %p92 = pneg %p86
    %p93 = scmp.eq.s32.totalorder %s9, 1
    %p94 = por %p92, %p93
    %p95 = scmp.ne.s32.totalorder %s87, %s90
    %p96 = scmp.eq.s32.totalorder %s9, 0
    %p97 = por %p95, %p96
    %p98 = scmp.ne.s32.totalorder %s87, %s90
    %p99 = scmp.eq.s32.totalorder %s14, 1
    %p100 = por %p98, %p99
    %p101 = scmp.ne.s32.totalorder %s90, %s91
    %p102 = scmp.eq.s32.totalorder %s14, 0
    %p103 = por %p101, %p102
    %p104 = scmp.ne.s32.totalorder %s90, %s91
    %p105 = scmp.eq.s32.totalorder %s15, 1
    %p106 = por %p104, %p105
    %p108 = scmp.ne.s32.totalorder %s91, %s107
    %p109 = scmp.eq.s32.totalorder %s15, 0
    %p110 = por %p108, %p109
    %p111 = scmp.le.s32.totalorder 1, %s9
    %p112 = scmp.lt.s32.totalorder %s9, 3
    %p113 = pnand %p111, %p112
    %p114 = pneg %p113
    // Predicated region
    $region9: #{higher_hrnet_forward.22} parent=5 // pred_check
      _
    $region10: #{higher_hrnet_forward.22} parent=5 // pred_check_branch
      %116 = sbr.rel (%p113) target = $region12
    $region11: #{higher_hrnet_forward.22} parent=5 // pred_region
      %s117 = ssub.s32 %s9, 1
      // Predicated region
      $region13: #{higher_hrnet_forward.22} parent=11 // pred_check
        %p118 = pneg %p56
      $region14: #{higher_hrnet_forward.22} parent=11 // pred_check_branch
        %120 = sbr.rel (%p118) target = $region16
      $region15: #{higher_hrnet_forward.22} parent=11 // pred_region
        _
      $region16: #{higher_hrnet_forward.22} parent=11 // pred_fallthru
        _
      // Predicated region
      $region17: #{higher_hrnet_forward.22} parent=11 // pred_check
        %p121 = pneg %p77
      $region18: #{higher_hrnet_forward.22} parent=11 // pred_check_branch
        %123 = sbr.rel (%p121) target = $region20
      $region19: #{higher_hrnet_forward.22} parent=11 // pred_region
        _
      $region20: #{higher_hrnet_forward.22} parent=11 // pred_fallthru
        _
    $region12: #{higher_hrnet_forward.22} parent=5 // pred_fallthru
      _
    %p124 = scmp.lt.s32.totalorder %s9, 2
    // Predicated region
    $region21: #{higher_hrnet_forward.22} parent=5 // pred_check
      %p125 = pneg %p124
    $region22: #{higher_hrnet_forward.22} parent=5 // pred_check_branch
      %127 = sbr.rel (%p125) target = $region24
    $region23: #{higher_hrnet_forward.22} parent=5 // pred_region
      // Predicated region
      $region25: #{higher_hrnet_forward.22} parent=23 // pred_check
        %p128 = pneg %p29
      $region26: #{higher_hrnet_forward.22} parent=23 // pred_check_branch
        %130 = sbr.rel (%p128) target = $region28
      $region27: #{higher_hrnet_forward.22} parent=23 // pred_region
        %p131 = scmp.lt.s32.totalorder %s9, 1
        %s132 = scalar_select %p131, %s9, 1
        %s133 = smul.addr %s132, 11
        %s134 = smul.addr %s133, 4
        %s135 = scalar_lea.vmem %s0, %s134
      $region28: #{higher_hrnet_forward.22} parent=23 // pred_fallthru
        _
    $region24: #{higher_hrnet_forward.22} parent=5 // pred_fallthru
      _
    %p136 = scmp.le.s32.totalorder 1, %s9
    %p137 = scmp.lt.s32.totalorder %s9, 3
    %p138 = pnand %p136, %p137
    %p139 = pneg %p138
    // Predicated region
    $region29: #{higher_hrnet_forward.22} parent=5 // pred_check
      _
    $region30: #{higher_hrnet_forward.22} parent=5 // pred_check_branch
      %141 = sbr.rel (%p138) target = $region32
    $region31: #{higher_hrnet_forward.22} parent=5 // pred_region
      %s142 = ssub.s32 %s9, 1
      %p143 = scmp.lt.s32.totalorder %s14, 1
      %s144 = scalar_select %p143, %s14, 1
      %s145 = smul.addr %s144, 11
      %s146 = smul.addr %s145, 4
      %s147 = scalar_lea.vmem %s0, %s146
      %p148 = pneg %p35
      %p149 = pneg %p32
      %p150 = pneg %p56
      %p151 = pneg %p53
      %p152 = pneg %p77
      %p153 = pneg %p74
      %p154 = pneg %p103
      %p155 = pneg %p100
      %p156 = scmp.lt.s32.totalorder %s14, 1
      %s157 = scalar_select %p156, %s14, 1
      %s158 = smul.addr %s157, 9
      %s159 = smul.addr %s158, 4
      %s160 = scalar_lea.vmem %s3, %s159
      %p161 = scmp.lt.s32.totalorder %s14, 1
      %s162 = scalar_select %p161, %s14, 1
      %s163 = smul.addr %s162, 11
      %s164 = smul.addr %s163, 4
      %s165 = scalar_lea.vmem %s0, %s164
      %p166 = scmp.lt.s32.totalorder %s14, 1
      %s167 = scalar_select %p166, %s14, 1
      %s168 = smul.addr %s167, 9
      %s169 = smul.addr %s168, 4
      %s170 = scalar_lea.vmem %s3, %s169
      %v172 = vld [vmem:[%s165] sm:$0xf]
      %v173 = vld [vmem:[%s165 + $0x4] sm:$0xf]
      %v174 = vld [vmem:[%s165 + $0x8] sm:$0xf]
      %v175 = vld [vmem:[%s165 + $0xc] sm:$0xf]
      %v176 = vld [vmem:[%s165 + $0x10] sm:$0xf]
      %v177 = vld [vmem:[%s165 + $0x14] sm:$0xf]
      %v178 = vld [vmem:[%s165 + $0x18] sm:$0xf]
      %v179 = vld [vmem:[%s165 + $0x1c] sm:$0xf]
      %v180 = vld [vmem:[%s165 + $0x20] sm:$0xf]
      %v181 = vld [vmem:[%s1] sm:$0xf]
      %v182 = vld [vmem:[%s1 + $0x4] sm:$0xf]
      %v183 = vld [vmem:[%s1 + $0x8] sm:$0xf]
      %v184 = vld [vmem:[%s165 + $0x24] sm:$0x1]
      %s185 = scalar_lea.vmem %s1, 12
      %v186 = vld [vmem:[%s185] sm:$0xf]
      %v187 = vld [vmem:[%s185 + $0x4] sm:$0xf]
      %v188 = vld [vmem:[%s185 + $0x8] sm:$0xf]
      %v199 = vunpack.c.l.b16 %v172
      %v200 = vunpack.c.l.b16 %v173
      %v201 = vunpack.c.l.b16 %v174
      %v202 = vunpack.c.l.b16 %v175
      %v203 = vunpack.c.l.b16 %v176
      %v204 = vunpack.c.l.b16 %v177
      %v205 = vunpack.c.l.b16 %v178
      %v206 = vunpack.c.l.b16 %v179
      %v207 = vunpack.c.l.b16 %v180
      %v208 = vunpack.c.l.b16 %v184
      %v209 = vpack.c.b16 %v200, %v199
      %v210 = vpack.c.b16 %v202, %v201
      %v211 = vpack.c.b16 %v204, %v203
      %v212 = vpack.c.b16 %v206, %v205
      %v213 = vpack.c.b16 %v208, %v207
      %vm214 = vsmask.f32 7424
      %v216 = vshrl.u32 %v209, 16
      %v218 = vshll.u32 %v209, 16
      %v220 = vrot.slane %v218, 1
      %v221 = vor.u32 %v216, %v220
      %v223 = vshll.u32 %v210, 16
      %v225 = vrot.slane %v223, 1
      %v226 = vsel %vm214, %v221, %v225
      %v227 = vshrl.u32 %v210, 16
      %v229 = vor.u32 %v227, %v225
      %v231 = vshll.u32 %v211, 16
      %v233 = vrot.slane %v231, 1
      %v234 = vsel %vm214, %v229, %v233
      %v235 = vshrl.u32 %v211, 16
      %v237 = vor.u32 %v235, %v233
      %v239 = vshll.u32 %v212, 16
      %v241 = vrot.slane %v239, 1
      %v242 = vsel %vm214, %v237, %v241
      %v243 = vshrl.u32 %v212, 16
      %v245 = vor.u32 %v243, %v241
      %v247 = vshll.u32 %v213, 16
      %v249 = vrot.slane %v247, 1
      %v250 = vsel %vm214, %v245, %v249
      %v251 = vshrl.u32 %v213, 16
      %v253 = vor.u32 %v251, %v249
      %v257 = vunpack.c.l.b16 %v186
      %v258 = vunpack.c.l.b16 %v187
      %v259 = vunpack.c.l.b16 %v188
      %v260 = vpack.c.b16 %v258, %v257
      %v261 = vpack.c.b16 %v259, %v259
      %vm263 = vcmask 195584
      %v265 = vsel %vm263, %v226, 0
      %v268 = vsel %vm263, %v234, 0
      %v271 = vsel %vm263, %v242, 0
      %v274 = vsel %vm263, %v250, 0
      %v277 = vsel %vm263, %v253, 0
      %vm279 = vcmask 1043456
      %v281 = vsel %vm279, %v261, 0
      %283 = vmatpush.bf16.msra.mxu0 0
      %284 = vmatpush.bf16.msra.mxu0 0
      %285 = vmatpush.bf16.msra.mxu0 0
      %286 = vmatpush.bf16.msra.mxu0 0
      %287 = vmatpush.bf16.msra.mxu0 0
      %288 = vmatpush.bf16.msra.mxu0 0
      %289 = vmatpush.bf16.msra.mxu0 %v281
      %290 = vmatpush.bf16.msra.mxu0 %v260
      %291 = vmatmul.bf16.gmra.mxu0 %v265
      %v292 = vpop.f32.mrf.mxu0
      %v293 = vadd.f32 0.0, %v292
      %v294 = vpop.f32.mrf.mxu0
      %v295 = vadd.f32 0.0, %v294
      %296 = vmatmul.bf16.gmra.mxu0 %v268
      %v297 = vpop.f32.mrf.mxu0
      %v298 = vadd.f32 0.0, %v297
      %v299 = vpop.f32.mrf.mxu0
      %v300 = vadd.f32 0.0, %v299
      %301 = vmatmul.bf16.gmra.mxu0 %v271
      %v302 = vpop.f32.mrf.mxu0
      %v303 = vadd.f32 0.0, %v302
      %v304 = vpop.f32.mrf.mxu0
      %v305 = vadd.f32 0.0, %v304
      %306 = vmatmul.bf16.gmra.mxu0 %v274
      %v307 = vpop.f32.mrf.mxu0
      %v308 = vadd.f32 0.0, %v307
      %v309 = vpop.f32.mrf.mxu0
      %v310 = vadd.f32 0.0, %v309
      %311 = vmatmul.bf16.gmra.mxu0 %v277
      %v312 = vpop.f32.mrf.mxu0
      %v313 = vadd.f32 0.0, %v312
      %v314 = vpop.f32.mrf.mxu0
      %315 = vdwg.mxu0
      %v316 = vpack.c.b16 %v207, %v207
      %v320 = vunpack.c.l.b16 %v181
      %v321 = vunpack.c.l.b16 %v182
      %v322 = vunpack.c.l.b16 %v183
      %v323 = vpack.c.b16 %v321, %v320
      %v324 = vpack.c.b16 %v322, %v322
      %v326 = vsel %vm263, %v209, 0
      %v328 = vsel %vm263, %v210, 0
      %v330 = vsel %vm263, %v211, 0
      %v332 = vsel %vm263, %v212, 0
      %v335 = vsel %vm263, %v316, 0
      %v338 = vsel %vm279, %v324, 0
      %340 = vmatpush.bf16.msra.mxu0 0
      %341 = vmatpush.bf16.msra.mxu0 0
      %342 = vmatpush.bf16.msra.mxu0 0
      %343 = vmatpush.bf16.msra.mxu0 0
      %344 = vmatpush.bf16.msra.mxu0 0
      %345 = vmatpush.bf16.msra.mxu0 0
      %346 = vmatpush.bf16.msra.mxu0 %v338
      %347 = vmatpush.bf16.msra.mxu0 %v323
      %348 = vmatmul.bf16.gmra.mxu0 %v326
      %v349 = vpop.f32.mrf.mxu0
      %v350 = vadd.f32 %v293, %v349
      %v351 = vpop.f32.mrf.mxu0
      %v352 = vadd.f32 %v295, %v351
      %353 = vmatmul.bf16.gmra.mxu0 %v328
      %v354 = vpop.f32.mrf.mxu0
      %v355 = vadd.f32 %v298, %v354
      %v356 = vpop.f32.mrf.mxu0
      %v357 = vadd.f32 %v300, %v356
      %358 = vmatmul.bf16.gmra.mxu0 %v330
      %v359 = vpop.f32.mrf.mxu0
      %v360 = vadd.f32 %v303, %v359
      %v361 = vpop.f32.mrf.mxu0
      %v362 = vadd.f32 %v305, %v361
      %363 = vmatmul.bf16.gmra.mxu0 %v332
      %v364 = vpop.f32.mrf.mxu0
      %v365 = vadd.f32 %v308, %v364
      %v366 = vpop.f32.mrf.mxu0
      %v367 = vadd.f32 %v310, %v366
      %368 = vmatmul.bf16.gmra.mxu0 %v335
      %v369 = vpop.f32.mrf.mxu0
      %v370 = vadd.f32 %v313, %v369
      %v371 = vpop.f32.mrf.mxu0
      %372 = vdwg.mxu0
      %v373 = vld [vmem:[%s165 + $0x4] sm:$0xf]
      %v374 = vld [vmem:[%s165 + $0x8] sm:$0xf]
      %v375 = vld [vmem:[%s165 + $0xc] sm:$0xf]
      %v376 = vld [vmem:[%s165 + $0x10] sm:$0xf]
      %v377 = vld [vmem:[%s165 + $0x14] sm:$0xf]
      %v378 = vld [vmem:[%s165 + $0x18] sm:$0xf]
      %v379 = vld [vmem:[%s165 + $0x1c] sm:$0xf]
      %v380 = vld [vmem:[%s165 + $0x20] sm:$0xf]
      %v381 = vld [vmem:[%s165 + $0x24] sm:$0xf]
      %v382 = vld [vmem:[%s165 + $0x28] sm:$0x1]
      %s383 = scalar_lea.vmem %s1, 24
      %v384 = vld [vmem:[%s383] sm:$0xf]
      %v385 = vld [vmem:[%s383 + $0x4] sm:$0xf]
      %v386 = vld [vmem:[%s383 + $0x8] sm:$0xf]
      %v397 = vunpack.c.l.b16 %v373
      %v398 = vunpack.c.l.b16 %v374
      %v399 = vunpack.c.l.b16 %v375
      %v400 = vunpack.c.l.b16 %v376
      %v401 = vunpack.c.l.b16 %v377
      %v402 = vunpack.c.l.b16 %v378
      %v403 = vunpack.c.l.b16 %v379
      %v404 = vunpack.c.l.b16 %v380
      %v405 = vunpack.c.l.b16 %v381
      %v406 = vunpack.c.l.b16 %v382
      %v407 = vpack.c.b16 %v398, %v397
      %v408 = vpack.c.b16 %v400, %v399
      %v409 = vpack.c.b16 %v402, %v401
      %v410 = vpack.c.b16 %v404, %v403
      %v411 = vpack.c.b16 %v406, %v405
      %v413 = vshrl.u32 %v407, 16
      %v415 = vshll.u32 %v407, 16
      %v417 = vrot.slane %v415, 1
      %v418 = vor.u32 %v413, %v417
      %v420 = vshll.u32 %v408, 16
      %v422 = vrot.slane %v420, 1
      %v423 = vsel %vm214, %v418, %v422
      %v424 = vshrl.u32 %v408, 16
      %v426 = vor.u32 %v424, %v422
      %v428 = vshll.u32 %v409, 16
      %v430 = vrot.slane %v428, 1
      %v431 = vsel %vm214, %v426, %v430
      %v432 = vshrl.u32 %v409, 16
      %v434 = vor.u32 %v432, %v430
      %v436 = vshll.u32 %v410, 16
      %v438 = vrot.slane %v436, 1
      %v439 = vsel %vm214, %v434, %v438
      %v440 = vshrl.u32 %v410, 16
      %v442 = vor.u32 %v440, %v438
      %v444 = vshll.u32 %v411, 16
      %v446 = vrot.slane %v444, 1
      %v447 = vsel %vm214, %v442, %v446
      %v448 = vshrl.u32 %v411, 16
      %v450 = vor.u32 %v448, %v446
      %v454 = vunpack.c.l.b16 %v384
      %v455 = vunpack.c.l.b16 %v385
      %v456 = vunpack.c.l.b16 %v386
      %v457 = vpack.c.b16 %v455, %v454
      %v458 = vpack.c.b16 %v456, %v456
      %v461 = vsel %vm263, %v423, 0
      %v464 = vsel %vm263, %v431, 0
      %v467 = vsel %vm263, %v439, 0
      %v470 = vsel %vm263, %v447, 0
      %v473 = vsel %vm263, %v450, 0
      %v476 = vsel %vm279, %v458, 0
      %478 = vmatpush.bf16.msra.mxu0 0
      %479 = vmatpush.bf16.msra.mxu0 0
      %480 = vmatpush.bf16.msra.mxu0 0
      %481 = vmatpush.bf16.msra.mxu0 0
      %482 = vmatpush.bf16.msra.mxu0 0
      %483 = vmatpush.bf16.msra.mxu0 0
      %484 = vmatpush.bf16.msra.mxu0 %v476
      %485 = vmatpush.bf16.msra.mxu0 %v457
      %486 = vmatmul.bf16.gmra.mxu0 %v461
      %v487 = vpop.f32.mrf.mxu0
      %v488 = vadd.f32 0.0, %v487
      %v489 = vpop.f32.mrf.mxu0
      %v490 = vadd.f32 0.0, %v489
      %491 = vmatmul.bf16.gmra.mxu0 %v464
      %v492 = vpop.f32.mrf.mxu0
      %v493 = vadd.f32 0.0, %v492
      %v494 = vpop.f32.mrf.mxu0
      %v495 = vadd.f32 0.0, %v494
      %496 = vmatmul.bf16.gmra.mxu0 %v467
      %v497 = vpop.f32.mrf.mxu0
      %v498 = vadd.f32 0.0, %v497
      %v499 = vpop.f32.mrf.mxu0
      %v500 = vadd.f32 0.0, %v499
      %501 = vmatmul.bf16.gmra.mxu0 %v470
      %v502 = vpop.f32.mrf.mxu0
      %v503 = vadd.f32 0.0, %v502
      %v504 = vpop.f32.mrf.mxu0
      %v505 = vadd.f32 0.0, %v504
      %506 = vmatmul.bf16.gmra.mxu0 %v473
      %v507 = vpop.f32.mrf.mxu0
      %v508 = vadd.f32 0.0, %v507
      %v509 = vpop.f32.mrf.mxu0
      %510 = vdwg.mxu0
      %v511 = vadd.f32 %v350, %v488
      %v512 = vadd.f32 %v352, %v490
      %v513 = vadd.f32 %v355, %v493
      %v514 = vadd.f32 %v357, %v495
      %v515 = vadd.f32 %v360, %v498
      %v516 = vadd.f32 %v362, %v500
      %v517 = vadd.f32 %v365, %v503
      %v518 = vadd.f32 %v367, %v505
      %v519 = vadd.f32 %v370, %v508
      %v520 = vld [vmem:[%s165 + $0x4] sm:$0xe]
      %s521 = scalar_lea.vmem %s1, 36
      %v522 = vld [vmem:[%s521] sm:$0xf]
      %v523 = vld [vmem:[%s521 + $0x4] sm:$0xf]
      %v524 = vld [vmem:[%s521 + $0x8] sm:$0xf]
      %v526 = vunpack.c.l.b16 %v520
      %v527 = vpack.c.b16 %v398, %v526
      %vm528 = vcmask 1046528
      %v529 = vrot.slane %v527, 1
      %v530 = vrot.slane %v408, 1
      %v531 = vsel %vm528, %v529, %v530
      %v532 = vrot.slane %v409, 1
      %v533 = vsel %vm528, %v530, %v532
      %v534 = vrot.slane %v410, 1
      %v535 = vsel %vm528, %v532, %v534
      %v536 = vrot.slane %v411, 1
      %v537 = vsel %vm528, %v534, %v536
      %v541 = vunpack.c.l.b16 %v522
      %v542 = vunpack.c.l.b16 %v523
      %v543 = vunpack.c.l.b16 %v524
      %v544 = vpack.c.b16 %v542, %v541
      %v545 = vpack.c.b16 %v543, %v543
      %v548 = vsel %vm263, %v531, 0
      %v551 = vsel %vm263, %v533, 0
      %v554 = vsel %vm263, %v535, 0
      %v557 = vsel %vm263, %v537, 0
      %v560 = vsel %vm263, %v536, 0
      %v563 = vsel %vm279, %v545, 0
      %565 = vmatpush.bf16.msra.mxu0 0
      %566 = vmatpush.bf16.msra.mxu0 0
      %567 = vmatpush.bf16.msra.mxu0 0
      %568 = vmatpush.bf16.msra.mxu0 0
      %569 = vmatpush.bf16.msra.mxu0 0
      %570 = vmatpush.bf16.msra.mxu0 0
      %571 = vmatpush.bf16.msra.mxu0 %v563
      %572 = vmatpush.bf16.msra.mxu0 %v544
      %573 = vmatmul.bf16.gmra.mxu0 %v548
      %v574 = vpop.f32.mrf.mxu0
      %v575 = vadd.f32 0.0, %v574
      %v576 = vpop.f32.mrf.mxu0
      %v577 = vadd.f32 0.0, %v576
      %578 = vmatmul.bf16.gmra.mxu0 %v551
      %v579 = vpop.f32.mrf.mxu0
      %v580 = vadd.f32 0.0, %v579
      %v581 = vpop.f32.mrf.mxu0
      %v582 = vadd.f32 0.0, %v581
      %583 = vmatmul.bf16.gmra.mxu0 %v554
      %v584 = vpop.f32.mrf.mxu0
      %v585 = vadd.f32 0.0, %v584
      %v586 = vpop.f32.mrf.mxu0
      %v587 = vadd.f32 0.0, %v586
      %588 = vmatmul.bf16.gmra.mxu0 %v557
      %v589 = vpop.f32.mrf.mxu0
      %v590 = vadd.f32 0.0, %v589
      %v591 = vpop.f32.mrf.mxu0
      %v592 = vadd.f32 0.0, %v591
      %593 = vmatmul.bf16.gmra.mxu0 %v560
      %v594 = vpop.f32.mrf.mxu0
      %v595 = vadd.f32 0.0, %v594
      %v596 = vpop.f32.mrf.mxu0
      %597 = vdwg.mxu0
      %v598 = vadd.f32 %v511, %v575
      %v599 = vadd.f32 %v512, %v577
      %v600 = vadd.f32 %v513, %v580
      %v601 = vadd.f32 %v514, %v582
      %v602 = vadd.f32 %v515, %v585
      %v603 = vadd.f32 %v516, %v587
      %v604 = vadd.f32 %v517, %v590
      %v605 = vadd.f32 %v518, %v592
      %v606 = vadd.f32 %v519, %v595
      %v607 = vld [vmem:[%s2] sm:$0x1]
      %v609 = vperm.slane %v607, 0
      %v611 = vadd.f32 %v598, %v609
      %v612 = vadd.f32 %v599, %v609
      %v613 = vadd.f32 %v600, %v609
      %v614 = vadd.f32 %v601, %v609
      %v615 = vadd.f32 %v602, %v609
      %v616 = vadd.f32 %v603, %v609
      %v617 = vadd.f32 %v604, %v609
      %v618 = vadd.f32 %v605, %v609
      %v619 = vadd.f32 %v606, %v609
      %v620 = vmax.f32 %v611, 0.0
      %v621 = vmax.f32 %v612, 0.0
      %v622 = vmax.f32 %v613, 0.0
      %v623 = vmax.f32 %v614, 0.0
      %v624 = vmax.f32 %v615, 0.0
      %v625 = vmax.f32 %v616, 0.0
      %v626 = vmax.f32 %v617, 0.0
      %v627 = vmax.f32 %v618, 0.0
      %v628 = vmax.f32 %v619, 0.0
      %v629 = vpack.c.bf16 %v620, %v620
      %v630 = vpack.c.bf16 %v621, %v621
      %v631 = vpack.c.bf16 %v622, %v622
      %v632 = vpack.c.bf16 %v623, %v623
      %v633 = vpack.c.bf16 %v624, %v624
      %v634 = vpack.c.bf16 %v625, %v625
      %v635 = vpack.c.bf16 %v626, %v626
      %v636 = vpack.c.bf16 %v627, %v627
      %v637 = vpack.c.bf16 %v628, %v628
      %vm638 = vcmask 125952
      %639 = vst.msk [vmem:[%s170] sm:$0xf] %vm638, %v629
      %640 = vst.msk [vmem:[%s170 + $0x4] sm:$0xf] %vm638, %v630
      %641 = vst.msk [vmem:[%s170 + $0x8] sm:$0xf] %vm638, %v631
      %642 = vst.msk [vmem:[%s170 + $0xc] sm:$0xf] %vm638, %v632
      %643 = vst.msk [vmem:[%s170 + $0x10] sm:$0xf] %vm638, %v633
      %644 = vst.msk [vmem:[%s170 + $0x14] sm:$0xf] %vm638, %v634
      %645 = vst.msk [vmem:[%s170 + $0x18] sm:$0xf] %vm638, %v635
      %646 = vst.msk [vmem:[%s170 + $0x1c] sm:$0xf] %vm638, %v636
      %647 = vst.msk [vmem:[%s170 + $0x20] sm:$0xf] %vm638, %v637
      %p648 = scmp.lt.s32.totalorder %s14, 1
      %s649 = scalar_select %p648, %s14, 1
      %s650 = smul.addr %s649, 9
      %s651 = smul.addr %s650, 4
      %s652 = scalar_lea.vmem %s3, %s651
      // Predicated region
      $region33: #{higher_hrnet_forward.22} parent=31 // pred_check
        %p653 = pneg %p100
      $region34: #{higher_hrnet_forward.22} parent=31 // pred_check_branch
        %655 = sbr.rel (%p653) target = $region36
      $region35: #{higher_hrnet_forward.22} parent=31 // pred_region
        _
      $region36: #{higher_hrnet_forward.22} parent=31 // pred_fallthru
        _
    $region32: #{higher_hrnet_forward.22} parent=5 // pred_fallthru
      _
    %p656 = scmp.le.s32.totalorder 2, %s9
    // Predicated region
    $region37: #{higher_hrnet_forward.22} parent=5 // pred_check
      %p657 = pneg %p656
    $region38: #{higher_hrnet_forward.22} parent=5 // pred_check_branch
      %659 = sbr.rel (%p657) target = $region40
    $region39: #{higher_hrnet_forward.22} parent=5 // pred_region
      %s660 = ssub.s32 %s9, 2
      // Predicated region
      $region41: #{higher_hrnet_forward.22} parent=39 // pred_check
        %p661 = pneg %p106
      $region42: #{higher_hrnet_forward.22} parent=39 // pred_check_branch
        %663 = sbr.rel (%p661) target = $region44
      $region43: #{higher_hrnet_forward.22} parent=39 // pred_region
        %p664 = scmp.lt.s32.totalorder %s15, 1
        %s665 = scalar_select %p664, %s15, 1
        %s666 = smul.addr %s665, 9
        %s667 = smul.addr %s666, 4
        %s668 = scalar_lea.vmem %s3, %s667
      $region44: #{higher_hrnet_forward.22} parent=39 // pred_fallthru
        _
    $region40: #{higher_hrnet_forward.22} parent=5 // pred_fallthru
      _
  $region6: #{higher_hrnet_forward.22} parent=0 // loop_footer
    %s13 = sadd.s32 1, %s9
  $region7: #{higher_hrnet_forward.22} parent=0 // loop_footer_branch
    %8 = sbr.rel target = $region3
  $region8: #{higher_hrnet_forward.22} parent=0 // loop_exit
    _

// kernel: higher_hrnet_forward.31
$region0: #{higher_hrnet_forward.31}
  #allocation0 [shape = 'u32[]', space=smem, size = 0x4, offset = 0x4, fixed_abs, tag = 'smem constant byte address 0x4 - core index']
  #allocation1 [shape = 'u32[72,128]{1,0:T(1,128)}', space=vmem, size = 0x9000, scoped, tag = 'internal scratch']
  %s0 = inlined_call_operand.vmem [shape: bf16[2,256,16], index: 0, kind: input, shape index: {}]
  %s1 = inlined_call_operand.vmem [shape: bf16[1,16,4], index: 1, kind: input, shape index: {}]
  %s2 = inlined_call_operand.vmem [shape: f32[1,4], index: 2, kind: input, shape index: {}]
  %s3 = inlined_call_operand.vmem [shape: f32[2,256,4], index: 3, kind: output, shape index: {}]
  %s4 = sld [smem:[#allocation0]]
  $region45: #{higher_hrnet_forward.31} parent=0
    _
  %s6 = ssub.s32 1, %s4
  %s7 = scalar_select 0, %s6, %s4
  loop: start=0, step=1, limit=4
  $region2: #{higher_hrnet_forward.31} parent=0 // loop_pre_header
    _
  $region3: #{higher_hrnet_forward.31} parent=0 // loop_header
    %s9 = sphi 0, %s13
    %p10 = scmp.ge.s32.totalorder %s9, 4
    %s19 = sphi 0, %s21
    %s22 = sphi 0, %s19
    %s23 = sphi 0, %s22
    %s39 = sphi 0, %s23
    %s43 = sphi 0, %s43
    %s45 = sphi 0, %s43
    %s46 = sphi 0, %s45
    %s60 = sphi 0, %s46
    %s64 = sphi 0, %s64
    %s66 = sphi 0, %s64
    %s67 = sphi 0, %s66
    %s81 = sphi 0, %s67
    %s87 = sphi 0, %s89
    %s90 = sphi 0, %s87
    %s91 = sphi 0, %s90
    %s107 = sphi 0, %s91
  $region4: #{higher_hrnet_forward.31} parent=0 // loop_header_branch
    %12 = sbr.rel (%p10) target = $region8
  $region5: #{higher_hrnet_forward.31} parent=0 // loop_body
    %s14 = ssub.s32 %s9, 1
    %s15 = ssub.s32 %s9, 2
    %s16 = sadd.s32 %s9, 1
    %s17 = ssub.s32 %s9, %s16
    %p18 = scmp.eq.s32.totalorder %s17, 0
    %s20 = sadd.s32 %s19, 1
    %s21 = scalar_select %p18, %s19, %s20
    %p24 = pneg %p18
    %p25 = scmp.eq.s32.totalorder %s9, 1
    %p26 = por %p24, %p25
    %p27 = scmp.ne.s32.totalorder %s19, %s22
    %p28 = scmp.eq.s32.totalorder %s9, 0
    %p29 = por %p27, %p28
    %p30 = scmp.ne.s32.totalorder %s19, %s22
    %p31 = scmp.eq.s32.totalorder %s14, 1
    %p32 = por %p30, %p31
    %p33 = scmp.ne.s32.totalorder %s22, %s23
    %p34 = scmp.eq.s32.totalorder %s14, 0
    %p35 = por %p33, %p34
    %p36 = scmp.ne.s32.totalorder %s22, %s23
    %p37 = scmp.eq.s32.totalorder %s15, 1
    %p38 = por %p36, %p37
    %p40 = scmp.ne.s32.totalorder %s23, %s39
    %p41 = scmp.eq.s32.totalorder %s15, 0
    %p42 = por %p40, %p41
    %s44 = sadd.s32 %s43, 1
    %p47 = scmp.eq.s32.totalorder %s9, 1
    %p48 = scmp.ne.s32.totalorder %s43, %s45
    %p49 = scmp.eq.s32.totalorder %s9, 0
    %p50 = por %p48, %p49
    %p51 = scmp.ne.s32.totalorder %s43, %s45
    %p52 = scmp.eq.s32.totalorder %s14, 1
    %p53 = por %p51, %p52
    %p54 = scmp.ne.s32.totalorder %s45, %s46
    %p55 = scmp.eq.s32.totalorder %s14, 0
    %p56 = por %p54, %p55
    %p57 = scmp.ne.s32.totalorder %s45, %s46
    %p58 = scmp.eq.s32.totalorder %s15, 1
    %p59 = por %p57, %p58
    %p61 = scmp.ne.s32.totalorder %s46, %s60
    %p62 = scmp.eq.s32.totalorder %s15, 0
    %p63 = por %p61, %p62
    %s65 = sadd.s32 %s64, 1
    %p68 = scmp.eq.s32.totalorder %s9, 1
    %p69 = scmp.ne.s32.totalorder %s64, %s66
    %p70 = scmp.eq.s32.totalorder %s9, 0
    %p71 = por %p69, %p70
    %p72 = scmp.ne.s32.totalorder %s64, %s66
    %p73 = scmp.eq.s32.totalorder %s14, 1
    %p74 = por %p72, %p73
    %p75 = scmp.ne.s32.totalorder %s66, %s67
    %p76 = scmp.eq.s32.totalorder %s14, 0
    %p77 = por %p75, %p76
    %p78 = scmp.ne.s32.totalorder %s66, %s67
    %p79 = scmp.eq.s32.totalorder %s15, 1
    %p80 = por %p78, %p79
    %p82 = scmp.ne.s32.totalorder %s67, %s81
    %p83 = scmp.eq.s32.totalorder %s15, 0
    %p84 = por %p82, %p83
    %s85 = ssub.s32 %s9, %s16
    %p86 = scmp.eq.s32.totalorder %s85, 0
    %s88 = sadd.s32 %s87, 1
    %s89 = scalar_select %p86, %s87, %s88
    %p92 = pneg %p86
    %p93 = scmp.eq.s32.totalorder %s9, 1
    %p94 = por %p92, %p93
    %p95 = scmp.ne.s32.totalorder %s87, %s90
    %p96 = scmp.eq.s32.totalorder %s9, 0
    %p97 = por %p95, %p96
    %p98 = scmp.ne.s32.totalorder %s87, %s90
    %p99 = scmp.eq.s32.totalorder %s14, 1
    %p100 = por %p98, %p99
    %p101 = scmp.ne.s32.totalorder %s90, %s91
    %p102 = scmp.eq.s32.totalorder %s14, 0
    %p103 = por %p101, %p102
    %p104 = scmp.ne.s32.totalorder %s90, %s91
    %p105 = scmp.eq.s32.totalorder %s15, 1
    %p106 = por %p104, %p105
    %p108 = scmp.ne.s32.totalorder %s91, %s107
    %p109 = scmp.eq.s32.totalorder %s15, 0
    %p110 = por %p108, %p109
    %p111 = scmp.le.s32.totalorder 1, %s9
    %p112 = scmp.lt.s32.totalorder %s9, 3
    %p113 = pnand %p111, %p112
    %p114 = pneg %p113
    // Predicated region
    $region9: #{higher_hrnet_forward.31} parent=5 // pred_check
      _
    $region10: #{higher_hrnet_forward.31} parent=5 // pred_check_branch
      %116 = sbr.rel (%p113) target = $region12
    $region11: #{higher_hrnet_forward.31} parent=5 // pred_region
      %s117 = ssub.s32 %s9, 1
      // Predicated region
      $region13: #{higher_hrnet_forward.31} parent=11 // pred_check
        %p118 = pneg %p56
      $region14: #{higher_hrnet_forward.31} parent=11 // pred_check_branch
        %120 = sbr.rel (%p118) target = $region16
      $region15: #{higher_hrnet_forward.31} parent=11 // pred_region
        _
      $region16: #{higher_hrnet_forward.31} parent=11 // pred_fallthru
        _
      // Predicated region
      $region17: #{higher_hrnet_forward.31} parent=11 // pred_check
        %p121 = pneg %p77
      $region18: #{higher_hrnet_forward.31} parent=11 // pred_check_branch
        %123 = sbr.rel (%p121) target = $region20
      $region19: #{higher_hrnet_forward.31} parent=11 // pred_region
        _
      $region20: #{higher_hrnet_forward.31} parent=11 // pred_fallthru
        _
    $region12: #{higher_hrnet_forward.31} parent=5 // pred_fallthru
      _
    %p124 = scmp.lt.s32.totalorder %s9, 2
    // Predicated region
    $region21: #{higher_hrnet_forward.31} parent=5 // pred_check
      %p125 = pneg %p124
    $region22: #{higher_hrnet_forward.31} parent=5 // pred_check_branch
      %127 = sbr.rel (%p125) target = $region24
    $region23: #{higher_hrnet_forward.31} parent=5 // pred_region
      // Predicated region
      $region25: #{higher_hrnet_forward.31} parent=23 // pred_check
        %p128 = pneg %p29
      $region26: #{higher_hrnet_forward.31} parent=23 // pred_check_branch
        %130 = sbr.rel (%p128) target = $region28
      $region27: #{higher_hrnet_forward.31} parent=23 // pred_region
        %p131 = scmp.lt.s32.totalorder %s9, 1
        %s132 = scalar_select %p131, %s9, 1
        %s133 = smul.addr %s132, 32
        %s134 = smul.addr %s133, 4
        %s135 = scalar_lea.vmem %s0, %s134
      $region28: #{higher_hrnet_forward.31} parent=23 // pred_fallthru
        _
    $region24: #{higher_hrnet_forward.31} parent=5 // pred_fallthru
      _
    %p136 = scmp.le.s32.totalorder 1, %s9
    %p137 = scmp.lt.s32.totalorder %s9, 3
    %p138 = pnand %p136, %p137
    %p139 = pneg %p138
    // Predicated region
    $region29: #{higher_hrnet_forward.31} parent=5 // pred_check
      _
    $region30: #{higher_hrnet_forward.31} parent=5 // pred_check_branch
      %141 = sbr.rel (%p138) target = $region32
    $region31: #{higher_hrnet_forward.31} parent=5 // pred_region
      %s142 = ssub.s32 %s9, 1
      %p143 = scmp.lt.s32.totalorder %s14, 1
      %s144 = scalar_select %p143, %s14, 1
      %s145 = smul.addr %s144, 32
      %s146 = smul.addr %s145, 4
      %s147 = scalar_lea.vmem %s0, %s146
      %p148 = pneg %p35
      %p149 = pneg %p32
      %p150 = pneg %p56
      %p151 = pneg %p53
      %p152 = pneg %p77
      %p153 = pneg %p74
      %p154 = pneg %p103
      %p155 = pneg %p100
      %p156 = scmp.lt.s32.totalorder %s14, 1
      %s157 = scalar_select %p156, %s14, 1
      %s158 = smul.addr %s157, 32
      %s159 = smul.addr %s158, 8
      %s160 = scalar_lea.vmem %s3, %s159
      %p161 = scmp.lt.s32.totalorder %s14, 1
      %s162 = scalar_select %p161, %s14, 1
      %s163 = smul.addr %s162, 32
      %s164 = smul.addr %s163, 4
      %s165 = scalar_lea.vmem %s0, %s164
      %p166 = scmp.lt.s32.totalorder %s14, 1
      %s167 = scalar_select %p166, %s14, 1
      %s168 = smul.addr %s167, 32
      %s169 = smul.addr %s168, 8
      %s170 = scalar_lea.vmem %s3, %s169
      %v172 = vld [vmem:[%s165] sm:$0xf]
      %v173 = vld [vmem:[%s165 + $0x4] sm:$0xf]
      %v174 = vld [vmem:[%s165 + $0x8] sm:$0xf]
      %v175 = vld [vmem:[%s165 + $0xc] sm:$0xf]
      %v176 = vld [vmem:[%s165 + $0x10] sm:$0xf]
      %v177 = vld [vmem:[%s165 + $0x14] sm:$0xf]
      %v178 = vld [vmem:[%s165 + $0x18] sm:$0xf]
      %v179 = vld [vmem:[%s165 + $0x1c] sm:$0xf]
      %v180 = vld [vmem:[%s165 + $0x20] sm:$0xf]
      %v181 = vld [vmem:[%s165 + $0x24] sm:$0xf]
      %v182 = vld [vmem:[%s165 + $0x28] sm:$0xf]
      %v183 = vld [vmem:[%s165 + $0x2c] sm:$0xf]
      %v184 = vld [vmem:[%s165 + $0x30] sm:$0xf]
      %v185 = vld [vmem:[%s165 + $0x34] sm:$0xf]
      %v186 = vld [vmem:[%s165 + $0x38] sm:$0xf]
      %v187 = vld [vmem:[%s165 + $0x3c] sm:$0xf]
      %v188 = vld [vmem:[%s165 + $0x40] sm:$0xf]
      %v189 = vld [vmem:[%s165 + $0x44] sm:$0xf]
      %v190 = vld [vmem:[%s165 + $0x48] sm:$0xf]
      %v191 = vld [vmem:[%s165 + $0x4c] sm:$0xf]
      %v192 = vld [vmem:[%s165 + $0x50] sm:$0xf]
      %v193 = vld [vmem:[%s165 + $0x54] sm:$0xf]
      %v194 = vld [vmem:[%s165 + $0x58] sm:$0xf]
      %v195 = vld [vmem:[%s165 + $0x5c] sm:$0xf]
      %v196 = vld [vmem:[%s165 + $0x60] sm:$0xf]
      %v197 = vld [vmem:[%s165 + $0x64] sm:$0xf]
      %v198 = vld [vmem:[%s165 + $0x68] sm:$0xf]
      %v199 = vld [vmem:[%s165 + $0x6c] sm:$0xf]
      %v200 = vld [vmem:[%s165 + $0x70] sm:$0xf]
      %v201 = vld [vmem:[%s165 + $0x74] sm:$0xf]
      %v202 = vld [vmem:[%s165 + $0x78] sm:$0xf]
      %v203 = vld [vmem:[%s165 + $0x7c] sm:$0xf]
      %v204 = vld [vmem:[%s1] sm:$0xf]
      %v205 = vld [vmem:[%s1 + $0x4] sm:$0xf]
      %v206 = vld [vmem:[%s2] sm:$0x1]
      %v208 = vperm.slane %v206, 0
      %v242 = vunpack.c.l.b16 %v172
      %v243 = vunpack.c.l.b16 %v173
      %v244 = vunpack.c.l.b16 %v174
      %v245 = vunpack.c.l.b16 %v175
      %v246 = vunpack.c.l.b16 %v176
      %v247 = vunpack.c.l.b16 %v177
      %v248 = vunpack.c.l.b16 %v178
      %v249 = vunpack.c.l.b16 %v179
      %v250 = vunpack.c.l.b16 %v180
      %v251 = vunpack.c.l.b16 %v181
      %v252 = vunpack.c.l.b16 %v182
      %v253 = vunpack.c.l.b16 %v183
      %v254 = vunpack.c.l.b16 %v184
      %v255 = vunpack.c.l.b16 %v185
      %v256 = vunpack.c.l.b16 %v186
      %v257 = vunpack.c.l.b16 %v187
      %v258 = vunpack.c.l.b16 %v188
      %v259 = vunpack.c.l.b16 %v189
      %v260 = vunpack.c.l.b16 %v190
      %v261 = vunpack.c.l.b16 %v191
      %v262 = vunpack.c.l.b16 %v192
      %v263 = vunpack.c.l.b16 %v193
      %v264 = vunpack.c.l.b16 %v194
      %v265 = vunpack.c.l.b16 %v195
      %v266 = vunpack.c.l.b16 %v196
      %v267 = vunpack.c.l.b16 %v197
      %v268 = vunpack.c.l.b16 %v198
      %v269 = vunpack.c.l.b16 %v199
      %v270 = vunpack.c.l.b16 %v200
      %v271 = vunpack.c.l.b16 %v201
      %v272 = vunpack.c.l.b16 %v202
      %v273 = vunpack.c.l.b16 %v203
      %v274 = vpack.c.b16 %v243, %v242
      %v275 = vpack.c.b16 %v245, %v244
      %v276 = vpack.c.b16 %v247, %v246
      %v277 = vpack.c.b16 %v249, %v248
      %v278 = vpack.c.b16 %v251, %v250
      %v279 = vpack.c.b16 %v253, %v252
      %v280 = vpack.c.b16 %v255, %v254
      %v281 = vpack.c.b16 %v257, %v256
      %v282 = vpack.c.b16 %v259, %v258
      %v283 = vpack.c.b16 %v261, %v260
      %v284 = vpack.c.b16 %v263, %v262
      %v285 = vpack.c.b16 %v265, %v264
      %v286 = vpack.c.b16 %v267, %v266
      %v287 = vpack.c.b16 %v269, %v268
      %v288 = vpack.c.b16 %v271, %v270
      %v289 = vpack.c.b16 %v273, %v272
      %v292 = vunpack.c.l.b16 %v204
      %v293 = vunpack.c.l.b16 %v205
      %v294 = vpack.c.b16 %v293, %v292
      %vm296 = vcmask 130048
      %v298 = vsel %vm296, %v274, 0
      %v301 = vsel %vm296, %v275, 0
      %v304 = vsel %vm296, %v276, 0
      %v307 = vsel %vm296, %v277, 0
      %v310 = vsel %vm296, %v278, 0
      %v313 = vsel %vm296, %v279, 0
      %v316 = vsel %vm296, %v280, 0
      %v319 = vsel %vm296, %v281, 0
      %v322 = vsel %vm296, %v282, 0
      %v325 = vsel %vm296, %v283, 0
      %v328 = vsel %vm296, %v284, 0
      %v331 = vsel %vm296, %v285, 0
      %v334 = vsel %vm296, %v286, 0
      %v337 = vsel %vm296, %v287, 0
      %v340 = vsel %vm296, %v288, 0
      %v343 = vsel %vm296, %v289, 0
      %345 = vmatpush.bf16.msra.mxu0 0
      %346 = vmatpush.bf16.msra.mxu0 0
      %347 = vmatpush.bf16.msra.mxu0 0
      %348 = vmatpush.bf16.msra.mxu0 0
      %349 = vmatpush.bf16.msra.mxu0 0
      %350 = vmatpush.bf16.msra.mxu0 0
      %351 = vmatpush.bf16.msra.mxu0 0
      %352 = vmatpush.bf16.msra.mxu0 %v294
      %353 = vmatmul.bf16.gmra.mxu0 %v298
      %v354 = vpop.f32.mrf.mxu0
      %v355 = vadd.f32 %v208, %v354
      %v356 = vpop.f32.mrf.mxu0
      %v357 = vadd.f32 %v208, %v356
      %358 = vmatmul.bf16.gmra.mxu0 %v301
      %v359 = vpop.f32.mrf.mxu0
      %v360 = vadd.f32 %v208, %v359
      %v361 = vpop.f32.mrf.mxu0
      %v362 = vadd.f32 %v208, %v361
      %363 = vmatmul.bf16.gmra.mxu0 %v304
      %v364 = vpop.f32.mrf.mxu0
      %v365 = vadd.f32 %v208, %v364
      %v366 = vpop.f32.mrf.mxu0
      %v367 = vadd.f32 %v208, %v366
      %368 = vmatmul.bf16.gmra.mxu0 %v307
      %v369 = vpop.f32.mrf.mxu0
      %v370 = vadd.f32 %v208, %v369
      %v371 = vpop.f32.mrf.mxu0
      %v372 = vadd.f32 %v208, %v371
      %373 = vmatmul.bf16.gmra.mxu0 %v310
      %v374 = vpop.f32.mrf.mxu0
      %v375 = vadd.f32 %v208, %v374
      %v376 = vpop.f32.mrf.mxu0
      %v377 = vadd.f32 %v208, %v376
      %378 = vmatmul.bf16.gmra.mxu0 %v313
      %v379 = vpop.f32.mrf.mxu0
      %v380 = vadd.f32 %v208, %v379
      %v381 = vpop.f32.mrf.mxu0
      %v382 = vadd.f32 %v208, %v381
      %383 = vmatmul.bf16.gmra.mxu0 %v316
      %v384 = vpop.f32.mrf.mxu0
      %v385 = vadd.f32 %v208, %v384
      %v386 = vpop.f32.mrf.mxu0
      %v387 = vadd.f32 %v208, %v386
      %388 = vmatmul.bf16.gmra.mxu0 %v319
      %v389 = vpop.f32.mrf.mxu0
      %v390 = vadd.f32 %v208, %v389
      %v391 = vpop.f32.mrf.mxu0
      %v392 = vadd.f32 %v208, %v391
      %393 = vmatmul.bf16.gmra.mxu0 %v322
      %v394 = vpop.f32.mrf.mxu0
      %v395 = vadd.f32 %v208, %v394
      %v396 = vpop.f32.mrf.mxu0
      %v397 = vadd.f32 %v208, %v396
      %398 = vmatmul.bf16.gmra.mxu0 %v325
      %v399 = vpop.f32.mrf.mxu0
      %v400 = vadd.f32 %v208, %v399
      %v401 = vpop.f32.mrf.mxu0
      %v402 = vadd.f32 %v208, %v401
      %403 = vmatmul.bf16.gmra.mxu0 %v328
      %v404 = vpop.f32.mrf.mxu0
      %v405 = vadd.f32 %v208, %v404
      %v406 = vpop.f32.mrf.mxu0
      %v407 = vadd.f32 %v208, %v406
      %408 = vmatmul.bf16.gmra.mxu0 %v331
      %v409 = vpop.f32.mrf.mxu0
      %v410 = vadd.f32 %v208, %v409
      %v411 = vpop.f32.mrf.mxu0
      %v412 = vadd.f32 %v208, %v411
      %413 = vmatmul.bf16.gmra.mxu0 %v334
      %v414 = vpop.f32.mrf.mxu0
      %v415 = vadd.f32 %v208, %v414
      %v416 = vpop.f32.mrf.mxu0
      %v417 = vadd.f32 %v208, %v416
      %418 = vmatmul.bf16.gmra.mxu0 %v337
      %v419 = vpop.f32.mrf.mxu0
      %v420 = vadd.f32 %v208, %v419
      %v421 = vpop.f32.mrf.mxu0
      %v422 = vadd.f32 %v208, %v421
      %423 = vmatmul.bf16.gmra.mxu0 %v340
      %v424 = vpop.f32.mrf.mxu0
      %v425 = vadd.f32 %v208, %v424
      %v426 = vpop.f32.mrf.mxu0
      %v427 = vadd.f32 %v208, %v426
      %428 = vmatmul.bf16.gmra.mxu0 %v343
      %v429 = vpop.f32.mrf.mxu0
      %v430 = vadd.f32 %v208, %v429
      %v431 = vpop.f32.mrf.mxu0
      %v432 = vadd.f32 %v208, %v431
      %433 = vdwg.mxu0
      %vm434 = vcmask 31744
      %435 = vst.msk [vmem:[%s170] sm:$0xff] %vm434, %v355
      %436 = vst.msk [vmem:[%s170 + $0x8] sm:$0xff] %vm434, %v357
      %437 = vst.msk [vmem:[%s170 + $0x10] sm:$0xff] %vm434, %v360
      %438 = vst.msk [vmem:[%s170 + $0x18] sm:$0xff] %vm434, %v362
      %439 = vst.msk [vmem:[%s170 + $0x20] sm:$0xff] %vm434, %v365
      %440 = vst.msk [vmem:[%s170 + $0x28] sm:$0xff] %vm434, %v367
      %441 = vst.msk [vmem:[%s170 + $0x30] sm:$0xff] %vm434, %v370
      %442 = vst.msk [vmem:[%s170 + $0x38] sm:$0xff] %vm434, %v372
      %443 = vst.msk [vmem:[%s170 + $0x40] sm:$0xff] %vm434, %v375
      %444 = vst.msk [vmem:[%s170 + $0x48] sm:$0xff] %vm434, %v377
      %445 = vst.msk [vmem:[%s170 + $0x50] sm:$0xff] %vm434, %v380
      %446 = vst.msk [vmem:[%s170 + $0x58] sm:$0xff] %vm434, %v382
      %447 = vst.msk [vmem:[%s170 + $0x60] sm:$0xff] %vm434, %v385
      %448 = vst.msk [vmem:[%s170 + $0x68] sm:$0xff] %vm434, %v387
      %449 = vst.msk [vmem:[%s170 + $0x70] sm:$0xff] %vm434, %v390
      %450 = vst.msk [vmem:[%s170 + $0x78] sm:$0xff] %vm434, %v392
      %451 = vst.msk [vmem:[%s170 + $0x80] sm:$0xff] %vm434, %v395
      %452 = vst.msk [vmem:[%s170 + $0x88] sm:$0xff] %vm434, %v397
      %453 = vst.msk [vmem:[%s170 + $0x90] sm:$0xff] %vm434, %v400
      %454 = vst.msk [vmem:[%s170 + $0x98] sm:$0xff] %vm434, %v402
      %455 = vst.msk [vmem:[%s170 + $0xa0] sm:$0xff] %vm434, %v405
      %456 = vst.msk [vmem:[%s170 + $0xa8] sm:$0xff] %vm434, %v407
      %457 = vst.msk [vmem:[%s170 + $0xb0] sm:$0xff] %vm434, %v410
      %458 = vst.msk [vmem:[%s170 + $0xb8] sm:$0xff] %vm434, %v412
      %459 = vst.msk [vmem:[%s170 + $0xc0] sm:$0xff] %vm434, %v415
      %460 = vst.msk [vmem:[%s170 + $0xc8] sm:$0xff] %vm434, %v417
      %461 = vst.msk [vmem:[%s170 + $0xd0] sm:$0xff] %vm434, %v420
      %462 = vst.msk [vmem:[%s170 + $0xd8] sm:$0xff] %vm434, %v422
      %463 = vst.msk [vmem:[%s170 + $0xe0] sm:$0xff] %vm434, %v425
      %464 = vst.msk [vmem:[%s170 + $0xe8] sm:$0xff] %vm434, %v427
      %465 = vst.msk [vmem:[%s170 + $0xf0] sm:$0xff] %vm434, %v430
      %466 = vst.msk [vmem:[%s170 + $0xf8] sm:$0xff] %vm434, %v432
      %p467 = scmp.lt.s32.totalorder %s14, 1
      %s468 = scalar_select %p467, %s14, 1
      %s469 = smul.addr %s468, 32
      %s470 = smul.addr %s469, 8
      %s471 = scalar_lea.vmem %s3, %s470
      // Predicated region
      $region33: #{higher_hrnet_forward.31} parent=31 // pred_check
        %p472 = pneg %p100
      $region34: #{higher_hrnet_forward.31} parent=31 // pred_check_branch
        %474 = sbr.rel (%p472) target = $region36
      $region35: #{higher_hrnet_forward.31} parent=31 // pred_region
        _
      $region36: #{higher_hrnet_forward.31} parent=31 // pred_fallthru
        _
    $region32: #{higher_hrnet_forward.31} parent=5 // pred_fallthru
      _
    %p475 = scmp.le.s32.totalorder 2, %s9
    // Predicated region
    $region37: #{higher_hrnet_forward.31} parent=5 // pred_check
      %p476 = pneg %p475
    $region38: #{higher_hrnet_forward.31} parent=5 // pred_check_branch
      %478 = sbr.rel (%p476) target = $region40
    $region39: #{higher_hrnet_forward.31} parent=5 // pred_region
      %s479 = ssub.s32 %s9, 2
      // Predicated region
      $region41: #{higher_hrnet_forward.31} parent=39 // pred_check
        %p480 = pneg %p106
      $region42: #{higher_hrnet_forward.31} parent=39 // pred_check_branch
        %482 = sbr.rel (%p480) target = $region44
      $region43: #{higher_hrnet_forward.31} parent=39 // pred_region
        %p483 = scmp.lt.s32.totalorder %s15, 1
        %s484 = scalar_select %p483, %s15, 1
        %s485 = smul.addr %s484, 32
        %s486 = smul.addr %s485, 8
        %s487 = scalar_lea.vmem %s3, %s486
      $region44: #{higher_hrnet_forward.31} parent=39 // pred_fallthru
        _
    $region40: #{higher_hrnet_forward.31} parent=5 // pred_fallthru
      _
  $region6: #{higher_hrnet_forward.31} parent=0 // loop_footer
    %s13 = sadd.s32 1, %s9
  $region7: #{higher_hrnet_forward.31} parent=0 // loop_footer_branch
    %8 = sbr.rel target = $region3
  $region8: #{higher_hrnet_forward.31} parent=0 // loop_exit
    _

// kernel: higher_hrnet_forward.23
$region0: #{higher_hrnet_forward.23}
  #allocation0 [shape = 'u32[]', space=smem, size = 0x4, offset = 0x4, fixed_abs, tag = 'smem constant byte address 0x4 - core index']
  #allocation1 [shape = 'u32[72,128]{1,0:T(1,128)}', space=vmem, size = 0x9000, scoped, tag = 'internal scratch']
  %s0 = inlined_call_operand.vmem [shape: bf16[2,328,16], index: 0, kind: input, shape index: {}]
  %s1 = inlined_call_operand.vmem [shape: bf16[9,16,16], index: 1, kind: input, shape index: {}]
  %s2 = inlined_call_operand.vmem [shape: f32[1,16], index: 2, kind: input, shape index: {}]
  %s3 = inlined_call_operand.vmem [shape: bf16[2,288,16], index: 3, kind: output, shape index: {}]
  %s4 = sld [smem:[#allocation0]]
  $region45: #{higher_hrnet_forward.23} parent=0
    _
  %s6 = ssub.s32 1, %s4
  %s7 = scalar_select 0, %s6, %s4
  loop: start=0, step=1, limit=4
  $region2: #{higher_hrnet_forward.23} parent=0 // loop_pre_header
    _
  $region3: #{higher_hrnet_forward.23} parent=0 // loop_header
    %s9 = sphi 0, %s13
    %p10 = scmp.ge.s32.totalorder %s9, 4
    %s19 = sphi 0, %s21
    %s22 = sphi 0, %s19
    %s23 = sphi 0, %s22
    %s39 = sphi 0, %s23
    %s43 = sphi 0, %s43
    %s45 = sphi 0, %s43
    %s46 = sphi 0, %s45
    %s60 = sphi 0, %s46
    %s64 = sphi 0, %s64
    %s66 = sphi 0, %s64
    %s67 = sphi 0, %s66
    %s81 = sphi 0, %s67
    %s87 = sphi 0, %s89
    %s90 = sphi 0, %s87
    %s91 = sphi 0, %s90
    %s107 = sphi 0, %s91
  $region4: #{higher_hrnet_forward.23} parent=0 // loop_header_branch
    %12 = sbr.rel (%p10) target = $region8
  $region5: #{higher_hrnet_forward.23} parent=0 // loop_body
    %s14 = ssub.s32 %s9, 1
    %s15 = ssub.s32 %s9, 2
    %s16 = sadd.s32 %s9, 1
    %s17 = ssub.s32 %s9, %s16
    %p18 = scmp.eq.s32.totalorder %s17, 0
    %s20 = sadd.s32 %s19, 1
    %s21 = scalar_select %p18, %s19, %s20
    %p24 = pneg %p18
    %p25 = scmp.eq.s32.totalorder %s9, 1
    %p26 = por %p24, %p25
    %p27 = scmp.ne.s32.totalorder %s19, %s22
    %p28 = scmp.eq.s32.totalorder %s9, 0
    %p29 = por %p27, %p28
    %p30 = scmp.ne.s32.totalorder %s19, %s22
    %p31 = scmp.eq.s32.totalorder %s14, 1
    %p32 = por %p30, %p31
    %p33 = scmp.ne.s32.totalorder %s22, %s23
    %p34 = scmp.eq.s32.totalorder %s14, 0
    %p35 = por %p33, %p34
    %p36 = scmp.ne.s32.totalorder %s22, %s23
    %p37 = scmp.eq.s32.totalorder %s15, 1
    %p38 = por %p36, %p37
    %p40 = scmp.ne.s32.totalorder %s23, %s39
    %p41 = scmp.eq.s32.totalorder %s15, 0
    %p42 = por %p40, %p41
    %s44 = sadd.s32 %s43, 1
    %p47 = scmp.eq.s32.totalorder %s9, 1
    %p48 = scmp.ne.s32.totalorder %s43, %s45
    %p49 = scmp.eq.s32.totalorder %s9, 0
    %p50 = por %p48, %p49
    %p51 = scmp.ne.s32.totalorder %s43, %s45
    %p52 = scmp.eq.s32.totalorder %s14, 1
    %p53 = por %p51, %p52
    %p54 = scmp.ne.s32.totalorder %s45, %s46
    %p55 = scmp.eq.s32.totalorder %s14, 0
    %p56 = por %p54, %p55
    %p57 = scmp.ne.s32.totalorder %s45, %s46
    %p58 = scmp.eq.s32.totalorder %s15, 1
    %p59 = por %p57, %p58
    %p61 = scmp.ne.s32.totalorder %s46, %s60
    %p62 = scmp.eq.s32.totalorder %s15, 0
    %p63 = por %p61, %p62
    %s65 = sadd.s32 %s64, 1
    %p68 = scmp.eq.s32.totalorder %s9, 1
    %p69 = scmp.ne.s32.totalorder %s64, %s66
    %p70 = scmp.eq.s32.totalorder %s9, 0
    %p71 = por %p69, %p70
    %p72 = scmp.ne.s32.totalorder %s64, %s66
    %p73 = scmp.eq.s32.totalorder %s14, 1
    %p74 = por %p72, %p73
    %p75 = scmp.ne.s32.totalorder %s66, %s67
    %p76 = scmp.eq.s32.totalorder %s14, 0
    %p77 = por %p75, %p76
    %p78 = scmp.ne.s32.totalorder %s66, %s67
    %p79 = scmp.eq.s32.totalorder %s15, 1
    %p80 = por %p78, %p79
    %p82 = scmp.ne.s32.totalorder %s67, %s81
    %p83 = scmp.eq.s32.totalorder %s15, 0
    %p84 = por %p82, %p83
    %s85 = ssub.s32 %s9, %s16
    %p86 = scmp.eq.s32.totalorder %s85, 0
    %s88 = sadd.s32 %s87, 1
    %s89 = scalar_select %p86, %s87, %s88
    %p92 = pneg %p86
    %p93 = scmp.eq.s32.totalorder %s9, 1
    %p94 = por %p92, %p93
    %p95 = scmp.ne.s32.totalorder %s87, %s90
    %p96 = scmp.eq.s32.totalorder %s9, 0
    %p97 = por %p95, %p96
    %p98 = scmp.ne.s32.totalorder %s87, %s90
    %p99 = scmp.eq.s32.totalorder %s14, 1
    %p100 = por %p98, %p99
    %p101 = scmp.ne.s32.totalorder %s90, %s91
    %p102 = scmp.eq.s32.totalorder %s14, 0
    %p103 = por %p101, %p102
    %p104 = scmp.ne.s32.totalorder %s90, %s91
    %p105 = scmp.eq.s32.totalorder %s15, 1
    %p106 = por %p104, %p105
    %p108 = scmp.ne.s32.totalorder %s91, %s107
    %p109 = scmp.eq.s32.totalorder %s15, 0
    %p110 = por %p108, %p109
    %p111 = scmp.le.s32.totalorder 1, %s9
    %p112 = scmp.lt.s32.totalorder %s9, 3
    %p113 = pnand %p111, %p112
    %p114 = pneg %p113
    // Predicated region
    $region9: #{higher_hrnet_forward.23} parent=5 // pred_check
      _
    $region10: #{higher_hrnet_forward.23} parent=5 // pred_check_branch
      %116 = sbr.rel (%p113) target = $region12
    $region11: #{higher_hrnet_forward.23} parent=5 // pred_region
      %s117 = ssub.s32 %s9, 1
      // Predicated region
      $region13: #{higher_hrnet_forward.23} parent=11 // pred_check
        %p118 = pneg %p56
      $region14: #{higher_hrnet_forward.23} parent=11 // pred_check_branch
        %120 = sbr.rel (%p118) target = $region16
      $region15: #{higher_hrnet_forward.23} parent=11 // pred_region
        _
      $region16: #{higher_hrnet_forward.23} parent=11 // pred_fallthru
        _
      // Predicated region
      $region17: #{higher_hrnet_forward.23} parent=11 // pred_check
        %p121 = pneg %p77
      $region18: #{higher_hrnet_forward.23} parent=11 // pred_check_branch
        %123 = sbr.rel (%p121) target = $region20
      $region19: #{higher_hrnet_forward.23} parent=11 // pred_region
        _
      $region20: #{higher_hrnet_forward.23} parent=11 // pred_fallthru
        _
    $region12: #{higher_hrnet_forward.23} parent=5 // pred_fallthru
      _
    %p124 = scmp.lt.s32.totalorder %s9, 2
    // Predicated region
    $region21: #{higher_hrnet_forward.23} parent=5 // pred_check
      %p125 = pneg %p124
    $region22: #{higher_hrnet_forward.23} parent=5 // pred_check_branch
      %127 = sbr.rel (%p125) target = $region24
    $region23: #{higher_hrnet_forward.23} parent=5 // pred_region
      // Predicated region
      $region25: #{higher_hrnet_forward.23} parent=23 // pred_check
        %p128 = pneg %p29
      $region26: #{higher_hrnet_forward.23} parent=23 // pred_check_branch
        %130 = sbr.rel (%p128) target = $region28
      $region27: #{higher_hrnet_forward.23} parent=23 // pred_region
        %p131 = scmp.lt.s32.totalorder %s9, 1
        %s132 = scalar_select %p131, %s9, 1
        %s133 = smul.addr %s132, 41
        %s134 = smul.addr %s133, 4
        %s135 = scalar_lea.vmem %s0, %s134
      $region28: #{higher_hrnet_forward.23} parent=23 // pred_fallthru
        _
    $region24: #{higher_hrnet_forward.23} parent=5 // pred_fallthru
      _
    %p136 = scmp.le.s32.totalorder 1, %s9
    %p137 = scmp.lt.s32.totalorder %s9, 3
    %p138 = pnand %p136, %p137
    %p139 = pneg %p138
    // Predicated region
    $region29: #{higher_hrnet_forward.23} parent=5 // pred_check
      _
    $region30: #{higher_hrnet_forward.23} parent=5 // pred_check_branch
      %141 = sbr.rel (%p138) target = $region32
    $region31: #{higher_hrnet_forward.23} parent=5 // pred_region
      %s142 = ssub.s32 %s9, 1
      %p143 = scmp.lt.s32.totalorder %s14, 1
      %s144 = scalar_select %p143, %s14, 1
      %s145 = smul.addr %s144, 41
      %s146 = smul.addr %s145, 4
      %s147 = scalar_lea.vmem %s0, %s146
      %p148 = pneg %p35
      %p149 = pneg %p32
      %p150 = pneg %p56
      %p151 = pneg %p53
      %p152 = pneg %p77
      %p153 = pneg %p74
      %p154 = pneg %p103
      %p155 = pneg %p100
      %p156 = scmp.lt.s32.totalorder %s14, 1
      %s157 = scalar_select %p156, %s14, 1
      %s158 = smul.addr %s157, 36
      %s159 = smul.addr %s158, 4
      %s160 = scalar_lea.vmem %s3, %s159
      %p161 = scmp.lt.s32.totalorder %s14, 1
      %s162 = scalar_select %p161, %s14, 1
      %s163 = smul.addr %s162, 41
      %s164 = smul.addr %s163, 4
      %s165 = scalar_lea.vmem %s0, %s164
      %p166 = scmp.lt.s32.totalorder %s14, 1
      %s167 = scalar_select %p166, %s14, 1
      %s168 = smul.addr %s167, 36
      %s169 = smul.addr %s168, 4
      %s170 = scalar_lea.vmem %s3, %s169
      %v172 = vld [vmem:[%s165] sm:$0xf]
      %v173 = vld [vmem:[%s165 + $0x4] sm:$0xf]
      %v174 = vld [vmem:[%s165 + $0x8] sm:$0xf]
      %v175 = vld [vmem:[%s165 + $0xc] sm:$0xf]
      %v176 = vld [vmem:[%s165 + $0x10] sm:$0xf]
      %v177 = vld [vmem:[%s165 + $0x14] sm:$0xf]
      %v178 = vld [vmem:[%s165 + $0x18] sm:$0xf]
      %v179 = vld [vmem:[%s165 + $0x1c] sm:$0xf]
      %v180 = vld [vmem:[%s165 + $0x20] sm:$0xf]
      %v181 = vld [vmem:[%s165 + $0x24] sm:$0xf]
      %v182 = vld [vmem:[%s165 + $0x28] sm:$0xf]
      %v183 = vld [vmem:[%s165 + $0x2c] sm:$0xf]
      %v184 = vld [vmem:[%s165 + $0x30] sm:$0xf]
      %v185 = vld [vmem:[%s165 + $0x34] sm:$0xf]
      %v186 = vld [vmem:[%s165 + $0x38] sm:$0xf]
      %v187 = vld [vmem:[%s165 + $0x3c] sm:$0xf]
      %v188 = vld [vmem:[%s165 + $0x40] sm:$0xf]
      %v189 = vld [vmem:[%s165 + $0x44] sm:$0xf]
      %v190 = vld [vmem:[%s165 + $0x48] sm:$0xf]
      %v191 = vld [vmem:[%s165 + $0x4c] sm:$0xf]
      %v192 = vld [vmem:[%s165 + $0x50] sm:$0xf]
      %v193 = vld [vmem:[%s165 + $0x54] sm:$0xf]
      %v194 = vld [vmem:[%s165 + $0x58] sm:$0xf]
      %v195 = vld [vmem:[%s165 + $0x5c] sm:$0xf]
      %v196 = vld [vmem:[%s165 + $0x60] sm:$0xf]
      %v197 = vld [vmem:[%s165 + $0x64] sm:$0xf]
      %v198 = vld [vmem:[%s165 + $0x68] sm:$0xf]
      %v199 = vld [vmem:[%s165 + $0x6c] sm:$0xf]
      %v200 = vld [vmem:[%s165 + $0x70] sm:$0xf]
      %v201 = vld [vmem:[%s165 + $0x74] sm:$0xf]
      %v202 = vld [vmem:[%s165 + $0x78] sm:$0xf]
      %v203 = vld [vmem:[%s165 + $0x7c] sm:$0xf]
      %v204 = vld [vmem:[%s165 + $0x80] sm:$0xf]
      %v205 = vld [vmem:[%s165 + $0x84] sm:$0xf]
      %v206 = vld [vmem:[%s165 + $0x88] sm:$0xf]
      %v207 = vld [vmem:[%s165 + $0x8c] sm:$0xf]
      %v208 = vld [vmem:[%s1] sm:$0xf]
      %v209 = vld [vmem:[%s1 + $0x4] sm:$0xf]
      %v210 = vld [vmem:[%s165 + $0x90] sm:$0x1]
      %s211 = scalar_lea.vmem %s1, 8
      %v212 = vld [vmem:[%s211] sm:$0xf]
      %v213 = vld [vmem:[%s211 + $0x4] sm:$0xf]
      %v251 = vunpack.c.l.b16 %v172
      %v252 = vunpack.c.l.b16 %v173
      %v253 = vunpack.c.l.b16 %v174
      %v254 = vunpack.c.l.b16 %v175
      %v255 = vunpack.c.l.b16 %v176
      %v256 = vunpack.c.l.b16 %v177
      %v257 = vunpack.c.l.b16 %v178
      %v258 = vunpack.c.l.b16 %v179
      %v259 = vunpack.c.l.b16 %v180
      %v260 = vunpack.c.l.b16 %v181
      %v261 = vunpack.c.l.b16 %v182
      %v262 = vunpack.c.l.b16 %v183
      %v263 = vunpack.c.l.b16 %v184
      %v264 = vunpack.c.l.b16 %v185
      %v265 = vunpack.c.l.b16 %v186
      %v266 = vunpack.c.l.b16 %v187
      %v267 = vunpack.c.l.b16 %v188
      %v268 = vunpack.c.l.b16 %v189
      %v269 = vunpack.c.l.b16 %v190
      %v270 = vunpack.c.l.b16 %v191
      %v271 = vunpack.c.l.b16 %v192
      %v272 = vunpack.c.l.b16 %v193
      %v273 = vunpack.c.l.b16 %v194
      %v274 = vunpack.c.l.b16 %v195
      %v275 = vunpack.c.l.b16 %v196
      %v276 = vunpack.c.l.b16 %v197
      %v277 = vunpack.c.l.b16 %v198
      %v278 = vunpack.c.l.b16 %v199
      %v279 = vunpack.c.l.b16 %v200
      %v280 = vunpack.c.l.b16 %v201
      %v281 = vunpack.c.l.b16 %v202
      %v282 = vunpack.c.l.b16 %v203
      %v283 = vunpack.c.l.b16 %v204
      %v284 = vunpack.c.l.b16 %v205
      %v285 = vunpack.c.l.b16 %v206
      %v286 = vunpack.c.l.b16 %v207
      %v287 = vunpack.c.l.b16 %v210
      %v288 = vpack.c.b16 %v252, %v251
      %v289 = vpack.c.b16 %v254, %v253
      %v290 = vpack.c.b16 %v256, %v255
      %v291 = vpack.c.b16 %v258, %v257
      %v292 = vpack.c.b16 %v260, %v259
      %v293 = vpack.c.b16 %v262, %v261
      %v294 = vpack.c.b16 %v264, %v263
      %v295 = vpack.c.b16 %v266, %v265
      %v296 = vpack.c.b16 %v268, %v267
      %v297 = vpack.c.b16 %v270, %v269
      %v298 = vpack.c.b16 %v272, %v271
      %v299 = vpack.c.b16 %v274, %v273
      %v300 = vpack.c.b16 %v276, %v275
      %v301 = vpack.c.b16 %v278, %v277
      %v302 = vpack.c.b16 %v280, %v279
      %v303 = vpack.c.b16 %v282, %v281
      %v304 = vpack.c.b16 %v284, %v283
      %v305 = vpack.c.b16 %v286, %v285
      %v306 = vpack.c.b16 %v287, %v287
      %vm307 = vsmask.f32 7424
      %v309 = vshrl.u32 %v288, 16
      %v311 = vshll.u32 %v288, 16
      %v313 = vrot.slane %v311, 1
      %v314 = vor.u32 %v309, %v313
      %v316 = vshll.u32 %v289, 16
      %v318 = vrot.slane %v316, 1
      %v319 = vsel %vm307, %v314, %v318
      %v320 = vshrl.u32 %v289, 16
      %v322 = vor.u32 %v320, %v318
      %v324 = vshll.u32 %v290, 16
      %v326 = vrot.slane %v324, 1
      %v327 = vsel %vm307, %v322, %v326
      %v328 = vshrl.u32 %v290, 16
      %v330 = vor.u32 %v328, %v326
      %v332 = vshll.u32 %v291, 16
      %v334 = vrot.slane %v332, 1
      %v335 = vsel %vm307, %v330, %v334
      %v336 = vshrl.u32 %v291, 16
      %v338 = vor.u32 %v336, %v334
      %v340 = vshll.u32 %v292, 16
      %v342 = vrot.slane %v340, 1
      %v343 = vsel %vm307, %v338, %v342
      %v344 = vshrl.u32 %v292, 16
      %v346 = vor.u32 %v344, %v342
      %v348 = vshll.u32 %v293, 16
      %v350 = vrot.slane %v348, 1
      %v351 = vsel %vm307, %v346, %v350
      %v352 = vshrl.u32 %v293, 16
      %v354 = vor.u32 %v352, %v350
      %v356 = vshll.u32 %v294, 16
      %v358 = vrot.slane %v356, 1
      %v359 = vsel %vm307, %v354, %v358
      %v360 = vshrl.u32 %v294, 16
      %v362 = vor.u32 %v360, %v358
      %v364 = vshll.u32 %v295, 16
      %v366 = vrot.slane %v364, 1
      %v367 = vsel %vm307, %v362, %v366
      %v368 = vshrl.u32 %v295, 16
      %v370 = vor.u32 %v368, %v366
      %v372 = vshll.u32 %v296, 16
      %v374 = vrot.slane %v372, 1
      %v375 = vsel %vm307, %v370, %v374
      %v376 = vshrl.u32 %v296, 16
      %v378 = vor.u32 %v376, %v374
      %v380 = vshll.u32 %v297, 16
      %v382 = vrot.slane %v380, 1
      %v383 = vsel %vm307, %v378, %v382
      %v384 = vshrl.u32 %v297, 16
      %v386 = vor.u32 %v384, %v382
      %v388 = vshll.u32 %v298, 16
      %v390 = vrot.slane %v388, 1
      %v391 = vsel %vm307, %v386, %v390
      %v392 = vshrl.u32 %v298, 16
      %v394 = vor.u32 %v392, %v390
      %v396 = vshll.u32 %v299, 16
      %v398 = vrot.slane %v396, 1
      %v399 = vsel %vm307, %v394, %v398
      %v400 = vshrl.u32 %v299, 16
      %v402 = vor.u32 %v400, %v398
      %v404 = vshll.u32 %v300, 16
      %v406 = vrot.slane %v404, 1
      %v407 = vsel %vm307, %v402, %v406
      %v408 = vshrl.u32 %v300, 16
      %v410 = vor.u32 %v408, %v406
      %v412 = vshll.u32 %v301, 16
      %v414 = vrot.slane %v412, 1
      %v415 = vsel %vm307, %v410, %v414
      %v416 = vshrl.u32 %v301, 16
      %v418 = vor.u32 %v416, %v414
      %v420 = vshll.u32 %v302, 16
      %v422 = vrot.slane %v420, 1
      %v423 = vsel %vm307, %v418, %v422
      %v424 = vshrl.u32 %v302, 16
      %v426 = vor.u32 %v424, %v422
      %v428 = vshll.u32 %v303, 16
      %v430 = vrot.slane %v428, 1
      %v431 = vsel %vm307, %v426, %v430
      %v432 = vshrl.u32 %v303, 16
      %v434 = vor.u32 %v432, %v430
      %v436 = vshll.u32 %v304, 16
      %v438 = vrot.slane %v436, 1
      %v439 = vsel %vm307, %v434, %v438
      %v440 = vshrl.u32 %v304, 16
      %v442 = vor.u32 %v440, %v438
      %v444 = vshll.u32 %v305, 16
      %v446 = vrot.slane %v444, 1
      %v447 = vsel %vm307, %v442, %v446
      %v448 = vshrl.u32 %v305, 16
      %v450 = vor.u32 %v448, %v446
      %v452 = vshll.u32 %v306, 16
      %v454 = vrot.slane %v452, 1
      %v455 = vsel %vm307, %v450, %v454
      %v458 = vunpack.c.l.b16 %v212
      %v459 = vunpack.c.l.b16 %v213
      %v460 = vpack.c.b16 %v459, %v458
      %vm462 = vcmask 130048
      %v464 = vsel %vm462, %v319, 0
      %v467 = vsel %vm462, %v327, 0
      %v470 = vsel %vm462, %v335, 0
      %v473 = vsel %vm462, %v343, 0
      %v476 = vsel %vm462, %v351, 0
      %v479 = vsel %vm462, %v359, 0
      %v482 = vsel %vm462, %v367, 0
      %v485 = vsel %vm462, %v375, 0
      %v488 = vsel %vm462, %v383, 0
      %v491 = vsel %vm462, %v391, 0
      %v494 = vsel %vm462, %v399, 0
      %v497 = vsel %vm462, %v407, 0
      %v500 = vsel %vm462, %v415, 0
      %v503 = vsel %vm462, %v423, 0
      %v506 = vsel %vm462, %v431, 0
      %v509 = vsel %vm462, %v439, 0
      %v512 = vsel %vm462, %v447, 0
      %v515 = vsel %vm462, %v455, 0
      %517 = vmatpush.bf16.msra.mxu0 0
      %518 = vmatpush.bf16.msra.mxu0 0
      %519 = vmatpush.bf16.msra.mxu0 0
      %520 = vmatpush.bf16.msra.mxu0 0
      %521 = vmatpush.bf16.msra.mxu0 0
      %522 = vmatpush.bf16.msra.mxu0 0
      %523 = vmatpush.bf16.msra.mxu0 0
      %524 = vmatpush.bf16.msra.mxu0 %v460
      %525 = vmatmul.bf16.gmra.mxu0 %v464
      %v526 = vpop.f32.mrf.mxu0
      %v527 = vadd.f32 0.0, %v526
      %v528 = vpop.f32.mrf.mxu0
      %v529 = vadd.f32 0.0, %v528
      %530 = vmatmul.bf16.gmra.mxu0 %v467
      %v531 = vpop.f32.mrf.mxu0
      %v532 = vadd.f32 0.0, %v531
      %v533 = vpop.f32.mrf.mxu0
      %v534 = vadd.f32 0.0, %v533
      %535 = vmatmul.bf16.gmra.mxu0 %v470
      %v536 = vpop.f32.mrf.mxu0
      %v537 = vadd.f32 0.0, %v536
      %v538 = vpop.f32.mrf.mxu0
      %v539 = vadd.f32 0.0, %v538
      %540 = vmatmul.bf16.gmra.mxu0 %v473
      %v541 = vpop.f32.mrf.mxu0
      %v542 = vadd.f32 0.0, %v541
      %v543 = vpop.f32.mrf.mxu0
      %v544 = vadd.f32 0.0, %v543
      %545 = vmatmul.bf16.gmra.mxu0 %v476
      %v546 = vpop.f32.mrf.mxu0
      %v547 = vadd.f32 0.0, %v546
      %v548 = vpop.f32.mrf.mxu0
      %v549 = vadd.f32 0.0, %v548
      %550 = vmatmul.bf16.gmra.mxu0 %v479
      %v551 = vpop.f32.mrf.mxu0
      %v552 = vadd.f32 0.0, %v551
      %v553 = vpop.f32.mrf.mxu0
      %v554 = vadd.f32 0.0, %v553
      %555 = vmatmul.bf16.gmra.mxu0 %v482
      %v556 = vpop.f32.mrf.mxu0
      %v557 = vadd.f32 0.0, %v556
      %v558 = vpop.f32.mrf.mxu0
      %v559 = vadd.f32 0.0, %v558
      %560 = vmatmul.bf16.gmra.mxu0 %v485
      %v561 = vpop.f32.mrf.mxu0
      %v562 = vadd.f32 0.0, %v561
      %v563 = vpop.f32.mrf.mxu0
      %v564 = vadd.f32 0.0, %v563
      %565 = vmatmul.bf16.gmra.mxu0 %v488
      %v566 = vpop.f32.mrf.mxu0
      %v567 = vadd.f32 0.0, %v566
      %v568 = vpop.f32.mrf.mxu0
      %v569 = vadd.f32 0.0, %v568
      %570 = vmatmul.bf16.gmra.mxu0 %v491
      %v571 = vpop.f32.mrf.mxu0
      %v572 = vadd.f32 0.0, %v571
      %v573 = vpop.f32.mrf.mxu0
      %v574 = vadd.f32 0.0, %v573
      %575 = vmatmul.bf16.gmra.mxu0 %v494
      %v576 = vpop.f32.mrf.mxu0
      %v577 = vadd.f32 0.0, %v576
      %v578 = vpop.f32.mrf.mxu0
      %v579 = vadd.f32 0.0, %v578
      %580 = vmatmul.bf16.gmra.mxu0 %v497
      %v581 = vpop.f32.mrf.mxu0
      %v582 = vadd.f32 0.0, %v581
      %v583 = vpop.f32.mrf.mxu0
      %v584 = vadd.f32 0.0, %v583
      %585 = vmatmul.bf16.gmra.mxu0 %v500
      %v586 = vpop.f32.mrf.mxu0
      %v587 = vadd.f32 0.0, %v586
      %v588 = vpop.f32.mrf.mxu0
      %v589 = vadd.f32 0.0, %v588
      %590 = vmatmul.bf16.gmra.mxu0 %v503
      %v591 = vpop.f32.mrf.mxu0
      %v592 = vadd.f32 0.0, %v591
      %v593 = vpop.f32.mrf.mxu0
      %v594 = vadd.f32 0.0, %v593
      %595 = vmatmul.bf16.gmra.mxu0 %v506
      %v596 = vpop.f32.mrf.mxu0
      %v597 = vadd.f32 0.0, %v596
      %v598 = vpop.f32.mrf.mxu0
      %v599 = vadd.f32 0.0, %v598
      %600 = vmatmul.bf16.gmra.mxu0 %v509
      %v601 = vpop.f32.mrf.mxu0
      %v602 = vadd.f32 0.0, %v601
      %v603 = vpop.f32.mrf.mxu0
      %v604 = vadd.f32 0.0, %v603
      %605 = vmatmul.bf16.gmra.mxu0 %v512
      %v606 = vpop.f32.mrf.mxu0
      %v607 = vadd.f32 0.0, %v606
      %v608 = vpop.f32.mrf.mxu0
      %v609 = vadd.f32 0.0, %v608
      %610 = vmatmul.bf16.gmra.mxu0 %v515
      %v611 = vpop.f32.mrf.mxu0
      %v612 = vadd.f32 0.0, %v611
      %v613 = vpop.f32.mrf.mxu0
      %v614 = vadd.f32 0.0, %v613
      %615 = vdwg.mxu0
      %v618 = vunpack.c.l.b16 %v208
      %v619 = vunpack.c.l.b16 %v209
      %v620 = vpack.c.b16 %v619, %v618
      %v622 = vsel %vm462, %v288, 0
      %v624 = vsel %vm462, %v289, 0
      %v626 = vsel %vm462, %v290, 0
      %v628 = vsel %vm462, %v291, 0
      %v630 = vsel %vm462, %v292, 0
      %v632 = vsel %vm462, %v293, 0
      %v634 = vsel %vm462, %v294, 0
      %v636 = vsel %vm462, %v295, 0
      %v638 = vsel %vm462, %v296, 0
      %v640 = vsel %vm462, %v297, 0
      %v642 = vsel %vm462, %v298, 0
      %v644 = vsel %vm462, %v299, 0
      %v646 = vsel %vm462, %v300, 0
      %v648 = vsel %vm462, %v301, 0
      %v650 = vsel %vm462, %v302, 0
      %v652 = vsel %vm462, %v303, 0
      %v654 = vsel %vm462, %v304, 0
      %v656 = vsel %vm462, %v305, 0
      %658 = vmatpush.bf16.msra.mxu0 0
      %659 = vmatpush.bf16.msra.mxu0 0
      %660 = vmatpush.bf16.msra.mxu0 0
      %661 = vmatpush.bf16.msra.mxu0 0
      %662 = vmatpush.bf16.msra.mxu0 0
      %663 = vmatpush.bf16.msra.mxu0 0
      %664 = vmatpush.bf16.msra.mxu0 0
      %665 = vmatpush.bf16.msra.mxu0 %v620
      %666 = vmatmul.bf16.gmra.mxu0 %v622
      %v667 = vpop.f32.mrf.mxu0
      %v668 = vadd.f32 %v527, %v667
      %v669 = vpop.f32.mrf.mxu0
      %v670 = vadd.f32 %v529, %v669
      %671 = vmatmul.bf16.gmra.mxu0 %v624
      %v672 = vpop.f32.mrf.mxu0
      %v673 = vadd.f32 %v532, %v672
      %v674 = vpop.f32.mrf.mxu0
      %v675 = vadd.f32 %v534, %v674
      %676 = vmatmul.bf16.gmra.mxu0 %v626
      %v677 = vpop.f32.mrf.mxu0
      %v678 = vadd.f32 %v537, %v677
      %v679 = vpop.f32.mrf.mxu0
      %v680 = vadd.f32 %v539, %v679
      %681 = vmatmul.bf16.gmra.mxu0 %v628
      %v682 = vpop.f32.mrf.mxu0
      %v683 = vadd.f32 %v542, %v682
      %v684 = vpop.f32.mrf.mxu0
      %v685 = vadd.f32 %v544, %v684
      %686 = vmatmul.bf16.gmra.mxu0 %v630
      %v687 = vpop.f32.mrf.mxu0
      %v688 = vadd.f32 %v547, %v687
      %v689 = vpop.f32.mrf.mxu0
      %v690 = vadd.f32 %v549, %v689
      %691 = vmatmul.bf16.gmra.mxu0 %v632
      %v692 = vpop.f32.mrf.mxu0
      %v693 = vadd.f32 %v552, %v692
      %v694 = vpop.f32.mrf.mxu0
      %v695 = vadd.f32 %v554, %v694
      %696 = vmatmul.bf16.gmra.mxu0 %v634
      %v697 = vpop.f32.mrf.mxu0
      %v698 = vadd.f32 %v557, %v697
      %v699 = vpop.f32.mrf.mxu0
      %v700 = vadd.f32 %v559, %v699
      %701 = vmatmul.bf16.gmra.mxu0 %v636
      %v702 = vpop.f32.mrf.mxu0
      %v703 = vadd.f32 %v562, %v702
      %v704 = vpop.f32.mrf.mxu0
      %v705 = vadd.f32 %v564, %v704
      %706 = vmatmul.bf16.gmra.mxu0 %v638
      %v707 = vpop.f32.mrf.mxu0
      %v708 = vadd.f32 %v567, %v707
      %v709 = vpop.f32.mrf.mxu0
      %v710 = vadd.f32 %v569, %v709
      %711 = vmatmul.bf16.gmra.mxu0 %v640
      %v712 = vpop.f32.mrf.mxu0
      %v713 = vadd.f32 %v572, %v712
      %v714 = vpop.f32.mrf.mxu0
      %v715 = vadd.f32 %v574, %v714
      %716 = vmatmul.bf16.gmra.mxu0 %v642
      %v717 = vpop.f32.mrf.mxu0
      %v718 = vadd.f32 %v577, %v717
      %v719 = vpop.f32.mrf.mxu0
      %v720 = vadd.f32 %v579, %v719
      %721 = vmatmul.bf16.gmra.mxu0 %v644
      %v722 = vpop.f32.mrf.mxu0
      %v723 = vadd.f32 %v582, %v722
      %v724 = vpop.f32.mrf.mxu0
      %v725 = vadd.f32 %v584, %v724
      %726 = vmatmul.bf16.gmra.mxu0 %v646
      %v727 = vpop.f32.mrf.mxu0
      %v728 = vadd.f32 %v587, %v727
      %v729 = vpop.f32.mrf.mxu0
      %v730 = vadd.f32 %v589, %v729
      %731 = vmatmul.bf16.gmra.mxu0 %v648
      %v732 = vpop.f32.mrf.mxu0
      %v733 = vadd.f32 %v592, %v732
      %v734 = vpop.f32.mrf.mxu0
      %v735 = vadd.f32 %v594, %v734
      %736 = vmatmul.bf16.gmra.mxu0 %v650
      %v737 = vpop.f32.mrf.mxu0
      %v738 = vadd.f32 %v597, %v737
      %v739 = vpop.f32.mrf.mxu0
      %v740 = vadd.f32 %v599, %v739
      %741 = vmatmul.bf16.gmra.mxu0 %v652
      %v742 = vpop.f32.mrf.mxu0
      %v743 = vadd.f32 %v602, %v742
      %v744 = vpop.f32.mrf.mxu0
      %v745 = vadd.f32 %v604, %v744
      %746 = vmatmul.bf16.gmra.mxu0 %v654
      %v747 = vpop.f32.mrf.mxu0
      %v748 = vadd.f32 %v607, %v747
      %v749 = vpop.f32.mrf.mxu0
      %v750 = vadd.f32 %v609, %v749
      %751 = vmatmul.bf16.gmra.mxu0 %v656
      %v752 = vpop.f32.mrf.mxu0
      %v753 = vadd.f32 %v612, %v752
      %v754 = vpop.f32.mrf.mxu0
      %v755 = vadd.f32 %v614, %v754
      %756 = vdwg.mxu0
      %v757 = vld [vmem:[%s165] sm:$0xe]
      %s758 = scalar_lea.vmem %s1, 16
      %v759 = vld [vmem:[%s758] sm:$0xf]
      %v760 = vld [vmem:[%s758 + $0x4] sm:$0xf]
      %v762 = vunpack.c.l.b16 %v757
      %v763 = vpack.c.b16 %v252, %v762
      %vm764 = vcmask 1046528
      %v765 = vrot.slane %v763, 1
      %v766 = vrot.slane %v289, 1
      %v767 = vsel %vm764, %v765, %v766
      %v768 = vrot.slane %v290, 1
      %v769 = vsel %vm764, %v766, %v768
      %v770 = vrot.slane %v291, 1
      %v771 = vsel %vm764, %v768, %v770
      %v772 = vrot.slane %v292, 1
      %v773 = vsel %vm764, %v770, %v772
      %v774 = vrot.slane %v293, 1
      %v775 = vsel %vm764, %v772, %v774
      %v776 = vrot.slane %v294, 1
      %v777 = vsel %vm764, %v774, %v776
      %v778 = vrot.slane %v295, 1
      %v779 = vsel %vm764, %v776, %v778
      %v780 = vrot.slane %v296, 1
      %v781 = vsel %vm764, %v778, %v780
      %v782 = vrot.slane %v297, 1
      %v783 = vsel %vm764, %v780, %v782
      %v784 = vrot.slane %v298, 1
      %v785 = vsel %vm764, %v782, %v784
      %v786 = vrot.slane %v299, 1
      %v787 = vsel %vm764, %v784, %v786
      %v788 = vrot.slane %v300, 1
      %v789 = vsel %vm764, %v786, %v788
      %v790 = vrot.slane %v301, 1
      %v791 = vsel %vm764, %v788, %v790
      %v792 = vrot.slane %v302, 1
      %v793 = vsel %vm764, %v790, %v792
      %v794 = vrot.slane %v303, 1
      %v795 = vsel %vm764, %v792, %v794
      %v796 = vrot.slane %v304, 1
      %v797 = vsel %vm764, %v794, %v796
      %v798 = vrot.slane %v305, 1
      %v799 = vsel %vm764, %v796, %v798
      %v800 = vrot.slane %v306, 1
      %v801 = vsel %vm764, %v798, %v800
      %v804 = vunpack.c.l.b16 %v759
      %v805 = vunpack.c.l.b16 %v760
      %v806 = vpack.c.b16 %v805, %v804
      %v809 = vsel %vm462, %v767, 0
      %v812 = vsel %vm462, %v769, 0
      %v815 = vsel %vm462, %v771, 0
      %v818 = vsel %vm462, %v773, 0
      %v821 = vsel %vm462, %v775, 0
      %v824 = vsel %vm462, %v777, 0
      %v827 = vsel %vm462, %v779, 0
      %v830 = vsel %vm462, %v781, 0
      %v833 = vsel %vm462, %v783, 0
      %v836 = vsel %vm462, %v785, 0
      %v839 = vsel %vm462, %v787, 0
      %v842 = vsel %vm462, %v789, 0
      %v845 = vsel %vm462, %v791, 0
      %v848 = vsel %vm462, %v793, 0
      %v851 = vsel %vm462, %v795, 0
      %v854 = vsel %vm462, %v797, 0
      %v857 = vsel %vm462, %v799, 0
      %v860 = vsel %vm462, %v801, 0
      %862 = vmatpush.bf16.msra.mxu0 0
      %863 = vmatpush.bf16.msra.mxu0 0
      %864 = vmatpush.bf16.msra.mxu0 0
      %865 = vmatpush.bf16.msra.mxu0 0
      %866 = vmatpush.bf16.msra.mxu0 0
      %867 = vmatpush.bf16.msra.mxu0 0
      %868 = vmatpush.bf16.msra.mxu0 0
      %869 = vmatpush.bf16.msra.mxu0 %v806
      %870 = vmatmul.bf16.gmra.mxu0 %v809
      %v871 = vpop.f32.mrf.mxu0
      %v872 = vadd.f32 0.0, %v871
      %v873 = vpop.f32.mrf.mxu0
      %v874 = vadd.f32 0.0, %v873
      %875 = vmatmul.bf16.gmra.mxu0 %v812
      %v876 = vpop.f32.mrf.mxu0
      %v877 = vadd.f32 0.0, %v876
      %v878 = vpop.f32.mrf.mxu0
      %v879 = vadd.f32 0.0, %v878
      %880 = vmatmul.bf16.gmra.mxu0 %v815
      %v881 = vpop.f32.mrf.mxu0
      %v882 = vadd.f32 0.0, %v881
      %v883 = vpop.f32.mrf.mxu0
      %v884 = vadd.f32 0.0, %v883
      %885 = vmatmul.bf16.gmra.mxu0 %v818
      %v886 = vpop.f32.mrf.mxu0
      %v887 = vadd.f32 0.0, %v886
      %v888 = vpop.f32.mrf.mxu0
      %v889 = vadd.f32 0.0, %v888
      %890 = vmatmul.bf16.gmra.mxu0 %v821
      %v891 = vpop.f32.mrf.mxu0
      %v892 = vadd.f32 0.0, %v891
      %v893 = vpop.f32.mrf.mxu0
      %v894 = vadd.f32 0.0, %v893
      %895 = vmatmul.bf16.gmra.mxu0 %v824
      %v896 = vpop.f32.mrf.mxu0
      %v897 = vadd.f32 0.0, %v896
      %v898 = vpop.f32.mrf.mxu0
      %v899 = vadd.f32 0.0, %v898
      %900 = vmatmul.bf16.gmra.mxu0 %v827
      %v901 = vpop.f32.mrf.mxu0
      %v902 = vadd.f32 0.0, %v901
      %v903 = vpop.f32.mrf.mxu0
      %v904 = vadd.f32 0.0, %v903
      %905 = vmatmul.bf16.gmra.mxu0 %v830
      %v906 = vpop.f32.mrf.mxu0
      %v907 = vadd.f32 0.0, %v906
      %v908 = vpop.f32.mrf.mxu0
      %v909 = vadd.f32 0.0, %v908
      %910 = vmatmul.bf16.gmra.mxu0 %v833
      %v911 = vpop.f32.mrf.mxu0
      %v912 = vadd.f32 0.0, %v911
      %v913 = vpop.f32.mrf.mxu0
      %v914 = vadd.f32 0.0, %v913
      %915 = vmatmul.bf16.gmra.mxu0 %v836
      %v916 = vpop.f32.mrf.mxu0
      %v917 = vadd.f32 0.0, %v916
      %v918 = vpop.f32.mrf.mxu0
      %v919 = vadd.f32 0.0, %v918
      %920 = vmatmul.bf16.gmra.mxu0 %v839
      %v921 = vpop.f32.mrf.mxu0
      %v922 = vadd.f32 0.0, %v921
      %v923 = vpop.f32.mrf.mxu0
      %v924 = vadd.f32 0.0, %v923
      %925 = vmatmul.bf16.gmra.mxu0 %v842
      %v926 = vpop.f32.mrf.mxu0
      %v927 = vadd.f32 0.0, %v926
      %v928 = vpop.f32.mrf.mxu0
      %v929 = vadd.f32 0.0, %v928
      %930 = vmatmul.bf16.gmra.mxu0 %v845
      %v931 = vpop.f32.mrf.mxu0
      %v932 = vadd.f32 0.0, %v931
      %v933 = vpop.f32.mrf.mxu0
      %v934 = vadd.f32 0.0, %v933
      %935 = vmatmul.bf16.gmra.mxu0 %v848
      %v936 = vpop.f32.mrf.mxu0
      %v937 = vadd.f32 0.0, %v936
      %v938 = vpop.f32.mrf.mxu0
      %v939 = vadd.f32 0.0, %v938
      %940 = vmatmul.bf16.gmra.mxu0 %v851
      %v941 = vpop.f32.mrf.mxu0
      %v942 = vadd.f32 0.0, %v941
      %v943 = vpop.f32.mrf.mxu0
      %v944 = vadd.f32 0.0, %v943
      %945 = vmatmul.bf16.gmra.mxu0 %v854
      %v946 = vpop.f32.mrf.mxu0
      %v947 = vadd.f32 0.0, %v946
      %v948 = vpop.f32.mrf.mxu0
      %v949 = vadd.f32 0.0, %v948
      %950 = vmatmul.bf16.gmra.mxu0 %v857
      %v951 = vpop.f32.mrf.mxu0
      %v952 = vadd.f32 0.0, %v951
      %v953 = vpop.f32.mrf.mxu0
      %v954 = vadd.f32 0.0, %v953
      %955 = vmatmul.bf16.gmra.mxu0 %v860
      %v956 = vpop.f32.mrf.mxu0
      %v957 = vadd.f32 0.0, %v956
      %v958 = vpop.f32.mrf.mxu0
      %v959 = vadd.f32 0.0, %v958
      %960 = vdwg.mxu0
      %v961 = vadd.f32 %v668, %v872
      %v962 = vadd.f32 %v670, %v874
      %v963 = vadd.f32 %v673, %v877
      %v964 = vadd.f32 %v675, %v879
      %v965 = vadd.f32 %v678, %v882
      %v966 = vadd.f32 %v680, %v884
      %v967 = vadd.f32 %v683, %v887
      %v968 = vadd.f32 %v685, %v889
      %v969 = vadd.f32 %v688, %v892
      %v970 = vadd.f32 %v690, %v894
      %v971 = vadd.f32 %v693, %v897
      %v972 = vadd.f32 %v695, %v899
      %v973 = vadd.f32 %v698, %v902
      %v974 = vadd.f32 %v700, %v904
      %v975 = vadd.f32 %v703, %v907
      %v976 = vadd.f32 %v705, %v909
      %v977 = vadd.f32 %v708, %v912
      %v978 = vadd.f32 %v710, %v914
      %v979 = vadd.f32 %v713, %v917
      %v980 = vadd.f32 %v715, %v919
      %v981 = vadd.f32 %v718, %v922
      %v982 = vadd.f32 %v720, %v924
      %v983 = vadd.f32 %v723, %v927
      %v984 = vadd.f32 %v725, %v929
      %v985 = vadd.f32 %v728, %v932
      %v986 = vadd.f32 %v730, %v934
      %v987 = vadd.f32 %v733, %v937
      %v988 = vadd.f32 %v735, %v939
      %v989 = vadd.f32 %v738, %v942
      %v990 = vadd.f32 %v740, %v944
      %v991 = vadd.f32 %v743, %v947
      %v992 = vadd.f32 %v745, %v949
      %v993 = vadd.f32 %v748, %v952
      %v994 = vadd.f32 %v750, %v954
      %v995 = vadd.f32 %v753, %v957
      %v996 = vadd.f32 %v755, %v959
      %v997 = vld [vmem:[%s165 + $0x8] sm:$0xe]
      %v998 = vld [vmem:[%s165 + $0xc] sm:$0xf]
      %v999 = vld [vmem:[%s165 + $0x10] sm:$0xf]
      %v1000 = vld [vmem:[%s165 + $0x14] sm:$0xf]
      %v1001 = vld [vmem:[%s165 + $0x18] sm:$0xf]
      %v1002 = vld [vmem:[%s165 + $0x1c] sm:$0xf]
      %v1003 = vld [vmem:[%s165 + $0x20] sm:$0xf]
      %v1004 = vld [vmem:[%s165 + $0x24] sm:$0xf]
      %v1005 = vld [vmem:[%s165 + $0x28] sm:$0xf]
      %v1006 = vld [vmem:[%s165 + $0x2c] sm:$0xf]
      %v1007 = vld [vmem:[%s165 + $0x30] sm:$0xf]
      %v1008 = vld [vmem:[%s165 + $0x34] sm:$0xf]
      %v1009 = vld [vmem:[%s165 + $0x38] sm:$0xf]
      %v1010 = vld [vmem:[%s165 + $0x3c] sm:$0xf]
      %v1011 = vld [vmem:[%s165 + $0x40] sm:$0xf]
      %v1012 = vld [vmem:[%s165 + $0x44] sm:$0xf]
      %v1013 = vld [vmem:[%s165 + $0x48] sm:$0xf]
      %v1014 = vld [vmem:[%s165 + $0x4c] sm:$0xf]
      %v1015 = vld [vmem:[%s165 + $0x50] sm:$0xf]
      %v1016 = vld [vmem:[%s165 + $0x54] sm:$0xf]
      %v1017 = vld [vmem:[%s165 + $0x58] sm:$0xf]
      %v1018 = vld [vmem:[%s165 + $0x5c] sm:$0xf]
      %v1019 = vld [vmem:[%s165 + $0x60] sm:$0xf]
      %v1020 = vld [vmem:[%s165 + $0x64] sm:$0xf]
      %v1021 = vld [vmem:[%s165 + $0x68] sm:$0xf]
      %v1022 = vld [vmem:[%s165 + $0x6c] sm:$0xf]
      %v1023 = vld [vmem:[%s165 + $0x70] sm:$0xf]
      %v1024 = vld [vmem:[%s165 + $0x74] sm:$0xf]
      %v1025 = vld [vmem:[%s165 + $0x78] sm:$0xf]
      %v1026 = vld [vmem:[%s165 + $0x7c] sm:$0xf]
      %v1027 = vld [vmem:[%s165 + $0x80] sm:$0xf]
      %v1028 = vld [vmem:[%s165 + $0x84] sm:$0xf]
      %v1029 = vld [vmem:[%s165 + $0x88] sm:$0xf]
      %v1030 = vld [vmem:[%s165 + $0x8c] sm:$0xf]
      %v1031 = vld [vmem:[%s165 + $0x90] sm:$0xf]
      %v1032 = vld [vmem:[%s165 + $0x94] sm:$0xf]
      %v1033 = vld [vmem:[%s165 + $0x98] sm:$0x1]
      %s1034 = scalar_lea.vmem %s1, 24
      %v1035 = vld [vmem:[%s1034] sm:$0xf]
      %v1036 = vld [vmem:[%s1034 + $0x4] sm:$0xf]
      %v1074 = vunpack.c.l.b16 %v997
      %v1075 = vunpack.c.l.b16 %v998
      %v1076 = vunpack.c.l.b16 %v999
      %v1077 = vunpack.c.l.b16 %v1000
      %v1078 = vunpack.c.l.b16 %v1001
      %v1079 = vunpack.c.l.b16 %v1002
      %v1080 = vunpack.c.l.b16 %v1003
      %v1081 = vunpack.c.l.b16 %v1004
      %v1082 = vunpack.c.l.b16 %v1005
      %v1083 = vunpack.c.l.b16 %v1006
      %v1084 = vunpack.c.l.b16 %v1007
      %v1085 = vunpack.c.l.b16 %v1008
      %v1086 = vunpack.c.l.b16 %v1009
      %v1087 = vunpack.c.l.b16 %v1010
      %v1088 = vunpack.c.l.b16 %v1011
      %v1089 = vunpack.c.l.b16 %v1012
      %v1090 = vunpack.c.l.b16 %v1013
      %v1091 = vunpack.c.l.b16 %v1014
      %v1092 = vunpack.c.l.b16 %v1015
      %v1093 = vunpack.c.l.b16 %v1016
      %v1094 = vunpack.c.l.b16 %v1017
      %v1095 = vunpack.c.l.b16 %v1018
      %v1096 = vunpack.c.l.b16 %v1019
      %v1097 = vunpack.c.l.b16 %v1020
      %v1098 = vunpack.c.l.b16 %v1021
      %v1099 = vunpack.c.l.b16 %v1022
      %v1100 = vunpack.c.l.b16 %v1023
      %v1101 = vunpack.c.l.b16 %v1024
      %v1102 = vunpack.c.l.b16 %v1025
      %v1103 = vunpack.c.l.b16 %v1026
      %v1104 = vunpack.c.l.b16 %v1027
      %v1105 = vunpack.c.l.b16 %v1028
      %v1106 = vunpack.c.l.b16 %v1029
      %v1107 = vunpack.c.l.b16 %v1030
      %v1108 = vunpack.c.l.b16 %v1031
      %v1109 = vunpack.c.l.b16 %v1032
      %v1110 = vunpack.c.l.b16 %v1033
      %v1111 = vpack.c.b16 %v1075, %v1074
      %v1112 = vpack.c.b16 %v1077, %v1076
      %v1113 = vpack.c.b16 %v1079, %v1078
      %v1114 = vpack.c.b16 %v1081, %v1080
      %v1115 = vpack.c.b16 %v1083, %v1082
      %v1116 = vpack.c.b16 %v1085, %v1084
      %v1117 = vpack.c.b16 %v1087, %v1086
      %v1118 = vpack.c.b16 %v1089, %v1088
      %v1119 = vpack.c.b16 %v1091, %v1090
      %v1120 = vpack.c.b16 %v1093, %v1092
      %v1121 = vpack.c.b16 %v1095, %v1094
      %v1122 = vpack.c.b16 %v1097, %v1096
      %v1123 = vpack.c.b16 %v1099, %v1098
      %v1124 = vpack.c.b16 %v1101, %v1100
      %v1125 = vpack.c.b16 %v1103, %v1102
      %v1126 = vpack.c.b16 %v1105, %v1104
      %v1127 = vpack.c.b16 %v1107, %v1106
      %v1128 = vpack.c.b16 %v1109, %v1108
      %v1129 = vpack.c.b16 %v1110, %v1110
      %v1130 = vrot.slane %v1111, 1
      %v1131 = vrot.slane %v1112, 1
      %v1132 = vsel %vm764, %v1130, %v1131
      %v1133 = vrot.slane %v1113, 1
      %v1134 = vsel %vm764, %v1131, %v1133
      %v1135 = vrot.slane %v1114, 1
      %v1136 = vsel %vm764, %v1133, %v1135
      %v1137 = vrot.slane %v1115, 1
      %v1138 = vsel %vm764, %v1135, %v1137
      %v1139 = vrot.slane %v1116, 1
      %v1140 = vsel %vm764, %v1137, %v1139
      %v1141 = vrot.slane %v1117, 1
      %v1142 = vsel %vm764, %v1139, %v1141
      %v1143 = vrot.slane %v1118, 1
      %v1144 = vsel %vm764, %v1141, %v1143
      %v1145 = vrot.slane %v1119, 1
      %v1146 = vsel %vm764, %v1143, %v1145
      %v1147 = vrot.slane %v1120, 1
      %v1148 = vsel %vm764, %v1145, %v1147
      %v1149 = vrot.slane %v1121, 1
      %v1150 = vsel %vm764, %v1147, %v1149
      %v1151 = vrot.slane %v1122, 1
      %v1152 = vsel %vm764, %v1149, %v1151
      %v1153 = vrot.slane %v1123, 1
      %v1154 = vsel %vm764, %v1151, %v1153
      %v1155 = vrot.slane %v1124, 1
      %v1156 = vsel %vm764, %v1153, %v1155
      %v1157 = vrot.slane %v1125, 1
      %v1158 = vsel %vm764, %v1155, %v1157
      %v1159 = vrot.slane %v1126, 1
      %v1160 = vsel %vm764, %v1157, %v1159
      %v1161 = vrot.slane %v1127, 1
      %v1162 = vsel %vm764, %v1159, %v1161
      %v1163 = vrot.slane %v1128, 1
      %v1164 = vsel %vm764, %v1161, %v1163
      %v1165 = vrot.slane %v1129, 1
      %v1166 = vsel %vm764, %v1163, %v1165
      %v1169 = vunpack.c.l.b16 %v1035
      %v1170 = vunpack.c.l.b16 %v1036
      %v1171 = vpack.c.b16 %v1170, %v1169
      %v1174 = vsel %vm462, %v1132, 0
      %v1177 = vsel %vm462, %v1134, 0
      %v1180 = vsel %vm462, %v1136, 0
      %v1183 = vsel %vm462, %v1138, 0
      %v1186 = vsel %vm462, %v1140, 0
      %v1189 = vsel %vm462, %v1142, 0
      %v1192 = vsel %vm462, %v1144, 0
      %v1195 = vsel %vm462, %v1146, 0
      %v1198 = vsel %vm462, %v1148, 0
      %v1201 = vsel %vm462, %v1150, 0
      %v1204 = vsel %vm462, %v1152, 0
      %v1207 = vsel %vm462, %v1154, 0
      %v1210 = vsel %vm462, %v1156, 0
      %v1213 = vsel %vm462, %v1158, 0
      %v1216 = vsel %vm462, %v1160, 0
      %v1219 = vsel %vm462, %v1162, 0
      %v1222 = vsel %vm462, %v1164, 0
      %v1225 = vsel %vm462, %v1166, 0
      %1227 = vmatpush.bf16.msra.mxu0 0
      %1228 = vmatpush.bf16.msra.mxu0 0
      %1229 = vmatpush.bf16.msra.mxu0 0
      %1230 = vmatpush.bf16.msra.mxu0 0
      %1231 = vmatpush.bf16.msra.mxu0 0
      %1232 = vmatpush.bf16.msra.mxu0 0
      %1233 = vmatpush.bf16.msra.mxu0 0
      %1234 = vmatpush.bf16.msra.mxu0 %v1171
      %1235 = vmatmul.bf16.gmra.mxu0 %v1174
      %v1236 = vpop.f32.mrf.mxu0
      %v1237 = vadd.f32 0.0, %v1236
      %v1238 = vpop.f32.mrf.mxu0
      %v1239 = vadd.f32 0.0, %v1238
      %1240 = vmatmul.bf16.gmra.mxu0 %v1177
      %v1241 = vpop.f32.mrf.mxu0
      %v1242 = vadd.f32 0.0, %v1241
      %v1243 = vpop.f32.mrf.mxu0
      %v1244 = vadd.f32 0.0, %v1243
      %1245 = vmatmul.bf16.gmra.mxu0 %v1180
      %v1246 = vpop.f32.mrf.mxu0
      %v1247 = vadd.f32 0.0, %v1246
      %v1248 = vpop.f32.mrf.mxu0
      %v1249 = vadd.f32 0.0, %v1248
      %1250 = vmatmul.bf16.gmra.mxu0 %v1183
      %v1251 = vpop.f32.mrf.mxu0
      %v1252 = vadd.f32 0.0, %v1251
      %v1253 = vpop.f32.mrf.mxu0
      %v1254 = vadd.f32 0.0, %v1253
      %1255 = vmatmul.bf16.gmra.mxu0 %v1186
      %v1256 = vpop.f32.mrf.mxu0
      %v1257 = vadd.f32 0.0, %v1256
      %v1258 = vpop.f32.mrf.mxu0
      %v1259 = vadd.f32 0.0, %v1258
      %1260 = vmatmul.bf16.gmra.mxu0 %v1189
      %v1261 = vpop.f32.mrf.mxu0
      %v1262 = vadd.f32 0.0, %v1261
      %v1263 = vpop.f32.mrf.mxu0
      %v1264 = vadd.f32 0.0, %v1263
      %1265 = vmatmul.bf16.gmra.mxu0 %v1192
      %v1266 = vpop.f32.mrf.mxu0
      %v1267 = vadd.f32 0.0, %v1266
      %v1268 = vpop.f32.mrf.mxu0
      %v1269 = vadd.f32 0.0, %v1268
      %1270 = vmatmul.bf16.gmra.mxu0 %v1195
      %v1271 = vpop.f32.mrf.mxu0
      %v1272 = vadd.f32 0.0, %v1271
      %v1273 = vpop.f32.mrf.mxu0
      %v1274 = vadd.f32 0.0, %v1273
      %1275 = vmatmul.bf16.gmra.mxu0 %v1198
      %v1276 = vpop.f32.mrf.mxu0
      %v1277 = vadd.f32 0.0, %v1276
      %v1278 = vpop.f32.mrf.mxu0
      %v1279 = vadd.f32 0.0, %v1278
      %1280 = vmatmul.bf16.gmra.mxu0 %v1201
      %v1281 = vpop.f32.mrf.mxu0
      %v1282 = vadd.f32 0.0, %v1281
      %v1283 = vpop.f32.mrf.mxu0
      %v1284 = vadd.f32 0.0, %v1283
      %1285 = vmatmul.bf16.gmra.mxu0 %v1204
      %v1286 = vpop.f32.mrf.mxu0
      %v1287 = vadd.f32 0.0, %v1286
      %v1288 = vpop.f32.mrf.mxu0
      %v1289 = vadd.f32 0.0, %v1288
      %1290 = vmatmul.bf16.gmra.mxu0 %v1207
      %v1291 = vpop.f32.mrf.mxu0
      %v1292 = vadd.f32 0.0, %v1291
      %v1293 = vpop.f32.mrf.mxu0
      %v1294 = vadd.f32 0.0, %v1293
      %1295 = vmatmul.bf16.gmra.mxu0 %v1210
      %v1296 = vpop.f32.mrf.mxu0
      %v1297 = vadd.f32 0.0, %v1296
      %v1298 = vpop.f32.mrf.mxu0
      %v1299 = vadd.f32 0.0, %v1298
      %1300 = vmatmul.bf16.gmra.mxu0 %v1213
      %v1301 = vpop.f32.mrf.mxu0
      %v1302 = vadd.f32 0.0, %v1301
      %v1303 = vpop.f32.mrf.mxu0
      %v1304 = vadd.f32 0.0, %v1303
      %1305 = vmatmul.bf16.gmra.mxu0 %v1216
      %v1306 = vpop.f32.mrf.mxu0
      %v1307 = vadd.f32 0.0, %v1306
      %v1308 = vpop.f32.mrf.mxu0
      %v1309 = vadd.f32 0.0, %v1308
      %1310 = vmatmul.bf16.gmra.mxu0 %v1219
      %v1311 = vpop.f32.mrf.mxu0
      %v1312 = vadd.f32 0.0, %v1311
      %v1313 = vpop.f32.mrf.mxu0
      %v1314 = vadd.f32 0.0, %v1313
      %1315 = vmatmul.bf16.gmra.mxu0 %v1222
      %v1316 = vpop.f32.mrf.mxu0
      %v1317 = vadd.f32 0.0, %v1316
      %v1318 = vpop.f32.mrf.mxu0
      %v1319 = vadd.f32 0.0, %v1318
      %1320 = vmatmul.bf16.gmra.mxu0 %v1225
      %v1321 = vpop.f32.mrf.mxu0
      %v1322 = vadd.f32 0.0, %v1321
      %v1323 = vpop.f32.mrf.mxu0
      %v1324 = vadd.f32 0.0, %v1323
      %1325 = vdwg.mxu0
      %v1326 = vadd.f32 %v961, %v1237
      %v1327 = vadd.f32 %v962, %v1239
      %v1328 = vadd.f32 %v963, %v1242
      %v1329 = vadd.f32 %v964, %v1244
      %v1330 = vadd.f32 %v965, %v1247
      %v1331 = vadd.f32 %v966, %v1249
      %v1332 = vadd.f32 %v967, %v1252
      %v1333 = vadd.f32 %v968, %v1254
      %v1334 = vadd.f32 %v969, %v1257
      %v1335 = vadd.f32 %v970, %v1259
      %v1336 = vadd.f32 %v971, %v1262
      %v1337 = vadd.f32 %v972, %v1264
      %v1338 = vadd.f32 %v973, %v1267
      %v1339 = vadd.f32 %v974, %v1269
      %v1340 = vadd.f32 %v975, %v1272
      %v1341 = vadd.f32 %v976, %v1274
      %v1342 = vadd.f32 %v977, %v1277
      %v1343 = vadd.f32 %v978, %v1279
      %v1344 = vadd.f32 %v979, %v1282
      %v1345 = vadd.f32 %v980, %v1284
      %v1346 = vadd.f32 %v981, %v1287
      %v1347 = vadd.f32 %v982, %v1289
      %v1348 = vadd.f32 %v983, %v1292
      %v1349 = vadd.f32 %v984, %v1294
      %v1350 = vadd.f32 %v985, %v1297
      %v1351 = vadd.f32 %v986, %v1299
      %v1352 = vadd.f32 %v987, %v1302
      %v1353 = vadd.f32 %v988, %v1304
      %v1354 = vadd.f32 %v989, %v1307
      %v1355 = vadd.f32 %v990, %v1309
      %v1356 = vadd.f32 %v991, %v1312
      %v1357 = vadd.f32 %v992, %v1314
      %v1358 = vadd.f32 %v993, %v1317
      %v1359 = vadd.f32 %v994, %v1319
      %v1360 = vadd.f32 %v995, %v1322
      %v1361 = vadd.f32 %v996, %v1324
      %v1362 = vld [vmem:[%s165 + $0x98] sm:$0x3]
      %s1363 = scalar_lea.vmem %s1, 32
      %v1364 = vld [vmem:[%s1363] sm:$0xf]
      %v1365 = vld [vmem:[%s1363 + $0x4] sm:$0xf]
      %v1367 = vunpack.c.l.b16 %v1362
      %v1368 = vpack.c.b16 %v1367, %v1367
      %vm1369 = vsmask.f32 6400
      %v1371 = vshrl.u32 %v1111, 16
      %v1373 = vrot.slane %v1371, 1
      %v1374 = vshll.u32 %v1111, 16
      %v1376 = vrot.slane %v1374, 2
      %v1377 = vor.u32 %v1373, %v1376
      %v1379 = vshrl.u32 %v1112, 16
      %v1381 = vrot.slane %v1379, 1
      %v1382 = vshll.u32 %v1112, 16
      %v1384 = vrot.slane %v1382, 2
      %v1385 = vor.u32 %v1381, %v1384
      %v1386 = vsel %vm1369, %v1377, %v1385
      %v1388 = vshrl.u32 %v1113, 16
      %v1390 = vrot.slane %v1388, 1
      %v1391 = vshll.u32 %v1113, 16
      %v1393 = vrot.slane %v1391, 2
      %v1394 = vor.u32 %v1390, %v1393
      %v1395 = vsel %vm1369, %v1385, %v1394
      %v1397 = vshrl.u32 %v1114, 16
      %v1399 = vrot.slane %v1397, 1
      %v1400 = vshll.u32 %v1114, 16
      %v1402 = vrot.slane %v1400, 2
      %v1403 = vor.u32 %v1399, %v1402
      %v1404 = vsel %vm1369, %v1394, %v1403
      %v1406 = vshrl.u32 %v1115, 16
      %v1408 = vrot.slane %v1406, 1
      %v1409 = vshll.u32 %v1115, 16
      %v1411 = vrot.slane %v1409, 2
      %v1412 = vor.u32 %v1408, %v1411
      %v1413 = vsel %vm1369, %v1403, %v1412
      %v1415 = vshrl.u32 %v1116, 16
      %v1417 = vrot.slane %v1415, 1
      %v1418 = vshll.u32 %v1116, 16
      %v1420 = vrot.slane %v1418, 2
      %v1421 = vor.u32 %v1417, %v1420
      %v1422 = vsel %vm1369, %v1412, %v1421
      %v1424 = vshrl.u32 %v1117, 16
      %v1426 = vrot.slane %v1424, 1
      %v1427 = vshll.u32 %v1117, 16
      %v1429 = vrot.slane %v1427, 2
      %v1430 = vor.u32 %v1426, %v1429
      %v1431 = vsel %vm1369, %v1421, %v1430
      %v1433 = vshrl.u32 %v1118, 16
      %v1435 = vrot.slane %v1433, 1
      %v1436 = vshll.u32 %v1118, 16
      %v1438 = vrot.slane %v1436, 2
      %v1439 = vor.u32 %v1435, %v1438
      %v1440 = vsel %vm1369, %v1430, %v1439
      %v1442 = vshrl.u32 %v1119, 16
      %v1444 = vrot.slane %v1442, 1
      %v1445 = vshll.u32 %v1119, 16
      %v1447 = vrot.slane %v1445, 2
      %v1448 = vor.u32 %v1444, %v1447
      %v1449 = vsel %vm1369, %v1439, %v1448
      %v1451 = vshrl.u32 %v1120, 16
      %v1453 = vrot.slane %v1451, 1
      %v1454 = vshll.u32 %v1120, 16
      %v1456 = vrot.slane %v1454, 2
      %v1457 = vor.u32 %v1453, %v1456
      %v1458 = vsel %vm1369, %v1448, %v1457
      %v1460 = vshrl.u32 %v1121, 16
      %v1462 = vrot.slane %v1460, 1
      %v1463 = vshll.u32 %v1121, 16
      %v1465 = vrot.slane %v1463, 2
      %v1466 = vor.u32 %v1462, %v1465
      %v1467 = vsel %vm1369, %v1457, %v1466
      %v1469 = vshrl.u32 %v1122, 16
      %v1471 = vrot.slane %v1469, 1
      %v1472 = vshll.u32 %v1122, 16
      %v1474 = vrot.slane %v1472, 2
      %v1475 = vor.u32 %v1471, %v1474
      %v1476 = vsel %vm1369, %v1466, %v1475
      %v1478 = vshrl.u32 %v1123, 16
      %v1480 = vrot.slane %v1478, 1
      %v1481 = vshll.u32 %v1123, 16
      %v1483 = vrot.slane %v1481, 2
      %v1484 = vor.u32 %v1480, %v1483
      %v1485 = vsel %vm1369, %v1475, %v1484
      %v1487 = vshrl.u32 %v1124, 16
      %v1489 = vrot.slane %v1487, 1
      %v1490 = vshll.u32 %v1124, 16
      %v1492 = vrot.slane %v1490, 2
      %v1493 = vor.u32 %v1489, %v1492
      %v1494 = vsel %vm1369, %v1484, %v1493
      %v1496 = vshrl.u32 %v1125, 16
      %v1498 = vrot.slane %v1496, 1
      %v1499 = vshll.u32 %v1125, 16
      %v1501 = vrot.slane %v1499, 2
      %v1502 = vor.u32 %v1498, %v1501
      %v1503 = vsel %vm1369, %v1493, %v1502
      %v1505 = vshrl.u32 %v1126, 16
      %v1507 = vrot.slane %v1505, 1
      %v1508 = vshll.u32 %v1126, 16
      %v1510 = vrot.slane %v1508, 2
      %v1511 = vor.u32 %v1507, %v1510
      %v1512 = vsel %vm1369, %v1502, %v1511
      %v1514 = vshrl.u32 %v1127, 16
      %v1516 = vrot.slane %v1514, 1
      %v1517 = vshll.u32 %v1127, 16
      %v1519 = vrot.slane %v1517, 2
      %v1520 = vor.u32 %v1516, %v1519
      %v1521 = vsel %vm1369, %v1511, %v1520
      %v1523 = vshrl.u32 %v1128, 16
      %v1525 = vrot.slane %v1523, 1
      %v1526 = vshll.u32 %v1128, 16
      %v1528 = vrot.slane %v1526, 2
      %v1529 = vor.u32 %v1525, %v1528
      %v1530 = vsel %vm1369, %v1520, %v1529
      %v1532 = vshrl.u32 %v1368, 16
      %v1534 = vrot.slane %v1532, 1
      %v1535 = vshll.u32 %v1368, 16
      %v1537 = vrot.slane %v1535, 2
      %v1538 = vor.u32 %v1534, %v1537
      %v1539 = vsel %vm1369, %v1529, %v1538
      %v1542 = vunpack.c.l.b16 %v1364
      %v1543 = vunpack.c.l.b16 %v1365
      %v1544 = vpack.c.b16 %v1543, %v1542
      %v1547 = vsel %vm462, %v1386, 0
      %v1550 = vsel %vm462, %v1395, 0
      %v1553 = vsel %vm462, %v1404, 0
      %v1556 = vsel %vm462, %v1413, 0
      %v1559 = vsel %vm462, %v1422, 0
      %v1562 = vsel %vm462, %v1431, 0
      %v1565 = vsel %vm462, %v1440, 0
      %v1568 = vsel %vm462, %v1449, 0
      %v1571 = vsel %vm462, %v1458, 0
      %v1574 = vsel %vm462, %v1467, 0
      %v1577 = vsel %vm462, %v1476, 0
      %v1580 = vsel %vm462, %v1485, 0
      %v1583 = vsel %vm462, %v1494, 0
      %v1586 = vsel %vm462, %v1503, 0
      %v1589 = vsel %vm462, %v1512, 0
      %v1592 = vsel %vm462, %v1521, 0
      %v1595 = vsel %vm462, %v1530, 0
      %v1598 = vsel %vm462, %v1539, 0
      %1600 = vmatpush.bf16.msra.mxu0 0
      %1601 = vmatpush.bf16.msra.mxu0 0
      %1602 = vmatpush.bf16.msra.mxu0 0
      %1603 = vmatpush.bf16.msra.mxu0 0
      %1604 = vmatpush.bf16.msra.mxu0 0
      %1605 = vmatpush.bf16.msra.mxu0 0
      %1606 = vmatpush.bf16.msra.mxu0 0
      %1607 = vmatpush.bf16.msra.mxu0 %v1544
      %1608 = vmatmul.bf16.gmra.mxu0 %v1547
      %v1609 = vpop.f32.mrf.mxu0
      %v1610 = vadd.f32 0.0, %v1609
      %v1611 = vpop.f32.mrf.mxu0
      %v1612 = vadd.f32 0.0, %v1611
      %1613 = vmatmul.bf16.gmra.mxu0 %v1550
      %v1614 = vpop.f32.mrf.mxu0
      %v1615 = vadd.f32 0.0, %v1614
      %v1616 = vpop.f32.mrf.mxu0
      %v1617 = vadd.f32 0.0, %v1616
      %1618 = vmatmul.bf16.gmra.mxu0 %v1553
      %v1619 = vpop.f32.mrf.mxu0
      %v1620 = vadd.f32 0.0, %v1619
      %v1621 = vpop.f32.mrf.mxu0
      %v1622 = vadd.f32 0.0, %v1621
      %1623 = vmatmul.bf16.gmra.mxu0 %v1556
      %v1624 = vpop.f32.mrf.mxu0
      %v1625 = vadd.f32 0.0, %v1624
      %v1626 = vpop.f32.mrf.mxu0
      %v1627 = vadd.f32 0.0, %v1626
      %1628 = vmatmul.bf16.gmra.mxu0 %v1559
      %v1629 = vpop.f32.mrf.mxu0
      %v1630 = vadd.f32 0.0, %v1629
      %v1631 = vpop.f32.mrf.mxu0
      %v1632 = vadd.f32 0.0, %v1631
      %1633 = vmatmul.bf16.gmra.mxu0 %v1562
      %v1634 = vpop.f32.mrf.mxu0
      %v1635 = vadd.f32 0.0, %v1634
      %v1636 = vpop.f32.mrf.mxu0
      %v1637 = vadd.f32 0.0, %v1636
      %1638 = vmatmul.bf16.gmra.mxu0 %v1565
      %v1639 = vpop.f32.mrf.mxu0
      %v1640 = vadd.f32 0.0, %v1639
      %v1641 = vpop.f32.mrf.mxu0
      %v1642 = vadd.f32 0.0, %v1641
      %1643 = vmatmul.bf16.gmra.mxu0 %v1568
      %v1644 = vpop.f32.mrf.mxu0
      %v1645 = vadd.f32 0.0, %v1644
      %v1646 = vpop.f32.mrf.mxu0
      %v1647 = vadd.f32 0.0, %v1646
      %1648 = vmatmul.bf16.gmra.mxu0 %v1571
      %v1649 = vpop.f32.mrf.mxu0
      %v1650 = vadd.f32 0.0, %v1649
      %v1651 = vpop.f32.mrf.mxu0
      %v1652 = vadd.f32 0.0, %v1651
      %1653 = vmatmul.bf16.gmra.mxu0 %v1574
      %v1654 = vpop.f32.mrf.mxu0
      %v1655 = vadd.f32 0.0, %v1654
      %v1656 = vpop.f32.mrf.mxu0
      %v1657 = vadd.f32 0.0, %v1656
      %1658 = vmatmul.bf16.gmra.mxu0 %v1577
      %v1659 = vpop.f32.mrf.mxu0
      %v1660 = vadd.f32 0.0, %v1659
      %v1661 = vpop.f32.mrf.mxu0
      %v1662 = vadd.f32 0.0, %v1661
      %1663 = vmatmul.bf16.gmra.mxu0 %v1580
      %v1664 = vpop.f32.mrf.mxu0
      %v1665 = vadd.f32 0.0, %v1664
      %v1666 = vpop.f32.mrf.mxu0
      %v1667 = vadd.f32 0.0, %v1666
      %1668 = vmatmul.bf16.gmra.mxu0 %v1583
      %v1669 = vpop.f32.mrf.mxu0
      %v1670 = vadd.f32 0.0, %v1669
      %v1671 = vpop.f32.mrf.mxu0
      %v1672 = vadd.f32 0.0, %v1671
      %1673 = vmatmul.bf16.gmra.mxu0 %v1586
      %v1674 = vpop.f32.mrf.mxu0
      %v1675 = vadd.f32 0.0, %v1674
      %v1676 = vpop.f32.mrf.mxu0
      %v1677 = vadd.f32 0.0, %v1676
      %1678 = vmatmul.bf16.gmra.mxu0 %v1589
      %v1679 = vpop.f32.mrf.mxu0
      %v1680 = vadd.f32 0.0, %v1679
      %v1681 = vpop.f32.mrf.mxu0
      %v1682 = vadd.f32 0.0, %v1681
      %1683 = vmatmul.bf16.gmra.mxu0 %v1592
      %v1684 = vpop.f32.mrf.mxu0
      %v1685 = vadd.f32 0.0, %v1684
      %v1686 = vpop.f32.mrf.mxu0
      %v1687 = vadd.f32 0.0, %v1686
      %1688 = vmatmul.bf16.gmra.mxu0 %v1595
      %v1689 = vpop.f32.mrf.mxu0
      %v1690 = vadd.f32 0.0, %v1689
      %v1691 = vpop.f32.mrf.mxu0
      %v1692 = vadd.f32 0.0, %v1691
      %1693 = vmatmul.bf16.gmra.mxu0 %v1598
      %v1694 = vpop.f32.mrf.mxu0
      %v1695 = vadd.f32 0.0, %v1694
      %v1696 = vpop.f32.mrf.mxu0
      %v1697 = vadd.f32 0.0, %v1696
      %1698 = vdwg.mxu0
      %v1699 = vadd.f32 %v1326, %v1610
      %v1700 = vadd.f32 %v1327, %v1612
      %v1701 = vadd.f32 %v1328, %v1615
      %v1702 = vadd.f32 %v1329, %v1617
      %v1703 = vadd.f32 %v1330, %v1620
      %v1704 = vadd.f32 %v1331, %v1622
      %v1705 = vadd.f32 %v1332, %v1625
      %v1706 = vadd.f32 %v1333, %v1627
      %v1707 = vadd.f32 %v1334, %v1630
      %v1708 = vadd.f32 %v1335, %v1632
      %v1709 = vadd.f32 %v1336, %v1635
      %v1710 = vadd.f32 %v1337, %v1637
      %v1711 = vadd.f32 %v1338, %v1640
      %v1712 = vadd.f32 %v1339, %v1642
      %v1713 = vadd.f32 %v1340, %v1645
      %v1714 = vadd.f32 %v1341, %v1647
      %v1715 = vadd.f32 %v1342, %v1650
      %v1716 = vadd.f32 %v1343, %v1652
      %v1717 = vadd.f32 %v1344, %v1655
      %v1718 = vadd.f32 %v1345, %v1657
      %v1719 = vadd.f32 %v1346, %v1660
      %v1720 = vadd.f32 %v1347, %v1662
      %v1721 = vadd.f32 %v1348, %v1665
      %v1722 = vadd.f32 %v1349, %v1667
      %v1723 = vadd.f32 %v1350, %v1670
      %v1724 = vadd.f32 %v1351, %v1672
      %v1725 = vadd.f32 %v1352, %v1675
      %v1726 = vadd.f32 %v1353, %v1677
      %v1727 = vadd.f32 %v1354, %v1680
      %v1728 = vadd.f32 %v1355, %v1682
      %v1729 = vadd.f32 %v1356, %v1685
      %v1730 = vadd.f32 %v1357, %v1687
      %v1731 = vadd.f32 %v1358, %v1690
      %v1732 = vadd.f32 %v1359, %v1692
      %v1733 = vadd.f32 %v1360, %v1695
      %v1734 = vadd.f32 %v1361, %v1697
      %v1735 = vld [vmem:[%s165 + $0x8] sm:$0xc]
      %s1736 = scalar_lea.vmem %s1, 40
      %v1737 = vld [vmem:[%s1736] sm:$0xf]
      %v1738 = vld [vmem:[%s1736 + $0x4] sm:$0xf]
      %v1740 = vunpack.c.l.b16 %v1735
      %v1741 = vpack.c.b16 %v1075, %v1740
      %vm1742 = vcmask 1045504
      %v1743 = vrot.slane %v1741, 2
      %v1744 = vrot.slane %v1112, 2
      %v1745 = vsel %vm1742, %v1743, %v1744
      %v1746 = vrot.slane %v1113, 2
      %v1747 = vsel %vm1742, %v1744, %v1746
      %v1748 = vrot.slane %v1114, 2
      %v1749 = vsel %vm1742, %v1746, %v1748
      %v1750 = vrot.slane %v1115, 2
      %v1751 = vsel %vm1742, %v1748, %v1750
      %v1752 = vrot.slane %v1116, 2
      %v1753 = vsel %vm1742, %v1750, %v1752
      %v1754 = vrot.slane %v1117, 2
      %v1755 = vsel %vm1742, %v1752, %v1754
      %v1756 = vrot.slane %v1118, 2
      %v1757 = vsel %vm1742, %v1754, %v1756
      %v1758 = vrot.slane %v1119, 2
      %v1759 = vsel %vm1742, %v1756, %v1758
      %v1760 = vrot.slane %v1120, 2
      %v1761 = vsel %vm1742, %v1758, %v1760
      %v1762 = vrot.slane %v1121, 2
      %v1763 = vsel %vm1742, %v1760, %v1762
      %v1764 = vrot.slane %v1122, 2
      %v1765 = vsel %vm1742, %v1762, %v1764
      %v1766 = vrot.slane %v1123, 2
      %v1767 = vsel %vm1742, %v1764, %v1766
      %v1768 = vrot.slane %v1124, 2
      %v1769 = vsel %vm1742, %v1766, %v1768
      %v1770 = vrot.slane %v1125, 2
      %v1771 = vsel %vm1742, %v1768, %v1770
      %v1772 = vrot.slane %v1126, 2
      %v1773 = vsel %vm1742, %v1770, %v1772
      %v1774 = vrot.slane %v1127, 2
      %v1775 = vsel %vm1742, %v1772, %v1774
      %v1776 = vrot.slane %v1128, 2
      %v1777 = vsel %vm1742, %v1774, %v1776
      %v1778 = vrot.slane %v1368, 2
      %v1779 = vsel %vm1742, %v1776, %v1778
      %v1782 = vunpack.c.l.b16 %v1737
      %v1783 = vunpack.c.l.b16 %v1738
      %v1784 = vpack.c.b16 %v1783, %v1782
      %v1787 = vsel %vm462, %v1745, 0
      %v1790 = vsel %vm462, %v1747, 0
      %v1793 = vsel %vm462, %v1749, 0
      %v1796 = vsel %vm462, %v1751, 0
      %v1799 = vsel %vm462, %v1753, 0
      %v1802 = vsel %vm462, %v1755, 0
      %v1805 = vsel %vm462, %v1757, 0
      %v1808 = vsel %vm462, %v1759, 0
      %v1811 = vsel %vm462, %v1761, 0
      %v1814 = vsel %vm462, %v1763, 0
      %v1817 = vsel %vm462, %v1765, 0
      %v1820 = vsel %vm462, %v1767, 0
      %v1823 = vsel %vm462, %v1769, 0
      %v1826 = vsel %vm462, %v1771, 0
      %v1829 = vsel %vm462, %v1773, 0
      %v1832 = vsel %vm462, %v1775, 0
      %v1835 = vsel %vm462, %v1777, 0
      %v1838 = vsel %vm462, %v1779, 0
      %1840 = vmatpush.bf16.msra.mxu0 0
      %1841 = vmatpush.bf16.msra.mxu0 0
      %1842 = vmatpush.bf16.msra.mxu0 0
      %1843 = vmatpush.bf16.msra.mxu0 0
      %1844 = vmatpush.bf16.msra.mxu0 0
      %1845 = vmatpush.bf16.msra.mxu0 0
      %1846 = vmatpush.bf16.msra.mxu0 0
      %1847 = vmatpush.bf16.msra.mxu0 %v1784
      %1848 = vmatmul.bf16.gmra.mxu0 %v1787
      %v1849 = vpop.f32.mrf.mxu0
      %v1850 = vadd.f32 0.0, %v1849
      %v1851 = vpop.f32.mrf.mxu0
      %v1852 = vadd.f32 0.0, %v1851
      %1853 = vmatmul.bf16.gmra.mxu0 %v1790
      %v1854 = vpop.f32.mrf.mxu0
      %v1855 = vadd.f32 0.0, %v1854
      %v1856 = vpop.f32.mrf.mxu0
      %v1857 = vadd.f32 0.0, %v1856
      %1858 = vmatmul.bf16.gmra.mxu0 %v1793
      %v1859 = vpop.f32.mrf.mxu0
      %v1860 = vadd.f32 0.0, %v1859
      %v1861 = vpop.f32.mrf.mxu0
      %v1862 = vadd.f32 0.0, %v1861
      %1863 = vmatmul.bf16.gmra.mxu0 %v1796
      %v1864 = vpop.f32.mrf.mxu0
      %v1865 = vadd.f32 0.0, %v1864
      %v1866 = vpop.f32.mrf.mxu0
      %v1867 = vadd.f32 0.0, %v1866
      %1868 = vmatmul.bf16.gmra.mxu0 %v1799
      %v1869 = vpop.f32.mrf.mxu0
      %v1870 = vadd.f32 0.0, %v1869
      %v1871 = vpop.f32.mrf.mxu0
      %v1872 = vadd.f32 0.0, %v1871
      %1873 = vmatmul.bf16.gmra.mxu0 %v1802
      %v1874 = vpop.f32.mrf.mxu0
      %v1875 = vadd.f32 0.0, %v1874
      %v1876 = vpop.f32.mrf.mxu0
      %v1877 = vadd.f32 0.0, %v1876
      %1878 = vmatmul.bf16.gmra.mxu0 %v1805
      %v1879 = vpop.f32.mrf.mxu0
      %v1880 = vadd.f32 0.0, %v1879
      %v1881 = vpop.f32.mrf.mxu0
      %v1882 = vadd.f32 0.0, %v1881
      %1883 = vmatmul.bf16.gmra.mxu0 %v1808
      %v1884 = vpop.f32.mrf.mxu0
      %v1885 = vadd.f32 0.0, %v1884
      %v1886 = vpop.f32.mrf.mxu0
      %v1887 = vadd.f32 0.0, %v1886
      %1888 = vmatmul.bf16.gmra.mxu0 %v1811
      %v1889 = vpop.f32.mrf.mxu0
      %v1890 = vadd.f32 0.0, %v1889
      %v1891 = vpop.f32.mrf.mxu0
      %v1892 = vadd.f32 0.0, %v1891
      %1893 = vmatmul.bf16.gmra.mxu0 %v1814
      %v1894 = vpop.f32.mrf.mxu0
      %v1895 = vadd.f32 0.0, %v1894
      %v1896 = vpop.f32.mrf.mxu0
      %v1897 = vadd.f32 0.0, %v1896
      %1898 = vmatmul.bf16.gmra.mxu0 %v1817
      %v1899 = vpop.f32.mrf.mxu0
      %v1900 = vadd.f32 0.0, %v1899
      %v1901 = vpop.f32.mrf.mxu0
      %v1902 = vadd.f32 0.0, %v1901
      %1903 = vmatmul.bf16.gmra.mxu0 %v1820
      %v1904 = vpop.f32.mrf.mxu0
      %v1905 = vadd.f32 0.0, %v1904
      %v1906 = vpop.f32.mrf.mxu0
      %v1907 = vadd.f32 0.0, %v1906
      %1908 = vmatmul.bf16.gmra.mxu0 %v1823
      %v1909 = vpop.f32.mrf.mxu0
      %v1910 = vadd.f32 0.0, %v1909
      %v1911 = vpop.f32.mrf.mxu0
      %v1912 = vadd.f32 0.0, %v1911
      %1913 = vmatmul.bf16.gmra.mxu0 %v1826
      %v1914 = vpop.f32.mrf.mxu0
      %v1915 = vadd.f32 0.0, %v1914
      %v1916 = vpop.f32.mrf.mxu0
      %v1917 = vadd.f32 0.0, %v1916
      %1918 = vmatmul.bf16.gmra.mxu0 %v1829
      %v1919 = vpop.f32.mrf.mxu0
      %v1920 = vadd.f32 0.0, %v1919
      %v1921 = vpop.f32.mrf.mxu0
      %v1922 = vadd.f32 0.0, %v1921
      %1923 = vmatmul.bf16.gmra.mxu0 %v1832
      %v1924 = vpop.f32.mrf.mxu0
      %v1925 = vadd.f32 0.0, %v1924
      %v1926 = vpop.f32.mrf.mxu0
      %v1927 = vadd.f32 0.0, %v1926
      %1928 = vmatmul.bf16.gmra.mxu0 %v1835
      %v1929 = vpop.f32.mrf.mxu0
      %v1930 = vadd.f32 0.0, %v1929
      %v1931 = vpop.f32.mrf.mxu0
      %v1932 = vadd.f32 0.0, %v1931
      %1933 = vmatmul.bf16.gmra.mxu0 %v1838
      %v1934 = vpop.f32.mrf.mxu0
      %v1935 = vadd.f32 0.0, %v1934
      %v1936 = vpop.f32.mrf.mxu0
      %v1937 = vadd.f32 0.0, %v1936
      %1938 = vdwg.mxu0
      %v1939 = vadd.f32 %v1699, %v1850
      %v1940 = vadd.f32 %v1700, %v1852
      %v1941 = vadd.f32 %v1701, %v1855
      %v1942 = vadd.f32 %v1702, %v1857
      %v1943 = vadd.f32 %v1703, %v1860
      %v1944 = vadd.f32 %v1704, %v1862
      %v1945 = vadd.f32 %v1705, %v1865
      %v1946 = vadd.f32 %v1706, %v1867
      %v1947 = vadd.f32 %v1707, %v1870
      %v1948 = vadd.f32 %v1708, %v1872
      %v1949 = vadd.f32 %v1709, %v1875
      %v1950 = vadd.f32 %v1710, %v1877
      %v1951 = vadd.f32 %v1711, %v1880
      %v1952 = vadd.f32 %v1712, %v1882
      %v1953 = vadd.f32 %v1713, %v1885
      %v1954 = vadd.f32 %v1714, %v1887
      %v1955 = vadd.f32 %v1715, %v1890
      %v1956 = vadd.f32 %v1716, %v1892
      %v1957 = vadd.f32 %v1717, %v1895
      %v1958 = vadd.f32 %v1718, %v1897
      %v1959 = vadd.f32 %v1719, %v1900
      %v1960 = vadd.f32 %v1720, %v1902
      %v1961 = vadd.f32 %v1721, %v1905
      %v1962 = vadd.f32 %v1722, %v1907
      %v1963 = vadd.f32 %v1723, %v1910
      %v1964 = vadd.f32 %v1724, %v1912
      %v1965 = vadd.f32 %v1725, %v1915
      %v1966 = vadd.f32 %v1726, %v1917
      %v1967 = vadd.f32 %v1727, %v1920
      %v1968 = vadd.f32 %v1728, %v1922
      %v1969 = vadd.f32 %v1729, %v1925
      %v1970 = vadd.f32 %v1730, %v1927
      %v1971 = vadd.f32 %v1731, %v1930
      %v1972 = vadd.f32 %v1732, %v1932
      %v1973 = vadd.f32 %v1733, %v1935
      %v1974 = vadd.f32 %v1734, %v1937
      %v1975 = vld [vmem:[%s165 + $0x10] sm:$0xc]
      %v1976 = vld [vmem:[%s165 + $0x14] sm:$0xf]
      %v1977 = vld [vmem:[%s165 + $0x18] sm:$0xf]
      %v1978 = vld [vmem:[%s165 + $0x1c] sm:$0xf]
      %v1979 = vld [vmem:[%s165 + $0x20] sm:$0xf]
      %v1980 = vld [vmem:[%s165 + $0x24] sm:$0xf]
      %v1981 = vld [vmem:[%s165 + $0x28] sm:$0xf]
      %v1982 = vld [vmem:[%s165 + $0x2c] sm:$0xf]
      %v1983 = vld [vmem:[%s165 + $0x30] sm:$0xf]
      %v1984 = vld [vmem:[%s165 + $0x34] sm:$0xf]
      %v1985 = vld [vmem:[%s165 + $0x38] sm:$0xf]
      %v1986 = vld [vmem:[%s165 + $0x3c] sm:$0xf]
      %v1987 = vld [vmem:[%s165 + $0x40] sm:$0xf]
      %v1988 = vld [vmem:[%s165 + $0x44] sm:$0xf]
      %v1989 = vld [vmem:[%s165 + $0x48] sm:$0xf]
      %v1990 = vld [vmem:[%s165 + $0x4c] sm:$0xf]
      %v1991 = vld [vmem:[%s165 + $0x50] sm:$0xf]
      %v1992 = vld [vmem:[%s165 + $0x54] sm:$0xf]
      %v1993 = vld [vmem:[%s165 + $0x58] sm:$0xf]
      %v1994 = vld [vmem:[%s165 + $0x5c] sm:$0xf]
      %v1995 = vld [vmem:[%s165 + $0x60] sm:$0xf]
      %v1996 = vld [vmem:[%s165 + $0x64] sm:$0xf]
      %v1997 = vld [vmem:[%s165 + $0x68] sm:$0xf]
      %v1998 = vld [vmem:[%s165 + $0x6c] sm:$0xf]
      %v1999 = vld [vmem:[%s165 + $0x70] sm:$0xf]
      %v2000 = vld [vmem:[%s165 + $0x74] sm:$0xf]
      %v2001 = vld [vmem:[%s165 + $0x78] sm:$0xf]
      %v2002 = vld [vmem:[%s165 + $0x7c] sm:$0xf]
      %v2003 = vld [vmem:[%s165 + $0x80] sm:$0xf]
      %v2004 = vld [vmem:[%s165 + $0x84] sm:$0xf]
      %v2005 = vld [vmem:[%s165 + $0x88] sm:$0xf]
      %v2006 = vld [vmem:[%s165 + $0x8c] sm:$0xf]
      %v2007 = vld [vmem:[%s165 + $0x90] sm:$0xf]
      %v2008 = vld [vmem:[%s165 + $0x94] sm:$0xf]
      %v2009 = vld [vmem:[%s165 + $0x98] sm:$0xf]
      %v2010 = vld [vmem:[%s165 + $0x9c] sm:$0xf]
      %v2011 = vld [vmem:[%s165 + $0xa0] sm:$0x3]
      %s2012 = scalar_lea.vmem %s1, 48
      %v2013 = vld [vmem:[%s2012] sm:$0xf]
      %v2014 = vld [vmem:[%s2012 + $0x4] sm:$0xf]
      %v2052 = vunpack.c.l.b16 %v1975
      %v2053 = vunpack.c.l.b16 %v1976
      %v2054 = vunpack.c.l.b16 %v1977
      %v2055 = vunpack.c.l.b16 %v1978
      %v2056 = vunpack.c.l.b16 %v1979
      %v2057 = vunpack.c.l.b16 %v1980
      %v2058 = vunpack.c.l.b16 %v1981
      %v2059 = vunpack.c.l.b16 %v1982
      %v2060 = vunpack.c.l.b16 %v1983
      %v2061 = vunpack.c.l.b16 %v1984
      %v2062 = vunpack.c.l.b16 %v1985
      %v2063 = vunpack.c.l.b16 %v1986
      %v2064 = vunpack.c.l.b16 %v1987
      %v2065 = vunpack.c.l.b16 %v1988
      %v2066 = vunpack.c.l.b16 %v1989
      %v2067 = vunpack.c.l.b16 %v1990
      %v2068 = vunpack.c.l.b16 %v1991
      %v2069 = vunpack.c.l.b16 %v1992
      %v2070 = vunpack.c.l.b16 %v1993
      %v2071 = vunpack.c.l.b16 %v1994
      %v2072 = vunpack.c.l.b16 %v1995
      %v2073 = vunpack.c.l.b16 %v1996
      %v2074 = vunpack.c.l.b16 %v1997
      %v2075 = vunpack.c.l.b16 %v1998
      %v2076 = vunpack.c.l.b16 %v1999
      %v2077 = vunpack.c.l.b16 %v2000
      %v2078 = vunpack.c.l.b16 %v2001
      %v2079 = vunpack.c.l.b16 %v2002
      %v2080 = vunpack.c.l.b16 %v2003
      %v2081 = vunpack.c.l.b16 %v2004
      %v2082 = vunpack.c.l.b16 %v2005
      %v2083 = vunpack.c.l.b16 %v2006
      %v2084 = vunpack.c.l.b16 %v2007
      %v2085 = vunpack.c.l.b16 %v2008
      %v2086 = vunpack.c.l.b16 %v2009
      %v2087 = vunpack.c.l.b16 %v2010
      %v2088 = vunpack.c.l.b16 %v2011
      %v2089 = vpack.c.b16 %v2053, %v2052
      %v2090 = vpack.c.b16 %v2055, %v2054
      %v2091 = vpack.c.b16 %v2057, %v2056
      %v2092 = vpack.c.b16 %v2059, %v2058
      %v2093 = vpack.c.b16 %v2061, %v2060
      %v2094 = vpack.c.b16 %v2063, %v2062
      %v2095 = vpack.c.b16 %v2065, %v2064
      %v2096 = vpack.c.b16 %v2067, %v2066
      %v2097 = vpack.c.b16 %v2069, %v2068
      %v2098 = vpack.c.b16 %v2071, %v2070
      %v2099 = vpack.c.b16 %v2073, %v2072
      %v2100 = vpack.c.b16 %v2075, %v2074
      %v2101 = vpack.c.b16 %v2077, %v2076
      %v2102 = vpack.c.b16 %v2079, %v2078
      %v2103 = vpack.c.b16 %v2081, %v2080
      %v2104 = vpack.c.b16 %v2083, %v2082
      %v2105 = vpack.c.b16 %v2085, %v2084
      %v2106 = vpack.c.b16 %v2087, %v2086
      %v2107 = vpack.c.b16 %v2088, %v2088
      %v2108 = vrot.slane %v2089, 2
      %v2109 = vrot.slane %v2090, 2
      %v2110 = vsel %vm1742, %v2108, %v2109
      %v2111 = vrot.slane %v2091, 2
      %v2112 = vsel %vm1742, %v2109, %v2111
      %v2113 = vrot.slane %v2092, 2
      %v2114 = vsel %vm1742, %v2111, %v2113
      %v2115 = vrot.slane %v2093, 2
      %v2116 = vsel %vm1742, %v2113, %v2115
      %v2117 = vrot.slane %v2094, 2
      %v2118 = vsel %vm1742, %v2115, %v2117
      %v2119 = vrot.slane %v2095, 2
      %v2120 = vsel %vm1742, %v2117, %v2119
      %v2121 = vrot.slane %v2096, 2
      %v2122 = vsel %vm1742, %v2119, %v2121
      %v2123 = vrot.slane %v2097, 2
      %v2124 = vsel %vm1742, %v2121, %v2123
      %v2125 = vrot.slane %v2098, 2
      %v2126 = vsel %vm1742, %v2123, %v2125
      %v2127 = vrot.slane %v2099, 2
      %v2128 = vsel %vm1742, %v2125, %v2127
      %v2129 = vrot.slane %v2100, 2
      %v2130 = vsel %vm1742, %v2127, %v2129
      %v2131 = vrot.slane %v2101, 2
      %v2132 = vsel %vm1742, %v2129, %v2131
      %v2133 = vrot.slane %v2102, 2
      %v2134 = vsel %vm1742, %v2131, %v2133
      %v2135 = vrot.slane %v2103, 2
      %v2136 = vsel %vm1742, %v2133, %v2135
      %v2137 = vrot.slane %v2104, 2
      %v2138 = vsel %vm1742, %v2135, %v2137
      %v2139 = vrot.slane %v2105, 2
      %v2140 = vsel %vm1742, %v2137, %v2139
      %v2141 = vrot.slane %v2106, 2
      %v2142 = vsel %vm1742, %v2139, %v2141
      %v2143 = vrot.slane %v2107, 2
      %v2144 = vsel %vm1742, %v2141, %v2143
      %v2147 = vunpack.c.l.b16 %v2013
      %v2148 = vunpack.c.l.b16 %v2014
      %v2149 = vpack.c.b16 %v2148, %v2147
      %v2152 = vsel %vm462, %v2110, 0
      %v2155 = vsel %vm462, %v2112, 0
      %v2158 = vsel %vm462, %v2114, 0
      %v2161 = vsel %vm462, %v2116, 0
      %v2164 = vsel %vm462, %v2118, 0
      %v2167 = vsel %vm462, %v2120, 0
      %v2170 = vsel %vm462, %v2122, 0
      %v2173 = vsel %vm462, %v2124, 0
      %v2176 = vsel %vm462, %v2126, 0
      %v2179 = vsel %vm462, %v2128, 0
      %v2182 = vsel %vm462, %v2130, 0
      %v2185 = vsel %vm462, %v2132, 0
      %v2188 = vsel %vm462, %v2134, 0
      %v2191 = vsel %vm462, %v2136, 0
      %v2194 = vsel %vm462, %v2138, 0
      %v2197 = vsel %vm462, %v2140, 0
      %v2200 = vsel %vm462, %v2142, 0
      %v2203 = vsel %vm462, %v2144, 0
      %2205 = vmatpush.bf16.msra.mxu0 0
      %2206 = vmatpush.bf16.msra.mxu0 0
      %2207 = vmatpush.bf16.msra.mxu0 0
      %2208 = vmatpush.bf16.msra.mxu0 0
      %2209 = vmatpush.bf16.msra.mxu0 0
      %2210 = vmatpush.bf16.msra.mxu0 0
      %2211 = vmatpush.bf16.msra.mxu0 0
      %2212 = vmatpush.bf16.msra.mxu0 %v2149
      %2213 = vmatmul.bf16.gmra.mxu0 %v2152
      %v2214 = vpop.f32.mrf.mxu0
      %v2215 = vadd.f32 0.0, %v2214
      %v2216 = vpop.f32.mrf.mxu0
      %v2217 = vadd.f32 0.0, %v2216
      %2218 = vmatmul.bf16.gmra.mxu0 %v2155
      %v2219 = vpop.f32.mrf.mxu0
      %v2220 = vadd.f32 0.0, %v2219
      %v2221 = vpop.f32.mrf.mxu0
      %v2222 = vadd.f32 0.0, %v2221
      %2223 = vmatmul.bf16.gmra.mxu0 %v2158
      %v2224 = vpop.f32.mrf.mxu0
      %v2225 = vadd.f32 0.0, %v2224
      %v2226 = vpop.f32.mrf.mxu0
      %v2227 = vadd.f32 0.0, %v2226
      %2228 = vmatmul.bf16.gmra.mxu0 %v2161
      %v2229 = vpop.f32.mrf.mxu0
      %v2230 = vadd.f32 0.0, %v2229
      %v2231 = vpop.f32.mrf.mxu0
      %v2232 = vadd.f32 0.0, %v2231
      %2233 = vmatmul.bf16.gmra.mxu0 %v2164
      %v2234 = vpop.f32.mrf.mxu0
      %v2235 = vadd.f32 0.0, %v2234
      %v2236 = vpop.f32.mrf.mxu0
      %v2237 = vadd.f32 0.0, %v2236
      %2238 = vmatmul.bf16.gmra.mxu0 %v2167
      %v2239 = vpop.f32.mrf.mxu0
      %v2240 = vadd.f32 0.0, %v2239
      %v2241 = vpop.f32.mrf.mxu0
      %v2242 = vadd.f32 0.0, %v2241
      %2243 = vmatmul.bf16.gmra.mxu0 %v2170
      %v2244 = vpop.f32.mrf.mxu0
      %v2245 = vadd.f32 0.0, %v2244
      %v2246 = vpop.f32.mrf.mxu0
      %v2247 = vadd.f32 0.0, %v2246
      %2248 = vmatmul.bf16.gmra.mxu0 %v2173
      %v2249 = vpop.f32.mrf.mxu0
      %v2250 = vadd.f32 0.0, %v2249
      %v2251 = vpop.f32.mrf.mxu0
      %v2252 = vadd.f32 0.0, %v2251
      %2253 = vmatmul.bf16.gmra.mxu0 %v2176
      %v2254 = vpop.f32.mrf.mxu0
      %v2255 = vadd.f32 0.0, %v2254
      %v2256 = vpop.f32.mrf.mxu0
      %v2257 = vadd.f32 0.0, %v2256
      %2258 = vmatmul.bf16.gmra.mxu0 %v2179
      %v2259 = vpop.f32.mrf.mxu0
      %v2260 = vadd.f32 0.0, %v2259
      %v2261 = vpop.f32.mrf.mxu0
      %v2262 = vadd.f32 0.0, %v2261
      %2263 = vmatmul.bf16.gmra.mxu0 %v2182
      %v2264 = vpop.f32.mrf.mxu0
      %v2265 = vadd.f32 0.0, %v2264
      %v2266 = vpop.f32.mrf.mxu0
      %v2267 = vadd.f32 0.0, %v2266
      %2268 = vmatmul.bf16.gmra.mxu0 %v2185
      %v2269 = vpop.f32.mrf.mxu0
      %v2270 = vadd.f32 0.0, %v2269
      %v2271 = vpop.f32.mrf.mxu0
      %v2272 = vadd.f32 0.0, %v2271
      %2273 = vmatmul.bf16.gmra.mxu0 %v2188
      %v2274 = vpop.f32.mrf.mxu0
      %v2275 = vadd.f32 0.0, %v2274
      %v2276 = vpop.f32.mrf.mxu0
      %v2277 = vadd.f32 0.0, %v2276
      %2278 = vmatmul.bf16.gmra.mxu0 %v2191
      %v2279 = vpop.f32.mrf.mxu0
      %v2280 = vadd.f32 0.0, %v2279
      %v2281 = vpop.f32.mrf.mxu0
      %v2282 = vadd.f32 0.0, %v2281
      %2283 = vmatmul.bf16.gmra.mxu0 %v2194
      %v2284 = vpop.f32.mrf.mxu0
      %v2285 = vadd.f32 0.0, %v2284
      %v2286 = vpop.f32.mrf.mxu0
      %v2287 = vadd.f32 0.0, %v2286
      %2288 = vmatmul.bf16.gmra.mxu0 %v2197
      %v2289 = vpop.f32.mrf.mxu0
      %v2290 = vadd.f32 0.0, %v2289
      %v2291 = vpop.f32.mrf.mxu0
      %v2292 = vadd.f32 0.0, %v2291
      %2293 = vmatmul.bf16.gmra.mxu0 %v2200
      %v2294 = vpop.f32.mrf.mxu0
      %v2295 = vadd.f32 0.0, %v2294
      %v2296 = vpop.f32.mrf.mxu0
      %v2297 = vadd.f32 0.0, %v2296
      %2298 = vmatmul.bf16.gmra.mxu0 %v2203
      %v2299 = vpop.f32.mrf.mxu0
      %v2300 = vadd.f32 0.0, %v2299
      %v2301 = vpop.f32.mrf.mxu0
      %v2302 = vadd.f32 0.0, %v2301
      %2303 = vdwg.mxu0
      %v2304 = vadd.f32 %v1939, %v2215
      %v2305 = vadd.f32 %v1940, %v2217
      %v2306 = vadd.f32 %v1941, %v2220
      %v2307 = vadd.f32 %v1942, %v2222
      %v2308 = vadd.f32 %v1943, %v2225
      %v2309 = vadd.f32 %v1944, %v2227
      %v2310 = vadd.f32 %v1945, %v2230
      %v2311 = vadd.f32 %v1946, %v2232
      %v2312 = vadd.f32 %v1947, %v2235
      %v2313 = vadd.f32 %v1948, %v2237
      %v2314 = vadd.f32 %v1949, %v2240
      %v2315 = vadd.f32 %v1950, %v2242
      %v2316 = vadd.f32 %v1951, %v2245
      %v2317 = vadd.f32 %v1952, %v2247
      %v2318 = vadd.f32 %v1953, %v2250
      %v2319 = vadd.f32 %v1954, %v2252
      %v2320 = vadd.f32 %v1955, %v2255
      %v2321 = vadd.f32 %v1956, %v2257
      %v2322 = vadd.f32 %v1957, %v2260
      %v2323 = vadd.f32 %v1958, %v2262
      %v2324 = vadd.f32 %v1959, %v2265
      %v2325 = vadd.f32 %v1960, %v2267
      %v2326 = vadd.f32 %v1961, %v2270
      %v2327 = vadd.f32 %v1962, %v2272
      %v2328 = vadd.f32 %v1963, %v2275
      %v2329 = vadd.f32 %v1964, %v2277
      %v2330 = vadd.f32 %v1965, %v2280
      %v2331 = vadd.f32 %v1966, %v2282
      %v2332 = vadd.f32 %v1967, %v2285
      %v2333 = vadd.f32 %v1968, %v2287
      %v2334 = vadd.f32 %v1969, %v2290
      %v2335 = vadd.f32 %v1970, %v2292
      %v2336 = vadd.f32 %v1971, %v2295
      %v2337 = vadd.f32 %v1972, %v2297
      %v2338 = vadd.f32 %v1973, %v2300
      %v2339 = vadd.f32 %v1974, %v2302
      %v2340 = vld [vmem:[%s165 + $0xa0] sm:$0x7]
      %s2341 = scalar_lea.vmem %s1, 56
      %v2342 = vld [vmem:[%s2341] sm:$0xf]
      %v2343 = vld [vmem:[%s2341 + $0x4] sm:$0xf]
      %v2345 = vunpack.c.l.b16 %v2340
      %v2346 = vpack.c.b16 %v2345, %v2345
      %vm2347 = vsmask.f32 5376
      %v2349 = vshrl.u32 %v2089, 16
      %v2351 = vrot.slane %v2349, 2
      %v2352 = vshll.u32 %v2089, 16
      %v2354 = vrot.slane %v2352, 3
      %v2355 = vor.u32 %v2351, %v2354
      %v2357 = vshrl.u32 %v2090, 16
      %v2359 = vrot.slane %v2357, 2
      %v2360 = vshll.u32 %v2090, 16
      %v2362 = vrot.slane %v2360, 3
      %v2363 = vor.u32 %v2359, %v2362
      %v2364 = vsel %vm2347, %v2355, %v2363
      %v2366 = vshrl.u32 %v2091, 16
      %v2368 = vrot.slane %v2366, 2
      %v2369 = vshll.u32 %v2091, 16
      %v2371 = vrot.slane %v2369, 3
      %v2372 = vor.u32 %v2368, %v2371
      %v2373 = vsel %vm2347, %v2363, %v2372
      %v2375 = vshrl.u32 %v2092, 16
      %v2377 = vrot.slane %v2375, 2
      %v2378 = vshll.u32 %v2092, 16
      %v2380 = vrot.slane %v2378, 3
      %v2381 = vor.u32 %v2377, %v2380
      %v2382 = vsel %vm2347, %v2372, %v2381
      %v2384 = vshrl.u32 %v2093, 16
      %v2386 = vrot.slane %v2384, 2
      %v2387 = vshll.u32 %v2093, 16
      %v2389 = vrot.slane %v2387, 3
      %v2390 = vor.u32 %v2386, %v2389
      %v2391 = vsel %vm2347, %v2381, %v2390
      %v2393 = vshrl.u32 %v2094, 16
      %v2395 = vrot.slane %v2393, 2
      %v2396 = vshll.u32 %v2094, 16
      %v2398 = vrot.slane %v2396, 3
      %v2399 = vor.u32 %v2395, %v2398
      %v2400 = vsel %vm2347, %v2390, %v2399
      %v2402 = vshrl.u32 %v2095, 16
      %v2404 = vrot.slane %v2402, 2
      %v2405 = vshll.u32 %v2095, 16
      %v2407 = vrot.slane %v2405, 3
      %v2408 = vor.u32 %v2404, %v2407
      %v2409 = vsel %vm2347, %v2399, %v2408
      %v2411 = vshrl.u32 %v2096, 16
      %v2413 = vrot.slane %v2411, 2
      %v2414 = vshll.u32 %v2096, 16
      %v2416 = vrot.slane %v2414, 3
      %v2417 = vor.u32 %v2413, %v2416
      %v2418 = vsel %vm2347, %v2408, %v2417
      %v2420 = vshrl.u32 %v2097, 16
      %v2422 = vrot.slane %v2420, 2
      %v2423 = vshll.u32 %v2097, 16
      %v2425 = vrot.slane %v2423, 3
      %v2426 = vor.u32 %v2422, %v2425
      %v2427 = vsel %vm2347, %v2417, %v2426
      %v2429 = vshrl.u32 %v2098, 16
      %v2431 = vrot.slane %v2429, 2
      %v2432 = vshll.u32 %v2098, 16
      %v2434 = vrot.slane %v2432, 3
      %v2435 = vor.u32 %v2431, %v2434
      %v2436 = vsel %vm2347, %v2426, %v2435
      %v2438 = vshrl.u32 %v2099, 16
      %v2440 = vrot.slane %v2438, 2
      %v2441 = vshll.u32 %v2099, 16
      %v2443 = vrot.slane %v2441, 3
      %v2444 = vor.u32 %v2440, %v2443
      %v2445 = vsel %vm2347, %v2435, %v2444
      %v2447 = vshrl.u32 %v2100, 16
      %v2449 = vrot.slane %v2447, 2
      %v2450 = vshll.u32 %v2100, 16
      %v2452 = vrot.slane %v2450, 3
      %v2453 = vor.u32 %v2449, %v2452
      %v2454 = vsel %vm2347, %v2444, %v2453
      %v2456 = vshrl.u32 %v2101, 16
      %v2458 = vrot.slane %v2456, 2
      %v2459 = vshll.u32 %v2101, 16
      %v2461 = vrot.slane %v2459, 3
      %v2462 = vor.u32 %v2458, %v2461
      %v2463 = vsel %vm2347, %v2453, %v2462
      %v2465 = vshrl.u32 %v2102, 16
      %v2467 = vrot.slane %v2465, 2
      %v2468 = vshll.u32 %v2102, 16
      %v2470 = vrot.slane %v2468, 3
      %v2471 = vor.u32 %v2467, %v2470
      %v2472 = vsel %vm2347, %v2462, %v2471
      %v2474 = vshrl.u32 %v2103, 16
      %v2476 = vrot.slane %v2474, 2
      %v2477 = vshll.u32 %v2103, 16
      %v2479 = vrot.slane %v2477, 3
      %v2480 = vor.u32 %v2476, %v2479
      %v2481 = vsel %vm2347, %v2471, %v2480
      %v2483 = vshrl.u32 %v2104, 16
      %v2485 = vrot.slane %v2483, 2
      %v2486 = vshll.u32 %v2104, 16
      %v2488 = vrot.slane %v2486, 3
      %v2489 = vor.u32 %v2485, %v2488
      %v2490 = vsel %vm2347, %v2480, %v2489
      %v2492 = vshrl.u32 %v2105, 16
      %v2494 = vrot.slane %v2492, 2
      %v2495 = vshll.u32 %v2105, 16
      %v2497 = vrot.slane %v2495, 3
      %v2498 = vor.u32 %v2494, %v2497
      %v2499 = vsel %vm2347, %v2489, %v2498
      %v2501 = vshrl.u32 %v2106, 16
      %v2503 = vrot.slane %v2501, 2
      %v2504 = vshll.u32 %v2106, 16
      %v2506 = vrot.slane %v2504, 3
      %v2507 = vor.u32 %v2503, %v2506
      %v2508 = vsel %vm2347, %v2498, %v2507
      %v2510 = vshrl.u32 %v2346, 16
      %v2512 = vrot.slane %v2510, 2
      %v2513 = vshll.u32 %v2346, 16
      %v2515 = vrot.slane %v2513, 3
      %v2516 = vor.u32 %v2512, %v2515
      %v2517 = vsel %vm2347, %v2507, %v2516
      %v2520 = vunpack.c.l.b16 %v2342
      %v2521 = vunpack.c.l.b16 %v2343
      %v2522 = vpack.c.b16 %v2521, %v2520
      %v2525 = vsel %vm462, %v2364, 0
      %v2528 = vsel %vm462, %v2373, 0
      %v2531 = vsel %vm462, %v2382, 0
      %v2534 = vsel %vm462, %v2391, 0
      %v2537 = vsel %vm462, %v2400, 0
      %v2540 = vsel %vm462, %v2409, 0
      %v2543 = vsel %vm462, %v2418, 0
      %v2546 = vsel %vm462, %v2427, 0
      %v2549 = vsel %vm462, %v2436, 0
      %v2552 = vsel %vm462, %v2445, 0
      %v2555 = vsel %vm462, %v2454, 0
      %v2558 = vsel %vm462, %v2463, 0
      %v2561 = vsel %vm462, %v2472, 0
      %v2564 = vsel %vm462, %v2481, 0
      %v2567 = vsel %vm462, %v2490, 0
      %v2570 = vsel %vm462, %v2499, 0
      %v2573 = vsel %vm462, %v2508, 0
      %v2576 = vsel %vm462, %v2517, 0
      %2578 = vmatpush.bf16.msra.mxu0 0
      %2579 = vmatpush.bf16.msra.mxu0 0
      %2580 = vmatpush.bf16.msra.mxu0 0
      %2581 = vmatpush.bf16.msra.mxu0 0
      %2582 = vmatpush.bf16.msra.mxu0 0
      %2583 = vmatpush.bf16.msra.mxu0 0
      %2584 = vmatpush.bf16.msra.mxu0 0
      %2585 = vmatpush.bf16.msra.mxu0 %v2522
      %2586 = vmatmul.bf16.gmra.mxu0 %v2525
      %v2587 = vpop.f32.mrf.mxu0
      %v2588 = vadd.f32 0.0, %v2587
      %v2589 = vpop.f32.mrf.mxu0
      %v2590 = vadd.f32 0.0, %v2589
      %2591 = vmatmul.bf16.gmra.mxu0 %v2528
      %v2592 = vpop.f32.mrf.mxu0
      %v2593 = vadd.f32 0.0, %v2592
      %v2594 = vpop.f32.mrf.mxu0
      %v2595 = vadd.f32 0.0, %v2594
      %2596 = vmatmul.bf16.gmra.mxu0 %v2531
      %v2597 = vpop.f32.mrf.mxu0
      %v2598 = vadd.f32 0.0, %v2597
      %v2599 = vpop.f32.mrf.mxu0
      %v2600 = vadd.f32 0.0, %v2599
      %2601 = vmatmul.bf16.gmra.mxu0 %v2534
      %v2602 = vpop.f32.mrf.mxu0
      %v2603 = vadd.f32 0.0, %v2602
      %v2604 = vpop.f32.mrf.mxu0
      %v2605 = vadd.f32 0.0, %v2604
      %2606 = vmatmul.bf16.gmra.mxu0 %v2537
      %v2607 = vpop.f32.mrf.mxu0
      %v2608 = vadd.f32 0.0, %v2607
      %v2609 = vpop.f32.mrf.mxu0
      %v2610 = vadd.f32 0.0, %v2609
      %2611 = vmatmul.bf16.gmra.mxu0 %v2540
      %v2612 = vpop.f32.mrf.mxu0
      %v2613 = vadd.f32 0.0, %v2612
      %v2614 = vpop.f32.mrf.mxu0
      %v2615 = vadd.f32 0.0, %v2614
      %2616 = vmatmul.bf16.gmra.mxu0 %v2543
      %v2617 = vpop.f32.mrf.mxu0
      %v2618 = vadd.f32 0.0, %v2617
      %v2619 = vpop.f32.mrf.mxu0
      %v2620 = vadd.f32 0.0, %v2619
      %2621 = vmatmul.bf16.gmra.mxu0 %v2546
      %v2622 = vpop.f32.mrf.mxu0
      %v2623 = vadd.f32 0.0, %v2622
      %v2624 = vpop.f32.mrf.mxu0
      %v2625 = vadd.f32 0.0, %v2624
      %2626 = vmatmul.bf16.gmra.mxu0 %v2549
      %v2627 = vpop.f32.mrf.mxu0
      %v2628 = vadd.f32 0.0, %v2627
      %v2629 = vpop.f32.mrf.mxu0
      %v2630 = vadd.f32 0.0, %v2629
      %2631 = vmatmul.bf16.gmra.mxu0 %v2552
      %v2632 = vpop.f32.mrf.mxu0
      %v2633 = vadd.f32 0.0, %v2632
      %v2634 = vpop.f32.mrf.mxu0
      %v2635 = vadd.f32 0.0, %v2634
      %2636 = vmatmul.bf16.gmra.mxu0 %v2555
      %v2637 = vpop.f32.mrf.mxu0
      %v2638 = vadd.f32 0.0, %v2637
      %v2639 = vpop.f32.mrf.mxu0
      %v2640 = vadd.f32 0.0, %v2639
      %2641 = vmatmul.bf16.gmra.mxu0 %v2558
      %v2642 = vpop.f32.mrf.mxu0
      %v2643 = vadd.f32 0.0, %v2642
      %v2644 = vpop.f32.mrf.mxu0
      %v2645 = vadd.f32 0.0, %v2644
      %2646 = vmatmul.bf16.gmra.mxu0 %v2561
      %v2647 = vpop.f32.mrf.mxu0
      %v2648 = vadd.f32 0.0, %v2647
      %v2649 = vpop.f32.mrf.mxu0
      %v2650 = vadd.f32 0.0, %v2649
      %2651 = vmatmul.bf16.gmra.mxu0 %v2564
      %v2652 = vpop.f32.mrf.mxu0
      %v2653 = vadd.f32 0.0, %v2652
      %v2654 = vpop.f32.mrf.mxu0
      %v2655 = vadd.f32 0.0, %v2654
      %2656 = vmatmul.bf16.gmra.mxu0 %v2567
      %v2657 = vpop.f32.mrf.mxu0
      %v2658 = vadd.f32 0.0, %v2657
      %v2659 = vpop.f32.mrf.mxu0
      %v2660 = vadd.f32 0.0, %v2659
      %2661 = vmatmul.bf16.gmra.mxu0 %v2570
      %v2662 = vpop.f32.mrf.mxu0
      %v2663 = vadd.f32 0.0, %v2662
      %v2664 = vpop.f32.mrf.mxu0
      %v2665 = vadd.f32 0.0, %v2664
      %2666 = vmatmul.bf16.gmra.mxu0 %v2573
      %v2667 = vpop.f32.mrf.mxu0
      %v2668 = vadd.f32 0.0, %v2667
      %v2669 = vpop.f32.mrf.mxu0
      %v2670 = vadd.f32 0.0, %v2669
      %2671 = vmatmul.bf16.gmra.mxu0 %v2576
      %v2672 = vpop.f32.mrf.mxu0
      %v2673 = vadd.f32 0.0, %v2672
      %v2674 = vpop.f32.mrf.mxu0
      %v2675 = vadd.f32 0.0, %v2674
      %2676 = vdwg.mxu0
      %v2677 = vadd.f32 %v2304, %v2588
      %v2678 = vadd.f32 %v2305, %v2590
      %v2679 = vadd.f32 %v2306, %v2593
      %v2680 = vadd.f32 %v2307, %v2595
      %v2681 = vadd.f32 %v2308, %v2598
      %v2682 = vadd.f32 %v2309, %v2600
      %v2683 = vadd.f32 %v2310, %v2603
      %v2684 = vadd.f32 %v2311, %v2605
      %v2685 = vadd.f32 %v2312, %v2608
      %v2686 = vadd.f32 %v2313, %v2610
      %v2687 = vadd.f32 %v2314, %v2613
      %v2688 = vadd.f32 %v2315, %v2615
      %v2689 = vadd.f32 %v2316, %v2618
      %v2690 = vadd.f32 %v2317, %v2620
      %v2691 = vadd.f32 %v2318, %v2623
      %v2692 = vadd.f32 %v2319, %v2625
      %v2693 = vadd.f32 %v2320, %v2628
      %v2694 = vadd.f32 %v2321, %v2630
      %v2695 = vadd.f32 %v2322, %v2633
      %v2696 = vadd.f32 %v2323, %v2635
      %v2697 = vadd.f32 %v2324, %v2638
      %v2698 = vadd.f32 %v2325, %v2640
      %v2699 = vadd.f32 %v2326, %v2643
      %v2700 = vadd.f32 %v2327, %v2645
      %v2701 = vadd.f32 %v2328, %v2648
      %v2702 = vadd.f32 %v2329, %v2650
      %v2703 = vadd.f32 %v2330, %v2653
      %v2704 = vadd.f32 %v2331, %v2655
      %v2705 = vadd.f32 %v2332, %v2658
      %v2706 = vadd.f32 %v2333, %v2660
      %v2707 = vadd.f32 %v2334, %v2663
      %v2708 = vadd.f32 %v2335, %v2665
      %v2709 = vadd.f32 %v2336, %v2668
      %v2710 = vadd.f32 %v2337, %v2670
      %v2711 = vadd.f32 %v2338, %v2673
      %v2712 = vadd.f32 %v2339, %v2675
      %v2713 = vld [vmem:[%s165 + $0x10] sm:$0x8]
      %s2714 = scalar_lea.vmem %s1, 64
      %v2715 = vld [vmem:[%s2714] sm:$0xf]
      %v2716 = vld [vmem:[%s2714 + $0x4] sm:$0xf]
      %v2718 = vunpack.c.l.b16 %v2713
      %v2719 = vpack.c.b16 %v2053, %v2718
      %vm2720 = vcmask 1044480
      %v2721 = vrot.slane %v2719, 3
      %v2722 = vrot.slane %v2090, 3
      %v2723 = vsel %vm2720, %v2721, %v2722
      %v2724 = vrot.slane %v2091, 3
      %v2725 = vsel %vm2720, %v2722, %v2724
      %v2726 = vrot.slane %v2092, 3
      %v2727 = vsel %vm2720, %v2724, %v2726
      %v2728 = vrot.slane %v2093, 3
      %v2729 = vsel %vm2720, %v2726, %v2728
      %v2730 = vrot.slane %v2094, 3
      %v2731 = vsel %vm2720, %v2728, %v2730
      %v2732 = vrot.slane %v2095, 3
      %v2733 = vsel %vm2720, %v2730, %v2732
      %v2734 = vrot.slane %v2096, 3
      %v2735 = vsel %vm2720, %v2732, %v2734
      %v2736 = vrot.slane %v2097, 3
      %v2737 = vsel %vm2720, %v2734, %v2736
      %v2738 = vrot.slane %v2098, 3
      %v2739 = vsel %vm2720, %v2736, %v2738
      %v2740 = vrot.slane %v2099, 3
      %v2741 = vsel %vm2720, %v2738, %v2740
      %v2742 = vrot.slane %v2100, 3
      %v2743 = vsel %vm2720, %v2740, %v2742
      %v2744 = vrot.slane %v2101, 3
      %v2745 = vsel %vm2720, %v2742, %v2744
      %v2746 = vrot.slane %v2102, 3
      %v2747 = vsel %vm2720, %v2744, %v2746
      %v2748 = vrot.slane %v2103, 3
      %v2749 = vsel %vm2720, %v2746, %v2748
      %v2750 = vrot.slane %v2104, 3
      %v2751 = vsel %vm2720, %v2748, %v2750
      %v2752 = vrot.slane %v2105, 3
      %v2753 = vsel %vm2720, %v2750, %v2752
      %v2754 = vrot.slane %v2106, 3
      %v2755 = vsel %vm2720, %v2752, %v2754
      %v2756 = vrot.slane %v2346, 3
      %v2757 = vsel %vm2720, %v2754, %v2756
      %v2760 = vunpack.c.l.b16 %v2715
      %v2761 = vunpack.c.l.b16 %v2716
      %v2762 = vpack.c.b16 %v2761, %v2760
      %v2765 = vsel %vm462, %v2723, 0
      %v2768 = vsel %vm462, %v2725, 0
      %v2771 = vsel %vm462, %v2727, 0
      %v2774 = vsel %vm462, %v2729, 0
      %v2777 = vsel %vm462, %v2731, 0
      %v2780 = vsel %vm462, %v2733, 0
      %v2783 = vsel %vm462, %v2735, 0
      %v2786 = vsel %vm462, %v2737, 0
      %v2789 = vsel %vm462, %v2739, 0
      %v2792 = vsel %vm462, %v2741, 0
      %v2795 = vsel %vm462, %v2743, 0
      %v2798 = vsel %vm462, %v2745, 0
      %v2801 = vsel %vm462, %v2747, 0
      %v2804 = vsel %vm462, %v2749, 0
      %v2807 = vsel %vm462, %v2751, 0
      %v2810 = vsel %vm462, %v2753, 0
      %v2813 = vsel %vm462, %v2755, 0
      %v2816 = vsel %vm462, %v2757, 0
      %2818 = vmatpush.bf16.msra.mxu0 0
      %2819 = vmatpush.bf16.msra.mxu0 0
      %2820 = vmatpush.bf16.msra.mxu0 0
      %2821 = vmatpush.bf16.msra.mxu0 0
      %2822 = vmatpush.bf16.msra.mxu0 0
      %2823 = vmatpush.bf16.msra.mxu0 0
      %2824 = vmatpush.bf16.msra.mxu0 0
      %2825 = vmatpush.bf16.msra.mxu0 %v2762
      %2826 = vmatmul.bf16.gmra.mxu0 %v2765
      %v2827 = vpop.f32.mrf.mxu0
      %v2828 = vadd.f32 0.0, %v2827
      %v2829 = vpop.f32.mrf.mxu0
      %v2830 = vadd.f32 0.0, %v2829
      %2831 = vmatmul.bf16.gmra.mxu0 %v2768
      %v2832 = vpop.f32.mrf.mxu0
      %v2833 = vadd.f32 0.0, %v2832
      %v2834 = vpop.f32.mrf.mxu0
      %v2835 = vadd.f32 0.0, %v2834
      %2836 = vmatmul.bf16.gmra.mxu0 %v2771
      %v2837 = vpop.f32.mrf.mxu0
      %v2838 = vadd.f32 0.0, %v2837
      %v2839 = vpop.f32.mrf.mxu0
      %v2840 = vadd.f32 0.0, %v2839
      %2841 = vmatmul.bf16.gmra.mxu0 %v2774
      %v2842 = vpop.f32.mrf.mxu0
      %v2843 = vadd.f32 0.0, %v2842
      %v2844 = vpop.f32.mrf.mxu0
      %v2845 = vadd.f32 0.0, %v2844
      %2846 = vmatmul.bf16.gmra.mxu0 %v2777
      %v2847 = vpop.f32.mrf.mxu0
      %v2848 = vadd.f32 0.0, %v2847
      %v2849 = vpop.f32.mrf.mxu0
      %v2850 = vadd.f32 0.0, %v2849
      %2851 = vmatmul.bf16.gmra.mxu0 %v2780
      %v2852 = vpop.f32.mrf.mxu0
      %v2853 = vadd.f32 0.0, %v2852
      %v2854 = vpop.f32.mrf.mxu0
      %v2855 = vadd.f32 0.0, %v2854
      %2856 = vmatmul.bf16.gmra.mxu0 %v2783
      %v2857 = vpop.f32.mrf.mxu0
      %v2858 = vadd.f32 0.0, %v2857
      %v2859 = vpop.f32.mrf.mxu0
      %v2860 = vadd.f32 0.0, %v2859
      %2861 = vmatmul.bf16.gmra.mxu0 %v2786
      %v2862 = vpop.f32.mrf.mxu0
      %v2863 = vadd.f32 0.0, %v2862
      %v2864 = vpop.f32.mrf.mxu0
      %v2865 = vadd.f32 0.0, %v2864
      %2866 = vmatmul.bf16.gmra.mxu0 %v2789
      %v2867 = vpop.f32.mrf.mxu0
      %v2868 = vadd.f32 0.0, %v2867
      %v2869 = vpop.f32.mrf.mxu0
      %v2870 = vadd.f32 0.0, %v2869
      %2871 = vmatmul.bf16.gmra.mxu0 %v2792
      %v2872 = vpop.f32.mrf.mxu0
      %v2873 = vadd.f32 0.0, %v2872
      %v2874 = vpop.f32.mrf.mxu0
      %v2875 = vadd.f32 0.0, %v2874
      %2876 = vmatmul.bf16.gmra.mxu0 %v2795
      %v2877 = vpop.f32.mrf.mxu0
      %v2878 = vadd.f32 0.0, %v2877
      %v2879 = vpop.f32.mrf.mxu0
      %v2880 = vadd.f32 0.0, %v2879
      %2881 = vmatmul.bf16.gmra.mxu0 %v2798
      %v2882 = vpop.f32.mrf.mxu0
      %v2883 = vadd.f32 0.0, %v2882
      %v2884 = vpop.f32.mrf.mxu0
      %v2885 = vadd.f32 0.0, %v2884
      %2886 = vmatmul.bf16.gmra.mxu0 %v2801
      %v2887 = vpop.f32.mrf.mxu0
      %v2888 = vadd.f32 0.0, %v2887
      %v2889 = vpop.f32.mrf.mxu0
      %v2890 = vadd.f32 0.0, %v2889
      %2891 = vmatmul.bf16.gmra.mxu0 %v2804
      %v2892 = vpop.f32.mrf.mxu0
      %v2893 = vadd.f32 0.0, %v2892
      %v2894 = vpop.f32.mrf.mxu0
      %v2895 = vadd.f32 0.0, %v2894
      %2896 = vmatmul.bf16.gmra.mxu0 %v2807
      %v2897 = vpop.f32.mrf.mxu0
      %v2898 = vadd.f32 0.0, %v2897
      %v2899 = vpop.f32.mrf.mxu0
      %v2900 = vadd.f32 0.0, %v2899
      %2901 = vmatmul.bf16.gmra.mxu0 %v2810
      %v2902 = vpop.f32.mrf.mxu0
      %v2903 = vadd.f32 0.0, %v2902
      %v2904 = vpop.f32.mrf.mxu0
      %v2905 = vadd.f32 0.0, %v2904
      %2906 = vmatmul.bf16.gmra.mxu0 %v2813
      %v2907 = vpop.f32.mrf.mxu0
      %v2908 = vadd.f32 0.0, %v2907
      %v2909 = vpop.f32.mrf.mxu0
      %v2910 = vadd.f32 0.0, %v2909
      %2911 = vmatmul.bf16.gmra.mxu0 %v2816
      %v2912 = vpop.f32.mrf.mxu0
      %v2913 = vadd.f32 0.0, %v2912
      %v2914 = vpop.f32.mrf.mxu0
      %v2915 = vadd.f32 0.0, %v2914
      %2916 = vdwg.mxu0
      %v2917 = vadd.f32 %v2677, %v2828
      %v2918 = vadd.f32 %v2678, %v2830
      %v2919 = vadd.f32 %v2679, %v2833
      %v2920 = vadd.f32 %v2680, %v2835
      %v2921 = vadd.f32 %v2681, %v2838
      %v2922 = vadd.f32 %v2682, %v2840
      %v2923 = vadd.f32 %v2683, %v2843
      %v2924 = vadd.f32 %v2684, %v2845
      %v2925 = vadd.f32 %v2685, %v2848
      %v2926 = vadd.f32 %v2686, %v2850
      %v2927 = vadd.f32 %v2687, %v2853
      %v2928 = vadd.f32 %v2688, %v2855
      %v2929 = vadd.f32 %v2689, %v2858
      %v2930 = vadd.f32 %v2690, %v2860
      %v2931 = vadd.f32 %v2691, %v2863
      %v2932 = vadd.f32 %v2692, %v2865
      %v2933 = vadd.f32 %v2693, %v2868
      %v2934 = vadd.f32 %v2694, %v2870
      %v2935 = vadd.f32 %v2695, %v2873
      %v2936 = vadd.f32 %v2696, %v2875
      %v2937 = vadd.f32 %v2697, %v2878
      %v2938 = vadd.f32 %v2698, %v2880
      %v2939 = vadd.f32 %v2699, %v2883
      %v2940 = vadd.f32 %v2700, %v2885
      %v2941 = vadd.f32 %v2701, %v2888
      %v2942 = vadd.f32 %v2702, %v2890
      %v2943 = vadd.f32 %v2703, %v2893
      %v2944 = vadd.f32 %v2704, %v2895
      %v2945 = vadd.f32 %v2705, %v2898
      %v2946 = vadd.f32 %v2706, %v2900
      %v2947 = vadd.f32 %v2707, %v2903
      %v2948 = vadd.f32 %v2708, %v2905
      %v2949 = vadd.f32 %v2709, %v2908
      %v2950 = vadd.f32 %v2710, %v2910
      %v2951 = vadd.f32 %v2711, %v2913
      %v2952 = vadd.f32 %v2712, %v2915
      %v2953 = vld [vmem:[%s2] sm:$0x1]
      %v2955 = vperm.slane %v2953, 0
      %v2957 = vadd.f32 %v2917, %v2955
      %v2958 = vadd.f32 %v2918, %v2955
      %v2959 = vadd.f32 %v2919, %v2955
      %v2960 = vadd.f32 %v2920, %v2955
      %v2961 = vadd.f32 %v2921, %v2955
      %v2962 = vadd.f32 %v2922, %v2955
      %v2963 = vadd.f32 %v2923, %v2955
      %v2964 = vadd.f32 %v2924, %v2955
      %v2965 = vadd.f32 %v2925, %v2955
      %v2966 = vadd.f32 %v2926, %v2955
      %v2967 = vadd.f32 %v2927, %v2955
      %v2968 = vadd.f32 %v2928, %v2955
      %v2969 = vadd.f32 %v2929, %v2955
      %v2970 = vadd.f32 %v2930, %v2955
      %v2971 = vadd.f32 %v2931, %v2955
      %v2972 = vadd.f32 %v2932, %v2955
      %v2973 = vadd.f32 %v2933, %v2955
      %v2974 = vadd.f32 %v2934, %v2955
      %v2975 = vadd.f32 %v2935, %v2955
      %v2976 = vadd.f32 %v2936, %v2955
      %v2977 = vadd.f32 %v2937, %v2955
      %v2978 = vadd.f32 %v2938, %v2955
      %v2979 = vadd.f32 %v2939, %v2955
      %v2980 = vadd.f32 %v2940, %v2955
      %v2981 = vadd.f32 %v2941, %v2955
      %v2982 = vadd.f32 %v2942, %v2955
      %v2983 = vadd.f32 %v2943, %v2955
      %v2984 = vadd.f32 %v2944, %v2955
      %v2985 = vadd.f32 %v2945, %v2955
      %v2986 = vadd.f32 %v2946, %v2955
      %v2987 = vadd.f32 %v2947, %v2955
      %v2988 = vadd.f32 %v2948, %v2955
      %v2989 = vadd.f32 %v2949, %v2955
      %v2990 = vadd.f32 %v2950, %v2955
      %v2991 = vadd.f32 %v2951, %v2955
      %v2992 = vadd.f32 %v2952, %v2955
      %v2993 = vmax.f32 %v2957, 0.0
      %v2994 = vmax.f32 %v2958, 0.0
      %v2995 = vmax.f32 %v2959, 0.0
      %v2996 = vmax.f32 %v2960, 0.0
      %v2997 = vmax.f32 %v2961, 0.0
      %v2998 = vmax.f32 %v2962, 0.0
      %v2999 = vmax.f32 %v2963, 0.0
      %v3000 = vmax.f32 %v2964, 0.0
      %v3001 = vmax.f32 %v2965, 0.0
      %v3002 = vmax.f32 %v2966, 0.0
      %v3003 = vmax.f32 %v2967, 0.0
      %v3004 = vmax.f32 %v2968, 0.0
      %v3005 = vmax.f32 %v2969, 0.0
      %v3006 = vmax.f32 %v2970, 0.0
      %v3007 = vmax.f32 %v2971, 0.0
      %v3008 = vmax.f32 %v2972, 0.0
      %v3009 = vmax.f32 %v2973, 0.0
      %v3010 = vmax.f32 %v2974, 0.0
      %v3011 = vmax.f32 %v2975, 0.0
      %v3012 = vmax.f32 %v2976, 0.0
      %v3013 = vmax.f32 %v2977, 0.0
      %v3014 = vmax.f32 %v2978, 0.0
      %v3015 = vmax.f32 %v2979, 0.0
      %v3016 = vmax.f32 %v2980, 0.0
      %v3017 = vmax.f32 %v2981, 0.0
      %v3018 = vmax.f32 %v2982, 0.0
      %v3019 = vmax.f32 %v2983, 0.0
      %v3020 = vmax.f32 %v2984, 0.0
      %v3021 = vmax.f32 %v2985, 0.0
      %v3022 = vmax.f32 %v2986, 0.0
      %v3023 = vmax.f32 %v2987, 0.0
      %v3024 = vmax.f32 %v2988, 0.0
      %v3025 = vmax.f32 %v2989, 0.0
      %v3026 = vmax.f32 %v2990, 0.0
      %v3027 = vmax.f32 %v2991, 0.0
      %v3028 = vmax.f32 %v2992, 0.0
      %v3029 = vpack.c.bf16 %v2993, %v2993
      %v3030 = vpack.c.bf16 %v2994, %v2994
      %v3031 = vpack.c.bf16 %v2995, %v2995
      %v3032 = vpack.c.bf16 %v2996, %v2996
      %v3033 = vpack.c.bf16 %v2997, %v2997
      %v3034 = vpack.c.bf16 %v2998, %v2998
      %v3035 = vpack.c.bf16 %v2999, %v2999
      %v3036 = vpack.c.bf16 %v3000, %v3000
      %v3037 = vpack.c.bf16 %v3001, %v3001
      %v3038 = vpack.c.bf16 %v3002, %v3002
      %v3039 = vpack.c.bf16 %v3003, %v3003
      %v3040 = vpack.c.bf16 %v3004, %v3004
      %v3041 = vpack.c.bf16 %v3005, %v3005
      %v3042 = vpack.c.bf16 %v3006, %v3006
      %v3043 = vpack.c.bf16 %v3007, %v3007
      %v3044 = vpack.c.bf16 %v3008, %v3008
      %v3045 = vpack.c.bf16 %v3009, %v3009
      %v3046 = vpack.c.bf16 %v3010, %v3010
      %v3047 = vpack.c.bf16 %v3011, %v3011
      %v3048 = vpack.c.bf16 %v3012, %v3012
      %v3049 = vpack.c.bf16 %v3013, %v3013
      %v3050 = vpack.c.bf16 %v3014, %v3014
      %v3051 = vpack.c.bf16 %v3015, %v3015
      %v3052 = vpack.c.bf16 %v3016, %v3016
      %v3053 = vpack.c.bf16 %v3017, %v3017
      %v3054 = vpack.c.bf16 %v3018, %v3018
      %v3055 = vpack.c.bf16 %v3019, %v3019
      %v3056 = vpack.c.bf16 %v3020, %v3020
      %v3057 = vpack.c.bf16 %v3021, %v3021
      %v3058 = vpack.c.bf16 %v3022, %v3022
      %v3059 = vpack.c.bf16 %v3023, %v3023
      %v3060 = vpack.c.bf16 %v3024, %v3024
      %v3061 = vpack.c.bf16 %v3025, %v3025
      %v3062 = vpack.c.bf16 %v3026, %v3026
      %v3063 = vpack.c.bf16 %v3027, %v3027
      %v3064 = vpack.c.bf16 %v3028, %v3028
      %vm3065 = vcmask 125952
      %3066 = vst.msk [vmem:[%s170] sm:$0xf] %vm3065, %v3029
      %3067 = vst.msk [vmem:[%s170 + $0x4] sm:$0xf] %vm3065, %v3030
      %3068 = vst.msk [vmem:[%s170 + $0x8] sm:$0xf] %vm3065, %v3031
      %3069 = vst.msk [vmem:[%s170 + $0xc] sm:$0xf] %vm3065, %v3032
      %3070 = vst.msk [vmem:[%s170 + $0x10] sm:$0xf] %vm3065, %v3033
      %3071 = vst.msk [vmem:[%s170 + $0x14] sm:$0xf] %vm3065, %v3034
      %3072 = vst.msk [vmem:[%s170 + $0x18] sm:$0xf] %vm3065, %v3035
      %3073 = vst.msk [vmem:[%s170 + $0x1c] sm:$0xf] %vm3065, %v3036
      %3074 = vst.msk [vmem:[%s170 + $0x20] sm:$0xf] %vm3065, %v3037
      %3075 = vst.msk [vmem:[%s170 + $0x24] sm:$0xf] %vm3065, %v3038
      %3076 = vst.msk [vmem:[%s170 + $0x28] sm:$0xf] %vm3065, %v3039
      %3077 = vst.msk [vmem:[%s170 + $0x2c] sm:$0xf] %vm3065, %v3040
      %3078 = vst.msk [vmem:[%s170 + $0x30] sm:$0xf] %vm3065, %v3041
      %3079 = vst.msk [vmem:[%s170 + $0x34] sm:$0xf] %vm3065, %v3042
      %3080 = vst.msk [vmem:[%s170 + $0x38] sm:$0xf] %vm3065, %v3043
      %3081 = vst.msk [vmem:[%s170 + $0x3c] sm:$0xf] %vm3065, %v3044
      %3082 = vst.msk [vmem:[%s170 + $0x40] sm:$0xf] %vm3065, %v3045
      %3083 = vst.msk [vmem:[%s170 + $0x44] sm:$0xf] %vm3065, %v3046
      %3084 = vst.msk [vmem:[%s170 + $0x48] sm:$0xf] %vm3065, %v3047
      %3085 = vst.msk [vmem:[%s170 + $0x4c] sm:$0xf] %vm3065, %v3048
      %3086 = vst.msk [vmem:[%s170 + $0x50] sm:$0xf] %vm3065, %v3049
      %3087 = vst.msk [vmem:[%s170 + $0x54] sm:$0xf] %vm3065, %v3050
      %3088 = vst.msk [vmem:[%s170 + $0x58] sm:$0xf] %vm3065, %v3051
      %3089 = vst.msk [vmem:[%s170 + $0x5c] sm:$0xf] %vm3065, %v3052
      %3090 = vst.msk [vmem:[%s170 + $0x60] sm:$0xf] %vm3065, %v3053
      %3091 = vst.msk [vmem:[%s170 + $0x64] sm:$0xf] %vm3065, %v3054
      %3092 = vst.msk [vmem:[%s170 + $0x68] sm:$0xf] %vm3065, %v3055
      %3093 = vst.msk [vmem:[%s170 + $0x6c] sm:$0xf] %vm3065, %v3056
      %3094 = vst.msk [vmem:[%s170 + $0x70] sm:$0xf] %vm3065, %v3057
      %3095 = vst.msk [vmem:[%s170 + $0x74] sm:$0xf] %vm3065, %v3058
      %3096 = vst.msk [vmem:[%s170 + $0x78] sm:$0xf] %vm3065, %v3059
      %3097 = vst.msk [vmem:[%s170 + $0x7c] sm:$0xf] %vm3065, %v3060
      %3098 = vst.msk [vmem:[%s170 + $0x80] sm:$0xf] %vm3065, %v3061
      %3099 = vst.msk [vmem:[%s170 + $0x84] sm:$0xf] %vm3065, %v3062
      %3100 = vst.msk [vmem:[%s170 + $0x88] sm:$0xf] %vm3065, %v3063
      %3101 = vst.msk [vmem:[%s170 + $0x8c] sm:$0xf] %vm3065, %v3064
      %p3102 = scmp.lt.s32.totalorder %s14, 1
      %s3103 = scalar_select %p3102, %s14, 1
      %s3104 = smul.addr %s3103, 36
      %s3105 = smul.addr %s3104, 4
      %s3106 = scalar_lea.vmem %s3, %s3105
      // Predicated region
      $region33: #{higher_hrnet_forward.23} parent=31 // pred_check
        %p3107 = pneg %p100
      $region34: #{higher_hrnet_forward.23} parent=31 // pred_check_branch
        %3109 = sbr.rel (%p3107) target = $region36
      $region35: #{higher_hrnet_forward.23} parent=31 // pred_region
        _
      $region36: #{higher_hrnet_forward.23} parent=31 // pred_fallthru
        _
    $region32: #{higher_hrnet_forward.23} parent=5 // pred_fallthru
      _
    %p3110 = scmp.le.s32.totalorder 2, %s9
    // Predicated region
    $region37: #{higher_hrnet_forward.23} parent=5 // pred_check
      %p3111 = pneg %p3110
    $region38: #{higher_hrnet_forward.23} parent=5 // pred_check_branch
      %3113 = sbr.rel (%p3111) target = $region40
    $region39: #{higher_hrnet_forward.23} parent=5 // pred_region
      %s3114 = ssub.s32 %s9, 2
      // Predicated region
      $region41: #{higher_hrnet_forward.23} parent=39 // pred_check
        %p3115 = pneg %p106
      $region42: #{higher_hrnet_forward.23} parent=39 // pred_check_branch
        %3117 = sbr.rel (%p3115) target = $region44
      $region43: #{higher_hrnet_forward.23} parent=39 // pred_region
        %p3118 = scmp.lt.s32.totalorder %s15, 1
        %s3119 = scalar_select %p3118, %s15, 1
        %s3120 = smul.addr %s3119, 36
        %s3121 = smul.addr %s3120, 4
        %s3122 = scalar_lea.vmem %s3, %s3121
      $region44: #{higher_hrnet_forward.23} parent=39 // pred_fallthru
        _
    $region40: #{higher_hrnet_forward.23} parent=5 // pred_fallthru
      _
  $region6: #{higher_hrnet_forward.23} parent=0 // loop_footer
    %s13 = sadd.s32 1, %s9
  $region7: #{higher_hrnet_forward.23} parent=0 // loop_footer_branch
    %8 = sbr.rel target = $region3
  $region8: #{higher_hrnet_forward.23} parent=0 // loop_exit
    _

// kernel: higher_hrnet_forward.24
$region0: #{higher_hrnet_forward.24}
  #allocation0 [shape = 'u32[]', space=smem, size = 0x4, offset = 0x4, fixed_abs, tag = 'smem constant byte address 0x4 - core index']
  #allocation1 [shape = 'u32[72,128]{1,0:T(1,128)}', space=vmem, size = 0x9000, scoped, tag = 'internal scratch']
  %s0 = inlined_call_operand.vmem [shape: bf16[2,328,16], index: 0, kind: input, shape index: {}]
  %s1 = inlined_call_operand.vmem [shape: bf16[9,16,16], index: 1, kind: input, shape index: {}]
  %s2 = inlined_call_operand.vmem [shape: f32[1,16], index: 2, kind: input, shape index: {}]
  %s3 = inlined_call_operand.vmem [shape: bf16[2,328,16], index: 3, kind: input, shape index: {}]
  %s4 = inlined_call_operand.vmem [shape: bf16[2,288,16], index: 4, kind: output, shape index: {}]
  %s5 = sld [smem:[#allocation0]]
  $region49: #{higher_hrnet_forward.24} parent=0
    _
  %s7 = ssub.s32 1, %s5
  %s8 = scalar_select 0, %s7, %s5
  loop: start=0, step=1, limit=4
  $region2: #{higher_hrnet_forward.24} parent=0 // loop_pre_header
    _
  $region3: #{higher_hrnet_forward.24} parent=0 // loop_header
    %s10 = sphi 0, %s14
    %p11 = scmp.ge.s32.totalorder %s10, 4
    %s20 = sphi 0, %s22
    %s23 = sphi 0, %s20
    %s24 = sphi 0, %s23
    %s40 = sphi 0, %s24
    %s44 = sphi 0, %s44
    %s46 = sphi 0, %s44
    %s47 = sphi 0, %s46
    %s61 = sphi 0, %s47
    %s65 = sphi 0, %s65
    %s67 = sphi 0, %s65
    %s68 = sphi 0, %s67
    %s82 = sphi 0, %s68
    %s88 = sphi 0, %s90
    %s91 = sphi 0, %s88
    %s92 = sphi 0, %s91
    %s108 = sphi 0, %s92
    %s114 = sphi 0, %s116
    %s117 = sphi 0, %s114
    %s118 = sphi 0, %s117
    %s134 = sphi 0, %s118
  $region4: #{higher_hrnet_forward.24} parent=0 // loop_header_branch
    %13 = sbr.rel (%p11) target = $region8
  $region5: #{higher_hrnet_forward.24} parent=0 // loop_body
    %s15 = ssub.s32 %s10, 1
    %s16 = ssub.s32 %s10, 2
    %s17 = sadd.s32 %s10, 1
    %s18 = ssub.s32 %s10, %s17
    %p19 = scmp.eq.s32.totalorder %s18, 0
    %s21 = sadd.s32 %s20, 1
    %s22 = scalar_select %p19, %s20, %s21
    %p25 = pneg %p19
    %p26 = scmp.eq.s32.totalorder %s10, 1
    %p27 = por %p25, %p26
    %p28 = scmp.ne.s32.totalorder %s20, %s23
    %p29 = scmp.eq.s32.totalorder %s10, 0
    %p30 = por %p28, %p29
    %p31 = scmp.ne.s32.totalorder %s20, %s23
    %p32 = scmp.eq.s32.totalorder %s15, 1
    %p33 = por %p31, %p32
    %p34 = scmp.ne.s32.totalorder %s23, %s24
    %p35 = scmp.eq.s32.totalorder %s15, 0
    %p36 = por %p34, %p35
    %p37 = scmp.ne.s32.totalorder %s23, %s24
    %p38 = scmp.eq.s32.totalorder %s16, 1
    %p39 = por %p37, %p38
    %p41 = scmp.ne.s32.totalorder %s24, %s40
    %p42 = scmp.eq.s32.totalorder %s16, 0
    %p43 = por %p41, %p42
    %s45 = sadd.s32 %s44, 1
    %p48 = scmp.eq.s32.totalorder %s10, 1
    %p49 = scmp.ne.s32.totalorder %s44, %s46
    %p50 = scmp.eq.s32.totalorder %s10, 0
    %p51 = por %p49, %p50
    %p52 = scmp.ne.s32.totalorder %s44, %s46
    %p53 = scmp.eq.s32.totalorder %s15, 1
    %p54 = por %p52, %p53
    %p55 = scmp.ne.s32.totalorder %s46, %s47
    %p56 = scmp.eq.s32.totalorder %s15, 0
    %p57 = por %p55, %p56
    %p58 = scmp.ne.s32.totalorder %s46, %s47
    %p59 = scmp.eq.s32.totalorder %s16, 1
    %p60 = por %p58, %p59
    %p62 = scmp.ne.s32.totalorder %s47, %s61
    %p63 = scmp.eq.s32.totalorder %s16, 0
    %p64 = por %p62, %p63
    %s66 = sadd.s32 %s65, 1
    %p69 = scmp.eq.s32.totalorder %s10, 1
    %p70 = scmp.ne.s32.totalorder %s65, %s67
    %p71 = scmp.eq.s32.totalorder %s10, 0
    %p72 = por %p70, %p71
    %p73 = scmp.ne.s32.totalorder %s65, %s67
    %p74 = scmp.eq.s32.totalorder %s15, 1
    %p75 = por %p73, %p74
    %p76 = scmp.ne.s32.totalorder %s67, %s68
    %p77 = scmp.eq.s32.totalorder %s15, 0
    %p78 = por %p76, %p77
    %p79 = scmp.ne.s32.totalorder %s67, %s68
    %p80 = scmp.eq.s32.totalorder %s16, 1
    %p81 = por %p79, %p80
    %p83 = scmp.ne.s32.totalorder %s68, %s82
    %p84 = scmp.eq.s32.totalorder %s16, 0
    %p85 = por %p83, %p84
    %s86 = ssub.s32 %s10, %s17
    %p87 = scmp.eq.s32.totalorder %s86, 0
    %s89 = sadd.s32 %s88, 1
    %s90 = scalar_select %p87, %s88, %s89
    %p93 = pneg %p87
    %p94 = scmp.eq.s32.totalorder %s10, 1
    %p95 = por %p93, %p94
    %p96 = scmp.ne.s32.totalorder %s88, %s91
    %p97 = scmp.eq.s32.totalorder %s10, 0
    %p98 = por %p96, %p97
    %p99 = scmp.ne.s32.totalorder %s88, %s91
    %p100 = scmp.eq.s32.totalorder %s15, 1
    %p101 = por %p99, %p100
    %p102 = scmp.ne.s32.totalorder %s91, %s92
    %p103 = scmp.eq.s32.totalorder %s15, 0
    %p104 = por %p102, %p103
    %p105 = scmp.ne.s32.totalorder %s91, %s92
    %p106 = scmp.eq.s32.totalorder %s16, 1
    %p107 = por %p105, %p106
    %p109 = scmp.ne.s32.totalorder %s92, %s108
    %p110 = scmp.eq.s32.totalorder %s16, 0
    %p111 = por %p109, %p110
    %s112 = ssub.s32 %s10, %s17
    %p113 = scmp.eq.s32.totalorder %s112, 0
    %s115 = sadd.s32 %s114, 1
    %s116 = scalar_select %p113, %s114, %s115
    %p119 = pneg %p113
    %p120 = scmp.eq.s32.totalorder %s10, 1
    %p121 = por %p119, %p120
    %p122 = scmp.ne.s32.totalorder %s114, %s117
    %p123 = scmp.eq.s32.totalorder %s10, 0
    %p124 = por %p122, %p123
    %p125 = scmp.ne.s32.totalorder %s114, %s117
    %p126 = scmp.eq.s32.totalorder %s15, 1
    %p127 = por %p125, %p126
    %p128 = scmp.ne.s32.totalorder %s117, %s118
    %p129 = scmp.eq.s32.totalorder %s15, 0
    %p130 = por %p128, %p129
    %p131 = scmp.ne.s32.totalorder %s117, %s118
    %p132 = scmp.eq.s32.totalorder %s16, 1
    %p133 = por %p131, %p132
    %p135 = scmp.ne.s32.totalorder %s118, %s134
    %p136 = scmp.eq.s32.totalorder %s16, 0
    %p137 = por %p135, %p136
    %p138 = scmp.le.s32.totalorder 1, %s10
    %p139 = scmp.lt.s32.totalorder %s10, 3
    %p140 = pnand %p138, %p139
    %p141 = pneg %p140
    // Predicated region
    $region9: #{higher_hrnet_forward.24} parent=5 // pred_check
      _
    $region10: #{higher_hrnet_forward.24} parent=5 // pred_check_branch
      %143 = sbr.rel (%p140) target = $region12
    $region11: #{higher_hrnet_forward.24} parent=5 // pred_region
      %s144 = ssub.s32 %s10, 1
      // Predicated region
      $region13: #{higher_hrnet_forward.24} parent=11 // pred_check
        %p145 = pneg %p57
      $region14: #{higher_hrnet_forward.24} parent=11 // pred_check_branch
        %147 = sbr.rel (%p145) target = $region16
      $region15: #{higher_hrnet_forward.24} parent=11 // pred_region
        _
      $region16: #{higher_hrnet_forward.24} parent=11 // pred_fallthru
        _
      // Predicated region
      $region17: #{higher_hrnet_forward.24} parent=11 // pred_check
        %p148 = pneg %p78
      $region18: #{higher_hrnet_forward.24} parent=11 // pred_check_branch
        %150 = sbr.rel (%p148) target = $region20
      $region19: #{higher_hrnet_forward.24} parent=11 // pred_region
        _
      $region20: #{higher_hrnet_forward.24} parent=11 // pred_fallthru
        _
    $region12: #{higher_hrnet_forward.24} parent=5 // pred_fallthru
      _
    %p151 = scmp.lt.s32.totalorder %s10, 2
    // Predicated region
    $region21: #{higher_hrnet_forward.24} parent=5 // pred_check
      %p152 = pneg %p151
    $region22: #{higher_hrnet_forward.24} parent=5 // pred_check_branch
      %154 = sbr.rel (%p152) target = $region24
    $region23: #{higher_hrnet_forward.24} parent=5 // pred_region
      // Predicated region
      $region25: #{higher_hrnet_forward.24} parent=23 // pred_check
        %p155 = pneg %p30
      $region26: #{higher_hrnet_forward.24} parent=23 // pred_check_branch
        %157 = sbr.rel (%p155) target = $region28
      $region27: #{higher_hrnet_forward.24} parent=23 // pred_region
        %p158 = scmp.lt.s32.totalorder %s10, 1
        %s159 = scalar_select %p158, %s10, 1
        %s160 = smul.addr %s159, 41
        %s161 = smul.addr %s160, 4
        %s162 = scalar_lea.vmem %s0, %s161
      $region28: #{higher_hrnet_forward.24} parent=23 // pred_fallthru
        _
      // Predicated region
      $region29: #{higher_hrnet_forward.24} parent=23 // pred_check
        %p163 = pneg %p98
      $region30: #{higher_hrnet_forward.24} parent=23 // pred_check_branch
        %165 = sbr.rel (%p163) target = $region32
      $region31: #{higher_hrnet_forward.24} parent=23 // pred_region
        %p166 = scmp.lt.s32.totalorder %s10, 1
        %s167 = scalar_select %p166, %s10, 1
        %s168 = smul.addr %s167, 41
        %s169 = smul.addr %s168, 4
        %s170 = scalar_lea.vmem %s3, %s169
      $region32: #{higher_hrnet_forward.24} parent=23 // pred_fallthru
        _
    $region24: #{higher_hrnet_forward.24} parent=5 // pred_fallthru
      _
    %p171 = scmp.le.s32.totalorder 1, %s10
    %p172 = scmp.lt.s32.totalorder %s10, 3
    %p173 = pnand %p171, %p172
    %p174 = pneg %p173
    // Predicated region
    $region33: #{higher_hrnet_forward.24} parent=5 // pred_check
      _
    $region34: #{higher_hrnet_forward.24} parent=5 // pred_check_branch
      %176 = sbr.rel (%p173) target = $region36
    $region35: #{higher_hrnet_forward.24} parent=5 // pred_region
      %s177 = ssub.s32 %s10, 1
      %p178 = scmp.lt.s32.totalorder %s15, 1
      %s179 = scalar_select %p178, %s15, 1
      %s180 = smul.addr %s179, 41
      %s181 = smul.addr %s180, 4
      %s182 = scalar_lea.vmem %s0, %s181
      %p183 = pneg %p36
      %p184 = pneg %p33
      %p185 = pneg %p57
      %p186 = pneg %p54
      %p187 = pneg %p78
      %p188 = pneg %p75
      %p189 = scmp.lt.s32.totalorder %s15, 1
      %s190 = scalar_select %p189, %s15, 1
      %s191 = smul.addr %s190, 41
      %s192 = smul.addr %s191, 4
      %s193 = scalar_lea.vmem %s3, %s192
      %p194 = pneg %p104
      %p195 = pneg %p101
      %p196 = pneg %p130
      %p197 = pneg %p127
      %p198 = scmp.lt.s32.totalorder %s15, 1
      %s199 = scalar_select %p198, %s15, 1
      %s200 = smul.addr %s199, 36
      %s201 = smul.addr %s200, 4
      %s202 = scalar_lea.vmem %s4, %s201
      %p203 = scmp.lt.s32.totalorder %s15, 1
      %s204 = scalar_select %p203, %s15, 1
      %s205 = smul.addr %s204, 41
      %s206 = smul.addr %s205, 4
      %s207 = scalar_lea.vmem %s0, %s206
      %p208 = scmp.lt.s32.totalorder %s15, 1
      %s209 = scalar_select %p208, %s15, 1
      %s210 = smul.addr %s209, 41
      %s211 = smul.addr %s210, 4
      %s212 = scalar_lea.vmem %s3, %s211
      %p213 = scmp.lt.s32.totalorder %s15, 1
      %s214 = scalar_select %p213, %s15, 1
      %s215 = smul.addr %s214, 36
      %s216 = smul.addr %s215, 4
      %s217 = scalar_lea.vmem %s4, %s216
      %v219 = vld [vmem:[%s207] sm:$0xf]
      %v220 = vld [vmem:[%s207 + $0x4] sm:$0xf]
      %v221 = vld [vmem:[%s207 + $0x8] sm:$0xf]
      %v222 = vld [vmem:[%s207 + $0xc] sm:$0xf]
      %v223 = vld [vmem:[%s207 + $0x10] sm:$0xf]
      %v224 = vld [vmem:[%s207 + $0x14] sm:$0xf]
      %v225 = vld [vmem:[%s207 + $0x18] sm:$0xf]
      %v226 = vld [vmem:[%s207 + $0x1c] sm:$0xf]
      %v227 = vld [vmem:[%s207 + $0x20] sm:$0xf]
      %v228 = vld [vmem:[%s207 + $0x24] sm:$0xf]
      %v229 = vld [vmem:[%s207 + $0x28] sm:$0xf]
      %v230 = vld [vmem:[%s207 + $0x2c] sm:$0xf]
      %v231 = vld [vmem:[%s207 + $0x30] sm:$0xf]
      %v232 = vld [vmem:[%s207 + $0x34] sm:$0xf]
      %v233 = vld [vmem:[%s207 + $0x38] sm:$0xf]
      %v234 = vld [vmem:[%s207 + $0x3c] sm:$0xf]
      %v235 = vld [vmem:[%s207 + $0x40] sm:$0xf]
      %v236 = vld [vmem:[%s207 + $0x44] sm:$0xf]
      %v237 = vld [vmem:[%s207 + $0x48] sm:$0xf]
      %v238 = vld [vmem:[%s207 + $0x4c] sm:$0xf]
      %v239 = vld [vmem:[%s207 + $0x50] sm:$0xf]
      %v240 = vld [vmem:[%s207 + $0x54] sm:$0xf]
      %v241 = vld [vmem:[%s207 + $0x58] sm:$0xf]
      %v242 = vld [vmem:[%s207 + $0x5c] sm:$0xf]
      %v243 = vld [vmem:[%s207 + $0x60] sm:$0xf]
      %v244 = vld [vmem:[%s207 + $0x64] sm:$0xf]
      %v245 = vld [vmem:[%s207 + $0x68] sm:$0xf]
      %v246 = vld [vmem:[%s207 + $0x6c] sm:$0xf]
      %v247 = vld [vmem:[%s207 + $0x70] sm:$0xf]
      %v248 = vld [vmem:[%s207 + $0x74] sm:$0xf]
      %v249 = vld [vmem:[%s207 + $0x78] sm:$0xf]
      %v250 = vld [vmem:[%s207 + $0x7c] sm:$0xf]
      %v251 = vld [vmem:[%s207 + $0x80] sm:$0xf]
      %v252 = vld [vmem:[%s207 + $0x84] sm:$0xf]
      %v253 = vld [vmem:[%s207 + $0x88] sm:$0xf]
      %v254 = vld [vmem:[%s207 + $0x8c] sm:$0xf]
      %v255 = vld [vmem:[%s1] sm:$0xf]
      %v256 = vld [vmem:[%s1 + $0x4] sm:$0xf]
      %v257 = vld [vmem:[%s207 + $0x90] sm:$0x1]
      %s258 = scalar_lea.vmem %s1, 8
      %v259 = vld [vmem:[%s258] sm:$0xf]
      %v260 = vld [vmem:[%s258 + $0x4] sm:$0xf]
      %v298 = vunpack.c.l.b16 %v219
      %v299 = vunpack.c.l.b16 %v220
      %v300 = vunpack.c.l.b16 %v221
      %v301 = vunpack.c.l.b16 %v222
      %v302 = vunpack.c.l.b16 %v223
      %v303 = vunpack.c.l.b16 %v224
      %v304 = vunpack.c.l.b16 %v225
      %v305 = vunpack.c.l.b16 %v226
      %v306 = vunpack.c.l.b16 %v227
      %v307 = vunpack.c.l.b16 %v228
      %v308 = vunpack.c.l.b16 %v229
      %v309 = vunpack.c.l.b16 %v230
      %v310 = vunpack.c.l.b16 %v231
      %v311 = vunpack.c.l.b16 %v232
      %v312 = vunpack.c.l.b16 %v233
      %v313 = vunpack.c.l.b16 %v234
      %v314 = vunpack.c.l.b16 %v235
      %v315 = vunpack.c.l.b16 %v236
      %v316 = vunpack.c.l.b16 %v237
      %v317 = vunpack.c.l.b16 %v238
      %v318 = vunpack.c.l.b16 %v239
      %v319 = vunpack.c.l.b16 %v240
      %v320 = vunpack.c.l.b16 %v241
      %v321 = vunpack.c.l.b16 %v242
      %v322 = vunpack.c.l.b16 %v243
      %v323 = vunpack.c.l.b16 %v244
      %v324 = vunpack.c.l.b16 %v245
      %v325 = vunpack.c.l.b16 %v246
      %v326 = vunpack.c.l.b16 %v247
      %v327 = vunpack.c.l.b16 %v248
      %v328 = vunpack.c.l.b16 %v249
      %v329 = vunpack.c.l.b16 %v250
      %v330 = vunpack.c.l.b16 %v251
      %v331 = vunpack.c.l.b16 %v252
      %v332 = vunpack.c.l.b16 %v253
      %v333 = vunpack.c.l.b16 %v254
      %v334 = vunpack.c.l.b16 %v257
      %v335 = vpack.c.b16 %v299, %v298
      %v336 = vpack.c.b16 %v301, %v300
      %v337 = vpack.c.b16 %v303, %v302
      %v338 = vpack.c.b16 %v305, %v304
      %v339 = vpack.c.b16 %v307, %v306
      %v340 = vpack.c.b16 %v309, %v308
      %v341 = vpack.c.b16 %v311, %v310
      %v342 = vpack.c.b16 %v313, %v312
      %v343 = vpack.c.b16 %v315, %v314
      %v344 = vpack.c.b16 %v317, %v316
      %v345 = vpack.c.b16 %v319, %v318
      %v346 = vpack.c.b16 %v321, %v320
      %v347 = vpack.c.b16 %v323, %v322
      %v348 = vpack.c.b16 %v325, %v324
      %v349 = vpack.c.b16 %v327, %v326
      %v350 = vpack.c.b16 %v329, %v328
      %v351 = vpack.c.b16 %v331, %v330
      %v352 = vpack.c.b16 %v333, %v332
      %v353 = vpack.c.b16 %v334, %v334
      %vm354 = vsmask.f32 7424
      %v356 = vshrl.u32 %v335, 16
      %v358 = vshll.u32 %v335, 16
      %v360 = vrot.slane %v358, 1
      %v361 = vor.u32 %v356, %v360
      %v363 = vshll.u32 %v336, 16
      %v365 = vrot.slane %v363, 1
      %v366 = vsel %vm354, %v361, %v365
      %v367 = vshrl.u32 %v336, 16
      %v369 = vor.u32 %v367, %v365
      %v371 = vshll.u32 %v337, 16
      %v373 = vrot.slane %v371, 1
      %v374 = vsel %vm354, %v369, %v373
      %v375 = vshrl.u32 %v337, 16
      %v377 = vor.u32 %v375, %v373
      %v379 = vshll.u32 %v338, 16
      %v381 = vrot.slane %v379, 1
      %v382 = vsel %vm354, %v377, %v381
      %v383 = vshrl.u32 %v338, 16
      %v385 = vor.u32 %v383, %v381
      %v387 = vshll.u32 %v339, 16
      %v389 = vrot.slane %v387, 1
      %v390 = vsel %vm354, %v385, %v389
      %v391 = vshrl.u32 %v339, 16
      %v393 = vor.u32 %v391, %v389
      %v395 = vshll.u32 %v340, 16
      %v397 = vrot.slane %v395, 1
      %v398 = vsel %vm354, %v393, %v397
      %v399 = vshrl.u32 %v340, 16
      %v401 = vor.u32 %v399, %v397
      %v403 = vshll.u32 %v341, 16
      %v405 = vrot.slane %v403, 1
      %v406 = vsel %vm354, %v401, %v405
      %v407 = vshrl.u32 %v341, 16
      %v409 = vor.u32 %v407, %v405
      %v411 = vshll.u32 %v342, 16
      %v413 = vrot.slane %v411, 1
      %v414 = vsel %vm354, %v409, %v413
      %v415 = vshrl.u32 %v342, 16
      %v417 = vor.u32 %v415, %v413
      %v419 = vshll.u32 %v343, 16
      %v421 = vrot.slane %v419, 1
      %v422 = vsel %vm354, %v417, %v421
      %v423 = vshrl.u32 %v343, 16
      %v425 = vor.u32 %v423, %v421
      %v427 = vshll.u32 %v344, 16
      %v429 = vrot.slane %v427, 1
      %v430 = vsel %vm354, %v425, %v429
      %v431 = vshrl.u32 %v344, 16
      %v433 = vor.u32 %v431, %v429
      %v435 = vshll.u32 %v345, 16
      %v437 = vrot.slane %v435, 1
      %v438 = vsel %vm354, %v433, %v437
      %v439 = vshrl.u32 %v345, 16
      %v441 = vor.u32 %v439, %v437
      %v443 = vshll.u32 %v346, 16
      %v445 = vrot.slane %v443, 1
      %v446 = vsel %vm354, %v441, %v445
      %v447 = vshrl.u32 %v346, 16
      %v449 = vor.u32 %v447, %v445
      %v451 = vshll.u32 %v347, 16
      %v453 = vrot.slane %v451, 1
      %v454 = vsel %vm354, %v449, %v453
      %v455 = vshrl.u32 %v347, 16
      %v457 = vor.u32 %v455, %v453
      %v459 = vshll.u32 %v348, 16
      %v461 = vrot.slane %v459, 1
      %v462 = vsel %vm354, %v457, %v461
      %v463 = vshrl.u32 %v348, 16
      %v465 = vor.u32 %v463, %v461
      %v467 = vshll.u32 %v349, 16
      %v469 = vrot.slane %v467, 1
      %v470 = vsel %vm354, %v465, %v469
      %v471 = vshrl.u32 %v349, 16
      %v473 = vor.u32 %v471, %v469
      %v475 = vshll.u32 %v350, 16
      %v477 = vrot.slane %v475, 1
      %v478 = vsel %vm354, %v473, %v477
      %v479 = vshrl.u32 %v350, 16
      %v481 = vor.u32 %v479, %v477
      %v483 = vshll.u32 %v351, 16
      %v485 = vrot.slane %v483, 1
      %v486 = vsel %vm354, %v481, %v485
      %v487 = vshrl.u32 %v351, 16
      %v489 = vor.u32 %v487, %v485
      %v491 = vshll.u32 %v352, 16
      %v493 = vrot.slane %v491, 1
      %v494 = vsel %vm354, %v489, %v493
      %v495 = vshrl.u32 %v352, 16
      %v497 = vor.u32 %v495, %v493
      %v499 = vshll.u32 %v353, 16
      %v501 = vrot.slane %v499, 1
      %v502 = vsel %vm354, %v497, %v501
      %v505 = vunpack.c.l.b16 %v259
      %v506 = vunpack.c.l.b16 %v260
      %v507 = vpack.c.b16 %v506, %v505
      %vm509 = vcmask 130048
      %v511 = vsel %vm509, %v366, 0
      %v514 = vsel %vm509, %v374, 0
      %v517 = vsel %vm509, %v382, 0
      %v520 = vsel %vm509, %v390, 0
      %v523 = vsel %vm509, %v398, 0
      %v526 = vsel %vm509, %v406, 0
      %v529 = vsel %vm509, %v414, 0
      %v532 = vsel %vm509, %v422, 0
      %v535 = vsel %vm509, %v430, 0
      %v538 = vsel %vm509, %v438, 0
      %v541 = vsel %vm509, %v446, 0
      %v544 = vsel %vm509, %v454, 0
      %v547 = vsel %vm509, %v462, 0
      %v550 = vsel %vm509, %v470, 0
      %v553 = vsel %vm509, %v478, 0
      %v556 = vsel %vm509, %v486, 0
      %v559 = vsel %vm509, %v494, 0
      %v562 = vsel %vm509, %v502, 0
      %564 = vmatpush.bf16.msra.mxu0 0
      %565 = vmatpush.bf16.msra.mxu0 0
      %566 = vmatpush.bf16.msra.mxu0 0
      %567 = vmatpush.bf16.msra.mxu0 0
      %568 = vmatpush.bf16.msra.mxu0 0
      %569 = vmatpush.bf16.msra.mxu0 0
      %570 = vmatpush.bf16.msra.mxu0 0
      %571 = vmatpush.bf16.msra.mxu0 %v507
      %572 = vmatmul.bf16.gmra.mxu0 %v511
      %v573 = vpop.f32.mrf.mxu0
      %v574 = vadd.f32 0.0, %v573
      %v575 = vpop.f32.mrf.mxu0
      %v576 = vadd.f32 0.0, %v575
      %577 = vmatmul.bf16.gmra.mxu0 %v514
      %v578 = vpop.f32.mrf.mxu0
      %v579 = vadd.f32 0.0, %v578
      %v580 = vpop.f32.mrf.mxu0
      %v581 = vadd.f32 0.0, %v580
      %582 = vmatmul.bf16.gmra.mxu0 %v517
      %v583 = vpop.f32.mrf.mxu0
      %v584 = vadd.f32 0.0, %v583
      %v585 = vpop.f32.mrf.mxu0
      %v586 = vadd.f32 0.0, %v585
      %587 = vmatmul.bf16.gmra.mxu0 %v520
      %v588 = vpop.f32.mrf.mxu0
      %v589 = vadd.f32 0.0, %v588
      %v590 = vpop.f32.mrf.mxu0
      %v591 = vadd.f32 0.0, %v590
      %592 = vmatmul.bf16.gmra.mxu0 %v523
      %v593 = vpop.f32.mrf.mxu0
      %v594 = vadd.f32 0.0, %v593
      %v595 = vpop.f32.mrf.mxu0
      %v596 = vadd.f32 0.0, %v595
      %597 = vmatmul.bf16.gmra.mxu0 %v526
      %v598 = vpop.f32.mrf.mxu0
      %v599 = vadd.f32 0.0, %v598
      %v600 = vpop.f32.mrf.mxu0
      %v601 = vadd.f32 0.0, %v600
      %602 = vmatmul.bf16.gmra.mxu0 %v529
      %v603 = vpop.f32.mrf.mxu0
      %v604 = vadd.f32 0.0, %v603
      %v605 = vpop.f32.mrf.mxu0
      %v606 = vadd.f32 0.0, %v605
      %607 = vmatmul.bf16.gmra.mxu0 %v532
      %v608 = vpop.f32.mrf.mxu0
      %v609 = vadd.f32 0.0, %v608
      %v610 = vpop.f32.mrf.mxu0
      %v611 = vadd.f32 0.0, %v610
      %612 = vmatmul.bf16.gmra.mxu0 %v535
      %v613 = vpop.f32.mrf.mxu0
      %v614 = vadd.f32 0.0, %v613
      %v615 = vpop.f32.mrf.mxu0
      %v616 = vadd.f32 0.0, %v615
      %617 = vmatmul.bf16.gmra.mxu0 %v538
      %v618 = vpop.f32.mrf.mxu0
      %v619 = vadd.f32 0.0, %v618
      %v620 = vpop.f32.mrf.mxu0
      %v621 = vadd.f32 0.0, %v620
      %622 = vmatmul.bf16.gmra.mxu0 %v541
      %v623 = vpop.f32.mrf.mxu0
      %v624 = vadd.f32 0.0, %v623
      %v625 = vpop.f32.mrf.mxu0
      %v626 = vadd.f32 0.0, %v625
      %627 = vmatmul.bf16.gmra.mxu0 %v544
      %v628 = vpop.f32.mrf.mxu0
      %v629 = vadd.f32 0.0, %v628
      %v630 = vpop.f32.mrf.mxu0
      %v631 = vadd.f32 0.0, %v630
      %632 = vmatmul.bf16.gmra.mxu0 %v547
      %v633 = vpop.f32.mrf.mxu0
      %v634 = vadd.f32 0.0, %v633
      %v635 = vpop.f32.mrf.mxu0
      %v636 = vadd.f32 0.0, %v635
      %637 = vmatmul.bf16.gmra.mxu0 %v550
      %v638 = vpop.f32.mrf.mxu0
      %v639 = vadd.f32 0.0, %v638
      %v640 = vpop.f32.mrf.mxu0
      %v641 = vadd.f32 0.0, %v640
      %642 = vmatmul.bf16.gmra.mxu0 %v553
      %v643 = vpop.f32.mrf.mxu0
      %v644 = vadd.f32 0.0, %v643
      %v645 = vpop.f32.mrf.mxu0
      %v646 = vadd.f32 0.0, %v645
      %647 = vmatmul.bf16.gmra.mxu0 %v556
      %v648 = vpop.f32.mrf.mxu0
      %v649 = vadd.f32 0.0, %v648
      %v650 = vpop.f32.mrf.mxu0
      %v651 = vadd.f32 0.0, %v650
      %652 = vmatmul.bf16.gmra.mxu0 %v559
      %v653 = vpop.f32.mrf.mxu0
      %v654 = vadd.f32 0.0, %v653
      %v655 = vpop.f32.mrf.mxu0
      %v656 = vadd.f32 0.0, %v655
      %657 = vmatmul.bf16.gmra.mxu0 %v562
      %v658 = vpop.f32.mrf.mxu0
      %v659 = vadd.f32 0.0, %v658
      %v660 = vpop.f32.mrf.mxu0
      %v661 = vadd.f32 0.0, %v660
      %662 = vdwg.mxu0
      %v665 = vunpack.c.l.b16 %v255
      %v666 = vunpack.c.l.b16 %v256
      %v667 = vpack.c.b16 %v666, %v665
      %v669 = vsel %vm509, %v335, 0
      %v671 = vsel %vm509, %v336, 0
      %v673 = vsel %vm509, %v337, 0
      %v675 = vsel %vm509, %v338, 0
      %v677 = vsel %vm509, %v339, 0
      %v679 = vsel %vm509, %v340, 0
      %v681 = vsel %vm509, %v341, 0
      %v683 = vsel %vm509, %v342, 0
      %v685 = vsel %vm509, %v343, 0
      %v687 = vsel %vm509, %v344, 0
      %v689 = vsel %vm509, %v345, 0
      %v691 = vsel %vm509, %v346, 0
      %v693 = vsel %vm509, %v347, 0
      %v695 = vsel %vm509, %v348, 0
      %v697 = vsel %vm509, %v349, 0
      %v699 = vsel %vm509, %v350, 0
      %v701 = vsel %vm509, %v351, 0
      %v703 = vsel %vm509, %v352, 0
      %705 = vmatpush.bf16.msra.mxu0 0
      %706 = vmatpush.bf16.msra.mxu0 0
      %707 = vmatpush.bf16.msra.mxu0 0
      %708 = vmatpush.bf16.msra.mxu0 0
      %709 = vmatpush.bf16.msra.mxu0 0
      %710 = vmatpush.bf16.msra.mxu0 0
      %711 = vmatpush.bf16.msra.mxu0 0
      %712 = vmatpush.bf16.msra.mxu0 %v667
      %713 = vmatmul.bf16.gmra.mxu0 %v669
      %v714 = vpop.f32.mrf.mxu0
      %v715 = vadd.f32 %v574, %v714
      %v716 = vpop.f32.mrf.mxu0
      %v717 = vadd.f32 %v576, %v716
      %718 = vmatmul.bf16.gmra.mxu0 %v671
      %v719 = vpop.f32.mrf.mxu0
      %v720 = vadd.f32 %v579, %v719
      %v721 = vpop.f32.mrf.mxu0
      %v722 = vadd.f32 %v581, %v721
      %723 = vmatmul.bf16.gmra.mxu0 %v673
      %v724 = vpop.f32.mrf.mxu0
      %v725 = vadd.f32 %v584, %v724
      %v726 = vpop.f32.mrf.mxu0
      %v727 = vadd.f32 %v586, %v726
      %728 = vmatmul.bf16.gmra.mxu0 %v675
      %v729 = vpop.f32.mrf.mxu0
      %v730 = vadd.f32 %v589, %v729
      %v731 = vpop.f32.mrf.mxu0
      %v732 = vadd.f32 %v591, %v731
      %733 = vmatmul.bf16.gmra.mxu0 %v677
      %v734 = vpop.f32.mrf.mxu0
      %v735 = vadd.f32 %v594, %v734
      %v736 = vpop.f32.mrf.mxu0
      %v737 = vadd.f32 %v596, %v736
      %738 = vmatmul.bf16.gmra.mxu0 %v679
      %v739 = vpop.f32.mrf.mxu0
      %v740 = vadd.f32 %v599, %v739
      %v741 = vpop.f32.mrf.mxu0
      %v742 = vadd.f32 %v601, %v741
      %743 = vmatmul.bf16.gmra.mxu0 %v681
      %v744 = vpop.f32.mrf.mxu0
      %v745 = vadd.f32 %v604, %v744
      %v746 = vpop.f32.mrf.mxu0
      %v747 = vadd.f32 %v606, %v746
      %748 = vmatmul.bf16.gmra.mxu0 %v683
      %v749 = vpop.f32.mrf.mxu0
      %v750 = vadd.f32 %v609, %v749
      %v751 = vpop.f32.mrf.mxu0
      %v752 = vadd.f32 %v611, %v751
      %753 = vmatmul.bf16.gmra.mxu0 %v685
      %v754 = vpop.f32.mrf.mxu0
      %v755 = vadd.f32 %v614, %v754
      %v756 = vpop.f32.mrf.mxu0
      %v757 = vadd.f32 %v616, %v756
      %758 = vmatmul.bf16.gmra.mxu0 %v687
      %v759 = vpop.f32.mrf.mxu0
      %v760 = vadd.f32 %v619, %v759
      %v761 = vpop.f32.mrf.mxu0
      %v762 = vadd.f32 %v621, %v761
      %763 = vmatmul.bf16.gmra.mxu0 %v689
      %v764 = vpop.f32.mrf.mxu0
      %v765 = vadd.f32 %v624, %v764
      %v766 = vpop.f32.mrf.mxu0
      %v767 = vadd.f32 %v626, %v766
      %768 = vmatmul.bf16.gmra.mxu0 %v691
      %v769 = vpop.f32.mrf.mxu0
      %v770 = vadd.f32 %v629, %v769
      %v771 = vpop.f32.mrf.mxu0
      %v772 = vadd.f32 %v631, %v771
      %773 = vmatmul.bf16.gmra.mxu0 %v693
      %v774 = vpop.f32.mrf.mxu0
      %v775 = vadd.f32 %v634, %v774
      %v776 = vpop.f32.mrf.mxu0
      %v777 = vadd.f32 %v636, %v776
      %778 = vmatmul.bf16.gmra.mxu0 %v695
      %v779 = vpop.f32.mrf.mxu0
      %v780 = vadd.f32 %v639, %v779
      %v781 = vpop.f32.mrf.mxu0
      %v782 = vadd.f32 %v641, %v781
      %783 = vmatmul.bf16.gmra.mxu0 %v697
      %v784 = vpop.f32.mrf.mxu0
      %v785 = vadd.f32 %v644, %v784
      %v786 = vpop.f32.mrf.mxu0
      %v787 = vadd.f32 %v646, %v786
      %788 = vmatmul.bf16.gmra.mxu0 %v699
      %v789 = vpop.f32.mrf.mxu0
      %v790 = vadd.f32 %v649, %v789
      %v791 = vpop.f32.mrf.mxu0
      %v792 = vadd.f32 %v651, %v791
      %793 = vmatmul.bf16.gmra.mxu0 %v701
      %v794 = vpop.f32.mrf.mxu0
      %v795 = vadd.f32 %v654, %v794
      %v796 = vpop.f32.mrf.mxu0
      %v797 = vadd.f32 %v656, %v796
      %798 = vmatmul.bf16.gmra.mxu0 %v703
      %v799 = vpop.f32.mrf.mxu0
      %v800 = vadd.f32 %v659, %v799
      %v801 = vpop.f32.mrf.mxu0
      %v802 = vadd.f32 %v661, %v801
      %803 = vdwg.mxu0
      %v804 = vld [vmem:[%s207] sm:$0xe]
      %s805 = scalar_lea.vmem %s1, 16
      %v806 = vld [vmem:[%s805] sm:$0xf]
      %v807 = vld [vmem:[%s805 + $0x4] sm:$0xf]
      %v809 = vunpack.c.l.b16 %v804
      %v810 = vpack.c.b16 %v299, %v809
      %vm811 = vcmask 1046528
      %v812 = vrot.slane %v810, 1
      %v813 = vrot.slane %v336, 1
      %v814 = vsel %vm811, %v812, %v813
      %v815 = vrot.slane %v337, 1
      %v816 = vsel %vm811, %v813, %v815
      %v817 = vrot.slane %v338, 1
      %v818 = vsel %vm811, %v815, %v817
      %v819 = vrot.slane %v339, 1
      %v820 = vsel %vm811, %v817, %v819
      %v821 = vrot.slane %v340, 1
      %v822 = vsel %vm811, %v819, %v821
      %v823 = vrot.slane %v341, 1
      %v824 = vsel %vm811, %v821, %v823
      %v825 = vrot.slane %v342, 1
      %v826 = vsel %vm811, %v823, %v825
      %v827 = vrot.slane %v343, 1
      %v828 = vsel %vm811, %v825, %v827
      %v829 = vrot.slane %v344, 1
      %v830 = vsel %vm811, %v827, %v829
      %v831 = vrot.slane %v345, 1
      %v832 = vsel %vm811, %v829, %v831
      %v833 = vrot.slane %v346, 1
      %v834 = vsel %vm811, %v831, %v833
      %v835 = vrot.slane %v347, 1
      %v836 = vsel %vm811, %v833, %v835
      %v837 = vrot.slane %v348, 1
      %v838 = vsel %vm811, %v835, %v837
      %v839 = vrot.slane %v349, 1
      %v840 = vsel %vm811, %v837, %v839
      %v841 = vrot.slane %v350, 1
      %v842 = vsel %vm811, %v839, %v841
      %v843 = vrot.slane %v351, 1
      %v844 = vsel %vm811, %v841, %v843
      %v845 = vrot.slane %v352, 1
      %v846 = vsel %vm811, %v843, %v845
      %v847 = vrot.slane %v353, 1
      %v848 = vsel %vm811, %v845, %v847
      %v851 = vunpack.c.l.b16 %v806
      %v852 = vunpack.c.l.b16 %v807
      %v853 = vpack.c.b16 %v852, %v851
      %v856 = vsel %vm509, %v814, 0
      %v859 = vsel %vm509, %v816, 0
      %v862 = vsel %vm509, %v818, 0
      %v865 = vsel %vm509, %v820, 0
      %v868 = vsel %vm509, %v822, 0
      %v871 = vsel %vm509, %v824, 0
      %v874 = vsel %vm509, %v826, 0
      %v877 = vsel %vm509, %v828, 0
      %v880 = vsel %vm509, %v830, 0
      %v883 = vsel %vm509, %v832, 0
      %v886 = vsel %vm509, %v834, 0
      %v889 = vsel %vm509, %v836, 0
      %v892 = vsel %vm509, %v838, 0
      %v895 = vsel %vm509, %v840, 0
      %v898 = vsel %vm509, %v842, 0
      %v901 = vsel %vm509, %v844, 0
      %v904 = vsel %vm509, %v846, 0
      %v907 = vsel %vm509, %v848, 0
      %909 = vmatpush.bf16.msra.mxu0 0
      %910 = vmatpush.bf16.msra.mxu0 0
      %911 = vmatpush.bf16.msra.mxu0 0
      %912 = vmatpush.bf16.msra.mxu0 0
      %913 = vmatpush.bf16.msra.mxu0 0
      %914 = vmatpush.bf16.msra.mxu0 0
      %915 = vmatpush.bf16.msra.mxu0 0
      %916 = vmatpush.bf16.msra.mxu0 %v853
      %917 = vmatmul.bf16.gmra.mxu0 %v856
      %v918 = vpop.f32.mrf.mxu0
      %v919 = vadd.f32 0.0, %v918
      %v920 = vpop.f32.mrf.mxu0
      %v921 = vadd.f32 0.0, %v920
      %922 = vmatmul.bf16.gmra.mxu0 %v859
      %v923 = vpop.f32.mrf.mxu0
      %v924 = vadd.f32 0.0, %v923
      %v925 = vpop.f32.mrf.mxu0
      %v926 = vadd.f32 0.0, %v925
      %927 = vmatmul.bf16.gmra.mxu0 %v862
      %v928 = vpop.f32.mrf.mxu0
      %v929 = vadd.f32 0.0, %v928
      %v930 = vpop.f32.mrf.mxu0
      %v931 = vadd.f32 0.0, %v930
      %932 = vmatmul.bf16.gmra.mxu0 %v865
      %v933 = vpop.f32.mrf.mxu0
      %v934 = vadd.f32 0.0, %v933
      %v935 = vpop.f32.mrf.mxu0
      %v936 = vadd.f32 0.0, %v935
      %937 = vmatmul.bf16.gmra.mxu0 %v868
      %v938 = vpop.f32.mrf.mxu0
      %v939 = vadd.f32 0.0, %v938
      %v940 = vpop.f32.mrf.mxu0
      %v941 = vadd.f32 0.0, %v940
      %942 = vmatmul.bf16.gmra.mxu0 %v871
      %v943 = vpop.f32.mrf.mxu0
      %v944 = vadd.f32 0.0, %v943
      %v945 = vpop.f32.mrf.mxu0
      %v946 = vadd.f32 0.0, %v945
      %947 = vmatmul.bf16.gmra.mxu0 %v874
      %v948 = vpop.f32.mrf.mxu0
      %v949 = vadd.f32 0.0, %v948
      %v950 = vpop.f32.mrf.mxu0
      %v951 = vadd.f32 0.0, %v950
      %952 = vmatmul.bf16.gmra.mxu0 %v877
      %v953 = vpop.f32.mrf.mxu0
      %v954 = vadd.f32 0.0, %v953
      %v955 = vpop.f32.mrf.mxu0
      %v956 = vadd.f32 0.0, %v955
      %957 = vmatmul.bf16.gmra.mxu0 %v880
      %v958 = vpop.f32.mrf.mxu0
      %v959 = vadd.f32 0.0, %v958
      %v960 = vpop.f32.mrf.mxu0
      %v961 = vadd.f32 0.0, %v960
      %962 = vmatmul.bf16.gmra.mxu0 %v883
      %v963 = vpop.f32.mrf.mxu0
      %v964 = vadd.f32 0.0, %v963
      %v965 = vpop.f32.mrf.mxu0
      %v966 = vadd.f32 0.0, %v965
      %967 = vmatmul.bf16.gmra.mxu0 %v886
      %v968 = vpop.f32.mrf.mxu0
      %v969 = vadd.f32 0.0, %v968
      %v970 = vpop.f32.mrf.mxu0
      %v971 = vadd.f32 0.0, %v970
      %972 = vmatmul.bf16.gmra.mxu0 %v889
      %v973 = vpop.f32.mrf.mxu0
      %v974 = vadd.f32 0.0, %v973
      %v975 = vpop.f32.mrf.mxu0
      %v976 = vadd.f32 0.0, %v975
      %977 = vmatmul.bf16.gmra.mxu0 %v892
      %v978 = vpop.f32.mrf.mxu0
      %v979 = vadd.f32 0.0, %v978
      %v980 = vpop.f32.mrf.mxu0
      %v981 = vadd.f32 0.0, %v980
      %982 = vmatmul.bf16.gmra.mxu0 %v895
      %v983 = vpop.f32.mrf.mxu0
      %v984 = vadd.f32 0.0, %v983
      %v985 = vpop.f32.mrf.mxu0
      %v986 = vadd.f32 0.0, %v985
      %987 = vmatmul.bf16.gmra.mxu0 %v898
      %v988 = vpop.f32.mrf.mxu0
      %v989 = vadd.f32 0.0, %v988
      %v990 = vpop.f32.mrf.mxu0
      %v991 = vadd.f32 0.0, %v990
      %992 = vmatmul.bf16.gmra.mxu0 %v901
      %v993 = vpop.f32.mrf.mxu0
      %v994 = vadd.f32 0.0, %v993
      %v995 = vpop.f32.mrf.mxu0
      %v996 = vadd.f32 0.0, %v995
      %997 = vmatmul.bf16.gmra.mxu0 %v904
      %v998 = vpop.f32.mrf.mxu0
      %v999 = vadd.f32 0.0, %v998
      %v1000 = vpop.f32.mrf.mxu0
      %v1001 = vadd.f32 0.0, %v1000
      %1002 = vmatmul.bf16.gmra.mxu0 %v907
      %v1003 = vpop.f32.mrf.mxu0
      %v1004 = vadd.f32 0.0, %v1003
      %v1005 = vpop.f32.mrf.mxu0
      %v1006 = vadd.f32 0.0, %v1005
      %1007 = vdwg.mxu0
      %v1008 = vadd.f32 %v715, %v919
      %v1009 = vadd.f32 %v717, %v921
      %v1010 = vadd.f32 %v720, %v924
      %v1011 = vadd.f32 %v722, %v926
      %v1012 = vadd.f32 %v725, %v929
      %v1013 = vadd.f32 %v727, %v931
      %v1014 = vadd.f32 %v730, %v934
      %v1015 = vadd.f32 %v732, %v936
      %v1016 = vadd.f32 %v735, %v939
      %v1017 = vadd.f32 %v737, %v941
      %v1018 = vadd.f32 %v740, %v944
      %v1019 = vadd.f32 %v742, %v946
      %v1020 = vadd.f32 %v745, %v949
      %v1021 = vadd.f32 %v747, %v951
      %v1022 = vadd.f32 %v750, %v954
      %v1023 = vadd.f32 %v752, %v956
      %v1024 = vadd.f32 %v755, %v959
      %v1025 = vadd.f32 %v757, %v961
      %v1026 = vadd.f32 %v760, %v964
      %v1027 = vadd.f32 %v762, %v966
      %v1028 = vadd.f32 %v765, %v969
      %v1029 = vadd.f32 %v767, %v971
      %v1030 = vadd.f32 %v770, %v974
      %v1031 = vadd.f32 %v772, %v976
      %v1032 = vadd.f32 %v775, %v979
      %v1033 = vadd.f32 %v777, %v981
      %v1034 = vadd.f32 %v780, %v984
      %v1035 = vadd.f32 %v782, %v986
      %v1036 = vadd.f32 %v785, %v989
      %v1037 = vadd.f32 %v787, %v991
      %v1038 = vadd.f32 %v790, %v994
      %v1039 = vadd.f32 %v792, %v996
      %v1040 = vadd.f32 %v795, %v999
      %v1041 = vadd.f32 %v797, %v1001
      %v1042 = vadd.f32 %v800, %v1004
      %v1043 = vadd.f32 %v802, %v1006
      %v1044 = vld [vmem:[%s207 + $0x8] sm:$0xe]
      %v1045 = vld [vmem:[%s207 + $0xc] sm:$0xf]
      %v1046 = vld [vmem:[%s207 + $0x10] sm:$0xf]
      %v1047 = vld [vmem:[%s207 + $0x14] sm:$0xf]
      %v1048 = vld [vmem:[%s207 + $0x18] sm:$0xf]
      %v1049 = vld [vmem:[%s207 + $0x1c] sm:$0xf]
      %v1050 = vld [vmem:[%s207 + $0x20] sm:$0xf]
      %v1051 = vld [vmem:[%s207 + $0x24] sm:$0xf]
      %v1052 = vld [vmem:[%s207 + $0x28] sm:$0xf]
      %v1053 = vld [vmem:[%s207 + $0x2c] sm:$0xf]
      %v1054 = vld [vmem:[%s207 + $0x30] sm:$0xf]
      %v1055 = vld [vmem:[%s207 + $0x34] sm:$0xf]
      %v1056 = vld [vmem:[%s207 + $0x38] sm:$0xf]
      %v1057 = vld [vmem:[%s207 + $0x3c] sm:$0xf]
      %v1058 = vld [vmem:[%s207 + $0x40] sm:$0xf]
      %v1059 = vld [vmem:[%s207 + $0x44] sm:$0xf]
      %v1060 = vld [vmem:[%s207 + $0x48] sm:$0xf]
      %v1061 = vld [vmem:[%s207 + $0x4c] sm:$0xf]
      %v1062 = vld [vmem:[%s207 + $0x50] sm:$0xf]
      %v1063 = vld [vmem:[%s207 + $0x54] sm:$0xf]
      %v1064 = vld [vmem:[%s207 + $0x58] sm:$0xf]
      %v1065 = vld [vmem:[%s207 + $0x5c] sm:$0xf]
      %v1066 = vld [vmem:[%s207 + $0x60] sm:$0xf]
      %v1067 = vld [vmem:[%s207 + $0x64] sm:$0xf]
      %v1068 = vld [vmem:[%s207 + $0x68] sm:$0xf]
      %v1069 = vld [vmem:[%s207 + $0x6c] sm:$0xf]
      %v1070 = vld [vmem:[%s207 + $0x70] sm:$0xf]
      %v1071 = vld [vmem:[%s207 + $0x74] sm:$0xf]
      %v1072 = vld [vmem:[%s207 + $0x78] sm:$0xf]
      %v1073 = vld [vmem:[%s207 + $0x7c] sm:$0xf]
      %v1074 = vld [vmem:[%s207 + $0x80] sm:$0xf]
      %v1075 = vld [vmem:[%s207 + $0x84] sm:$0xf]
      %v1076 = vld [vmem:[%s207 + $0x88] sm:$0xf]
      %v1077 = vld [vmem:[%s207 + $0x8c] sm:$0xf]
      %v1078 = vld [vmem:[%s207 + $0x90] sm:$0xf]
      %v1079 = vld [vmem:[%s207 + $0x94] sm:$0xf]
      %v1080 = vld [vmem:[%s207 + $0x98] sm:$0x1]
      %s1081 = scalar_lea.vmem %s1, 24
      %v1082 = vld [vmem:[%s1081] sm:$0xf]
      %v1083 = vld [vmem:[%s1081 + $0x4] sm:$0xf]
      %v1121 = vunpack.c.l.b16 %v1044
      %v1122 = vunpack.c.l.b16 %v1045
      %v1123 = vunpack.c.l.b16 %v1046
      %v1124 = vunpack.c.l.b16 %v1047
      %v1125 = vunpack.c.l.b16 %v1048
      %v1126 = vunpack.c.l.b16 %v1049
      %v1127 = vunpack.c.l.b16 %v1050
      %v1128 = vunpack.c.l.b16 %v1051
      %v1129 = vunpack.c.l.b16 %v1052
      %v1130 = vunpack.c.l.b16 %v1053
      %v1131 = vunpack.c.l.b16 %v1054
      %v1132 = vunpack.c.l.b16 %v1055
      %v1133 = vunpack.c.l.b16 %v1056
      %v1134 = vunpack.c.l.b16 %v1057
      %v1135 = vunpack.c.l.b16 %v1058
      %v1136 = vunpack.c.l.b16 %v1059
      %v1137 = vunpack.c.l.b16 %v1060
      %v1138 = vunpack.c.l.b16 %v1061
      %v1139 = vunpack.c.l.b16 %v1062
      %v1140 = vunpack.c.l.b16 %v1063
      %v1141 = vunpack.c.l.b16 %v1064
      %v1142 = vunpack.c.l.b16 %v1065
      %v1143 = vunpack.c.l.b16 %v1066
      %v1144 = vunpack.c.l.b16 %v1067
      %v1145 = vunpack.c.l.b16 %v1068
      %v1146 = vunpack.c.l.b16 %v1069
      %v1147 = vunpack.c.l.b16 %v1070
      %v1148 = vunpack.c.l.b16 %v1071
      %v1149 = vunpack.c.l.b16 %v1072
      %v1150 = vunpack.c.l.b16 %v1073
      %v1151 = vunpack.c.l.b16 %v1074
      %v1152 = vunpack.c.l.b16 %v1075
      %v1153 = vunpack.c.l.b16 %v1076
      %v1154 = vunpack.c.l.b16 %v1077
      %v1155 = vunpack.c.l.b16 %v1078
      %v1156 = vunpack.c.l.b16 %v1079
      %v1157 = vunpack.c.l.b16 %v1080
      %v1158 = vpack.c.b16 %v1122, %v1121
      %v1159 = vpack.c.b16 %v1124, %v1123
      %v1160 = vpack.c.b16 %v1126, %v1125
      %v1161 = vpack.c.b16 %v1128, %v1127
      %v1162 = vpack.c.b16 %v1130, %v1129
      %v1163 = vpack.c.b16 %v1132, %v1131
      %v1164 = vpack.c.b16 %v1134, %v1133
      %v1165 = vpack.c.b16 %v1136, %v1135
      %v1166 = vpack.c.b16 %v1138, %v1137
      %v1167 = vpack.c.b16 %v1140, %v1139
      %v1168 = vpack.c.b16 %v1142, %v1141
      %v1169 = vpack.c.b16 %v1144, %v1143
      %v1170 = vpack.c.b16 %v1146, %v1145
      %v1171 = vpack.c.b16 %v1148, %v1147
      %v1172 = vpack.c.b16 %v1150, %v1149
      %v1173 = vpack.c.b16 %v1152, %v1151
      %v1174 = vpack.c.b16 %v1154, %v1153
      %v1175 = vpack.c.b16 %v1156, %v1155
      %v1176 = vpack.c.b16 %v1157, %v1157
      %v1177 = vrot.slane %v1158, 1
      %v1178 = vrot.slane %v1159, 1
      %v1179 = vsel %vm811, %v1177, %v1178
      %v1180 = vrot.slane %v1160, 1
      %v1181 = vsel %vm811, %v1178, %v1180
      %v1182 = vrot.slane %v1161, 1
      %v1183 = vsel %vm811, %v1180, %v1182
      %v1184 = vrot.slane %v1162, 1
      %v1185 = vsel %vm811, %v1182, %v1184
      %v1186 = vrot.slane %v1163, 1
      %v1187 = vsel %vm811, %v1184, %v1186
      %v1188 = vrot.slane %v1164, 1
      %v1189 = vsel %vm811, %v1186, %v1188
      %v1190 = vrot.slane %v1165, 1
      %v1191 = vsel %vm811, %v1188, %v1190
      %v1192 = vrot.slane %v1166, 1
      %v1193 = vsel %vm811, %v1190, %v1192
      %v1194 = vrot.slane %v1167, 1
      %v1195 = vsel %vm811, %v1192, %v1194
      %v1196 = vrot.slane %v1168, 1
      %v1197 = vsel %vm811, %v1194, %v1196
      %v1198 = vrot.slane %v1169, 1
      %v1199 = vsel %vm811, %v1196, %v1198
      %v1200 = vrot.slane %v1170, 1
      %v1201 = vsel %vm811, %v1198, %v1200
      %v1202 = vrot.slane %v1171, 1
      %v1203 = vsel %vm811, %v1200, %v1202
      %v1204 = vrot.slane %v1172, 1
      %v1205 = vsel %vm811, %v1202, %v1204
      %v1206 = vrot.slane %v1173, 1
      %v1207 = vsel %vm811, %v1204, %v1206
      %v1208 = vrot.slane %v1174, 1
      %v1209 = vsel %vm811, %v1206, %v1208
      %v1210 = vrot.slane %v1175, 1
      %v1211 = vsel %vm811, %v1208, %v1210
      %v1212 = vrot.slane %v1176, 1
      %v1213 = vsel %vm811, %v1210, %v1212
      %v1216 = vunpack.c.l.b16 %v1082
      %v1217 = vunpack.c.l.b16 %v1083
      %v1218 = vpack.c.b16 %v1217, %v1216
      %v1221 = vsel %vm509, %v1179, 0
      %v1224 = vsel %vm509, %v1181, 0
      %v1227 = vsel %vm509, %v1183, 0
      %v1230 = vsel %vm509, %v1185, 0
      %v1233 = vsel %vm509, %v1187, 0
      %v1236 = vsel %vm509, %v1189, 0
      %v1239 = vsel %vm509, %v1191, 0
      %v1242 = vsel %vm509, %v1193, 0
      %v1245 = vsel %vm509, %v1195, 0
      %v1248 = vsel %vm509, %v1197, 0
      %v1251 = vsel %vm509, %v1199, 0
      %v1254 = vsel %vm509, %v1201, 0
      %v1257 = vsel %vm509, %v1203, 0
      %v1260 = vsel %vm509, %v1205, 0
      %v1263 = vsel %vm509, %v1207, 0
      %v1266 = vsel %vm509, %v1209, 0
      %v1269 = vsel %vm509, %v1211, 0
      %v1272 = vsel %vm509, %v1213, 0
      %1274 = vmatpush.bf16.msra.mxu0 0
      %1275 = vmatpush.bf16.msra.mxu0 0
      %1276 = vmatpush.bf16.msra.mxu0 0
      %1277 = vmatpush.bf16.msra.mxu0 0
      %1278 = vmatpush.bf16.msra.mxu0 0
      %1279 = vmatpush.bf16.msra.mxu0 0
      %1280 = vmatpush.bf16.msra.mxu0 0
      %1281 = vmatpush.bf16.msra.mxu0 %v1218
      %1282 = vmatmul.bf16.gmra.mxu0 %v1221
      %v1283 = vpop.f32.mrf.mxu0
      %v1284 = vadd.f32 0.0, %v1283
      %v1285 = vpop.f32.mrf.mxu0
      %v1286 = vadd.f32 0.0, %v1285
      %1287 = vmatmul.bf16.gmra.mxu0 %v1224
      %v1288 = vpop.f32.mrf.mxu0
      %v1289 = vadd.f32 0.0, %v1288
      %v1290 = vpop.f32.mrf.mxu0
      %v1291 = vadd.f32 0.0, %v1290
      %1292 = vmatmul.bf16.gmra.mxu0 %v1227
      %v1293 = vpop.f32.mrf.mxu0
      %v1294 = vadd.f32 0.0, %v1293
      %v1295 = vpop.f32.mrf.mxu0
      %v1296 = vadd.f32 0.0, %v1295
      %1297 = vmatmul.bf16.gmra.mxu0 %v1230
      %v1298 = vpop.f32.mrf.mxu0
      %v1299 = vadd.f32 0.0, %v1298
      %v1300 = vpop.f32.mrf.mxu0
      %v1301 = vadd.f32 0.0, %v1300
      %1302 = vmatmul.bf16.gmra.mxu0 %v1233
      %v1303 = vpop.f32.mrf.mxu0
      %v1304 = vadd.f32 0.0, %v1303
      %v1305 = vpop.f32.mrf.mxu0
      %v1306 = vadd.f32 0.0, %v1305
      %1307 = vmatmul.bf16.gmra.mxu0 %v1236
      %v1308 = vpop.f32.mrf.mxu0
      %v1309 = vadd.f32 0.0, %v1308
      %v1310 = vpop.f32.mrf.mxu0
      %v1311 = vadd.f32 0.0, %v1310
      %1312 = vmatmul.bf16.gmra.mxu0 %v1239
      %v1313 = vpop.f32.mrf.mxu0
      %v1314 = vadd.f32 0.0, %v1313
      %v1315 = vpop.f32.mrf.mxu0
      %v1316 = vadd.f32 0.0, %v1315
      %1317 = vmatmul.bf16.gmra.mxu0 %v1242
      %v1318 = vpop.f32.mrf.mxu0
      %v1319 = vadd.f32 0.0, %v1318
      %v1320 = vpop.f32.mrf.mxu0
      %v1321 = vadd.f32 0.0, %v1320
      %1322 = vmatmul.bf16.gmra.mxu0 %v1245
      %v1323 = vpop.f32.mrf.mxu0
      %v1324 = vadd.f32 0.0, %v1323
      %v1325 = vpop.f32.mrf.mxu0
      %v1326 = vadd.f32 0.0, %v1325
      %1327 = vmatmul.bf16.gmra.mxu0 %v1248
      %v1328 = vpop.f32.mrf.mxu0
      %v1329 = vadd.f32 0.0, %v1328
      %v1330 = vpop.f32.mrf.mxu0
      %v1331 = vadd.f32 0.0, %v1330
      %1332 = vmatmul.bf16.gmra.mxu0 %v1251
      %v1333 = vpop.f32.mrf.mxu0
      %v1334 = vadd.f32 0.0, %v1333
      %v1335 = vpop.f32.mrf.mxu0
      %v1336 = vadd.f32 0.0, %v1335
      %1337 = vmatmul.bf16.gmra.mxu0 %v1254
      %v1338 = vpop.f32.mrf.mxu0
      %v1339 = vadd.f32 0.0, %v1338
      %v1340 = vpop.f32.mrf.mxu0
      %v1341 = vadd.f32 0.0, %v1340
      %1342 = vmatmul.bf16.gmra.mxu0 %v1257
      %v1343 = vpop.f32.mrf.mxu0
      %v1344 = vadd.f32 0.0, %v1343
      %v1345 = vpop.f32.mrf.mxu0
      %v1346 = vadd.f32 0.0, %v1345
      %1347 = vmatmul.bf16.gmra.mxu0 %v1260
      %v1348 = vpop.f32.mrf.mxu0
      %v1349 = vadd.f32 0.0, %v1348
      %v1350 = vpop.f32.mrf.mxu0
      %v1351 = vadd.f32 0.0, %v1350
      %1352 = vmatmul.bf16.gmra.mxu0 %v1263
      %v1353 = vpop.f32.mrf.mxu0
      %v1354 = vadd.f32 0.0, %v1353
      %v1355 = vpop.f32.mrf.mxu0
      %v1356 = vadd.f32 0.0, %v1355
      %1357 = vmatmul.bf16.gmra.mxu0 %v1266
      %v1358 = vpop.f32.mrf.mxu0
      %v1359 = vadd.f32 0.0, %v1358
      %v1360 = vpop.f32.mrf.mxu0
      %v1361 = vadd.f32 0.0, %v1360
      %1362 = vmatmul.bf16.gmra.mxu0 %v1269
      %v1363 = vpop.f32.mrf.mxu0
      %v1364 = vadd.f32 0.0, %v1363
      %v1365 = vpop.f32.mrf.mxu0
      %v1366 = vadd.f32 0.0, %v1365
      %1367 = vmatmul.bf16.gmra.mxu0 %v1272
      %v1368 = vpop.f32.mrf.mxu0
      %v1369 = vadd.f32 0.0, %v1368
      %v1370 = vpop.f32.mrf.mxu0
      %v1371 = vadd.f32 0.0, %v1370
      %1372 = vdwg.mxu0
      %v1373 = vadd.f32 %v1008, %v1284
      %v1374 = vadd.f32 %v1009, %v1286
      %v1375 = vadd.f32 %v1010, %v1289
      %v1376 = vadd.f32 %v1011, %v1291
      %v1377 = vadd.f32 %v1012, %v1294
      %v1378 = vadd.f32 %v1013, %v1296
      %v1379 = vadd.f32 %v1014, %v1299
      %v1380 = vadd.f32 %v1015, %v1301
      %v1381 = vadd.f32 %v1016, %v1304
      %v1382 = vadd.f32 %v1017, %v1306
      %v1383 = vadd.f32 %v1018, %v1309
      %v1384 = vadd.f32 %v1019, %v1311
      %v1385 = vadd.f32 %v1020, %v1314
      %v1386 = vadd.f32 %v1021, %v1316
      %v1387 = vadd.f32 %v1022, %v1319
      %v1388 = vadd.f32 %v1023, %v1321
      %v1389 = vadd.f32 %v1024, %v1324
      %v1390 = vadd.f32 %v1025, %v1326
      %v1391 = vadd.f32 %v1026, %v1329
      %v1392 = vadd.f32 %v1027, %v1331
      %v1393 = vadd.f32 %v1028, %v1334
      %v1394 = vadd.f32 %v1029, %v1336
      %v1395 = vadd.f32 %v1030, %v1339
      %v1396 = vadd.f32 %v1031, %v1341
      %v1397 = vadd.f32 %v1032, %v1344
      %v1398 = vadd.f32 %v1033, %v1346
      %v1399 = vadd.f32 %v1034, %v1349
      %v1400 = vadd.f32 %v1035, %v1351
      %v1401 = vadd.f32 %v1036, %v1354
      %v1402 = vadd.f32 %v1037, %v1356
      %v1403 = vadd.f32 %v1038, %v1359
      %v1404 = vadd.f32 %v1039, %v1361
      %v1405 = vadd.f32 %v1040, %v1364
      %v1406 = vadd.f32 %v1041, %v1366
      %v1407 = vadd.f32 %v1042, %v1369
      %v1408 = vadd.f32 %v1043, %v1371
      %v1409 = vld [vmem:[%s207 + $0x98] sm:$0x3]
      %s1410 = scalar_lea.vmem %s1, 32
      %v1411 = vld [vmem:[%s1410] sm:$0xf]
      %v1412 = vld [vmem:[%s1410 + $0x4] sm:$0xf]
      %v1414 = vunpack.c.l.b16 %v1409
      %v1415 = vpack.c.b16 %v1414, %v1414
      %vm1416 = vsmask.f32 6400
      %v1418 = vshrl.u32 %v1158, 16
      %v1420 = vrot.slane %v1418, 1
      %v1421 = vshll.u32 %v1158, 16
      %v1423 = vrot.slane %v1421, 2
      %v1424 = vor.u32 %v1420, %v1423
      %v1426 = vshrl.u32 %v1159, 16
      %v1428 = vrot.slane %v1426, 1
      %v1429 = vshll.u32 %v1159, 16
      %v1431 = vrot.slane %v1429, 2
      %v1432 = vor.u32 %v1428, %v1431
      %v1433 = vsel %vm1416, %v1424, %v1432
      %v1435 = vshrl.u32 %v1160, 16
      %v1437 = vrot.slane %v1435, 1
      %v1438 = vshll.u32 %v1160, 16
      %v1440 = vrot.slane %v1438, 2
      %v1441 = vor.u32 %v1437, %v1440
      %v1442 = vsel %vm1416, %v1432, %v1441
      %v1444 = vshrl.u32 %v1161, 16
      %v1446 = vrot.slane %v1444, 1
      %v1447 = vshll.u32 %v1161, 16
      %v1449 = vrot.slane %v1447, 2
      %v1450 = vor.u32 %v1446, %v1449
      %v1451 = vsel %vm1416, %v1441, %v1450
      %v1453 = vshrl.u32 %v1162, 16
      %v1455 = vrot.slane %v1453, 1
      %v1456 = vshll.u32 %v1162, 16
      %v1458 = vrot.slane %v1456, 2
      %v1459 = vor.u32 %v1455, %v1458
      %v1460 = vsel %vm1416, %v1450, %v1459
      %v1462 = vshrl.u32 %v1163, 16
      %v1464 = vrot.slane %v1462, 1
      %v1465 = vshll.u32 %v1163, 16
      %v1467 = vrot.slane %v1465, 2
      %v1468 = vor.u32 %v1464, %v1467
      %v1469 = vsel %vm1416, %v1459, %v1468
      %v1471 = vshrl.u32 %v1164, 16
      %v1473 = vrot.slane %v1471, 1
      %v1474 = vshll.u32 %v1164, 16
      %v1476 = vrot.slane %v1474, 2
      %v1477 = vor.u32 %v1473, %v1476
      %v1478 = vsel %vm1416, %v1468, %v1477
      %v1480 = vshrl.u32 %v1165, 16
      %v1482 = vrot.slane %v1480, 1
      %v1483 = vshll.u32 %v1165, 16
      %v1485 = vrot.slane %v1483, 2
      %v1486 = vor.u32 %v1482, %v1485
      %v1487 = vsel %vm1416, %v1477, %v1486
      %v1489 = vshrl.u32 %v1166, 16
      %v1491 = vrot.slane %v1489, 1
      %v1492 = vshll.u32 %v1166, 16
      %v1494 = vrot.slane %v1492, 2
      %v1495 = vor.u32 %v1491, %v1494
      %v1496 = vsel %vm1416, %v1486, %v1495
      %v1498 = vshrl.u32 %v1167, 16
      %v1500 = vrot.slane %v1498, 1
      %v1501 = vshll.u32 %v1167, 16
      %v1503 = vrot.slane %v1501, 2
      %v1504 = vor.u32 %v1500, %v1503
      %v1505 = vsel %vm1416, %v1495, %v1504
      %v1507 = vshrl.u32 %v1168, 16
      %v1509 = vrot.slane %v1507, 1
      %v1510 = vshll.u32 %v1168, 16
      %v1512 = vrot.slane %v1510, 2
      %v1513 = vor.u32 %v1509, %v1512
      %v1514 = vsel %vm1416, %v1504, %v1513
      %v1516 = vshrl.u32 %v1169, 16
      %v1518 = vrot.slane %v1516, 1
      %v1519 = vshll.u32 %v1169, 16
      %v1521 = vrot.slane %v1519, 2
      %v1522 = vor.u32 %v1518, %v1521
      %v1523 = vsel %vm1416, %v1513, %v1522
      %v1525 = vshrl.u32 %v1170, 16
      %v1527 = vrot.slane %v1525, 1
      %v1528 = vshll.u32 %v1170, 16
      %v1530 = vrot.slane %v1528, 2
      %v1531 = vor.u32 %v1527, %v1530
      %v1532 = vsel %vm1416, %v1522, %v1531
      %v1534 = vshrl.u32 %v1171, 16
      %v1536 = vrot.slane %v1534, 1
      %v1537 = vshll.u32 %v1171, 16
      %v1539 = vrot.slane %v1537, 2
      %v1540 = vor.u32 %v1536, %v1539
      %v1541 = vsel %vm1416, %v1531, %v1540
      %v1543 = vshrl.u32 %v1172, 16
      %v1545 = vrot.slane %v1543, 1
      %v1546 = vshll.u32 %v1172, 16
      %v1548 = vrot.slane %v1546, 2
      %v1549 = vor.u32 %v1545, %v1548
      %v1550 = vsel %vm1416, %v1540, %v1549
      %v1552 = vshrl.u32 %v1173, 16
      %v1554 = vrot.slane %v1552, 1
      %v1555 = vshll.u32 %v1173, 16
      %v1557 = vrot.slane %v1555, 2
      %v1558 = vor.u32 %v1554, %v1557
      %v1559 = vsel %vm1416, %v1549, %v1558
      %v1561 = vshrl.u32 %v1174, 16
      %v1563 = vrot.slane %v1561, 1
      %v1564 = vshll.u32 %v1174, 16
      %v1566 = vrot.slane %v1564, 2
      %v1567 = vor.u32 %v1563, %v1566
      %v1568 = vsel %vm1416, %v1558, %v1567
      %v1570 = vshrl.u32 %v1175, 16
      %v1572 = vrot.slane %v1570, 1
      %v1573 = vshll.u32 %v1175, 16
      %v1575 = vrot.slane %v1573, 2
      %v1576 = vor.u32 %v1572, %v1575
      %v1577 = vsel %vm1416, %v1567, %v1576
      %v1579 = vshrl.u32 %v1415, 16
      %v1581 = vrot.slane %v1579, 1
      %v1582 = vshll.u32 %v1415, 16
      %v1584 = vrot.slane %v1582, 2
      %v1585 = vor.u32 %v1581, %v1584
      %v1586 = vsel %vm1416, %v1576, %v1585
      %v1589 = vunpack.c.l.b16 %v1411
      %v1590 = vunpack.c.l.b16 %v1412
      %v1591 = vpack.c.b16 %v1590, %v1589
      %v1594 = vsel %vm509, %v1433, 0
      %v1597 = vsel %vm509, %v1442, 0
      %v1600 = vsel %vm509, %v1451, 0
      %v1603 = vsel %vm509, %v1460, 0
      %v1606 = vsel %vm509, %v1469, 0
      %v1609 = vsel %vm509, %v1478, 0
      %v1612 = vsel %vm509, %v1487, 0
      %v1615 = vsel %vm509, %v1496, 0
      %v1618 = vsel %vm509, %v1505, 0
      %v1621 = vsel %vm509, %v1514, 0
      %v1624 = vsel %vm509, %v1523, 0
      %v1627 = vsel %vm509, %v1532, 0
      %v1630 = vsel %vm509, %v1541, 0
      %v1633 = vsel %vm509, %v1550, 0
      %v1636 = vsel %vm509, %v1559, 0
      %v1639 = vsel %vm509, %v1568, 0
      %v1642 = vsel %vm509, %v1577, 0
      %v1645 = vsel %vm509, %v1586, 0
      %1647 = vmatpush.bf16.msra.mxu0 0
      %1648 = vmatpush.bf16.msra.mxu0 0
      %1649 = vmatpush.bf16.msra.mxu0 0
      %1650 = vmatpush.bf16.msra.mxu0 0
      %1651 = vmatpush.bf16.msra.mxu0 0
      %1652 = vmatpush.bf16.msra.mxu0 0
      %1653 = vmatpush.bf16.msra.mxu0 0
      %1654 = vmatpush.bf16.msra.mxu0 %v1591
      %1655 = vmatmul.bf16.gmra.mxu0 %v1594
      %v1656 = vpop.f32.mrf.mxu0
      %v1657 = vadd.f32 0.0, %v1656
      %v1658 = vpop.f32.mrf.mxu0
      %v1659 = vadd.f32 0.0, %v1658
      %1660 = vmatmul.bf16.gmra.mxu0 %v1597
      %v1661 = vpop.f32.mrf.mxu0
      %v1662 = vadd.f32 0.0, %v1661
      %v1663 = vpop.f32.mrf.mxu0
      %v1664 = vadd.f32 0.0, %v1663
      %1665 = vmatmul.bf16.gmra.mxu0 %v1600
      %v1666 = vpop.f32.mrf.mxu0
      %v1667 = vadd.f32 0.0, %v1666
      %v1668 = vpop.f32.mrf.mxu0
      %v1669 = vadd.f32 0.0, %v1668
      %1670 = vmatmul.bf16.gmra.mxu0 %v1603
      %v1671 = vpop.f32.mrf.mxu0
      %v1672 = vadd.f32 0.0, %v1671
      %v1673 = vpop.f32.mrf.mxu0
      %v1674 = vadd.f32 0.0, %v1673
      %1675 = vmatmul.bf16.gmra.mxu0 %v1606
      %v1676 = vpop.f32.mrf.mxu0
      %v1677 = vadd.f32 0.0, %v1676
      %v1678 = vpop.f32.mrf.mxu0
      %v1679 = vadd.f32 0.0, %v1678
      %1680 = vmatmul.bf16.gmra.mxu0 %v1609
      %v1681 = vpop.f32.mrf.mxu0
      %v1682 = vadd.f32 0.0, %v1681
      %v1683 = vpop.f32.mrf.mxu0
      %v1684 = vadd.f32 0.0, %v1683
      %1685 = vmatmul.bf16.gmra.mxu0 %v1612
      %v1686 = vpop.f32.mrf.mxu0
      %v1687 = vadd.f32 0.0, %v1686
      %v1688 = vpop.f32.mrf.mxu0
      %v1689 = vadd.f32 0.0, %v1688
      %1690 = vmatmul.bf16.gmra.mxu0 %v1615
      %v1691 = vpop.f32.mrf.mxu0
      %v1692 = vadd.f32 0.0, %v1691
      %v1693 = vpop.f32.mrf.mxu0
      %v1694 = vadd.f32 0.0, %v1693
      %1695 = vmatmul.bf16.gmra.mxu0 %v1618
      %v1696 = vpop.f32.mrf.mxu0
      %v1697 = vadd.f32 0.0, %v1696
      %v1698 = vpop.f32.mrf.mxu0
      %v1699 = vadd.f32 0.0, %v1698
      %1700 = vmatmul.bf16.gmra.mxu0 %v1621
      %v1701 = vpop.f32.mrf.mxu0
      %v1702 = vadd.f32 0.0, %v1701
      %v1703 = vpop.f32.mrf.mxu0
      %v1704 = vadd.f32 0.0, %v1703
      %1705 = vmatmul.bf16.gmra.mxu0 %v1624
      %v1706 = vpop.f32.mrf.mxu0
      %v1707 = vadd.f32 0.0, %v1706
      %v1708 = vpop.f32.mrf.mxu0
      %v1709 = vadd.f32 0.0, %v1708
      %1710 = vmatmul.bf16.gmra.mxu0 %v1627
      %v1711 = vpop.f32.mrf.mxu0
      %v1712 = vadd.f32 0.0, %v1711
      %v1713 = vpop.f32.mrf.mxu0
      %v1714 = vadd.f32 0.0, %v1713
      %1715 = vmatmul.bf16.gmra.mxu0 %v1630
      %v1716 = vpop.f32.mrf.mxu0
      %v1717 = vadd.f32 0.0, %v1716
      %v1718 = vpop.f32.mrf.mxu0
      %v1719 = vadd.f32 0.0, %v1718
      %1720 = vmatmul.bf16.gmra.mxu0 %v1633
      %v1721 = vpop.f32.mrf.mxu0
      %v1722 = vadd.f32 0.0, %v1721
      %v1723 = vpop.f32.mrf.mxu0
      %v1724 = vadd.f32 0.0, %v1723
      %1725 = vmatmul.bf16.gmra.mxu0 %v1636
      %v1726 = vpop.f32.mrf.mxu0
      %v1727 = vadd.f32 0.0, %v1726
      %v1728 = vpop.f32.mrf.mxu0
      %v1729 = vadd.f32 0.0, %v1728
      %1730 = vmatmul.bf16.gmra.mxu0 %v1639
      %v1731 = vpop.f32.mrf.mxu0
      %v1732 = vadd.f32 0.0, %v1731
      %v1733 = vpop.f32.mrf.mxu0
      %v1734 = vadd.f32 0.0, %v1733
      %1735 = vmatmul.bf16.gmra.mxu0 %v1642
      %v1736 = vpop.f32.mrf.mxu0
      %v1737 = vadd.f32 0.0, %v1736
      %v1738 = vpop.f32.mrf.mxu0
      %v1739 = vadd.f32 0.0, %v1738
      %1740 = vmatmul.bf16.gmra.mxu0 %v1645
      %v1741 = vpop.f32.mrf.mxu0
      %v1742 = vadd.f32 0.0, %v1741
      %v1743 = vpop.f32.mrf.mxu0
      %v1744 = vadd.f32 0.0, %v1743
      %1745 = vdwg.mxu0
      %v1746 = vadd.f32 %v1373, %v1657
      %v1747 = vadd.f32 %v1374, %v1659
      %v1748 = vadd.f32 %v1375, %v1662
      %v1749 = vadd.f32 %v1376, %v1664
      %v1750 = vadd.f32 %v1377, %v1667
      %v1751 = vadd.f32 %v1378, %v1669
      %v1752 = vadd.f32 %v1379, %v1672
      %v1753 = vadd.f32 %v1380, %v1674
      %v1754 = vadd.f32 %v1381, %v1677
      %v1755 = vadd.f32 %v1382, %v1679
      %v1756 = vadd.f32 %v1383, %v1682
      %v1757 = vadd.f32 %v1384, %v1684
      %v1758 = vadd.f32 %v1385, %v1687
      %v1759 = vadd.f32 %v1386, %v1689
      %v1760 = vadd.f32 %v1387, %v1692
      %v1761 = vadd.f32 %v1388, %v1694
      %v1762 = vadd.f32 %v1389, %v1697
      %v1763 = vadd.f32 %v1390, %v1699
      %v1764 = vadd.f32 %v1391, %v1702
      %v1765 = vadd.f32 %v1392, %v1704
      %v1766 = vadd.f32 %v1393, %v1707
      %v1767 = vadd.f32 %v1394, %v1709
      %v1768 = vadd.f32 %v1395, %v1712
      %v1769 = vadd.f32 %v1396, %v1714
      %v1770 = vadd.f32 %v1397, %v1717
      %v1771 = vadd.f32 %v1398, %v1719
      %v1772 = vadd.f32 %v1399, %v1722
      %v1773 = vadd.f32 %v1400, %v1724
      %v1774 = vadd.f32 %v1401, %v1727
      %v1775 = vadd.f32 %v1402, %v1729
      %v1776 = vadd.f32 %v1403, %v1732
      %v1777 = vadd.f32 %v1404, %v1734
      %v1778 = vadd.f32 %v1405, %v1737
      %v1779 = vadd.f32 %v1406, %v1739
      %v1780 = vadd.f32 %v1407, %v1742
      %v1781 = vadd.f32 %v1408, %v1744
      %v1782 = vld [vmem:[%s207 + $0x8] sm:$0xc]
      %s1783 = scalar_lea.vmem %s1, 40
      %v1784 = vld [vmem:[%s1783] sm:$0xf]
      %v1785 = vld [vmem:[%s1783 + $0x4] sm:$0xf]
      %v1787 = vunpack.c.l.b16 %v1782
      %v1788 = vpack.c.b16 %v1122, %v1787
      %vm1789 = vcmask 1045504
      %v1790 = vrot.slane %v1788, 2
      %v1791 = vrot.slane %v1159, 2
      %v1792 = vsel %vm1789, %v1790, %v1791
      %v1793 = vrot.slane %v1160, 2
      %v1794 = vsel %vm1789, %v1791, %v1793
      %v1795 = vrot.slane %v1161, 2
      %v1796 = vsel %vm1789, %v1793, %v1795
      %v1797 = vrot.slane %v1162, 2
      %v1798 = vsel %vm1789, %v1795, %v1797
      %v1799 = vrot.slane %v1163, 2
      %v1800 = vsel %vm1789, %v1797, %v1799
      %v1801 = vrot.slane %v1164, 2
      %v1802 = vsel %vm1789, %v1799, %v1801
      %v1803 = vrot.slane %v1165, 2
      %v1804 = vsel %vm1789, %v1801, %v1803
      %v1805 = vrot.slane %v1166, 2
      %v1806 = vsel %vm1789, %v1803, %v1805
      %v1807 = vrot.slane %v1167, 2
      %v1808 = vsel %vm1789, %v1805, %v1807
      %v1809 = vrot.slane %v1168, 2
      %v1810 = vsel %vm1789, %v1807, %v1809
      %v1811 = vrot.slane %v1169, 2
      %v1812 = vsel %vm1789, %v1809, %v1811
      %v1813 = vrot.slane %v1170, 2
      %v1814 = vsel %vm1789, %v1811, %v1813
      %v1815 = vrot.slane %v1171, 2
      %v1816 = vsel %vm1789, %v1813, %v1815
      %v1817 = vrot.slane %v1172, 2
      %v1818 = vsel %vm1789, %v1815, %v1817
      %v1819 = vrot.slane %v1173, 2
      %v1820 = vsel %vm1789, %v1817, %v1819
      %v1821 = vrot.slane %v1174, 2
      %v1822 = vsel %vm1789, %v1819, %v1821
      %v1823 = vrot.slane %v1175, 2
      %v1824 = vsel %vm1789, %v1821, %v1823
      %v1825 = vrot.slane %v1415, 2
      %v1826 = vsel %vm1789, %v1823, %v1825
      %v1829 = vunpack.c.l.b16 %v1784
      %v1830 = vunpack.c.l.b16 %v1785
      %v1831 = vpack.c.b16 %v1830, %v1829
      %v1834 = vsel %vm509, %v1792, 0
      %v1837 = vsel %vm509, %v1794, 0
      %v1840 = vsel %vm509, %v1796, 0
      %v1843 = vsel %vm509, %v1798, 0
      %v1846 = vsel %vm509, %v1800, 0
      %v1849 = vsel %vm509, %v1802, 0
      %v1852 = vsel %vm509, %v1804, 0
      %v1855 = vsel %vm509, %v1806, 0
      %v1858 = vsel %vm509, %v1808, 0
      %v1861 = vsel %vm509, %v1810, 0
      %v1864 = vsel %vm509, %v1812, 0
      %v1867 = vsel %vm509, %v1814, 0
      %v1870 = vsel %vm509, %v1816, 0
      %v1873 = vsel %vm509, %v1818, 0
      %v1876 = vsel %vm509, %v1820, 0
      %v1879 = vsel %vm509, %v1822, 0
      %v1882 = vsel %vm509, %v1824, 0
      %v1885 = vsel %vm509, %v1826, 0
      %1887 = vmatpush.bf16.msra.mxu0 0
      %1888 = vmatpush.bf16.msra.mxu0 0
      %1889 = vmatpush.bf16.msra.mxu0 0
      %1890 = vmatpush.bf16.msra.mxu0 0
      %1891 = vmatpush.bf16.msra.mxu0 0
      %1892 = vmatpush.bf16.msra.mxu0 0
      %1893 = vmatpush.bf16.msra.mxu0 0
      %1894 = vmatpush.bf16.msra.mxu0 %v1831
      %1895 = vmatmul.bf16.gmra.mxu0 %v1834
      %v1896 = vpop.f32.mrf.mxu0
      %v1897 = vadd.f32 0.0, %v1896
      %v1898 = vpop.f32.mrf.mxu0
      %v1899 = vadd.f32 0.0, %v1898
      %1900 = vmatmul.bf16.gmra.mxu0 %v1837
      %v1901 = vpop.f32.mrf.mxu0
      %v1902 = vadd.f32 0.0, %v1901
      %v1903 = vpop.f32.mrf.mxu0
      %v1904 = vadd.f32 0.0, %v1903
      %1905 = vmatmul.bf16.gmra.mxu0 %v1840
      %v1906 = vpop.f32.mrf.mxu0
      %v1907 = vadd.f32 0.0, %v1906
      %v1908 = vpop.f32.mrf.mxu0
      %v1909 = vadd.f32 0.0, %v1908
      %1910 = vmatmul.bf16.gmra.mxu0 %v1843
      %v1911 = vpop.f32.mrf.mxu0
      %v1912 = vadd.f32 0.0, %v1911
      %v1913 = vpop.f32.mrf.mxu0
      %v1914 = vadd.f32 0.0, %v1913
      %1915 = vmatmul.bf16.gmra.mxu0 %v1846
      %v1916 = vpop.f32.mrf.mxu0
      %v1917 = vadd.f32 0.0, %v1916
      %v1918 = vpop.f32.mrf.mxu0
      %v1919 = vadd.f32 0.0, %v1918
      %1920 = vmatmul.bf16.gmra.mxu0 %v1849
      %v1921 = vpop.f32.mrf.mxu0
      %v1922 = vadd.f32 0.0, %v1921
      %v1923 = vpop.f32.mrf.mxu0
      %v1924 = vadd.f32 0.0, %v1923
      %1925 = vmatmul.bf16.gmra.mxu0 %v1852
      %v1926 = vpop.f32.mrf.mxu0
      %v1927 = vadd.f32 0.0, %v1926
      %v1928 = vpop.f32.mrf.mxu0
      %v1929 = vadd.f32 0.0, %v1928
      %1930 = vmatmul.bf16.gmra.mxu0 %v1855
      %v1931 = vpop.f32.mrf.mxu0
      %v1932 = vadd.f32 0.0, %v1931
      %v1933 = vpop.f32.mrf.mxu0
      %v1934 = vadd.f32 0.0, %v1933
      %1935 = vmatmul.bf16.gmra.mxu0 %v1858
      %v1936 = vpop.f32.mrf.mxu0
      %v1937 = vadd.f32 0.0, %v1936
      %v1938 = vpop.f32.mrf.mxu0
      %v1939 = vadd.f32 0.0, %v1938
      %1940 = vmatmul.bf16.gmra.mxu0 %v1861
      %v1941 = vpop.f32.mrf.mxu0
      %v1942 = vadd.f32 0.0, %v1941
      %v1943 = vpop.f32.mrf.mxu0
      %v1944 = vadd.f32 0.0, %v1943
      %1945 = vmatmul.bf16.gmra.mxu0 %v1864
      %v1946 = vpop.f32.mrf.mxu0
      %v1947 = vadd.f32 0.0, %v1946
      %v1948 = vpop.f32.mrf.mxu0
      %v1949 = vadd.f32 0.0, %v1948
      %1950 = vmatmul.bf16.gmra.mxu0 %v1867
      %v1951 = vpop.f32.mrf.mxu0
      %v1952 = vadd.f32 0.0, %v1951
      %v1953 = vpop.f32.mrf.mxu0
      %v1954 = vadd.f32 0.0, %v1953
      %1955 = vmatmul.bf16.gmra.mxu0 %v1870
      %v1956 = vpop.f32.mrf.mxu0
      %v1957 = vadd.f32 0.0, %v1956
      %v1958 = vpop.f32.mrf.mxu0
      %v1959 = vadd.f32 0.0, %v1958
      %1960 = vmatmul.bf16.gmra.mxu0 %v1873
      %v1961 = vpop.f32.mrf.mxu0
      %v1962 = vadd.f32 0.0, %v1961
      %v1963 = vpop.f32.mrf.mxu0
      %v1964 = vadd.f32 0.0, %v1963
      %1965 = vmatmul.bf16.gmra.mxu0 %v1876
      %v1966 = vpop.f32.mrf.mxu0
      %v1967 = vadd.f32 0.0, %v1966
      %v1968 = vpop.f32.mrf.mxu0
      %v1969 = vadd.f32 0.0, %v1968
      %1970 = vmatmul.bf16.gmra.mxu0 %v1879
      %v1971 = vpop.f32.mrf.mxu0
      %v1972 = vadd.f32 0.0, %v1971
      %v1973 = vpop.f32.mrf.mxu0
      %v1974 = vadd.f32 0.0, %v1973
      %1975 = vmatmul.bf16.gmra.mxu0 %v1882
      %v1976 = vpop.f32.mrf.mxu0
      %v1977 = vadd.f32 0.0, %v1976
      %v1978 = vpop.f32.mrf.mxu0
      %v1979 = vadd.f32 0.0, %v1978
      %1980 = vmatmul.bf16.gmra.mxu0 %v1885
      %v1981 = vpop.f32.mrf.mxu0
      %v1982 = vadd.f32 0.0, %v1981
      %v1983 = vpop.f32.mrf.mxu0
      %v1984 = vadd.f32 0.0, %v1983
      %1985 = vdwg.mxu0
      %v1986 = vadd.f32 %v1746, %v1897
      %v1987 = vadd.f32 %v1747, %v1899
      %v1988 = vadd.f32 %v1748, %v1902
      %v1989 = vadd.f32 %v1749, %v1904
      %v1990 = vadd.f32 %v1750, %v1907
      %v1991 = vadd.f32 %v1751, %v1909
      %v1992 = vadd.f32 %v1752, %v1912
      %v1993 = vadd.f32 %v1753, %v1914
      %v1994 = vadd.f32 %v1754, %v1917
      %v1995 = vadd.f32 %v1755, %v1919
      %v1996 = vadd.f32 %v1756, %v1922
      %v1997 = vadd.f32 %v1757, %v1924
      %v1998 = vadd.f32 %v1758, %v1927
      %v1999 = vadd.f32 %v1759, %v1929
      %v2000 = vadd.f32 %v1760, %v1932
      %v2001 = vadd.f32 %v1761, %v1934
      %v2002 = vadd.f32 %v1762, %v1937
      %v2003 = vadd.f32 %v1763, %v1939
      %v2004 = vadd.f32 %v1764, %v1942
      %v2005 = vadd.f32 %v1765, %v1944
      %v2006 = vadd.f32 %v1766, %v1947
      %v2007 = vadd.f32 %v1767, %v1949
      %v2008 = vadd.f32 %v1768, %v1952
      %v2009 = vadd.f32 %v1769, %v1954
      %v2010 = vadd.f32 %v1770, %v1957
      %v2011 = vadd.f32 %v1771, %v1959
      %v2012 = vadd.f32 %v1772, %v1962
      %v2013 = vadd.f32 %v1773, %v1964
      %v2014 = vadd.f32 %v1774, %v1967
      %v2015 = vadd.f32 %v1775, %v1969
      %v2016 = vadd.f32 %v1776, %v1972
      %v2017 = vadd.f32 %v1777, %v1974
      %v2018 = vadd.f32 %v1778, %v1977
      %v2019 = vadd.f32 %v1779, %v1979
      %v2020 = vadd.f32 %v1780, %v1982
      %v2021 = vadd.f32 %v1781, %v1984
      %v2022 = vld [vmem:[%s207 + $0x10] sm:$0xc]
      %v2023 = vld [vmem:[%s207 + $0x14] sm:$0xf]
      %v2024 = vld [vmem:[%s207 + $0x18] sm:$0xf]
      %v2025 = vld [vmem:[%s207 + $0x1c] sm:$0xf]
      %v2026 = vld [vmem:[%s207 + $0x20] sm:$0xf]
      %v2027 = vld [vmem:[%s207 + $0x24] sm:$0xf]
      %v2028 = vld [vmem:[%s207 + $0x28] sm:$0xf]
      %v2029 = vld [vmem:[%s207 + $0x2c] sm:$0xf]
      %v2030 = vld [vmem:[%s207 + $0x30] sm:$0xf]
      %v2031 = vld [vmem:[%s207 + $0x34] sm:$0xf]
      %v2032 = vld [vmem:[%s207 + $0x38] sm:$0xf]
      %v2033 = vld [vmem:[%s207 + $0x3c] sm:$0xf]
      %v2034 = vld [vmem:[%s207 + $0x40] sm:$0xf]
      %v2035 = vld [vmem:[%s207 + $0x44] sm:$0xf]
      %v2036 = vld [vmem:[%s207 + $0x48] sm:$0xf]
      %v2037 = vld [vmem:[%s207 + $0x4c] sm:$0xf]
      %v2038 = vld [vmem:[%s207 + $0x50] sm:$0xf]
      %v2039 = vld [vmem:[%s207 + $0x54] sm:$0xf]
      %v2040 = vld [vmem:[%s207 + $0x58] sm:$0xf]
      %v2041 = vld [vmem:[%s207 + $0x5c] sm:$0xf]
      %v2042 = vld [vmem:[%s207 + $0x60] sm:$0xf]
      %v2043 = vld [vmem:[%s207 + $0x64] sm:$0xf]
      %v2044 = vld [vmem:[%s207 + $0x68] sm:$0xf]
      %v2045 = vld [vmem:[%s207 + $0x6c] sm:$0xf]
      %v2046 = vld [vmem:[%s207 + $0x70] sm:$0xf]
      %v2047 = vld [vmem:[%s207 + $0x74] sm:$0xf]
      %v2048 = vld [vmem:[%s207 + $0x78] sm:$0xf]
      %v2049 = vld [vmem:[%s207 + $0x7c] sm:$0xf]
      %v2050 = vld [vmem:[%s207 + $0x80] sm:$0xf]
      %v2051 = vld [vmem:[%s207 + $0x84] sm:$0xf]
      %v2052 = vld [vmem:[%s207 + $0x88] sm:$0xf]
      %v2053 = vld [vmem:[%s207 + $0x8c] sm:$0xf]
      %v2054 = vld [vmem:[%s207 + $0x90] sm:$0xf]
      %v2055 = vld [vmem:[%s207 + $0x94] sm:$0xf]
      %v2056 = vld [vmem:[%s207 + $0x98] sm:$0xf]
      %v2057 = vld [vmem:[%s207 + $0x9c] sm:$0xf]
      %v2058 = vld [vmem:[%s207 + $0xa0] sm:$0x3]
      %s2059 = scalar_lea.vmem %s1, 48
      %v2060 = vld [vmem:[%s2059] sm:$0xf]
      %v2061 = vld [vmem:[%s2059 + $0x4] sm:$0xf]
      %v2099 = vunpack.c.l.b16 %v2022
      %v2100 = vunpack.c.l.b16 %v2023
      %v2101 = vunpack.c.l.b16 %v2024
      %v2102 = vunpack.c.l.b16 %v2025
      %v2103 = vunpack.c.l.b16 %v2026
      %v2104 = vunpack.c.l.b16 %v2027
      %v2105 = vunpack.c.l.b16 %v2028
      %v2106 = vunpack.c.l.b16 %v2029
      %v2107 = vunpack.c.l.b16 %v2030
      %v2108 = vunpack.c.l.b16 %v2031
      %v2109 = vunpack.c.l.b16 %v2032
      %v2110 = vunpack.c.l.b16 %v2033
      %v2111 = vunpack.c.l.b16 %v2034
      %v2112 = vunpack.c.l.b16 %v2035
      %v2113 = vunpack.c.l.b16 %v2036
      %v2114 = vunpack.c.l.b16 %v2037
      %v2115 = vunpack.c.l.b16 %v2038
      %v2116 = vunpack.c.l.b16 %v2039
      %v2117 = vunpack.c.l.b16 %v2040
      %v2118 = vunpack.c.l.b16 %v2041
      %v2119 = vunpack.c.l.b16 %v2042
      %v2120 = vunpack.c.l.b16 %v2043
      %v2121 = vunpack.c.l.b16 %v2044
      %v2122 = vunpack.c.l.b16 %v2045
      %v2123 = vunpack.c.l.b16 %v2046
      %v2124 = vunpack.c.l.b16 %v2047
      %v2125 = vunpack.c.l.b16 %v2048
      %v2126 = vunpack.c.l.b16 %v2049
      %v2127 = vunpack.c.l.b16 %v2050
      %v2128 = vunpack.c.l.b16 %v2051
      %v2129 = vunpack.c.l.b16 %v2052
      %v2130 = vunpack.c.l.b16 %v2053
      %v2131 = vunpack.c.l.b16 %v2054
      %v2132 = vunpack.c.l.b16 %v2055
      %v2133 = vunpack.c.l.b16 %v2056
      %v2134 = vunpack.c.l.b16 %v2057
      %v2135 = vunpack.c.l.b16 %v2058
      %v2136 = vpack.c.b16 %v2100, %v2099
      %v2137 = vpack.c.b16 %v2102, %v2101
      %v2138 = vpack.c.b16 %v2104, %v2103
      %v2139 = vpack.c.b16 %v2106, %v2105
      %v2140 = vpack.c.b16 %v2108, %v2107
      %v2141 = vpack.c.b16 %v2110, %v2109
      %v2142 = vpack.c.b16 %v2112, %v2111
      %v2143 = vpack.c.b16 %v2114, %v2113
      %v2144 = vpack.c.b16 %v2116, %v2115
      %v2145 = vpack.c.b16 %v2118, %v2117
      %v2146 = vpack.c.b16 %v2120, %v2119
      %v2147 = vpack.c.b16 %v2122, %v2121
      %v2148 = vpack.c.b16 %v2124, %v2123
      %v2149 = vpack.c.b16 %v2126, %v2125
      %v2150 = vpack.c.b16 %v2128, %v2127
      %v2151 = vpack.c.b16 %v2130, %v2129
      %v2152 = vpack.c.b16 %v2132, %v2131
      %v2153 = vpack.c.b16 %v2134, %v2133
      %v2154 = vpack.c.b16 %v2135, %v2135
      %v2155 = vrot.slane %v2136, 2
      %v2156 = vrot.slane %v2137, 2
      %v2157 = vsel %vm1789, %v2155, %v2156
      %v2158 = vrot.slane %v2138, 2
      %v2159 = vsel %vm1789, %v2156, %v2158
      %v2160 = vrot.slane %v2139, 2
      %v2161 = vsel %vm1789, %v2158, %v2160
      %v2162 = vrot.slane %v2140, 2
      %v2163 = vsel %vm1789, %v2160, %v2162
      %v2164 = vrot.slane %v2141, 2
      %v2165 = vsel %vm1789, %v2162, %v2164
      %v2166 = vrot.slane %v2142, 2
      %v2167 = vsel %vm1789, %v2164, %v2166
      %v2168 = vrot.slane %v2143, 2
      %v2169 = vsel %vm1789, %v2166, %v2168
      %v2170 = vrot.slane %v2144, 2
      %v2171 = vsel %vm1789, %v2168, %v2170
      %v2172 = vrot.slane %v2145, 2
      %v2173 = vsel %vm1789, %v2170, %v2172
      %v2174 = vrot.slane %v2146, 2
      %v2175 = vsel %vm1789, %v2172, %v2174
      %v2176 = vrot.slane %v2147, 2
      %v2177 = vsel %vm1789, %v2174, %v2176
      %v2178 = vrot.slane %v2148, 2
      %v2179 = vsel %vm1789, %v2176, %v2178
      %v2180 = vrot.slane %v2149, 2
      %v2181 = vsel %vm1789, %v2178, %v2180
      %v2182 = vrot.slane %v2150, 2
      %v2183 = vsel %vm1789, %v2180, %v2182
      %v2184 = vrot.slane %v2151, 2
      %v2185 = vsel %vm1789, %v2182, %v2184
      %v2186 = vrot.slane %v2152, 2
      %v2187 = vsel %vm1789, %v2184, %v2186
      %v2188 = vrot.slane %v2153, 2
      %v2189 = vsel %vm1789, %v2186, %v2188
      %v2190 = vrot.slane %v2154, 2
      %v2191 = vsel %vm1789, %v2188, %v2190
      %v2194 = vunpack.c.l.b16 %v2060
      %v2195 = vunpack.c.l.b16 %v2061
      %v2196 = vpack.c.b16 %v2195, %v2194
      %v2199 = vsel %vm509, %v2157, 0
      %v2202 = vsel %vm509, %v2159, 0
      %v2205 = vsel %vm509, %v2161, 0
      %v2208 = vsel %vm509, %v2163, 0
      %v2211 = vsel %vm509, %v2165, 0
      %v2214 = vsel %vm509, %v2167, 0
      %v2217 = vsel %vm509, %v2169, 0
      %v2220 = vsel %vm509, %v2171, 0
      %v2223 = vsel %vm509, %v2173, 0
      %v2226 = vsel %vm509, %v2175, 0
      %v2229 = vsel %vm509, %v2177, 0
      %v2232 = vsel %vm509, %v2179, 0
      %v2235 = vsel %vm509, %v2181, 0
      %v2238 = vsel %vm509, %v2183, 0
      %v2241 = vsel %vm509, %v2185, 0
      %v2244 = vsel %vm509, %v2187, 0
      %v2247 = vsel %vm509, %v2189, 0
      %v2250 = vsel %vm509, %v2191, 0
      %2252 = vmatpush.bf16.msra.mxu0 0
      %2253 = vmatpush.bf16.msra.mxu0 0
      %2254 = vmatpush.bf16.msra.mxu0 0
      %2255 = vmatpush.bf16.msra.mxu0 0
      %2256 = vmatpush.bf16.msra.mxu0 0
      %2257 = vmatpush.bf16.msra.mxu0 0
      %2258 = vmatpush.bf16.msra.mxu0 0
      %2259 = vmatpush.bf16.msra.mxu0 %v2196
      %2260 = vmatmul.bf16.gmra.mxu0 %v2199
      %v2261 = vpop.f32.mrf.mxu0
      %v2262 = vadd.f32 0.0, %v2261
      %v2263 = vpop.f32.mrf.mxu0
      %v2264 = vadd.f32 0.0, %v2263
      %2265 = vmatmul.bf16.gmra.mxu0 %v2202
      %v2266 = vpop.f32.mrf.mxu0
      %v2267 = vadd.f32 0.0, %v2266
      %v2268 = vpop.f32.mrf.mxu0
      %v2269 = vadd.f32 0.0, %v2268
      %2270 = vmatmul.bf16.gmra.mxu0 %v2205
      %v2271 = vpop.f32.mrf.mxu0
      %v2272 = vadd.f32 0.0, %v2271
      %v2273 = vpop.f32.mrf.mxu0
      %v2274 = vadd.f32 0.0, %v2273
      %2275 = vmatmul.bf16.gmra.mxu0 %v2208
      %v2276 = vpop.f32.mrf.mxu0
      %v2277 = vadd.f32 0.0, %v2276
      %v2278 = vpop.f32.mrf.mxu0
      %v2279 = vadd.f32 0.0, %v2278
      %2280 = vmatmul.bf16.gmra.mxu0 %v2211
      %v2281 = vpop.f32.mrf.mxu0
      %v2282 = vadd.f32 0.0, %v2281
      %v2283 = vpop.f32.mrf.mxu0
      %v2284 = vadd.f32 0.0, %v2283
      %2285 = vmatmul.bf16.gmra.mxu0 %v2214
      %v2286 = vpop.f32.mrf.mxu0
      %v2287 = vadd.f32 0.0, %v2286
      %v2288 = vpop.f32.mrf.mxu0
      %v2289 = vadd.f32 0.0, %v2288
      %2290 = vmatmul.bf16.gmra.mxu0 %v2217
      %v2291 = vpop.f32.mrf.mxu0
      %v2292 = vadd.f32 0.0, %v2291
      %v2293 = vpop.f32.mrf.mxu0
      %v2294 = vadd.f32 0.0, %v2293
      %2295 = vmatmul.bf16.gmra.mxu0 %v2220
      %v2296 = vpop.f32.mrf.mxu0
      %v2297 = vadd.f32 0.0, %v2296
      %v2298 = vpop.f32.mrf.mxu0
      %v2299 = vadd.f32 0.0, %v2298
      %2300 = vmatmul.bf16.gmra.mxu0 %v2223
      %v2301 = vpop.f32.mrf.mxu0
      %v2302 = vadd.f32 0.0, %v2301
      %v2303 = vpop.f32.mrf.mxu0
      %v2304 = vadd.f32 0.0, %v2303
      %2305 = vmatmul.bf16.gmra.mxu0 %v2226
      %v2306 = vpop.f32.mrf.mxu0
      %v2307 = vadd.f32 0.0, %v2306
      %v2308 = vpop.f32.mrf.mxu0
      %v2309 = vadd.f32 0.0, %v2308
      %2310 = vmatmul.bf16.gmra.mxu0 %v2229
      %v2311 = vpop.f32.mrf.mxu0
      %v2312 = vadd.f32 0.0, %v2311
      %v2313 = vpop.f32.mrf.mxu0
      %v2314 = vadd.f32 0.0, %v2313
      %2315 = vmatmul.bf16.gmra.mxu0 %v2232
      %v2316 = vpop.f32.mrf.mxu0
      %v2317 = vadd.f32 0.0, %v2316
      %v2318 = vpop.f32.mrf.mxu0
      %v2319 = vadd.f32 0.0, %v2318
      %2320 = vmatmul.bf16.gmra.mxu0 %v2235
      %v2321 = vpop.f32.mrf.mxu0
      %v2322 = vadd.f32 0.0, %v2321
      %v2323 = vpop.f32.mrf.mxu0
      %v2324 = vadd.f32 0.0, %v2323
      %2325 = vmatmul.bf16.gmra.mxu0 %v2238
      %v2326 = vpop.f32.mrf.mxu0
      %v2327 = vadd.f32 0.0, %v2326
      %v2328 = vpop.f32.mrf.mxu0
      %v2329 = vadd.f32 0.0, %v2328
      %2330 = vmatmul.bf16.gmra.mxu0 %v2241
      %v2331 = vpop.f32.mrf.mxu0
      %v2332 = vadd.f32 0.0, %v2331
      %v2333 = vpop.f32.mrf.mxu0
      %v2334 = vadd.f32 0.0, %v2333
      %2335 = vmatmul.bf16.gmra.mxu0 %v2244
      %v2336 = vpop.f32.mrf.mxu0
      %v2337 = vadd.f32 0.0, %v2336
      %v2338 = vpop.f32.mrf.mxu0
      %v2339 = vadd.f32 0.0, %v2338
      %2340 = vmatmul.bf16.gmra.mxu0 %v2247
      %v2341 = vpop.f32.mrf.mxu0
      %v2342 = vadd.f32 0.0, %v2341
      %v2343 = vpop.f32.mrf.mxu0
      %v2344 = vadd.f32 0.0, %v2343
      %2345 = vmatmul.bf16.gmra.mxu0 %v2250
      %v2346 = vpop.f32.mrf.mxu0
      %v2347 = vadd.f32 0.0, %v2346
      %v2348 = vpop.f32.mrf.mxu0
      %v2349 = vadd.f32 0.0, %v2348
      %2350 = vdwg.mxu0
      %v2351 = vadd.f32 %v1986, %v2262
      %v2352 = vadd.f32 %v1987, %v2264
      %v2353 = vadd.f32 %v1988, %v2267
      %v2354 = vadd.f32 %v1989, %v2269
      %v2355 = vadd.f32 %v1990, %v2272
      %v2356 = vadd.f32 %v1991, %v2274
      %v2357 = vadd.f32 %v1992, %v2277
      %v2358 = vadd.f32 %v1993, %v2279
      %v2359 = vadd.f32 %v1994, %v2282
      %v2360 = vadd.f32 %v1995, %v2284
      %v2361 = vadd.f32 %v1996, %v2287
      %v2362 = vadd.f32 %v1997, %v2289
      %v2363 = vadd.f32 %v1998, %v2292
      %v2364 = vadd.f32 %v1999, %v2294
      %v2365 = vadd.f32 %v2000, %v2297
      %v2366 = vadd.f32 %v2001, %v2299
      %v2367 = vadd.f32 %v2002, %v2302
      %v2368 = vadd.f32 %v2003, %v2304
      %v2369 = vadd.f32 %v2004, %v2307
      %v2370 = vadd.f32 %v2005, %v2309
      %v2371 = vadd.f32 %v2006, %v2312
      %v2372 = vadd.f32 %v2007, %v2314
      %v2373 = vadd.f32 %v2008, %v2317
      %v2374 = vadd.f32 %v2009, %v2319
      %v2375 = vadd.f32 %v2010, %v2322
      %v2376 = vadd.f32 %v2011, %v2324
      %v2377 = vadd.f32 %v2012, %v2327
      %v2378 = vadd.f32 %v2013, %v2329
      %v2379 = vadd.f32 %v2014, %v2332
      %v2380 = vadd.f32 %v2015, %v2334
      %v2381 = vadd.f32 %v2016, %v2337
      %v2382 = vadd.f32 %v2017, %v2339
      %v2383 = vadd.f32 %v2018, %v2342
      %v2384 = vadd.f32 %v2019, %v2344
      %v2385 = vadd.f32 %v2020, %v2347
      %v2386 = vadd.f32 %v2021, %v2349
      %v2387 = vld [vmem:[%s207 + $0xa0] sm:$0x7]
      %s2388 = scalar_lea.vmem %s1, 56
      %v2389 = vld [vmem:[%s2388] sm:$0xf]
      %v2390 = vld [vmem:[%s2388 + $0x4] sm:$0xf]
      %v2392 = vunpack.c.l.b16 %v2387
      %v2393 = vpack.c.b16 %v2392, %v2392
      %vm2394 = vsmask.f32 5376
      %v2396 = vshrl.u32 %v2136, 16
      %v2398 = vrot.slane %v2396, 2
      %v2399 = vshll.u32 %v2136, 16
      %v2401 = vrot.slane %v2399, 3
      %v2402 = vor.u32 %v2398, %v2401
      %v2404 = vshrl.u32 %v2137, 16
      %v2406 = vrot.slane %v2404, 2
      %v2407 = vshll.u32 %v2137, 16
      %v2409 = vrot.slane %v2407, 3
      %v2410 = vor.u32 %v2406, %v2409
      %v2411 = vsel %vm2394, %v2402, %v2410
      %v2413 = vshrl.u32 %v2138, 16
      %v2415 = vrot.slane %v2413, 2
      %v2416 = vshll.u32 %v2138, 16
      %v2418 = vrot.slane %v2416, 3
      %v2419 = vor.u32 %v2415, %v2418
      %v2420 = vsel %vm2394, %v2410, %v2419
      %v2422 = vshrl.u32 %v2139, 16
      %v2424 = vrot.slane %v2422, 2
      %v2425 = vshll.u32 %v2139, 16
      %v2427 = vrot.slane %v2425, 3
      %v2428 = vor.u32 %v2424, %v2427
      %v2429 = vsel %vm2394, %v2419, %v2428
      %v2431 = vshrl.u32 %v2140, 16
      %v2433 = vrot.slane %v2431, 2
      %v2434 = vshll.u32 %v2140, 16
      %v2436 = vrot.slane %v2434, 3
      %v2437 = vor.u32 %v2433, %v2436
      %v2438 = vsel %vm2394, %v2428, %v2437
      %v2440 = vshrl.u32 %v2141, 16
      %v2442 = vrot.slane %v2440, 2
      %v2443 = vshll.u32 %v2141, 16
      %v2445 = vrot.slane %v2443, 3
      %v2446 = vor.u32 %v2442, %v2445
      %v2447 = vsel %vm2394, %v2437, %v2446
      %v2449 = vshrl.u32 %v2142, 16
      %v2451 = vrot.slane %v2449, 2
      %v2452 = vshll.u32 %v2142, 16
      %v2454 = vrot.slane %v2452, 3
      %v2455 = vor.u32 %v2451, %v2454
      %v2456 = vsel %vm2394, %v2446, %v2455
      %v2458 = vshrl.u32 %v2143, 16
      %v2460 = vrot.slane %v2458, 2
      %v2461 = vshll.u32 %v2143, 16
      %v2463 = vrot.slane %v2461, 3
      %v2464 = vor.u32 %v2460, %v2463
      %v2465 = vsel %vm2394, %v2455, %v2464
      %v2467 = vshrl.u32 %v2144, 16
      %v2469 = vrot.slane %v2467, 2
      %v2470 = vshll.u32 %v2144, 16
      %v2472 = vrot.slane %v2470, 3
      %v2473 = vor.u32 %v2469, %v2472
      %v2474 = vsel %vm2394, %v2464, %v2473
      %v2476 = vshrl.u32 %v2145, 16
      %v2478 = vrot.slane %v2476, 2
      %v2479 = vshll.u32 %v2145, 16
      %v2481 = vrot.slane %v2479, 3
      %v2482 = vor.u32 %v2478, %v2481
      %v2483 = vsel %vm2394, %v2473, %v2482
      %v2485 = vshrl.u32 %v2146, 16
      %v2487 = vrot.slane %v2485, 2
      %v2488 = vshll.u32 %v2146, 16
      %v2490 = vrot.slane %v2488, 3
      %v2491 = vor.u32 %v2487, %v2490
      %v2492 = vsel %vm2394, %v2482, %v2491
      %v2494 = vshrl.u32 %v2147, 16
      %v2496 = vrot.slane %v2494, 2
      %v2497 = vshll.u32 %v2147, 16
      %v2499 = vrot.slane %v2497, 3
      %v2500 = vor.u32 %v2496, %v2499
      %v2501 = vsel %vm2394, %v2491, %v2500
      %v2503 = vshrl.u32 %v2148, 16
      %v2505 = vrot.slane %v2503, 2
      %v2506 = vshll.u32 %v2148, 16
      %v2508 = vrot.slane %v2506, 3
      %v2509 = vor.u32 %v2505, %v2508
      %v2510 = vsel %vm2394, %v2500, %v2509
      %v2512 = vshrl.u32 %v2149, 16
      %v2514 = vrot.slane %v2512, 2
      %v2515 = vshll.u32 %v2149, 16
      %v2517 = vrot.slane %v2515, 3
      %v2518 = vor.u32 %v2514, %v2517
      %v2519 = vsel %vm2394, %v2509, %v2518
      %v2521 = vshrl.u32 %v2150, 16
      %v2523 = vrot.slane %v2521, 2
      %v2524 = vshll.u32 %v2150, 16
      %v2526 = vrot.slane %v2524, 3
      %v2527 = vor.u32 %v2523, %v2526
      %v2528 = vsel %vm2394, %v2518, %v2527
      %v2530 = vshrl.u32 %v2151, 16
      %v2532 = vrot.slane %v2530, 2
      %v2533 = vshll.u32 %v2151, 16
      %v2535 = vrot.slane %v2533, 3
      %v2536 = vor.u32 %v2532, %v2535
      %v2537 = vsel %vm2394, %v2527, %v2536
      %v2539 = vshrl.u32 %v2152, 16
      %v2541 = vrot.slane %v2539, 2
      %v2542 = vshll.u32 %v2152, 16
      %v2544 = vrot.slane %v2542, 3
      %v2545 = vor.u32 %v2541, %v2544
      %v2546 = vsel %vm2394, %v2536, %v2545
      %v2548 = vshrl.u32 %v2153, 16
      %v2550 = vrot.slane %v2548, 2
      %v2551 = vshll.u32 %v2153, 16
      %v2553 = vrot.slane %v2551, 3
      %v2554 = vor.u32 %v2550, %v2553
      %v2555 = vsel %vm2394, %v2545, %v2554
      %v2557 = vshrl.u32 %v2393, 16
      %v2559 = vrot.slane %v2557, 2
      %v2560 = vshll.u32 %v2393, 16
      %v2562 = vrot.slane %v2560, 3
      %v2563 = vor.u32 %v2559, %v2562
      %v2564 = vsel %vm2394, %v2554, %v2563
      %v2567 = vunpack.c.l.b16 %v2389
      %v2568 = vunpack.c.l.b16 %v2390
      %v2569 = vpack.c.b16 %v2568, %v2567
      %v2572 = vsel %vm509, %v2411, 0
      %v2575 = vsel %vm509, %v2420, 0
      %v2578 = vsel %vm509, %v2429, 0
      %v2581 = vsel %vm509, %v2438, 0
      %v2584 = vsel %vm509, %v2447, 0
      %v2587 = vsel %vm509, %v2456, 0
      %v2590 = vsel %vm509, %v2465, 0
      %v2593 = vsel %vm509, %v2474, 0
      %v2596 = vsel %vm509, %v2483, 0
      %v2599 = vsel %vm509, %v2492, 0
      %v2602 = vsel %vm509, %v2501, 0
      %v2605 = vsel %vm509, %v2510, 0
      %v2608 = vsel %vm509, %v2519, 0
      %v2611 = vsel %vm509, %v2528, 0
      %v2614 = vsel %vm509, %v2537, 0
      %v2617 = vsel %vm509, %v2546, 0
      %v2620 = vsel %vm509, %v2555, 0
      %v2623 = vsel %vm509, %v2564, 0
      %2625 = vmatpush.bf16.msra.mxu0 0
      %2626 = vmatpush.bf16.msra.mxu0 0
      %2627 = vmatpush.bf16.msra.mxu0 0
      %2628 = vmatpush.bf16.msra.mxu0 0
      %2629 = vmatpush.bf16.msra.mxu0 0
      %2630 = vmatpush.bf16.msra.mxu0 0
      %2631 = vmatpush.bf16.msra.mxu0 0
      %2632 = vmatpush.bf16.msra.mxu0 %v2569
      %2633 = vmatmul.bf16.gmra.mxu0 %v2572
      %v2634 = vpop.f32.mrf.mxu0
      %v2635 = vadd.f32 0.0, %v2634
      %v2636 = vpop.f32.mrf.mxu0
      %v2637 = vadd.f32 0.0, %v2636
      %2638 = vmatmul.bf16.gmra.mxu0 %v2575
      %v2639 = vpop.f32.mrf.mxu0
      %v2640 = vadd.f32 0.0, %v2639
      %v2641 = vpop.f32.mrf.mxu0
      %v2642 = vadd.f32 0.0, %v2641
      %2643 = vmatmul.bf16.gmra.mxu0 %v2578
      %v2644 = vpop.f32.mrf.mxu0
      %v2645 = vadd.f32 0.0, %v2644
      %v2646 = vpop.f32.mrf.mxu0
      %v2647 = vadd.f32 0.0, %v2646
      %2648 = vmatmul.bf16.gmra.mxu0 %v2581
      %v2649 = vpop.f32.mrf.mxu0
      %v2650 = vadd.f32 0.0, %v2649
      %v2651 = vpop.f32.mrf.mxu0
      %v2652 = vadd.f32 0.0, %v2651
      %2653 = vmatmul.bf16.gmra.mxu0 %v2584
      %v2654 = vpop.f32.mrf.mxu0
      %v2655 = vadd.f32 0.0, %v2654
      %v2656 = vpop.f32.mrf.mxu0
      %v2657 = vadd.f32 0.0, %v2656
      %2658 = vmatmul.bf16.gmra.mxu0 %v2587
      %v2659 = vpop.f32.mrf.mxu0
      %v2660 = vadd.f32 0.0, %v2659
      %v2661 = vpop.f32.mrf.mxu0
      %v2662 = vadd.f32 0.0, %v2661
      %2663 = vmatmul.bf16.gmra.mxu0 %v2590
      %v2664 = vpop.f32.mrf.mxu0
      %v2665 = vadd.f32 0.0, %v2664
      %v2666 = vpop.f32.mrf.mxu0
      %v2667 = vadd.f32 0.0, %v2666
      %2668 = vmatmul.bf16.gmra.mxu0 %v2593
      %v2669 = vpop.f32.mrf.mxu0
      %v2670 = vadd.f32 0.0, %v2669
      %v2671 = vpop.f32.mrf.mxu0
      %v2672 = vadd.f32 0.0, %v2671
      %2673 = vmatmul.bf16.gmra.mxu0 %v2596
      %v2674 = vpop.f32.mrf.mxu0
      %v2675 = vadd.f32 0.0, %v2674
      %v2676 = vpop.f32.mrf.mxu0
      %v2677 = vadd.f32 0.0, %v2676
      %2678 = vmatmul.bf16.gmra.mxu0 %v2599
      %v2679 = vpop.f32.mrf.mxu0
      %v2680 = vadd.f32 0.0, %v2679
      %v2681 = vpop.f32.mrf.mxu0
      %v2682 = vadd.f32 0.0, %v2681
      %2683 = vmatmul.bf16.gmra.mxu0 %v2602
      %v2684 = vpop.f32.mrf.mxu0
      %v2685 = vadd.f32 0.0, %v2684
      %v2686 = vpop.f32.mrf.mxu0
      %v2687 = vadd.f32 0.0, %v2686
      %2688 = vmatmul.bf16.gmra.mxu0 %v2605
      %v2689 = vpop.f32.mrf.mxu0
      %v2690 = vadd.f32 0.0, %v2689
      %v2691 = vpop.f32.mrf.mxu0
      %v2692 = vadd.f32 0.0, %v2691
      %2693 = vmatmul.bf16.gmra.mxu0 %v2608
      %v2694 = vpop.f32.mrf.mxu0
      %v2695 = vadd.f32 0.0, %v2694
      %v2696 = vpop.f32.mrf.mxu0
      %v2697 = vadd.f32 0.0, %v2696
      %2698 = vmatmul.bf16.gmra.mxu0 %v2611
      %v2699 = vpop.f32.mrf.mxu0
      %v2700 = vadd.f32 0.0, %v2699
      %v2701 = vpop.f32.mrf.mxu0
      %v2702 = vadd.f32 0.0, %v2701
      %2703 = vmatmul.bf16.gmra.mxu0 %v2614
      %v2704 = vpop.f32.mrf.mxu0
      %v2705 = vadd.f32 0.0, %v2704
      %v2706 = vpop.f32.mrf.mxu0
      %v2707 = vadd.f32 0.0, %v2706
      %2708 = vmatmul.bf16.gmra.mxu0 %v2617
      %v2709 = vpop.f32.mrf.mxu0
      %v2710 = vadd.f32 0.0, %v2709
      %v2711 = vpop.f32.mrf.mxu0
      %v2712 = vadd.f32 0.0, %v2711
      %2713 = vmatmul.bf16.gmra.mxu0 %v2620
      %v2714 = vpop.f32.mrf.mxu0
      %v2715 = vadd.f32 0.0, %v2714
      %v2716 = vpop.f32.mrf.mxu0
      %v2717 = vadd.f32 0.0, %v2716
      %2718 = vmatmul.bf16.gmra.mxu0 %v2623
      %v2719 = vpop.f32.mrf.mxu0
      %v2720 = vadd.f32 0.0, %v2719
      %v2721 = vpop.f32.mrf.mxu0
      %v2722 = vadd.f32 0.0, %v2721
      %2723 = vdwg.mxu0
      %v2724 = vadd.f32 %v2351, %v2635
      %v2725 = vadd.f32 %v2352, %v2637
      %v2726 = vadd.f32 %v2353, %v2640
      %v2727 = vadd.f32 %v2354, %v2642
      %v2728 = vadd.f32 %v2355, %v2645
      %v2729 = vadd.f32 %v2356, %v2647
      %v2730 = vadd.f32 %v2357, %v2650
      %v2731 = vadd.f32 %v2358, %v2652
      %v2732 = vadd.f32 %v2359, %v2655
      %v2733 = vadd.f32 %v2360, %v2657
      %v2734 = vadd.f32 %v2361, %v2660
      %v2735 = vadd.f32 %v2362, %v2662
      %v2736 = vadd.f32 %v2363, %v2665
      %v2737 = vadd.f32 %v2364, %v2667
      %v2738 = vadd.f32 %v2365, %v2670
      %v2739 = vadd.f32 %v2366, %v2672
      %v2740 = vadd.f32 %v2367, %v2675
      %v2741 = vadd.f32 %v2368, %v2677
      %v2742 = vadd.f32 %v2369, %v2680
      %v2743 = vadd.f32 %v2370, %v2682
      %v2744 = vadd.f32 %v2371, %v2685
      %v2745 = vadd.f32 %v2372, %v2687
      %v2746 = vadd.f32 %v2373, %v2690
      %v2747 = vadd.f32 %v2374, %v2692
      %v2748 = vadd.f32 %v2375, %v2695
      %v2749 = vadd.f32 %v2376, %v2697
      %v2750 = vadd.f32 %v2377, %v2700
      %v2751 = vadd.f32 %v2378, %v2702
      %v2752 = vadd.f32 %v2379, %v2705
      %v2753 = vadd.f32 %v2380, %v2707
      %v2754 = vadd.f32 %v2381, %v2710
      %v2755 = vadd.f32 %v2382, %v2712
      %v2756 = vadd.f32 %v2383, %v2715
      %v2757 = vadd.f32 %v2384, %v2717
      %v2758 = vadd.f32 %v2385, %v2720
      %v2759 = vadd.f32 %v2386, %v2722
      %v2760 = vld [vmem:[%s207 + $0x10] sm:$0x8]
      %s2761 = scalar_lea.vmem %s1, 64
      %v2762 = vld [vmem:[%s2761] sm:$0xf]
      %v2763 = vld [vmem:[%s2761 + $0x4] sm:$0xf]
      %v2765 = vunpack.c.l.b16 %v2760
      %v2766 = vpack.c.b16 %v2100, %v2765
      %vm2767 = vcmask 1044480
      %v2768 = vrot.slane %v2766, 3
      %v2769 = vrot.slane %v2137, 3
      %v2770 = vsel %vm2767, %v2768, %v2769
      %v2771 = vrot.slane %v2138, 3
      %v2772 = vsel %vm2767, %v2769, %v2771
      %v2773 = vrot.slane %v2139, 3
      %v2774 = vsel %vm2767, %v2771, %v2773
      %v2775 = vrot.slane %v2140, 3
      %v2776 = vsel %vm2767, %v2773, %v2775
      %v2777 = vrot.slane %v2141, 3
      %v2778 = vsel %vm2767, %v2775, %v2777
      %v2779 = vrot.slane %v2142, 3
      %v2780 = vsel %vm2767, %v2777, %v2779
      %v2781 = vrot.slane %v2143, 3
      %v2782 = vsel %vm2767, %v2779, %v2781
      %v2783 = vrot.slane %v2144, 3
      %v2784 = vsel %vm2767, %v2781, %v2783
      %v2785 = vrot.slane %v2145, 3
      %v2786 = vsel %vm2767, %v2783, %v2785
      %v2787 = vrot.slane %v2146, 3
      %v2788 = vsel %vm2767, %v2785, %v2787
      %v2789 = vrot.slane %v2147, 3
      %v2790 = vsel %vm2767, %v2787, %v2789
      %v2791 = vrot.slane %v2148, 3
      %v2792 = vsel %vm2767, %v2789, %v2791
      %v2793 = vrot.slane %v2149, 3
      %v2794 = vsel %vm2767, %v2791, %v2793
      %v2795 = vrot.slane %v2150, 3
      %v2796 = vsel %vm2767, %v2793, %v2795
      %v2797 = vrot.slane %v2151, 3
      %v2798 = vsel %vm2767, %v2795, %v2797
      %v2799 = vrot.slane %v2152, 3
      %v2800 = vsel %vm2767, %v2797, %v2799
      %v2801 = vrot.slane %v2153, 3
      %v2802 = vsel %vm2767, %v2799, %v2801
      %v2803 = vrot.slane %v2393, 3
      %v2804 = vsel %vm2767, %v2801, %v2803
      %v2807 = vunpack.c.l.b16 %v2762
      %v2808 = vunpack.c.l.b16 %v2763
      %v2809 = vpack.c.b16 %v2808, %v2807
      %v2812 = vsel %vm509, %v2770, 0
      %v2815 = vsel %vm509, %v2772, 0
      %v2818 = vsel %vm509, %v2774, 0
      %v2821 = vsel %vm509, %v2776, 0
      %v2824 = vsel %vm509, %v2778, 0
      %v2827 = vsel %vm509, %v2780, 0
      %v2830 = vsel %vm509, %v2782, 0
      %v2833 = vsel %vm509, %v2784, 0
      %v2836 = vsel %vm509, %v2786, 0
      %v2839 = vsel %vm509, %v2788, 0
      %v2842 = vsel %vm509, %v2790, 0
      %v2845 = vsel %vm509, %v2792, 0
      %v2848 = vsel %vm509, %v2794, 0
      %v2851 = vsel %vm509, %v2796, 0
      %v2854 = vsel %vm509, %v2798, 0
      %v2857 = vsel %vm509, %v2800, 0
      %v2860 = vsel %vm509, %v2802, 0
      %v2863 = vsel %vm509, %v2804, 0
      %2865 = vmatpush.bf16.msra.mxu0 0
      %2866 = vmatpush.bf16.msra.mxu0 0
      %2867 = vmatpush.bf16.msra.mxu0 0
      %2868 = vmatpush.bf16.msra.mxu0 0
      %2869 = vmatpush.bf16.msra.mxu0 0
      %2870 = vmatpush.bf16.msra.mxu0 0
      %2871 = vmatpush.bf16.msra.mxu0 0
      %2872 = vmatpush.bf16.msra.mxu0 %v2809
      %2873 = vmatmul.bf16.gmra.mxu0 %v2812
      %v2874 = vpop.f32.mrf.mxu0
      %v2875 = vadd.f32 0.0, %v2874
      %v2876 = vpop.f32.mrf.mxu0
      %v2877 = vadd.f32 0.0, %v2876
      %2878 = vmatmul.bf16.gmra.mxu0 %v2815
      %v2879 = vpop.f32.mrf.mxu0
      %v2880 = vadd.f32 0.0, %v2879
      %v2881 = vpop.f32.mrf.mxu0
      %v2882 = vadd.f32 0.0, %v2881
      %2883 = vmatmul.bf16.gmra.mxu0 %v2818
      %v2884 = vpop.f32.mrf.mxu0
      %v2885 = vadd.f32 0.0, %v2884
      %v2886 = vpop.f32.mrf.mxu0
      %v2887 = vadd.f32 0.0, %v2886
      %2888 = vmatmul.bf16.gmra.mxu0 %v2821
      %v2889 = vpop.f32.mrf.mxu0
      %v2890 = vadd.f32 0.0, %v2889
      %v2891 = vpop.f32.mrf.mxu0
      %v2892 = vadd.f32 0.0, %v2891
      %2893 = vmatmul.bf16.gmra.mxu0 %v2824
      %v2894 = vpop.f32.mrf.mxu0
      %v2895 = vadd.f32 0.0, %v2894
      %v2896 = vpop.f32.mrf.mxu0
      %v2897 = vadd.f32 0.0, %v2896
      %2898 = vmatmul.bf16.gmra.mxu0 %v2827
      %v2899 = vpop.f32.mrf.mxu0
      %v2900 = vadd.f32 0.0, %v2899
      %v2901 = vpop.f32.mrf.mxu0
      %v2902 = vadd.f32 0.0, %v2901
      %2903 = vmatmul.bf16.gmra.mxu0 %v2830
      %v2904 = vpop.f32.mrf.mxu0
      %v2905 = vadd.f32 0.0, %v2904
      %v2906 = vpop.f32.mrf.mxu0
      %v2907 = vadd.f32 0.0, %v2906
      %2908 = vmatmul.bf16.gmra.mxu0 %v2833
      %v2909 = vpop.f32.mrf.mxu0
      %v2910 = vadd.f32 0.0, %v2909
      %v2911 = vpop.f32.mrf.mxu0
      %v2912 = vadd.f32 0.0, %v2911
      %2913 = vmatmul.bf16.gmra.mxu0 %v2836
      %v2914 = vpop.f32.mrf.mxu0
      %v2915 = vadd.f32 0.0, %v2914
      %v2916 = vpop.f32.mrf.mxu0
      %v2917 = vadd.f32 0.0, %v2916
      %2918 = vmatmul.bf16.gmra.mxu0 %v2839
      %v2919 = vpop.f32.mrf.mxu0
      %v2920 = vadd.f32 0.0, %v2919
      %v2921 = vpop.f32.mrf.mxu0
      %v2922 = vadd.f32 0.0, %v2921
      %2923 = vmatmul.bf16.gmra.mxu0 %v2842
      %v2924 = vpop.f32.mrf.mxu0
      %v2925 = vadd.f32 0.0, %v2924
      %v2926 = vpop.f32.mrf.mxu0
      %v2927 = vadd.f32 0.0, %v2926
      %2928 = vmatmul.bf16.gmra.mxu0 %v2845
      %v2929 = vpop.f32.mrf.mxu0
      %v2930 = vadd.f32 0.0, %v2929
      %v2931 = vpop.f32.mrf.mxu0
      %v2932 = vadd.f32 0.0, %v2931
      %2933 = vmatmul.bf16.gmra.mxu0 %v2848
      %v2934 = vpop.f32.mrf.mxu0
      %v2935 = vadd.f32 0.0, %v2934
      %v2936 = vpop.f32.mrf.mxu0
      %v2937 = vadd.f32 0.0, %v2936
      %2938 = vmatmul.bf16.gmra.mxu0 %v2851
      %v2939 = vpop.f32.mrf.mxu0
      %v2940 = vadd.f32 0.0, %v2939
      %v2941 = vpop.f32.mrf.mxu0
      %v2942 = vadd.f32 0.0, %v2941
      %2943 = vmatmul.bf16.gmra.mxu0 %v2854
      %v2944 = vpop.f32.mrf.mxu0
      %v2945 = vadd.f32 0.0, %v2944
      %v2946 = vpop.f32.mrf.mxu0
      %v2947 = vadd.f32 0.0, %v2946
      %2948 = vmatmul.bf16.gmra.mxu0 %v2857
      %v2949 = vpop.f32.mrf.mxu0
      %v2950 = vadd.f32 0.0, %v2949
      %v2951 = vpop.f32.mrf.mxu0
      %v2952 = vadd.f32 0.0, %v2951
      %2953 = vmatmul.bf16.gmra.mxu0 %v2860
      %v2954 = vpop.f32.mrf.mxu0
      %v2955 = vadd.f32 0.0, %v2954
      %v2956 = vpop.f32.mrf.mxu0
      %v2957 = vadd.f32 0.0, %v2956
      %2958 = vmatmul.bf16.gmra.mxu0 %v2863
      %v2959 = vpop.f32.mrf.mxu0
      %v2960 = vadd.f32 0.0, %v2959
      %v2961 = vpop.f32.mrf.mxu0
      %v2962 = vadd.f32 0.0, %v2961
      %2963 = vdwg.mxu0
      %v2964 = vadd.f32 %v2724, %v2875
      %v2965 = vadd.f32 %v2725, %v2877
      %v2966 = vadd.f32 %v2726, %v2880
      %v2967 = vadd.f32 %v2727, %v2882
      %v2968 = vadd.f32 %v2728, %v2885
      %v2969 = vadd.f32 %v2729, %v2887
      %v2970 = vadd.f32 %v2730, %v2890
      %v2971 = vadd.f32 %v2731, %v2892
      %v2972 = vadd.f32 %v2732, %v2895
      %v2973 = vadd.f32 %v2733, %v2897
      %v2974 = vadd.f32 %v2734, %v2900
      %v2975 = vadd.f32 %v2735, %v2902
      %v2976 = vadd.f32 %v2736, %v2905
      %v2977 = vadd.f32 %v2737, %v2907
      %v2978 = vadd.f32 %v2738, %v2910
      %v2979 = vadd.f32 %v2739, %v2912
      %v2980 = vadd.f32 %v2740, %v2915
      %v2981 = vadd.f32 %v2741, %v2917
      %v2982 = vadd.f32 %v2742, %v2920
      %v2983 = vadd.f32 %v2743, %v2922
      %v2984 = vadd.f32 %v2744, %v2925
      %v2985 = vadd.f32 %v2745, %v2927
      %v2986 = vadd.f32 %v2746, %v2930
      %v2987 = vadd.f32 %v2747, %v2932
      %v2988 = vadd.f32 %v2748, %v2935
      %v2989 = vadd.f32 %v2749, %v2937
      %v2990 = vadd.f32 %v2750, %v2940
      %v2991 = vadd.f32 %v2751, %v2942
      %v2992 = vadd.f32 %v2752, %v2945
      %v2993 = vadd.f32 %v2753, %v2947
      %v2994 = vadd.f32 %v2754, %v2950
      %v2995 = vadd.f32 %v2755, %v2952
      %v2996 = vadd.f32 %v2756, %v2955
      %v2997 = vadd.f32 %v2757, %v2957
      %v2998 = vadd.f32 %v2758, %v2960
      %v2999 = vadd.f32 %v2759, %v2962
      %v3000 = vld [vmem:[%s2] sm:$0x1]
      %v3002 = vperm.slane %v3000, 0
      %v3004 = vadd.f32 %v2964, %v3002
      %v3005 = vadd.f32 %v2965, %v3002
      %v3006 = vadd.f32 %v2966, %v3002
      %v3007 = vadd.f32 %v2967, %v3002
      %v3008 = vadd.f32 %v2968, %v3002
      %v3009 = vadd.f32 %v2969, %v3002
      %v3010 = vadd.f32 %v2970, %v3002
      %v3011 = vadd.f32 %v2971, %v3002
      %v3012 = vadd.f32 %v2972, %v3002
      %v3013 = vadd.f32 %v2973, %v3002
      %v3014 = vadd.f32 %v2974, %v3002
      %v3015 = vadd.f32 %v2975, %v3002
      %v3016 = vadd.f32 %v2976, %v3002
      %v3017 = vadd.f32 %v2977, %v3002
      %v3018 = vadd.f32 %v2978, %v3002
      %v3019 = vadd.f32 %v2979, %v3002
      %v3020 = vadd.f32 %v2980, %v3002
      %v3021 = vadd.f32 %v2981, %v3002
      %v3022 = vadd.f32 %v2982, %v3002
      %v3023 = vadd.f32 %v2983, %v3002
      %v3024 = vadd.f32 %v2984, %v3002
      %v3025 = vadd.f32 %v2985, %v3002
      %v3026 = vadd.f32 %v2986, %v3002
      %v3027 = vadd.f32 %v2987, %v3002
      %v3028 = vadd.f32 %v2988, %v3002
      %v3029 = vadd.f32 %v2989, %v3002
      %v3030 = vadd.f32 %v2990, %v3002
      %v3031 = vadd.f32 %v2991, %v3002
      %v3032 = vadd.f32 %v2992, %v3002
      %v3033 = vadd.f32 %v2993, %v3002
      %v3034 = vadd.f32 %v2994, %v3002
      %v3035 = vadd.f32 %v2995, %v3002
      %v3036 = vadd.f32 %v2996, %v3002
      %v3037 = vadd.f32 %v2997, %v3002
      %v3038 = vadd.f32 %v2998, %v3002
      %v3039 = vadd.f32 %v2999, %v3002
      %v3040 = vld [vmem:[%s212 + $0x8] sm:$0xe]
      %v3041 = vld [vmem:[%s212 + $0xc] sm:$0xf]
      %v3042 = vld [vmem:[%s212 + $0x10] sm:$0xf]
      %v3043 = vld [vmem:[%s212 + $0x14] sm:$0xf]
      %v3044 = vld [vmem:[%s212 + $0x18] sm:$0xf]
      %v3045 = vld [vmem:[%s212 + $0x1c] sm:$0xf]
      %v3046 = vld [vmem:[%s212 + $0x20] sm:$0xf]
      %v3047 = vld [vmem:[%s212 + $0x24] sm:$0xf]
      %v3048 = vld [vmem:[%s212 + $0x28] sm:$0xf]
      %v3049 = vld [vmem:[%s212 + $0x2c] sm:$0xf]
      %v3050 = vld [vmem:[%s212 + $0x30] sm:$0xf]
      %v3051 = vld [vmem:[%s212 + $0x34] sm:$0xf]
      %v3052 = vld [vmem:[%s212 + $0x38] sm:$0xf]
      %v3053 = vld [vmem:[%s212 + $0x3c] sm:$0xf]
      %v3054 = vld [vmem:[%s212 + $0x40] sm:$0xf]
      %v3055 = vld [vmem:[%s212 + $0x44] sm:$0xf]
      %v3056 = vld [vmem:[%s212 + $0x48] sm:$0xf]
      %v3057 = vld [vmem:[%s212 + $0x4c] sm:$0xf]
      %v3058 = vld [vmem:[%s212 + $0x50] sm:$0xf]
      %v3059 = vld [vmem:[%s212 + $0x54] sm:$0xf]
      %v3060 = vld [vmem:[%s212 + $0x58] sm:$0xf]
      %v3061 = vld [vmem:[%s212 + $0x5c] sm:$0xf]
      %v3062 = vld [vmem:[%s212 + $0x60] sm:$0xf]
      %v3063 = vld [vmem:[%s212 + $0x64] sm:$0xf]
      %v3064 = vld [vmem:[%s212 + $0x68] sm:$0xf]
      %v3065 = vld [vmem:[%s212 + $0x6c] sm:$0xf]
      %v3066 = vld [vmem:[%s212 + $0x70] sm:$0xf]
      %v3067 = vld [vmem:[%s212 + $0x74] sm:$0xf]
      %v3068 = vld [vmem:[%s212 + $0x78] sm:$0xf]
      %v3069 = vld [vmem:[%s212 + $0x7c] sm:$0xf]
      %v3070 = vld [vmem:[%s212 + $0x80] sm:$0xf]
      %v3071 = vld [vmem:[%s212 + $0x84] sm:$0xf]
      %v3072 = vld [vmem:[%s212 + $0x88] sm:$0xf]
      %v3073 = vld [vmem:[%s212 + $0x8c] sm:$0xf]
      %v3074 = vld [vmem:[%s212 + $0x90] sm:$0xf]
      %v3075 = vld [vmem:[%s212 + $0x94] sm:$0xf]
      %v3076 = vld [vmem:[%s212 + $0x98] sm:$0x3]
      %v3077 = vunpack.c.l.bf16 %v3040
      %v3078 = vunpack.c.l.bf16 %v3041
      %v3079 = vunpack.c.l.bf16 %v3042
      %v3080 = vunpack.c.l.bf16 %v3043
      %v3081 = vunpack.c.l.bf16 %v3044
      %v3082 = vunpack.c.l.bf16 %v3045
      %v3083 = vunpack.c.l.bf16 %v3046
      %v3084 = vunpack.c.l.bf16 %v3047
      %v3085 = vunpack.c.l.bf16 %v3048
      %v3086 = vunpack.c.l.bf16 %v3049
      %v3087 = vunpack.c.l.bf16 %v3050
      %v3088 = vunpack.c.l.bf16 %v3051
      %v3089 = vunpack.c.l.bf16 %v3052
      %v3090 = vunpack.c.l.bf16 %v3053
      %v3091 = vunpack.c.l.bf16 %v3054
      %v3092 = vunpack.c.l.bf16 %v3055
      %v3093 = vunpack.c.l.bf16 %v3056
      %v3094 = vunpack.c.l.bf16 %v3057
      %v3095 = vunpack.c.l.bf16 %v3058
      %v3096 = vunpack.c.l.bf16 %v3059
      %v3097 = vunpack.c.l.bf16 %v3060
      %v3098 = vunpack.c.l.bf16 %v3061
      %v3099 = vunpack.c.l.bf16 %v3062
      %v3100 = vunpack.c.l.bf16 %v3063
      %v3101 = vunpack.c.l.bf16 %v3064
      %v3102 = vunpack.c.l.bf16 %v3065
      %v3103 = vunpack.c.l.bf16 %v3066
      %v3104 = vunpack.c.l.bf16 %v3067
      %v3105 = vunpack.c.l.bf16 %v3068
      %v3106 = vunpack.c.l.bf16 %v3069
      %v3107 = vunpack.c.l.bf16 %v3070
      %v3108 = vunpack.c.l.bf16 %v3071
      %v3109 = vunpack.c.l.bf16 %v3072
      %v3110 = vunpack.c.l.bf16 %v3073
      %v3111 = vunpack.c.l.bf16 %v3074
      %v3112 = vunpack.c.l.bf16 %v3075
      %v3113 = vunpack.c.l.bf16 %v3076
      %vm3151 = vcmask 1044480
      %v3152 = vrot.slane %v3077, 3
      %v3153 = vrot.slane %v3078, 3
      %v3154 = vsel %vm3151, %v3152, %v3153
      %v3155 = vrot.slane %v3079, 3
      %v3156 = vsel %vm3151, %v3153, %v3155
      %v3157 = vrot.slane %v3080, 3
      %v3158 = vsel %vm3151, %v3155, %v3157
      %v3159 = vrot.slane %v3081, 3
      %v3160 = vsel %vm3151, %v3157, %v3159
      %v3161 = vrot.slane %v3082, 3
      %v3162 = vsel %vm3151, %v3159, %v3161
      %v3163 = vrot.slane %v3083, 3
      %v3164 = vsel %vm3151, %v3161, %v3163
      %v3165 = vrot.slane %v3084, 3
      %v3166 = vsel %vm3151, %v3163, %v3165
      %v3167 = vrot.slane %v3085, 3
      %v3168 = vsel %vm3151, %v3165, %v3167
      %v3169 = vrot.slane %v3086, 3
      %v3170 = vsel %vm3151, %v3167, %v3169
      %v3171 = vrot.slane %v3087, 3
      %v3172 = vsel %vm3151, %v3169, %v3171
      %v3173 = vrot.slane %v3088, 3
      %v3174 = vsel %vm3151, %v3171, %v3173
      %v3175 = vrot.slane %v3089, 3
      %v3176 = vsel %vm3151, %v3173, %v3175
      %v3177 = vrot.slane %v3090, 3
      %v3178 = vsel %vm3151, %v3175, %v3177
      %v3179 = vrot.slane %v3091, 3
      %v3180 = vsel %vm3151, %v3177, %v3179
      %v3181 = vrot.slane %v3092, 3
      %v3182 = vsel %vm3151, %v3179, %v3181
      %v3183 = vrot.slane %v3093, 3
      %v3184 = vsel %vm3151, %v3181, %v3183
      %v3185 = vrot.slane %v3094, 3
      %v3186 = vsel %vm3151, %v3183, %v3185
      %v3187 = vrot.slane %v3095, 3
      %v3188 = vsel %vm3151, %v3185, %v3187
      %v3189 = vrot.slane %v3096, 3
      %v3190 = vsel %vm3151, %v3187, %v3189
      %v3191 = vrot.slane %v3097, 3
      %v3192 = vsel %vm3151, %v3189, %v3191
      %v3193 = vrot.slane %v3098, 3
      %v3194 = vsel %vm3151, %v3191, %v3193
      %v3195 = vrot.slane %v3099, 3
      %v3196 = vsel %vm3151, %v3193, %v3195
      %v3197 = vrot.slane %v3100, 3
      %v3198 = vsel %vm3151, %v3195, %v3197
      %v3199 = vrot.slane %v3101, 3
      %v3200 = vsel %vm3151, %v3197, %v3199
      %v3201 = vrot.slane %v3102, 3
      %v3202 = vsel %vm3151, %v3199, %v3201
      %v3203 = vrot.slane %v3103, 3
      %v3204 = vsel %vm3151, %v3201, %v3203
      %v3205 = vrot.slane %v3104, 3
      %v3206 = vsel %vm3151, %v3203, %v3205
      %v3207 = vrot.slane %v3105, 3
      %v3208 = vsel %vm3151, %v3205, %v3207
      %v3209 = vrot.slane %v3106, 3
      %v3210 = vsel %vm3151, %v3207, %v3209
      %v3211 = vrot.slane %v3107, 3
      %v3212 = vsel %vm3151, %v3209, %v3211
      %v3213 = vrot.slane %v3108, 3
      %v3214 = vsel %vm3151, %v3211, %v3213
      %v3215 = vrot.slane %v3109, 3
      %v3216 = vsel %vm3151, %v3213, %v3215
      %v3217 = vrot.slane %v3110, 3
      %v3218 = vsel %vm3151, %v3215, %v3217
      %v3219 = vrot.slane %v3111, 3
      %v3220 = vsel %vm3151, %v3217, %v3219
      %v3221 = vrot.slane %v3112, 3
      %v3222 = vsel %vm3151, %v3219, %v3221
      %v3223 = vrot.slane %v3113, 3
      %v3224 = vsel %vm3151, %v3221, %v3223
      %v3261 = vadd.f32 %v3004, %v3154
      %v3262 = vadd.f32 %v3005, %v3156
      %v3263 = vadd.f32 %v3006, %v3158
      %v3264 = vadd.f32 %v3007, %v3160
      %v3265 = vadd.f32 %v3008, %v3162
      %v3266 = vadd.f32 %v3009, %v3164
      %v3267 = vadd.f32 %v3010, %v3166
      %v3268 = vadd.f32 %v3011, %v3168
      %v3269 = vadd.f32 %v3012, %v3170
      %v3270 = vadd.f32 %v3013, %v3172
      %v3271 = vadd.f32 %v3014, %v3174
      %v3272 = vadd.f32 %v3015, %v3176
      %v3273 = vadd.f32 %v3016, %v3178
      %v3274 = vadd.f32 %v3017, %v3180
      %v3275 = vadd.f32 %v3018, %v3182
      %v3276 = vadd.f32 %v3019, %v3184
      %v3277 = vadd.f32 %v3020, %v3186
      %v3278 = vadd.f32 %v3021, %v3188
      %v3279 = vadd.f32 %v3022, %v3190
      %v3280 = vadd.f32 %v3023, %v3192
      %v3281 = vadd.f32 %v3024, %v3194
      %v3282 = vadd.f32 %v3025, %v3196
      %v3283 = vadd.f32 %v3026, %v3198
      %v3284 = vadd.f32 %v3027, %v3200
      %v3285 = vadd.f32 %v3028, %v3202
      %v3286 = vadd.f32 %v3029, %v3204
      %v3287 = vadd.f32 %v3030, %v3206
      %v3288 = vadd.f32 %v3031, %v3208
      %v3289 = vadd.f32 %v3032, %v3210
      %v3290 = vadd.f32 %v3033, %v3212
      %v3291 = vadd.f32 %v3034, %v3214
      %v3292 = vadd.f32 %v3035, %v3216
      %v3293 = vadd.f32 %v3036, %v3218
      %v3294 = vadd.f32 %v3037, %v3220
      %v3295 = vadd.f32 %v3038, %v3222
      %v3296 = vadd.f32 %v3039, %v3224
      %v3297 = vmax.f32 %v3261, 0.0
      %v3298 = vmax.f32 %v3262, 0.0
      %v3299 = vmax.f32 %v3263, 0.0
      %v3300 = vmax.f32 %v3264, 0.0
      %v3301 = vmax.f32 %v3265, 0.0
      %v3302 = vmax.f32 %v3266, 0.0
      %v3303 = vmax.f32 %v3267, 0.0
      %v3304 = vmax.f32 %v3268, 0.0
      %v3305 = vmax.f32 %v3269, 0.0
      %v3306 = vmax.f32 %v3270, 0.0
      %v3307 = vmax.f32 %v3271, 0.0
      %v3308 = vmax.f32 %v3272, 0.0
      %v3309 = vmax.f32 %v3273, 0.0
      %v3310 = vmax.f32 %v3274, 0.0
      %v3311 = vmax.f32 %v3275, 0.0
      %v3312 = vmax.f32 %v3276, 0.0
      %v3313 = vmax.f32 %v3277, 0.0
      %v3314 = vmax.f32 %v3278, 0.0
      %v3315 = vmax.f32 %v3279, 0.0
      %v3316 = vmax.f32 %v3280, 0.0
      %v3317 = vmax.f32 %v3281, 0.0
      %v3318 = vmax.f32 %v3282, 0.0
      %v3319 = vmax.f32 %v3283, 0.0
      %v3320 = vmax.f32 %v3284, 0.0
      %v3321 = vmax.f32 %v3285, 0.0
      %v3322 = vmax.f32 %v3286, 0.0
      %v3323 = vmax.f32 %v3287, 0.0
      %v3324 = vmax.f32 %v3288, 0.0
      %v3325 = vmax.f32 %v3289, 0.0
      %v3326 = vmax.f32 %v3290, 0.0
      %v3327 = vmax.f32 %v3291, 0.0
      %v3328 = vmax.f32 %v3292, 0.0
      %v3329 = vmax.f32 %v3293, 0.0
      %v3330 = vmax.f32 %v3294, 0.0
      %v3331 = vmax.f32 %v3295, 0.0
      %v3332 = vmax.f32 %v3296, 0.0
      %v3333 = vpack.c.bf16 %v3297, %v3297
      %v3334 = vpack.c.bf16 %v3298, %v3298
      %v3335 = vpack.c.bf16 %v3299, %v3299
      %v3336 = vpack.c.bf16 %v3300, %v3300
      %v3337 = vpack.c.bf16 %v3301, %v3301
      %v3338 = vpack.c.bf16 %v3302, %v3302
      %v3339 = vpack.c.bf16 %v3303, %v3303
      %v3340 = vpack.c.bf16 %v3304, %v3304
      %v3341 = vpack.c.bf16 %v3305, %v3305
      %v3342 = vpack.c.bf16 %v3306, %v3306
      %v3343 = vpack.c.bf16 %v3307, %v3307
      %v3344 = vpack.c.bf16 %v3308, %v3308
      %v3345 = vpack.c.bf16 %v3309, %v3309
      %v3346 = vpack.c.bf16 %v3310, %v3310
      %v3347 = vpack.c.bf16 %v3311, %v3311
      %v3348 = vpack.c.bf16 %v3312, %v3312
      %v3349 = vpack.c.bf16 %v3313, %v3313
      %v3350 = vpack.c.bf16 %v3314, %v3314
      %v3351 = vpack.c.bf16 %v3315, %v3315
      %v3352 = vpack.c.bf16 %v3316, %v3316
      %v3353 = vpack.c.bf16 %v3317, %v3317
      %v3354 = vpack.c.bf16 %v3318, %v3318
      %v3355 = vpack.c.bf16 %v3319, %v3319
      %v3356 = vpack.c.bf16 %v3320, %v3320
      %v3357 = vpack.c.bf16 %v3321, %v3321
      %v3358 = vpack.c.bf16 %v3322, %v3322
      %v3359 = vpack.c.bf16 %v3323, %v3323
      %v3360 = vpack.c.bf16 %v3324, %v3324
      %v3361 = vpack.c.bf16 %v3325, %v3325
      %v3362 = vpack.c.bf16 %v3326, %v3326
      %v3363 = vpack.c.bf16 %v3327, %v3327
      %v3364 = vpack.c.bf16 %v3328, %v3328
      %v3365 = vpack.c.bf16 %v3329, %v3329
      %v3366 = vpack.c.bf16 %v3330, %v3330
      %v3367 = vpack.c.bf16 %v3331, %v3331
      %v3368 = vpack.c.bf16 %v3332, %v3332
      %vm3369 = vcmask 125952
      %3370 = vst.msk [vmem:[%s217] sm:$0xf] %vm3369, %v3333
      %3371 = vst.msk [vmem:[%s217 + $0x4] sm:$0xf] %vm3369, %v3334
      %3372 = vst.msk [vmem:[%s217 + $0x8] sm:$0xf] %vm3369, %v3335
      %3373 = vst.msk [vmem:[%s217 + $0xc] sm:$0xf] %vm3369, %v3336
      %3374 = vst.msk [vmem:[%s217 + $0x10] sm:$0xf] %vm3369, %v3337
      %3375 = vst.msk [vmem:[%s217 + $0x14] sm:$0xf] %vm3369, %v3338
      %3376 = vst.msk [vmem:[%s217 + $0x18] sm:$0xf] %vm3369, %v3339
      %3377 = vst.msk [vmem:[%s217 + $0x1c] sm:$0xf] %vm3369, %v3340
      %3378 = vst.msk [vmem:[%s217 + $0x20] sm:$0xf] %vm3369, %v3341
      %3379 = vst.msk [vmem:[%s217 + $0x24] sm:$0xf] %vm3369, %v3342
      %3380 = vst.msk [vmem:[%s217 + $0x28] sm:$0xf] %vm3369, %v3343
      %3381 = vst.msk [vmem:[%s217 + $0x2c] sm:$0xf] %vm3369, %v3344
      %3382 = vst.msk [vmem:[%s217 + $0x30] sm:$0xf] %vm3369, %v3345
      %3383 = vst.msk [vmem:[%s217 + $0x34] sm:$0xf] %vm3369, %v3346
      %3384 = vst.msk [vmem:[%s217 + $0x38] sm:$0xf] %vm3369, %v3347
      %3385 = vst.msk [vmem:[%s217 + $0x3c] sm:$0xf] %vm3369, %v3348
      %3386 = vst.msk [vmem:[%s217 + $0x40] sm:$0xf] %vm3369, %v3349
      %3387 = vst.msk [vmem:[%s217 + $0x44] sm:$0xf] %vm3369, %v3350
      %3388 = vst.msk [vmem:[%s217 + $0x48] sm:$0xf] %vm3369, %v3351
      %3389 = vst.msk [vmem:[%s217 + $0x4c] sm:$0xf] %vm3369, %v3352
      %3390 = vst.msk [vmem:[%s217 + $0x50] sm:$0xf] %vm3369, %v3353
      %3391 = vst.msk [vmem:[%s217 + $0x54] sm:$0xf] %vm3369, %v3354
      %3392 = vst.msk [vmem:[%s217 + $0x58] sm:$0xf] %vm3369, %v3355
      %3393 = vst.msk [vmem:[%s217 + $0x5c] sm:$0xf] %vm3369, %v3356
      %3394 = vst.msk [vmem:[%s217 + $0x60] sm:$0xf] %vm3369, %v3357
      %3395 = vst.msk [vmem:[%s217 + $0x64] sm:$0xf] %vm3369, %v3358
      %3396 = vst.msk [vmem:[%s217 + $0x68] sm:$0xf] %vm3369, %v3359
      %3397 = vst.msk [vmem:[%s217 + $0x6c] sm:$0xf] %vm3369, %v3360
      %3398 = vst.msk [vmem:[%s217 + $0x70] sm:$0xf] %vm3369, %v3361
      %3399 = vst.msk [vmem:[%s217 + $0x74] sm:$0xf] %vm3369, %v3362
      %3400 = vst.msk [vmem:[%s217 + $0x78] sm:$0xf] %vm3369, %v3363
      %3401 = vst.msk [vmem:[%s217 + $0x7c] sm:$0xf] %vm3369, %v3364
      %3402 = vst.msk [vmem:[%s217 + $0x80] sm:$0xf] %vm3369, %v3365
      %3403 = vst.msk [vmem:[%s217 + $0x84] sm:$0xf] %vm3369, %v3366
      %3404 = vst.msk [vmem:[%s217 + $0x88] sm:$0xf] %vm3369, %v3367
      %3405 = vst.msk [vmem:[%s217 + $0x8c] sm:$0xf] %vm3369, %v3368
      %p3406 = scmp.lt.s32.totalorder %s15, 1
      %s3407 = scalar_select %p3406, %s15, 1
      %s3408 = smul.addr %s3407, 36
      %s3409 = smul.addr %s3408, 4
      %s3410 = scalar_lea.vmem %s4, %s3409
      // Predicated region
      $region37: #{higher_hrnet_forward.24} parent=35 // pred_check
        %p3411 = pneg %p127
      $region38: #{higher_hrnet_forward.24} parent=35 // pred_check_branch
        %3413 = sbr.rel (%p3411) target = $region40
      $region39: #{higher_hrnet_forward.24} parent=35 // pred_region
        _
      $region40: #{higher_hrnet_forward.24} parent=35 // pred_fallthru
        _
    $region36: #{higher_hrnet_forward.24} parent=5 // pred_fallthru
      _
    %p3414 = scmp.le.s32.totalorder 2, %s10
    // Predicated region
    $region41: #{higher_hrnet_forward.24} parent=5 // pred_check
      %p3415 = pneg %p3414
    $region42: #{higher_hrnet_forward.24} parent=5 // pred_check_branch
      %3417 = sbr.rel (%p3415) target = $region44
    $region43: #{higher_hrnet_forward.24} parent=5 // pred_region
      %s3418 = ssub.s32 %s10, 2
      // Predicated region
      $region45: #{higher_hrnet_forward.24} parent=43 // pred_check
        %p3419 = pneg %p133
      $region46: #{higher_hrnet_forward.24} parent=43 // pred_check_branch
        %3421 = sbr.rel (%p3419) target = $region48
      $region47: #{higher_hrnet_forward.24} parent=43 // pred_region
        %p3422 = scmp.lt.s32.totalorder %s16, 1
        %s3423 = scalar_select %p3422, %s16, 1
        %s3424 = smul.addr %s3423, 36
        %s3425 = smul.addr %s3424, 4
        %s3426 = scalar_lea.vmem %s4, %s3425
      $region48: #{higher_hrnet_forward.24} parent=43 // pred_fallthru
        _
    $region44: #{higher_hrnet_forward.24} parent=5 // pred_fallthru
      _
  $region6: #{higher_hrnet_forward.24} parent=0 // loop_footer
    %s14 = sadd.s32 1, %s10
  $region7: #{higher_hrnet_forward.24} parent=0 // loop_footer_branch
    %9 = sbr.rel target = $region3
  $region8: #{higher_hrnet_forward.24} parent=0 // loop_exit
    _

</llo_original>
